<compile_context>
chip_gen: v5e
topology: v5e:2x2
jax: 0.10.0
libtpu: 0.0.40
codegen_flags: <defaults>
</compile_context>

<pallas_src>
import jax
import jax.numpy as jnp
from jax import lax
from jax.experimental import pallas as pl
from jax.experimental.pallas import tpu as pltpu

# ----------------------------- model hyper-params (small) -------------------
BLOCK_SIZE = 128          # T (module: 256) -- forward requires T == block_size
N_HEAD     = 2            # module: 6
N_EMBED    = 64 * N_HEAD  # module: 64 * n_head
N_LAYER    = 2            # module: 6
VOCAB_SIZE = 65           # module: len(set(text))
VOCAB_PAD  = 128          # lane-dense padded vocab for the lm_head store
HEAD_SIZE  = N_EMBED // N_HEAD
LN_EPS     = 1e-5         # torch.nn.LayerNorm default
NEG_BIG    = -1e30        # finite "-inf" for the causal mask


def _layer_norm(x, gamma, beta):
    # x: (T, C) f32; gamma/beta: (1, C).  PyTorch LayerNorm (biased variance).
    mu = jnp.mean(x, axis=-1, keepdims=True)
    var = jnp.mean((x - mu) ** 2, axis=-1, keepdims=True)
    return (x - mu) * lax.rsqrt(var + LN_EPS) * gamma + beta


# ----------------------------- fully fused forward kernel -------------------
def _fused_kernel(x_ref,
                  ln1_g_ref, ln1_b_ref, wqkv_ref, wp_ref, bp_ref,
                  ln2_g_ref, ln2_b_ref, w1_ref, b1_ref, w2_ref, b2_ref,
                  lnf_g_ref, lnf_b_ref, wlm_ref, blm_ref,
                  o_ref):
    x = x_ref[...]                                   # (T, C) f32, one batch elem
    T, C = x.shape
    scale = 1.0 / (C ** 0.5)   # NOTE: module scales by sqrt(n_embed), not head_size

    # Additive causal mask -- built ONCE per kernel invocation (hoisted out of
    # the layer/head loops).
    row = lax.broadcasted_iota(jnp.int32, (T, T), 0)
    col = lax.broadcasted_iota(jnp.int32, (T, T), 1)
    causal_bias = jnp.where(row >= col, 0.0, NEG_BIG).astype(jnp.float32)

    for l in range(N_LAYER):                         # static unroll, weights resident
        # --- ln1 + multi-head causal self-attention --------------------------
        xn = _layer_norm(x, ln1_g_ref[l], ln1_b_ref[l])
        # fused QKV projection: (T, C) x (C, 3C) -> (T, 3C)
        qkv = jnp.dot(xn.astype(jnp.bfloat16), wqkv_ref[l],
                      preferred_element_type=jnp.float32)

        wp_l = wp_ref[l]                             # (C, C) bf16
        sa = jnp.zeros((T, C), jnp.float32)
        for h in range(N_HEAD):                      # static unroll over heads
            lo = h * HEAD_SIZE
            hi = lo + HEAD_SIZE
            q_h = qkv[:, 0 * C + lo: 0 * C + hi]
            k_h = qkv[:, 1 * C + lo: 1 * C + hi]
            v_h = qkv[:, 2 * C + lo: 2 * C + hi]

            # q . k^T via dot_general (contract last axes, no explicit transpose)
            wei = lax.dot_general(
                q_h.astype(jnp.bfloat16), k_h.astype(jnp.bfloat16),
                (((1,), (1,)), ((), ())),
                preferred_element_type=jnp.float32) * scale
            wei = wei + causal_bias
            wei = wei - jnp.max(wei, axis=-1, keepdims=True)
            p = jnp.exp(wei)
            p = p * pl.reciprocal(jnp.sum(p, axis=-1, keepdims=True), approx=True)
            # TODO(synk): nn.Dropout(p=0.2) on attention weights / proj / ffn is
            # eval-mode identity here.

            head_out = jnp.dot(p.astype(jnp.bfloat16), v_h.astype(jnp.bfloat16),
                               preferred_element_type=jnp.float32)   # (T, hs)
            # Fold the head concat into the projection:
            #   concat(head_outs) @ Wp == sum_h head_out_h @ Wp[h*hs:(h+1)*hs, :]
            sa = sa + jnp.dot(head_out.astype(jnp.bfloat16),
                              wp_l[lo:hi, :],
                              preferred_element_type=jnp.float32)
        sa = sa + bp_ref[l]
        x = x + sa

        # --- ln2 + feed-forward ----------------------------------------------
        xn2 = _layer_norm(x, ln2_g_ref[l], ln2_b_ref[l])
        hdn = jnp.dot(xn2.astype(jnp.bfloat16), w1_ref[l],
                      preferred_element_type=jnp.float32) + b1_ref[l]
        hdn = jnp.maximum(hdn, 0.0)
        ff = jnp.dot(hdn.astype(jnp.bfloat16), w2_ref[l],
                     preferred_element_type=jnp.float32) + b2_ref[l]
        x = x + ff

    # --- final LayerNorm + lm_head (vocab padded to 128 lanes) ----------------
    xnf = _layer_norm(x, lnf_g_ref[...], lnf_b_ref[...])
    o_ref[...] = jnp.dot(xnf.astype(jnp.bfloat16), wlm_ref[...],
                         preferred_element_type=jnp.float32) + blm_ref[...]


def fused_forward(x, prep):
    """x: (B, T, C) f32 embeddings; prep: stacked/bf16-cast weights.

    Returns padded logits (B, T, VOCAB_PAD) f32.
    """
    B, T, C = x.shape
    L = N_LAYER
    full = lambda shape: pl.BlockSpec(shape, lambda b: (0,) * len(shape))
    in_specs = [
        pl.BlockSpec((None, T, C), lambda b: (b, 0, 0)),     # x (batch-sliced)
        full((L, 1, C)), full((L, 1, C)),                    # ln1 gamma/beta
        full((L, C, 3 * C)),                                 # fused Wqkv (bf16)
        full((L, C, C)), full((L, 1, C)),                    # proj W (bf16), b
        full((L, 1, C)), full((L, 1, C)),                    # ln2 gamma/beta
        full((L, C, 4 * C)), full((L, 1, 4 * C)),            # ffn W1 (bf16), b1
        full((L, 4 * C, C)), full((L, 1, C)),                # ffn W2 (bf16), b2
        full((1, C)), full((1, C)),                          # final LN gamma/beta
        full((C, VOCAB_PAD)), full((1, VOCAB_PAD)),          # lm_head W (bf16), b
    ]
    out_spec = pl.BlockSpec((None, T, VOCAB_PAD), lambda b: (b, 0, 0))
    return pl.pallas_call(
        _fused_kernel,
        out_shape=jax.ShapeDtypeStruct((B, T, VOCAB_PAD), jnp.float32),
        grid_spec=pltpu.PrefetchScalarGridSpec(
            num_scalar_prefetch=0, grid=(B,),
            in_specs=in_specs, out_specs=out_spec),
        compiler_params=pltpu.CompilerParams(
            dimension_semantics=("parallel",)),
    )(x,
      prep["ln1_g"], prep["ln1_b"], prep["wqkv"], prep["wp"], prep["bp"],
      prep["ln2_g"], prep["ln2_b"], prep["w1"], prep["b1"], prep["w2"], prep["b2"],
      prep["lnf_g"], prep["lnf_b"], prep["w_lm"], prep["b_lm"])


# ----------------------------- parameter init --------------------------------
def init_params(key):
    """Parameters in PyTorch-module-like layout (per-head QKV, per-layer dicts)."""
    def nrm(k, shape, std=0.02):
        return (std * jax.random.normal(k, shape)).astype(jnp.float32)

    keys = jax.random.split(key, 4 + N_LAYER)
    params = {
        "tok_emb": nrm(keys[0], (VOCAB_SIZE, N_EMBED)),
        "pos_emb": nrm(keys[1], (BLOCK_SIZE, N_EMBED)),
        "lnf_g": jnp.ones((1, N_EMBED), jnp.float32),
        "lnf_b": jnp.zeros((1, N_EMBED), jnp.float32),
        "w_lm": nrm(keys[2], (N_EMBED, VOCAB_SIZE)),
        "b_lm": jnp.zeros((1, VOCAB_SIZE), jnp.float32),
        "layers": [],
    }
    for l in range(N_LAYER):
        lk = jax.random.split(keys[4 + l], 8)
        params["layers"].append({
            "ln1_g": jnp.ones((1, N_EMBED), jnp.float32),
            "ln1_b": jnp.zeros((1, N_EMBED), jnp.float32),
            "wk": nrm(lk[0], (N_HEAD, N_EMBED, HEAD_SIZE)),
            "wq": nrm(lk[1], (N_HEAD, N_EMBED, HEAD_SIZE)),
            "wv": nrm(lk[2], (N_HEAD, N_EMBED, HEAD_SIZE)),
            "wp": nrm(lk[3], (N_EMBED, N_EMBED)),
            "bp": jnp.zeros((1, N_EMBED), jnp.float32),
            "ln2_g": jnp.ones((1, N_EMBED), jnp.float32),
            "ln2_b": jnp.zeros((1, N_EMBED), jnp.float32),
            "w1": nrm(lk[4], (N_EMBED, 4 * N_EMBED)),
            "b1": jnp.zeros((1, 4 * N_EMBED), jnp.float32),
            "w2": nrm(lk[5], (4 * N_EMBED, N_EMBED)),
            "b2": jnp.zeros((1, N_EMBED), jnp.float32),
        })
    return params


def prepare_params(params):
    """One-time prep: stack layers, fuse per-head QKV, cast matmul weights to
    bf16, pad lm_head vocab to a lane-dense 128."""
    layers = params["layers"]

    def cat_heads(w):  # (H, C, hs) -> (C, H*hs) with per-head contiguous cols
        return jnp.concatenate([w[h] for h in range(N_HEAD)], axis=1)

    wqkv = jnp.stack([
        jnp.concatenate([cat_heads(lp["wq"]),
                         cat_heads(lp["wk"]),
                         cat_heads(lp["wv"])], axis=1)
        for lp in layers
    ]).astype(jnp.bfloat16)                                   # (L, C, 3C)

    stack = lambda name: jnp.stack([lp[name] for lp in layers])
    pad_v = VOCAB_PAD - VOCAB_SIZE
    return {
        "tok_emb": params["tok_emb"],
        "pos_emb": params["pos_emb"],
        "ln1_g": stack("ln1_g"), "ln1_b": stack("ln1_b"),
        "wqkv": wqkv,
        "wp": stack("wp").astype(jnp.bfloat16), "bp": stack("bp"),
        "ln2_g": stack("ln2_g"), "ln2_b": stack("ln2_b"),
        "w1": stack("w1").astype(jnp.bfloat16), "b1": stack("b1"),
        "w2": stack("w2").astype(jnp.bfloat16), "b2": stack("b2"),
        "lnf_g": params["lnf_g"], "lnf_b": params["lnf_b"],
        "w_lm": jnp.pad(params["w_lm"], ((0, 0), (0, pad_v))).astype(jnp.bfloat16),
        "b_lm": jnp.pad(params["b_lm"], ((0, 0), (0, pad_v))),
    }


# ----------------------------- forward (== BigramLanguageModel.forward) ------
@jax.jit
def bigram_lm_forward(prep, idx):
    # idx: (B, T=BLOCK_SIZE) int32.  targets=None path -> loss is None.
    tok_emb = jnp.take(prep["tok_emb"], idx, axis=0)          # (B, T, C) gather = glue
    x = tok_emb + prep["pos_emb"][None, :, :]                 # requires T == block_size
    logits_pad = fused_forward(x, prep)                       # (B, T, VOCAB_PAD)
    return logits_pad[:, :, :VOCAB_SIZE]                      # (B, T, vocab)


if __name__ == "__main__":
    key = jax.random.PRNGKey(0)
    pkey, ikey = jax.random.split(key)
    params = init_params(pkey)
    prep = prepare_params(params)

    B = 2
    idx = jax.random.randint(ikey, (B, BLOCK_SIZE), 0, VOCAB_SIZE, dtype=jnp.int32)

    logits = bigram_lm_forward(prep, idx)
    jax.block_until_ready(logits)

    assert logits.shape == (B, BLOCK_SIZE, VOCAB_SIZE)
    assert logits.dtype == jnp.float32
    assert bool(jnp.all(jnp.isfinite(logits)))
    print("KERNEL_OK")
</pallas_src>

<mosaic_0001>
module attributes {stable_mosaic.version = 11 : i64} {
  func.func @_fused_kernel(%arg0: i32, %arg1: memref<1x128x128xf32, #tpu.memory_space<vmem>>, %arg2: memref<2x1x128xf32, #tpu.memory_space<vmem>>, %arg3: memref<2x1x128xf32, #tpu.memory_space<vmem>>, %arg4: memref<2x128x384xbf16, #tpu.memory_space<vmem>>, %arg5: memref<2x128x128xbf16, #tpu.memory_space<vmem>>, %arg6: memref<2x1x128xf32, #tpu.memory_space<vmem>>, %arg7: memref<2x1x128xf32, #tpu.memory_space<vmem>>, %arg8: memref<2x1x128xf32, #tpu.memory_space<vmem>>, %arg9: memref<2x128x512xbf16, #tpu.memory_space<vmem>>, %arg10: memref<2x1x512xf32, #tpu.memory_space<vmem>>, %arg11: memref<2x512x128xbf16, #tpu.memory_space<vmem>>, %arg12: memref<2x1x128xf32, #tpu.memory_space<vmem>>, %arg13: memref<1x128xf32, #tpu.memory_space<vmem>>, %arg14: memref<1x128xf32, #tpu.memory_space<vmem>>, %arg15: memref<128x128xbf16, #tpu.memory_space<vmem>>, %arg16: memref<1x128xf32, #tpu.memory_space<vmem>>, %arg17: memref<1x128x128xf32, #tpu.memory_space<vmem>>) attributes {dimension_semantics = [#tpu.dimension_semantics<parallel>], iteration_bounds = array<i64: 2>, scalar_prefetch = 0 : i64, scratch_operands = 0 : i64, tpu.core_type = #tpu.core_type<tc>, window_params = [{transform_indices = @transform_0, window_bounds = array<i64: 1, 128, 128>}, {pipeline_mode = #tpu.pipeline_mode<synchronous>, transform_indices = @transform_1, window_bounds = array<i64: 2, 1, 128>}, {pipeline_mode = #tpu.pipeline_mode<synchronous>, transform_indices = @transform_2, window_bounds = array<i64: 2, 1, 128>}, {pipeline_mode = #tpu.pipeline_mode<synchronous>, transform_indices = @transform_3, window_bounds = array<i64: 2, 128, 384>}, {pipeline_mode = #tpu.pipeline_mode<synchronous>, transform_indices = @transform_4, window_bounds = array<i64: 2, 128, 128>}, {pipeline_mode = #tpu.pipeline_mode<synchronous>, transform_indices = @transform_5, window_bounds = array<i64: 2, 1, 128>}, {pipeline_mode = #tpu.pipeline_mode<synchronous>, transform_indices = @transform_6, window_bounds = array<i64: 2, 1, 128>}, {pipeline_mode = #tpu.pipeline_mode<synchronous>, transform_indices = @transform_7, window_bounds = array<i64: 2, 1, 128>}, {pipeline_mode = #tpu.pipeline_mode<synchronous>, transform_indices = @transform_8, window_bounds = array<i64: 2, 128, 512>}, {pipeline_mode = #tpu.pipeline_mode<synchronous>, transform_indices = @transform_9, window_bounds = array<i64: 2, 1, 512>}, {pipeline_mode = #tpu.pipeline_mode<synchronous>, transform_indices = @transform_10, window_bounds = array<i64: 2, 512, 128>}, {pipeline_mode = #tpu.pipeline_mode<synchronous>, transform_indices = @transform_11, window_bounds = array<i64: 2, 1, 128>}, {pipeline_mode = #tpu.pipeline_mode<synchronous>, transform_indices = @transform_12, window_bounds = array<i64: 1, 128>}, {pipeline_mode = #tpu.pipeline_mode<synchronous>, transform_indices = @transform_13, window_bounds = array<i64: 1, 128>}, {pipeline_mode = #tpu.pipeline_mode<synchronous>, transform_indices = @transform_14, window_bounds = array<i64: 128, 128>}, {pipeline_mode = #tpu.pipeline_mode<synchronous>, transform_indices = @transform_15, window_bounds = array<i64: 1, 128>}, {transform_indices = @transform_16, window_bounds = array<i64: 1, 128, 128>}]} {
    %c0 = arith.constant 0 : index
    %c0_0 = arith.constant 0 : index
    %c0_1 = arith.constant 0 : index
    %0 = vector.load %arg1[%c0, %c0_0, %c0_1] : memref<1x128x128xf32, #tpu.memory_space<vmem>>, vector<1x128x128xf32>
    %1 = vector.shape_cast %0 : vector<1x128x128xf32> to vector<128x128xf32>
    %2 = tpu.iota {dimensions = array<i32: 0>} : vector<128x128xi32>
    %3 = tpu.iota {dimensions = array<i32: 1>} : vector<128x128xi32>
    %4 = arith.cmpi sge, %2, %3 : vector<128x128xi32>
    %cst = arith.constant 0.000000e+00 : f32
    %cst_2 = arith.constant -1.000000e+30 : f32
    %5 = vector.broadcast %cst : f32 to vector<128x128xf32>
    %6 = vector.broadcast %cst_2 : f32 to vector<128x128xf32>
    %7 = arith.select %4, %5, %6 : vector<128x128xi1>, vector<128x128xf32>
    %c0_3 = arith.constant 0 : index
    %c0_4 = arith.constant 0 : index
    %c0_5 = arith.constant 0 : index
    %8 = vector.load %arg2[%c0_3, %c0_4, %c0_5] : memref<2x1x128xf32, #tpu.memory_space<vmem>>, vector<1x1x128xf32>
    %9 = vector.shape_cast %8 : vector<1x1x128xf32> to vector<1x128xf32>
    %c0_6 = arith.constant 0 : index
    %c0_7 = arith.constant 0 : index
    %c0_8 = arith.constant 0 : index
    %10 = vector.load %arg3[%c0_6, %c0_7, %c0_8] : memref<2x1x128xf32, #tpu.memory_space<vmem>>, vector<1x1x128xf32>
    %11 = vector.shape_cast %10 : vector<1x1x128xf32> to vector<1x128xf32>
    %cst_9 = arith.constant dense<0.000000e+00> : vector<128xf32>
    %12 = vector.multi_reduction <add>, %1, %cst_9 [1] : vector<128x128xf32> to vector<128xf32>
    %13 = vector.shape_cast %12 : vector<128xf32> to vector<128x1xf32>
    %cst_10 = arith.constant 1.280000e+02 : f32
    %14 = vector.broadcast %cst_10 : f32 to vector<128x1xf32>
    %15 = arith.divf %13, %14 : vector<128x1xf32>
    %16 = vector.broadcast %15 : vector<128x1xf32> to vector<128x128xf32>
    %17 = arith.subf %1, %16 : vector<128x128xf32>
    %18 = arith.mulf %17, %17 : vector<128x128xf32>
    %cst_11 = arith.constant dense<0.000000e+00> : vector<128xf32>
    %19 = vector.multi_reduction <add>, %18, %cst_11 [1] : vector<128x128xf32> to vector<128xf32>
    %20 = vector.shape_cast %19 : vector<128xf32> to vector<128x1xf32>
    %cst_12 = arith.constant 1.280000e+02 : f32
    %21 = vector.broadcast %cst_12 : f32 to vector<128x1xf32>
    %22 = arith.divf %20, %21 : vector<128x1xf32>
    %23 = vector.broadcast %15 : vector<128x1xf32> to vector<128x128xf32>
    %24 = arith.subf %1, %23 : vector<128x128xf32>
    %cst_13 = arith.constant 9.99999974E-6 : f32
    %25 = vector.broadcast %cst_13 : f32 to vector<128x1xf32>
    %26 = arith.addf %22, %25 : vector<128x1xf32>
    %27 = math.rsqrt %26 : vector<128x1xf32>
    %28 = vector.broadcast %27 : vector<128x1xf32> to vector<128x128xf32>
    %29 = arith.mulf %24, %28 : vector<128x128xf32>
    %30 = vector.broadcast %9 : vector<1x128xf32> to vector<128x128xf32>
    %31 = arith.mulf %29, %30 : vector<128x128xf32>
    %32 = vector.broadcast %11 : vector<1x128xf32> to vector<128x128xf32>
    %33 = arith.addf %31, %32 : vector<128x128xf32>
    %34 = arith.truncf %33 : vector<128x128xf32> to vector<128x128xbf16>
    %c0_14 = arith.constant 0 : index
    %c0_15 = arith.constant 0 : index
    %c0_16 = arith.constant 0 : index
    %35 = vector.load %arg4[%c0_14, %c0_15, %c0_16] : memref<2x128x384xbf16, #tpu.memory_space<vmem>>, vector<1x128x384xbf16>
    %36 = vector.shape_cast %35 : vector<1x128x384xbf16> to vector<128x384xbf16>
    %cst_17 = arith.constant dense<0.000000e+00> : vector<128x384xf32>
    %37 = tpu.matmul %34, %36, %cst_17 {dimension_numbers = #tpu.dot_dimension_numbers<[1], [0], [0], [1], [0, 0, 1, 1], [], []>} : vector<128x128xbf16>, vector<128x384xbf16>, vector<128x384xf32> -> vector<128x384xf32>
    %c0_18 = arith.constant 0 : index
    %c0_19 = arith.constant 0 : index
    %c0_20 = arith.constant 0 : index
    %38 = vector.load %arg5[%c0_18, %c0_19, %c0_20] : memref<2x128x128xbf16, #tpu.memory_space<vmem>>, vector<1x128x128xbf16>
    %39 = vector.shape_cast %38 : vector<1x128x128xbf16> to vector<128x128xbf16>
    %cst_21 = arith.constant 0.000000e+00 : f32
    %40 = vector.broadcast %cst_21 : f32 to vector<128x128xf32>
    %41 = vector.extract_strided_slice %37 {offsets = [0, 0], sizes = [128, 64], strides = [1, 1]} : vector<128x384xf32> to vector<128x64xf32>
    %42 = vector.extract_strided_slice %37 {offsets = [0, 128], sizes = [128, 64], strides = [1, 1]} : vector<128x384xf32> to vector<128x64xf32>
    %43 = vector.extract_strided_slice %37 {offsets = [0, 256], sizes = [128, 64], strides = [1, 1]} : vector<128x384xf32> to vector<128x64xf32>
    %44 = arith.truncf %41 : vector<128x64xf32> to vector<128x64xbf16>
    %45 = arith.truncf %42 : vector<128x64xf32> to vector<128x64xbf16>
    %cst_22 = arith.constant dense<0.000000e+00> : vector<128x128xf32>
    %46 = tpu.matmul %44, %45, %cst_22 {dimension_numbers = #tpu.dot_dimension_numbers<[1], [1], [0], [0], [0, 0, 1, 0], [], []>} : vector<128x64xbf16>, vector<128x64xbf16>, vector<128x128xf32> -> vector<128x128xf32>
    %cst_23 = arith.constant 0.0883883461 : f32
    %47 = vector.broadcast %cst_23 : f32 to vector<128x128xf32>
    %48 = arith.mulf %46, %47 : vector<128x128xf32>
    %49 = arith.addf %48, %7 : vector<128x128xf32>
    %cst_24 = arith.constant dense<0xFF800000> : vector<128xf32>
    %50 = vector.multi_reduction <maximumf>, %49, %cst_24 [1] : vector<128x128xf32> to vector<128xf32>
    %51 = vector.shape_cast %50 : vector<128xf32> to vector<128x1xf32>
    %52 = vector.broadcast %51 : vector<128x1xf32> to vector<128x128xf32>
    %53 = arith.subf %49, %52 : vector<128x128xf32>
    %54 = math.exp %53 : vector<128x128xf32>
    %cst_25 = arith.constant dense<0.000000e+00> : vector<128xf32>
    %55 = vector.multi_reduction <add>, %54, %cst_25 [1] : vector<128x128xf32> to vector<128xf32>
    %56 = vector.shape_cast %55 : vector<128xf32> to vector<128x1xf32>
    %57 = tpu.reciprocal %56 {approx = true} : vector<128x1xf32> -> vector<128x1xf32>
    %58 = vector.broadcast %57 : vector<128x1xf32> to vector<128x128xf32>
    %59 = arith.mulf %54, %58 : vector<128x128xf32>
    %60 = arith.truncf %59 : vector<128x128xf32> to vector<128x128xbf16>
    %61 = arith.truncf %43 : vector<128x64xf32> to vector<128x64xbf16>
    %cst_26 = arith.constant dense<0.000000e+00> : vector<128x64xf32>
    %62 = tpu.matmul %60, %61, %cst_26 {dimension_numbers = #tpu.dot_dimension_numbers<[1], [0], [0], [1], [0, 0, 1, 1], [], []>} : vector<128x128xbf16>, vector<128x64xbf16>, vector<128x64xf32> -> vector<128x64xf32>
    %63 = arith.truncf %62 : vector<128x64xf32> to vector<128x64xbf16>
    %64 = vector.extract_strided_slice %39 {offsets = [0, 0], sizes = [64, 128], strides = [1, 1]} : vector<128x128xbf16> to vector<64x128xbf16>
    %cst_27 = arith.constant dense<0.000000e+00> : vector<128x128xf32>
    %65 = tpu.matmul %63, %64, %cst_27 {dimension_numbers = #tpu.dot_dimension_numbers<[1], [0], [0], [1], [0, 0, 1, 1], [], []>} : vector<128x64xbf16>, vector<64x128xbf16>, vector<128x128xf32> -> vector<128x128xf32>
    %66 = arith.addf %40, %65 : vector<128x128xf32>
    %67 = vector.extract_strided_slice %37 {offsets = [0, 64], sizes = [128, 64], strides = [1, 1]} : vector<128x384xf32> to vector<128x64xf32>
    %68 = vector.extract_strided_slice %37 {offsets = [0, 192], sizes = [128, 64], strides = [1, 1]} : vector<128x384xf32> to vector<128x64xf32>
    %69 = vector.extract_strided_slice %37 {offsets = [0, 320], sizes = [128, 64], strides = [1, 1]} : vector<128x384xf32> to vector<128x64xf32>
    %70 = arith.truncf %67 : vector<128x64xf32> to vector<128x64xbf16>
    %71 = arith.truncf %68 : vector<128x64xf32> to vector<128x64xbf16>
    %cst_28 = arith.constant dense<0.000000e+00> : vector<128x128xf32>
    %72 = tpu.matmul %70, %71, %cst_28 {dimension_numbers = #tpu.dot_dimension_numbers<[1], [1], [0], [0], [0, 0, 1, 0], [], []>} : vector<128x64xbf16>, vector<128x64xbf16>, vector<128x128xf32> -> vector<128x128xf32>
    %cst_29 = arith.constant 0.0883883461 : f32
    %73 = vector.broadcast %cst_29 : f32 to vector<128x128xf32>
    %74 = arith.mulf %72, %73 : vector<128x128xf32>
    %75 = arith.addf %74, %7 : vector<128x128xf32>
    %cst_30 = arith.constant dense<0xFF800000> : vector<128xf32>
    %76 = vector.multi_reduction <maximumf>, %75, %cst_30 [1] : vector<128x128xf32> to vector<128xf32>
    %77 = vector.shape_cast %76 : vector<128xf32> to vector<128x1xf32>
    %78 = vector.broadcast %77 : vector<128x1xf32> to vector<128x128xf32>
    %79 = arith.subf %75, %78 : vector<128x128xf32>
    %80 = math.exp %79 : vector<128x128xf32>
    %cst_31 = arith.constant dense<0.000000e+00> : vector<128xf32>
    %81 = vector.multi_reduction <add>, %80, %cst_31 [1] : vector<128x128xf32> to vector<128xf32>
    %82 = vector.shape_cast %81 : vector<128xf32> to vector<128x1xf32>
    %83 = tpu.reciprocal %82 {approx = true} : vector<128x1xf32> -> vector<128x1xf32>
    %84 = vector.broadcast %83 : vector<128x1xf32> to vector<128x128xf32>
    %85 = arith.mulf %80, %84 : vector<128x128xf32>
    %86 = arith.truncf %85 : vector<128x128xf32> to vector<128x128xbf16>
    %87 = arith.truncf %69 : vector<128x64xf32> to vector<128x64xbf16>
    %cst_32 = arith.constant dense<0.000000e+00> : vector<128x64xf32>
    %88 = tpu.matmul %86, %87, %cst_32 {dimension_numbers = #tpu.dot_dimension_numbers<[1], [0], [0], [1], [0, 0, 1, 1], [], []>} : vector<128x128xbf16>, vector<128x64xbf16>, vector<128x64xf32> -> vector<128x64xf32>
    %89 = arith.truncf %88 : vector<128x64xf32> to vector<128x64xbf16>
    %90 = vector.extract_strided_slice %39 {offsets = [64, 0], sizes = [64, 128], strides = [1, 1]} : vector<128x128xbf16> to vector<64x128xbf16>
    %cst_33 = arith.constant dense<0.000000e+00> : vector<128x128xf32>
    %91 = tpu.matmul %89, %90, %cst_33 {dimension_numbers = #tpu.dot_dimension_numbers<[1], [0], [0], [1], [0, 0, 1, 1], [], []>} : vector<128x64xbf16>, vector<64x128xbf16>, vector<128x128xf32> -> vector<128x128xf32>
    %92 = arith.addf %66, %91 : vector<128x128xf32>
    %c0_34 = arith.constant 0 : index
    %c0_35 = arith.constant 0 : index
    %c0_36 = arith.constant 0 : index
    %93 = vector.load %arg6[%c0_34, %c0_35, %c0_36] : memref<2x1x128xf32, #tpu.memory_space<vmem>>, vector<1x1x128xf32>
    %94 = vector.shape_cast %93 : vector<1x1x128xf32> to vector<1x128xf32>
    %95 = vector.broadcast %94 : vector<1x128xf32> to vector<128x128xf32>
    %96 = arith.addf %92, %95 : vector<128x128xf32>
    %97 = arith.addf %1, %96 : vector<128x128xf32>
    %c0_37 = arith.constant 0 : index
    %c0_38 = arith.constant 0 : index
    %c0_39 = arith.constant 0 : index
    %98 = vector.load %arg7[%c0_37, %c0_38, %c0_39] : memref<2x1x128xf32, #tpu.memory_space<vmem>>, vector<1x1x128xf32>
    %99 = vector.shape_cast %98 : vector<1x1x128xf32> to vector<1x128xf32>
    %c0_40 = arith.constant 0 : index
    %c0_41 = arith.constant 0 : index
    %c0_42 = arith.constant 0 : index
    %100 = vector.load %arg8[%c0_40, %c0_41, %c0_42] : memref<2x1x128xf32, #tpu.memory_space<vmem>>, vector<1x1x128xf32>
    %101 = vector.shape_cast %100 : vector<1x1x128xf32> to vector<1x128xf32>
    %cst_43 = arith.constant dense<0.000000e+00> : vector<128xf32>
    %102 = vector.multi_reduction <add>, %97, %cst_43 [1] : vector<128x128xf32> to vector<128xf32>
    %103 = vector.shape_cast %102 : vector<128xf32> to vector<128x1xf32>
    %cst_44 = arith.constant 1.280000e+02 : f32
    %104 = vector.broadcast %cst_44 : f32 to vector<128x1xf32>
    %105 = arith.divf %103, %104 : vector<128x1xf32>
    %106 = vector.broadcast %105 : vector<128x1xf32> to vector<128x128xf32>
    %107 = arith.subf %97, %106 : vector<128x128xf32>
    %108 = arith.mulf %107, %107 : vector<128x128xf32>
    %cst_45 = arith.constant dense<0.000000e+00> : vector<128xf32>
    %109 = vector.multi_reduction <add>, %108, %cst_45 [1] : vector<128x128xf32> to vector<128xf32>
    %110 = vector.shape_cast %109 : vector<128xf32> to vector<128x1xf32>
    %cst_46 = arith.constant 1.280000e+02 : f32
    %111 = vector.broadcast %cst_46 : f32 to vector<128x1xf32>
    %112 = arith.divf %110, %111 : vector<128x1xf32>
    %113 = vector.broadcast %105 : vector<128x1xf32> to vector<128x128xf32>
    %114 = arith.subf %97, %113 : vector<128x128xf32>
    %cst_47 = arith.constant 9.99999974E-6 : f32
    %115 = vector.broadcast %cst_47 : f32 to vector<128x1xf32>
    %116 = arith.addf %112, %115 : vector<128x1xf32>
    %117 = math.rsqrt %116 : vector<128x1xf32>
    %118 = vector.broadcast %117 : vector<128x1xf32> to vector<128x128xf32>
    %119 = arith.mulf %114, %118 : vector<128x128xf32>
    %120 = vector.broadcast %99 : vector<1x128xf32> to vector<128x128xf32>
    %121 = arith.mulf %119, %120 : vector<128x128xf32>
    %122 = vector.broadcast %101 : vector<1x128xf32> to vector<128x128xf32>
    %123 = arith.addf %121, %122 : vector<128x128xf32>
    %124 = arith.truncf %123 : vector<128x128xf32> to vector<128x128xbf16>
    %c0_48 = arith.constant 0 : index
    %c0_49 = arith.constant 0 : index
    %c0_50 = arith.constant 0 : index
    %125 = vector.load %arg9[%c0_48, %c0_49, %c0_50] : memref<2x128x512xbf16, #tpu.memory_space<vmem>>, vector<1x128x512xbf16>
    %126 = vector.shape_cast %125 : vector<1x128x512xbf16> to vector<128x512xbf16>
    %cst_51 = arith.constant dense<0.000000e+00> : vector<128x512xf32>
    %127 = tpu.matmul %124, %126, %cst_51 {dimension_numbers = #tpu.dot_dimension_numbers<[1], [0], [0], [1], [0, 0, 1, 1], [], []>} : vector<128x128xbf16>, vector<128x512xbf16>, vector<128x512xf32> -> vector<128x512xf32>
    %c0_52 = arith.constant 0 : index
    %c0_53 = arith.constant 0 : index
    %c0_54 = arith.constant 0 : index
    %128 = vector.load %arg10[%c0_52, %c0_53, %c0_54] : memref<2x1x512xf32, #tpu.memory_space<vmem>>, vector<1x1x512xf32>
    %129 = vector.shape_cast %128 : vector<1x1x512xf32> to vector<1x512xf32>
    %130 = vector.broadcast %129 : vector<1x512xf32> to vector<128x512xf32>
    %131 = arith.addf %127, %130 : vector<128x512xf32>
    %cst_55 = arith.constant 0.000000e+00 : f32
    %132 = vector.broadcast %cst_55 : f32 to vector<128x512xf32>
    %133 = arith.maximumf %131, %132 : vector<128x512xf32>
    %134 = arith.truncf %133 : vector<128x512xf32> to vector<128x512xbf16>
    %c0_56 = arith.constant 0 : index
    %c0_57 = arith.constant 0 : index
    %c0_58 = arith.constant 0 : index
    %135 = vector.load %arg11[%c0_56, %c0_57, %c0_58] : memref<2x512x128xbf16, #tpu.memory_space<vmem>>, vector<1x512x128xbf16>
    %136 = vector.shape_cast %135 : vector<1x512x128xbf16> to vector<512x128xbf16>
    %cst_59 = arith.constant dense<0.000000e+00> : vector<128x128xf32>
    %137 = tpu.matmul %134, %136, %cst_59 {dimension_numbers = #tpu.dot_dimension_numbers<[1], [0], [0], [1], [0, 0, 1, 1], [], []>} : vector<128x512xbf16>, vector<512x128xbf16>, vector<128x128xf32> -> vector<128x128xf32>
    %c0_60 = arith.constant 0 : index
    %c0_61 = arith.constant 0 : index
    %c0_62 = arith.constant 0 : index
    %138 = vector.load %arg12[%c0_60, %c0_61, %c0_62] : memref<2x1x128xf32, #tpu.memory_space<vmem>>, vector<1x1x128xf32>
    %139 = vector.shape_cast %138 : vector<1x1x128xf32> to vector<1x128xf32>
    %140 = vector.broadcast %139 : vector<1x128xf32> to vector<128x128xf32>
    %141 = arith.addf %137, %140 : vector<128x128xf32>
    %142 = arith.addf %97, %141 : vector<128x128xf32>
    %c1 = arith.constant 1 : index
    %c0_63 = arith.constant 0 : index
    %c0_64 = arith.constant 0 : index
    %143 = vector.load %arg2[%c1, %c0_63, %c0_64] : memref<2x1x128xf32, #tpu.memory_space<vmem>>, vector<1x1x128xf32>
    %144 = vector.shape_cast %143 : vector<1x1x128xf32> to vector<1x128xf32>
    %c1_65 = arith.constant 1 : index
    %c0_66 = arith.constant 0 : index
    %c0_67 = arith.constant 0 : index
    %145 = vector.load %arg3[%c1_65, %c0_66, %c0_67] : memref<2x1x128xf32, #tpu.memory_space<vmem>>, vector<1x1x128xf32>
    %146 = vector.shape_cast %145 : vector<1x1x128xf32> to vector<1x128xf32>
    %cst_68 = arith.constant dense<0.000000e+00> : vector<128xf32>
    %147 = vector.multi_reduction <add>, %142, %cst_68 [1] : vector<128x128xf32> to vector<128xf32>
    %148 = vector.shape_cast %147 : vector<128xf32> to vector<128x1xf32>
    %cst_69 = arith.constant 1.280000e+02 : f32
    %149 = vector.broadcast %cst_69 : f32 to vector<128x1xf32>
    %150 = arith.divf %148, %149 : vector<128x1xf32>
    %151 = vector.broadcast %150 : vector<128x1xf32> to vector<128x128xf32>
    %152 = arith.subf %142, %151 : vector<128x128xf32>
    %153 = arith.mulf %152, %152 : vector<128x128xf32>
    %cst_70 = arith.constant dense<0.000000e+00> : vector<128xf32>
    %154 = vector.multi_reduction <add>, %153, %cst_70 [1] : vector<128x128xf32> to vector<128xf32>
    %155 = vector.shape_cast %154 : vector<128xf32> to vector<128x1xf32>
    %cst_71 = arith.constant 1.280000e+02 : f32
    %156 = vector.broadcast %cst_71 : f32 to vector<128x1xf32>
    %157 = arith.divf %155, %156 : vector<128x1xf32>
    %158 = vector.broadcast %150 : vector<128x1xf32> to vector<128x128xf32>
    %159 = arith.subf %142, %158 : vector<128x128xf32>
    %cst_72 = arith.constant 9.99999974E-6 : f32
    %160 = vector.broadcast %cst_72 : f32 to vector<128x1xf32>
    %161 = arith.addf %157, %160 : vector<128x1xf32>
    %162 = math.rsqrt %161 : vector<128x1xf32>
    %163 = vector.broadcast %162 : vector<128x1xf32> to vector<128x128xf32>
    %164 = arith.mulf %159, %163 : vector<128x128xf32>
    %165 = vector.broadcast %144 : vector<1x128xf32> to vector<128x128xf32>
    %166 = arith.mulf %164, %165 : vector<128x128xf32>
    %167 = vector.broadcast %146 : vector<1x128xf32> to vector<128x128xf32>
    %168 = arith.addf %166, %167 : vector<128x128xf32>
    %169 = arith.truncf %168 : vector<128x128xf32> to vector<128x128xbf16>
    %c1_73 = arith.constant 1 : index
    %c0_74 = arith.constant 0 : index
    %c0_75 = arith.constant 0 : index
    %170 = vector.load %arg4[%c1_73, %c0_74, %c0_75] : memref<2x128x384xbf16, #tpu.memory_space<vmem>>, vector<1x128x384xbf16>
    %171 = vector.shape_cast %170 : vector<1x128x384xbf16> to vector<128x384xbf16>
    %cst_76 = arith.constant dense<0.000000e+00> : vector<128x384xf32>
    %172 = tpu.matmul %169, %171, %cst_76 {dimension_numbers = #tpu.dot_dimension_numbers<[1], [0], [0], [1], [0, 0, 1, 1], [], []>} : vector<128x128xbf16>, vector<128x384xbf16>, vector<128x384xf32> -> vector<128x384xf32>
    %c1_77 = arith.constant 1 : index
    %c0_78 = arith.constant 0 : index
    %c0_79 = arith.constant 0 : index
    %173 = vector.load %arg5[%c1_77, %c0_78, %c0_79] : memref<2x128x128xbf16, #tpu.memory_space<vmem>>, vector<1x128x128xbf16>
    %174 = vector.shape_cast %173 : vector<1x128x128xbf16> to vector<128x128xbf16>
    %cst_80 = arith.constant 0.000000e+00 : f32
    %175 = vector.broadcast %cst_80 : f32 to vector<128x128xf32>
    %176 = vector.extract_strided_slice %172 {offsets = [0, 0], sizes = [128, 64], strides = [1, 1]} : vector<128x384xf32> to vector<128x64xf32>
    %177 = vector.extract_strided_slice %172 {offsets = [0, 128], sizes = [128, 64], strides = [1, 1]} : vector<128x384xf32> to vector<128x64xf32>
    %178 = vector.extract_strided_slice %172 {offsets = [0, 256], sizes = [128, 64], strides = [1, 1]} : vector<128x384xf32> to vector<128x64xf32>
    %179 = arith.truncf %176 : vector<128x64xf32> to vector<128x64xbf16>
    %180 = arith.truncf %177 : vector<128x64xf32> to vector<128x64xbf16>
    %cst_81 = arith.constant dense<0.000000e+00> : vector<128x128xf32>
    %181 = tpu.matmul %179, %180, %cst_81 {dimension_numbers = #tpu.dot_dimension_numbers<[1], [1], [0], [0], [0, 0, 1, 0], [], []>} : vector<128x64xbf16>, vector<128x64xbf16>, vector<128x128xf32> -> vector<128x128xf32>
    %cst_82 = arith.constant 0.0883883461 : f32
    %182 = vector.broadcast %cst_82 : f32 to vector<128x128xf32>
    %183 = arith.mulf %181, %182 : vector<128x128xf32>
    %184 = arith.addf %183, %7 : vector<128x128xf32>
    %cst_83 = arith.constant dense<0xFF800000> : vector<128xf32>
    %185 = vector.multi_reduction <maximumf>, %184, %cst_83 [1] : vector<128x128xf32> to vector<128xf32>
    %186 = vector.shape_cast %185 : vector<128xf32> to vector<128x1xf32>
    %187 = vector.broadcast %186 : vector<128x1xf32> to vector<128x128xf32>
    %188 = arith.subf %184, %187 : vector<128x128xf32>
    %189 = math.exp %188 : vector<128x128xf32>
    %cst_84 = arith.constant dense<0.000000e+00> : vector<128xf32>
    %190 = vector.multi_reduction <add>, %189, %cst_84 [1] : vector<128x128xf32> to vector<128xf32>
    %191 = vector.shape_cast %190 : vector<128xf32> to vector<128x1xf32>
    %192 = tpu.reciprocal %191 {approx = true} : vector<128x1xf32> -> vector<128x1xf32>
    %193 = vector.broadcast %192 : vector<128x1xf32> to vector<128x128xf32>
    %194 = arith.mulf %189, %193 : vector<128x128xf32>
    %195 = arith.truncf %194 : vector<128x128xf32> to vector<128x128xbf16>
    %196 = arith.truncf %178 : vector<128x64xf32> to vector<128x64xbf16>
    %cst_85 = arith.constant dense<0.000000e+00> : vector<128x64xf32>
    %197 = tpu.matmul %195, %196, %cst_85 {dimension_numbers = #tpu.dot_dimension_numbers<[1], [0], [0], [1], [0, 0, 1, 1], [], []>} : vector<128x128xbf16>, vector<128x64xbf16>, vector<128x64xf32> -> vector<128x64xf32>
    %198 = arith.truncf %197 : vector<128x64xf32> to vector<128x64xbf16>
    %199 = vector.extract_strided_slice %174 {offsets = [0, 0], sizes = [64, 128], strides = [1, 1]} : vector<128x128xbf16> to vector<64x128xbf16>
    %cst_86 = arith.constant dense<0.000000e+00> : vector<128x128xf32>
    %200 = tpu.matmul %198, %199, %cst_86 {dimension_numbers = #tpu.dot_dimension_numbers<[1], [0], [0], [1], [0, 0, 1, 1], [], []>} : vector<128x64xbf16>, vector<64x128xbf16>, vector<128x128xf32> -> vector<128x128xf32>
    %201 = arith.addf %175, %200 : vector<128x128xf32>
    %202 = vector.extract_strided_slice %172 {offsets = [0, 64], sizes = [128, 64], strides = [1, 1]} : vector<128x384xf32> to vector<128x64xf32>
    %203 = vector.extract_strided_slice %172 {offsets = [0, 192], sizes = [128, 64], strides = [1, 1]} : vector<128x384xf32> to vector<128x64xf32>
    %204 = vector.extract_strided_slice %172 {offsets = [0, 320], sizes = [128, 64], strides = [1, 1]} : vector<128x384xf32> to vector<128x64xf32>
    %205 = arith.truncf %202 : vector<128x64xf32> to vector<128x64xbf16>
    %206 = arith.truncf %203 : vector<128x64xf32> to vector<128x64xbf16>
    %cst_87 = arith.constant dense<0.000000e+00> : vector<128x128xf32>
    %207 = tpu.matmul %205, %206, %cst_87 {dimension_numbers = #tpu.dot_dimension_numbers<[1], [1], [0], [0], [0, 0, 1, 0], [], []>} : vector<128x64xbf16>, vector<128x64xbf16>, vector<128x128xf32> -> vector<128x128xf32>
    %cst_88 = arith.constant 0.0883883461 : f32
    %208 = vector.broadcast %cst_88 : f32 to vector<128x128xf32>
    %209 = arith.mulf %207, %208 : vector<128x128xf32>
    %210 = arith.addf %209, %7 : vector<128x128xf32>
    %cst_89 = arith.constant dense<0xFF800000> : vector<128xf32>
    %211 = vector.multi_reduction <maximumf>, %210, %cst_89 [1] : vector<128x128xf32> to vector<128xf32>
    %212 = vector.shape_cast %211 : vector<128xf32> to vector<128x1xf32>
    %213 = vector.broadcast %212 : vector<128x1xf32> to vector<128x128xf32>
    %214 = arith.subf %210, %213 : vector<128x128xf32>
    %215 = math.exp %214 : vector<128x128xf32>
    %cst_90 = arith.constant dense<0.000000e+00> : vector<128xf32>
    %216 = vector.multi_reduction <add>, %215, %cst_90 [1] : vector<128x128xf32> to vector<128xf32>
    %217 = vector.shape_cast %216 : vector<128xf32> to vector<128x1xf32>
    %218 = tpu.reciprocal %217 {approx = true} : vector<128x1xf32> -> vector<128x1xf32>
    %219 = vector.broadcast %218 : vector<128x1xf32> to vector<128x128xf32>
    %220 = arith.mulf %215, %219 : vector<128x128xf32>
    %221 = arith.truncf %220 : vector<128x128xf32> to vector<128x128xbf16>
    %222 = arith.truncf %204 : vector<128x64xf32> to vector<128x64xbf16>
    %cst_91 = arith.constant dense<0.000000e+00> : vector<128x64xf32>
    %223 = tpu.matmul %221, %222, %cst_91 {dimension_numbers = #tpu.dot_dimension_numbers<[1], [0], [0], [1], [0, 0, 1, 1], [], []>} : vector<128x128xbf16>, vector<128x64xbf16>, vector<128x64xf32> -> vector<128x64xf32>
    %224 = arith.truncf %223 : vector<128x64xf32> to vector<128x64xbf16>
    %225 = vector.extract_strided_slice %174 {offsets = [64, 0], sizes = [64, 128], strides = [1, 1]} : vector<128x128xbf16> to vector<64x128xbf16>
    %cst_92 = arith.constant dense<0.000000e+00> : vector<128x128xf32>
    %226 = tpu.matmul %224, %225, %cst_92 {dimension_numbers = #tpu.dot_dimension_numbers<[1], [0], [0], [1], [0, 0, 1, 1], [], []>} : vector<128x64xbf16>, vector<64x128xbf16>, vector<128x128xf32> -> vector<128x128xf32>
    %227 = arith.addf %201, %226 : vector<128x128xf32>
    %c1_93 = arith.constant 1 : index
    %c0_94 = arith.constant 0 : index
    %c0_95 = arith.constant 0 : index
    %228 = vector.load %arg6[%c1_93, %c0_94, %c0_95] : memref<2x1x128xf32, #tpu.memory_space<vmem>>, vector<1x1x128xf32>
    %229 = vector.shape_cast %228 : vector<1x1x128xf32> to vector<1x128xf32>
    %230 = vector.broadcast %229 : vector<1x128xf32> to vector<128x128xf32>
    %231 = arith.addf %227, %230 : vector<128x128xf32>
    %232 = arith.addf %142, %231 : vector<128x128xf32>
    %c1_96 = arith.constant 1 : index
    %c0_97 = arith.constant 0 : index
    %c0_98 = arith.constant 0 : index
    %233 = vector.load %arg7[%c1_96, %c0_97, %c0_98] : memref<2x1x128xf32, #tpu.memory_space<vmem>>, vector<1x1x128xf32>
    %234 = vector.shape_cast %233 : vector<1x1x128xf32> to vector<1x128xf32>
    %c1_99 = arith.constant 1 : index
    %c0_100 = arith.constant 0 : index
    %c0_101 = arith.constant 0 : index
    %235 = vector.load %arg8[%c1_99, %c0_100, %c0_101] : memref<2x1x128xf32, #tpu.memory_space<vmem>>, vector<1x1x128xf32>
    %236 = vector.shape_cast %235 : vector<1x1x128xf32> to vector<1x128xf32>
    %cst_102 = arith.constant dense<0.000000e+00> : vector<128xf32>
    %237 = vector.multi_reduction <add>, %232, %cst_102 [1] : vector<128x128xf32> to vector<128xf32>
    %238 = vector.shape_cast %237 : vector<128xf32> to vector<128x1xf32>
    %cst_103 = arith.constant 1.280000e+02 : f32
    %239 = vector.broadcast %cst_103 : f32 to vector<128x1xf32>
    %240 = arith.divf %238, %239 : vector<128x1xf32>
    %241 = vector.broadcast %240 : vector<128x1xf32> to vector<128x128xf32>
    %242 = arith.subf %232, %241 : vector<128x128xf32>
    %243 = arith.mulf %242, %242 : vector<128x128xf32>
    %cst_104 = arith.constant dense<0.000000e+00> : vector<128xf32>
    %244 = vector.multi_reduction <add>, %243, %cst_104 [1] : vector<128x128xf32> to vector<128xf32>
    %245 = vector.shape_cast %244 : vector<128xf32> to vector<128x1xf32>
    %cst_105 = arith.constant 1.280000e+02 : f32
    %246 = vector.broadcast %cst_105 : f32 to vector<128x1xf32>
    %247 = arith.divf %245, %246 : vector<128x1xf32>
    %248 = vector.broadcast %240 : vector<128x1xf32> to vector<128x128xf32>
    %249 = arith.subf %232, %248 : vector<128x128xf32>
    %cst_106 = arith.constant 9.99999974E-6 : f32
    %250 = vector.broadcast %cst_106 : f32 to vector<128x1xf32>
    %251 = arith.addf %247, %250 : vector<128x1xf32>
    %252 = math.rsqrt %251 : vector<128x1xf32>
    %253 = vector.broadcast %252 : vector<128x1xf32> to vector<128x128xf32>
    %254 = arith.mulf %249, %253 : vector<128x128xf32>
    %255 = vector.broadcast %234 : vector<1x128xf32> to vector<128x128xf32>
    %256 = arith.mulf %254, %255 : vector<128x128xf32>
    %257 = vector.broadcast %236 : vector<1x128xf32> to vector<128x128xf32>
    %258 = arith.addf %256, %257 : vector<128x128xf32>
    %259 = arith.truncf %258 : vector<128x128xf32> to vector<128x128xbf16>
    %c1_107 = arith.constant 1 : index
    %c0_108 = arith.constant 0 : index
    %c0_109 = arith.constant 0 : index
    %260 = vector.load %arg9[%c1_107, %c0_108, %c0_109] : memref<2x128x512xbf16, #tpu.memory_space<vmem>>, vector<1x128x512xbf16>
    %261 = vector.shape_cast %260 : vector<1x128x512xbf16> to vector<128x512xbf16>
    %cst_110 = arith.constant dense<0.000000e+00> : vector<128x512xf32>
    %262 = tpu.matmul %259, %261, %cst_110 {dimension_numbers = #tpu.dot_dimension_numbers<[1], [0], [0], [1], [0, 0, 1, 1], [], []>} : vector<128x128xbf16>, vector<128x512xbf16>, vector<128x512xf32> -> vector<128x512xf32>
    %c1_111 = arith.constant 1 : index
    %c0_112 = arith.constant 0 : index
    %c0_113 = arith.constant 0 : index
    %263 = vector.load %arg10[%c1_111, %c0_112, %c0_113] : memref<2x1x512xf32, #tpu.memory_space<vmem>>, vector<1x1x512xf32>
    %264 = vector.shape_cast %263 : vector<1x1x512xf32> to vector<1x512xf32>
    %265 = vector.broadcast %264 : vector<1x512xf32> to vector<128x512xf32>
    %266 = arith.addf %262, %265 : vector<128x512xf32>
    %cst_114 = arith.constant 0.000000e+00 : f32
    %267 = vector.broadcast %cst_114 : f32 to vector<128x512xf32>
    %268 = arith.maximumf %266, %267 : vector<128x512xf32>
    %269 = arith.truncf %268 : vector<128x512xf32> to vector<128x512xbf16>
    %c1_115 = arith.constant 1 : index
    %c0_116 = arith.constant 0 : index
    %c0_117 = arith.constant 0 : index
    %270 = vector.load %arg11[%c1_115, %c0_116, %c0_117] : memref<2x512x128xbf16, #tpu.memory_space<vmem>>, vector<1x512x128xbf16>
    %271 = vector.shape_cast %270 : vector<1x512x128xbf16> to vector<512x128xbf16>
    %cst_118 = arith.constant dense<0.000000e+00> : vector<128x128xf32>
    %272 = tpu.matmul %269, %271, %cst_118 {dimension_numbers = #tpu.dot_dimension_numbers<[1], [0], [0], [1], [0, 0, 1, 1], [], []>} : vector<128x512xbf16>, vector<512x128xbf16>, vector<128x128xf32> -> vector<128x128xf32>
    %c1_119 = arith.constant 1 : index
    %c0_120 = arith.constant 0 : index
    %c0_121 = arith.constant 0 : index
    %273 = vector.load %arg12[%c1_119, %c0_120, %c0_121] : memref<2x1x128xf32, #tpu.memory_space<vmem>>, vector<1x1x128xf32>
    %274 = vector.shape_cast %273 : vector<1x1x128xf32> to vector<1x128xf32>
    %275 = vector.broadcast %274 : vector<1x128xf32> to vector<128x128xf32>
    %276 = arith.addf %272, %275 : vector<128x128xf32>
    %277 = arith.addf %232, %276 : vector<128x128xf32>
    %c0_122 = arith.constant 0 : index
    %c0_123 = arith.constant 0 : index
    %278 = vector.load %arg13[%c0_122, %c0_123] : memref<1x128xf32, #tpu.memory_space<vmem>>, vector<1x128xf32>
    %c0_124 = arith.constant 0 : index
    %c0_125 = arith.constant 0 : index
    %279 = vector.load %arg14[%c0_124, %c0_125] : memref<1x128xf32, #tpu.memory_space<vmem>>, vector<1x128xf32>
    %cst_126 = arith.constant dense<0.000000e+00> : vector<128xf32>
    %280 = vector.multi_reduction <add>, %277, %cst_126 [1] : vector<128x128xf32> to vector<128xf32>
    %281 = vector.shape_cast %280 : vector<128xf32> to vector<128x1xf32>
    %cst_127 = arith.constant 1.280000e+02 : f32
    %282 = vector.broadcast %cst_127 : f32 to vector<128x1xf32>
    %283 = arith.divf %281, %282 : vector<128x1xf32>
    %284 = vector.broadcast %283 : vector<128x1xf32> to vector<128x128xf32>
    %285 = arith.subf %277, %284 : vector<128x128xf32>
    %286 = arith.mulf %285, %285 : vector<128x128xf32>
    %cst_128 = arith.constant dense<0.000000e+00> : vector<128xf32>
    %287 = vector.multi_reduction <add>, %286, %cst_128 [1] : vector<128x128xf32> to vector<128xf32>
    %288 = vector.shape_cast %287 : vector<128xf32> to vector<128x1xf32>
    %cst_129 = arith.constant 1.280000e+02 : f32
    %289 = vector.broadcast %cst_129 : f32 to vector<128x1xf32>
    %290 = arith.divf %288, %289 : vector<128x1xf32>
    %291 = vector.broadcast %283 : vector<128x1xf32> to vector<128x128xf32>
    %292 = arith.subf %277, %291 : vector<128x128xf32>
    %cst_130 = arith.constant 9.99999974E-6 : f32
    %293 = vector.broadcast %cst_130 : f32 to vector<128x1xf32>
    %294 = arith.addf %290, %293 : vector<128x1xf32>
    %295 = math.rsqrt %294 : vector<128x1xf32>
    %296 = vector.broadcast %295 : vector<128x1xf32> to vector<128x128xf32>
    %297 = arith.mulf %292, %296 : vector<128x128xf32>
    %298 = vector.broadcast %278 : vector<1x128xf32> to vector<128x128xf32>
    %299 = arith.mulf %297, %298 : vector<128x128xf32>
    %300 = vector.broadcast %279 : vector<1x128xf32> to vector<128x128xf32>
    %301 = arith.addf %299, %300 : vector<128x128xf32>
    %302 = arith.truncf %301 : vector<128x128xf32> to vector<128x128xbf16>
    %c0_131 = arith.constant 0 : index
    %c0_132 = arith.constant 0 : index
    %303 = vector.load %arg15[%c0_131, %c0_132] : memref<128x128xbf16, #tpu.memory_space<vmem>>, vector<128x128xbf16>
    %cst_133 = arith.constant dense<0.000000e+00> : vector<128x128xf32>
    %304 = tpu.matmul %302, %303, %cst_133 {dimension_numbers = #tpu.dot_dimension_numbers<[1], [0], [0], [1], [0, 0, 1, 1], [], []>} : vector<128x128xbf16>, vector<128x128xbf16>, vector<128x128xf32> -> vector<128x128xf32>
    %c0_134 = arith.constant 0 : index
    %c0_135 = arith.constant 0 : index
    %305 = vector.load %arg16[%c0_134, %c0_135] : memref<1x128xf32, #tpu.memory_space<vmem>>, vector<1x128xf32>
    %306 = vector.broadcast %305 : vector<1x128xf32> to vector<128x128xf32>
    %307 = arith.addf %304, %306 : vector<128x128xf32>
    %c0_136 = arith.constant 0 : index
    %c0_137 = arith.constant 0 : index
    %c0_138 = arith.constant 0 : index
    %308 = vector.load %arg17[%c0_136, %c0_137, %c0_138] : memref<1x128x128xf32, #tpu.memory_space<vmem>>, vector<1x128x128xf32>
    %309 = vector.shape_cast %308 : vector<1x128x128xf32> to vector<128x128xf32>
    %310 = vector.shape_cast %307 : vector<128x128xf32> to vector<1x128x128xf32>
    tpu.vector_store %arg17[%c0_136, %c0_137, %c0_138], %310 {strides = array<i32>} : memref<1x128x128xf32, #tpu.memory_space<vmem>>, vector<1x128x128xf32>,
    return
  }
  func.func @transform_0(%arg0: i32) -> (i32, i32, i32) {
    %c0_i32 = arith.constant 0 : i32
    %c0_i32_0 = arith.constant 0 : i32
    %c0_i32_1 = arith.constant 0 : i32
    return %arg0, %c0_i32, %c0_i32_0 : i32, i32, i32
  }
  func.func @transform_1(%arg0: i32) -> (i32, i32, i32) {
    %c0_i32 = arith.constant 0 : i32
    %c0_i32_0 = arith.constant 0 : i32
    %c0_i32_1 = arith.constant 0 : i32
    %c0_i32_2 = arith.constant 0 : i32
    return %c0_i32, %c0_i32_0, %c0_i32_1 : i32, i32, i32
  }
  func.func @transform_2(%arg0: i32) -> (i32, i32, i32) {
    %c0_i32 = arith.constant 0 : i32
    %c0_i32_0 = arith.constant 0 : i32
    %c0_i32_1 = arith.constant 0 : i32
    %c0_i32_2 = arith.constant 0 : i32
    return %c0_i32, %c0_i32_0, %c0_i32_1 : i32, i32, i32
  }
  func.func @transform_3(%arg0: i32) -> (i32, i32, i32) {
    %c0_i32 = arith.constant 0 : i32
    %c0_i32_0 = arith.constant 0 : i32
    %c0_i32_1 = arith.constant 0 : i32
    %c0_i32_2 = arith.constant 0 : i32
    return %c0_i32, %c0_i32_0, %c0_i32_1 : i32, i32, i32
  }
  func.func @transform_4(%arg0: i32) -> (i32, i32, i32) {
    %c0_i32 = arith.constant 0 : i32
    %c0_i32_0 = arith.constant 0 : i32
    %c0_i32_1 = arith.constant 0 : i32
    %c0_i32_2 = arith.constant 0 : i32
    return %c0_i32, %c0_i32_0, %c0_i32_1 : i32, i32, i32
  }
  func.func @transform_5(%arg0: i32) -> (i32, i32, i32) {
    %c0_i32 = arith.constant 0 : i32
    %c0_i32_0 = arith.constant 0 : i32
    %c0_i32_1 = arith.constant 0 : i32
    %c0_i32_2 = arith.constant 0 : i32
    return %c0_i32, %c0_i32_0, %c0_i32_1 : i32, i32, i32
  }
  func.func @transform_6(%arg0: i32) -> (i32, i32, i32) {
    %c0_i32 = arith.constant 0 : i32
    %c0_i32_0 = arith.constant 0 : i32
    %c0_i32_1 = arith.constant 0 : i32
    %c0_i32_2 = arith.constant 0 : i32
    return %c0_i32, %c0_i32_0, %c0_i32_1 : i32, i32, i32
  }
  func.func @transform_7(%arg0: i32) -> (i32, i32, i32) {
    %c0_i32 = arith.constant 0 : i32
    %c0_i32_0 = arith.constant 0 : i32
    %c0_i32_1 = arith.constant 0 : i32
    %c0_i32_2 = arith.constant 0 : i32
    return %c0_i32, %c0_i32_0, %c0_i32_1 : i32, i32, i32
  }
  func.func @transform_8(%arg0: i32) -> (i32, i32, i32) {
    %c0_i32 = arith.constant 0 : i32
    %c0_i32_0 = arith.constant 0 : i32
    %c0_i32_1 = arith.constant 0 : i32
    %c0_i32_2 = arith.constant 0 : i32
    return %c0_i32, %c0_i32_0, %c0_i32_1 : i32, i32, i32
  }
  func.func @transform_9(%arg0: i32) -> (i32, i32, i32) {
    %c0_i32 = arith.constant 0 : i32
    %c0_i32_0 = arith.constant 0 : i32
    %c0_i32_1 = arith.constant 0 : i32
    %c0_i32_2 = arith.constant 0 : i32
    return %c0_i32, %c0_i32_0, %c0_i32_1 : i32, i32, i32
  }
  func.func @transform_10(%arg0: i32) -> (i32, i32, i32) {
    %c0_i32 = arith.constant 0 : i32
    %c0_i32_0 = arith.constant 0 : i32
    %c0_i32_1 = arith.constant 0 : i32
    %c0_i32_2 = arith.constant 0 : i32
    return %c0_i32, %c0_i32_0, %c0_i32_1 : i32, i32, i32
  }
  func.func @transform_11(%arg0: i32) -> (i32, i32, i32) {
    %c0_i32 = arith.constant 0 : i32
    %c0_i32_0 = arith.constant 0 : i32
    %c0_i32_1 = arith.constant 0 : i32
    %c0_i32_2 = arith.constant 0 : i32
    return %c0_i32, %c0_i32_0, %c0_i32_1 : i32, i32, i32
  }
  func.func @transform_12(%arg0: i32) -> (i32, i32) {
    %c0_i32 = arith.constant 0 : i32
    %c0_i32_0 = arith.constant 0 : i32
    %c0_i32_1 = arith.constant 0 : i32
    return %c0_i32, %c0_i32_0 : i32, i32
  }
  func.func @transform_13(%arg0: i32) -> (i32, i32) {
    %c0_i32 = arith.constant 0 : i32
    %c0_i32_0 = arith.constant 0 : i32
    %c0_i32_1 = arith.constant 0 : i32
    return %c0_i32, %c0_i32_0 : i32, i32
  }
  func.func @transform_14(%arg0: i32) -> (i32, i32) {
    %c0_i32 = arith.constant 0 : i32
    %c0_i32_0 = arith.constant 0 : i32
    %c0_i32_1 = arith.constant 0 : i32
    return %c0_i32, %c0_i32_0 : i32, i32
  }
  func.func @transform_15(%arg0: i32) -> (i32, i32) {
    %c0_i32 = arith.constant 0 : i32
    %c0_i32_0 = arith.constant 0 : i32
    %c0_i32_1 = arith.constant 0 : i32
    return %c0_i32, %c0_i32_0 : i32, i32
  }
  func.func @transform_16(%arg0: i32) -> (i32, i32, i32) {
    %c0_i32 = arith.constant 0 : i32
    %c0_i32_0 = arith.constant 0 : i32
    %c0_i32_1 = arith.constant 0 : i32
    return %arg0, %c0_i32, %c0_i32_0 : i32, i32, i32
  }
}

</mosaic_0001>

<llo_original>
// kernel: bigram_lm_forward.1
$region0: #{bigram_lm_forward.1}
  #allocation0 [shape = 'u32[]', space=smem, size = 0x4, offset = 0x4, fixed_abs, tag = 'smem constant byte address 0x4 - core index']
  #allocation1 [shape = 'u32[72,128]{1,0:T(1,128)}', space=vmem, size = 0x9000, scoped, tag = 'internal scratch']
  %s0 = inlined_call_operand.vmem [shape: f32[2,128,128], index: 0, kind: input, shape index: {}]
  %s1 = inlined_call_operand.vmem [shape: f32[2,1,128], index: 1, kind: input, shape index: {}]
  %s2 = inlined_call_operand.vmem [shape: f32[2,1,128], index: 2, kind: input, shape index: {}]
  %s3 = inlined_call_operand.vmem [shape: bf16[2,128,384], index: 3, kind: input, shape index: {}]
  %s4 = inlined_call_operand.vmem [shape: bf16[2,128,128], index: 4, kind: input, shape index: {}]
  %s5 = inlined_call_operand.vmem [shape: f32[2,1,128], index: 5, kind: input, shape index: {}]
  %s6 = inlined_call_operand.vmem [shape: f32[2,1,128], index: 6, kind: input, shape index: {}]
  %s7 = inlined_call_operand.vmem [shape: f32[2,1,128], index: 7, kind: input, shape index: {}]
  %s8 = inlined_call_operand.vmem [shape: bf16[2,128,512], index: 8, kind: input, shape index: {}]
  %s9 = inlined_call_operand.vmem [shape: f32[2,1,512], index: 9, kind: input, shape index: {}]
  %s10 = inlined_call_operand.vmem [shape: bf16[2,512,128], index: 10, kind: input, shape index: {}]
  %s11 = inlined_call_operand.vmem [shape: f32[2,1,128], index: 11, kind: input, shape index: {}]
  %s12 = inlined_call_operand.vmem [shape: f32[1,128], index: 12, kind: input, shape index: {}]
  %s13 = inlined_call_operand.vmem [shape: f32[1,128], index: 13, kind: input, shape index: {}]
  %s14 = inlined_call_operand.vmem [shape: bf16[128,128], index: 14, kind: input, shape index: {}]
  %s15 = inlined_call_operand.vmem [shape: f32[1,128], index: 15, kind: input, shape index: {}]
  %s16 = inlined_call_operand.vmem [shape: f32[2,128,128], index: 16, kind: output, shape index: {}]
  %s17 = sld [smem:[#allocation0]]
  $region97: #{bigram_lm_forward.1} parent=0
    _
  %s19 = ssub.s32 1, %s17
  %s20 = scalar_select 0, %s19, %s17
  loop: start=0, step=1, limit=4
  $region2: #{bigram_lm_forward.1} parent=0 // loop_pre_header
    _
  $region3: #{bigram_lm_forward.1} parent=0 // loop_header
    %s22 = sphi 0, %s26
    %p23 = scmp.ge.s32.totalorder %s22, 4
    %s32 = sphi 0, %s34
    %s35 = sphi 0, %s32
    %s36 = sphi 0, %s35
    %s52 = sphi 0, %s36
    %s56 = sphi 0, %s56
    %s58 = sphi 0, %s56
    %s59 = sphi 0, %s58
    %s73 = sphi 0, %s59
    %s77 = sphi 0, %s77
    %s79 = sphi 0, %s77
    %s80 = sphi 0, %s79
    %s94 = sphi 0, %s80
    %s98 = sphi 0, %s98
    %s100 = sphi 0, %s98
    %s101 = sphi 0, %s100
    %s115 = sphi 0, %s101
    %s119 = sphi 0, %s119
    %s121 = sphi 0, %s119
    %s122 = sphi 0, %s121
    %s136 = sphi 0, %s122
    %s140 = sphi 0, %s140
    %s142 = sphi 0, %s140
    %s143 = sphi 0, %s142
    %s157 = sphi 0, %s143
    %s161 = sphi 0, %s161
    %s163 = sphi 0, %s161
    %s164 = sphi 0, %s163
    %s178 = sphi 0, %s164
    %s182 = sphi 0, %s182
    %s184 = sphi 0, %s182
    %s185 = sphi 0, %s184
    %s199 = sphi 0, %s185
    %s203 = sphi 0, %s203
    %s205 = sphi 0, %s203
    %s206 = sphi 0, %s205
    %s220 = sphi 0, %s206
    %s224 = sphi 0, %s224
    %s226 = sphi 0, %s224
    %s227 = sphi 0, %s226
    %s241 = sphi 0, %s227
    %s245 = sphi 0, %s245
    %s247 = sphi 0, %s245
    %s248 = sphi 0, %s247
    %s262 = sphi 0, %s248
    %s266 = sphi 0, %s266
    %s268 = sphi 0, %s266
    %s269 = sphi 0, %s268
    %s283 = sphi 0, %s269
    %s287 = sphi 0, %s287
    %s289 = sphi 0, %s287
    %s290 = sphi 0, %s289
    %s304 = sphi 0, %s290
    %s308 = sphi 0, %s308
    %s310 = sphi 0, %s308
    %s311 = sphi 0, %s310
    %s325 = sphi 0, %s311
    %s329 = sphi 0, %s329
    %s331 = sphi 0, %s329
    %s332 = sphi 0, %s331
    %s346 = sphi 0, %s332
    %s350 = sphi 0, %s350
    %s352 = sphi 0, %s350
    %s353 = sphi 0, %s352
    %s367 = sphi 0, %s353
    %s373 = sphi 0, %s375
    %s376 = sphi 0, %s373
    %s377 = sphi 0, %s376
    %s393 = sphi 0, %s377
  $region4: #{bigram_lm_forward.1} parent=0 // loop_header_branch
    %25 = sbr.rel (%p23) target = $region8
  $region5: #{bigram_lm_forward.1} parent=0 // loop_body
    %s27 = ssub.s32 %s22, 1
    %s28 = ssub.s32 %s22, 2
    %s29 = sadd.s32 %s22, 1
    %s30 = ssub.s32 %s22, %s29
    %p31 = scmp.eq.s32.totalorder %s30, 0
    %s33 = sadd.s32 %s32, 1
    %s34 = scalar_select %p31, %s32, %s33
    %p37 = pneg %p31
    %p38 = scmp.eq.s32.totalorder %s22, 1
    %p39 = por %p37, %p38
    %p40 = scmp.ne.s32.totalorder %s32, %s35
    %p41 = scmp.eq.s32.totalorder %s22, 0
    %p42 = por %p40, %p41
    %p43 = scmp.ne.s32.totalorder %s32, %s35
    %p44 = scmp.eq.s32.totalorder %s27, 1
    %p45 = por %p43, %p44
    %p46 = scmp.ne.s32.totalorder %s35, %s36
    %p47 = scmp.eq.s32.totalorder %s27, 0
    %p48 = por %p46, %p47
    %p49 = scmp.ne.s32.totalorder %s35, %s36
    %p50 = scmp.eq.s32.totalorder %s28, 1
    %p51 = por %p49, %p50
    %p53 = scmp.ne.s32.totalorder %s36, %s52
    %p54 = scmp.eq.s32.totalorder %s28, 0
    %p55 = por %p53, %p54
    %s57 = sadd.s32 %s56, 1
    %p60 = scmp.eq.s32.totalorder %s22, 1
    %p61 = scmp.ne.s32.totalorder %s56, %s58
    %p62 = scmp.eq.s32.totalorder %s22, 0
    %p63 = por %p61, %p62
    %p64 = scmp.ne.s32.totalorder %s56, %s58
    %p65 = scmp.eq.s32.totalorder %s27, 1
    %p66 = por %p64, %p65
    %p67 = scmp.ne.s32.totalorder %s58, %s59
    %p68 = scmp.eq.s32.totalorder %s27, 0
    %p69 = por %p67, %p68
    %p70 = scmp.ne.s32.totalorder %s58, %s59
    %p71 = scmp.eq.s32.totalorder %s28, 1
    %p72 = por %p70, %p71
    %p74 = scmp.ne.s32.totalorder %s59, %s73
    %p75 = scmp.eq.s32.totalorder %s28, 0
    %p76 = por %p74, %p75
    %s78 = sadd.s32 %s77, 1
    %p81 = scmp.eq.s32.totalorder %s22, 1
    %p82 = scmp.ne.s32.totalorder %s77, %s79
    %p83 = scmp.eq.s32.totalorder %s22, 0
    %p84 = por %p82, %p83
    %p85 = scmp.ne.s32.totalorder %s77, %s79
    %p86 = scmp.eq.s32.totalorder %s27, 1
    %p87 = por %p85, %p86
    %p88 = scmp.ne.s32.totalorder %s79, %s80
    %p89 = scmp.eq.s32.totalorder %s27, 0
    %p90 = por %p88, %p89
    %p91 = scmp.ne.s32.totalorder %s79, %s80
    %p92 = scmp.eq.s32.totalorder %s28, 1
    %p93 = por %p91, %p92
    %p95 = scmp.ne.s32.totalorder %s80, %s94
    %p96 = scmp.eq.s32.totalorder %s28, 0
    %p97 = por %p95, %p96
    %s99 = sadd.s32 %s98, 1
    %p102 = scmp.eq.s32.totalorder %s22, 1
    %p103 = scmp.ne.s32.totalorder %s98, %s100
    %p104 = scmp.eq.s32.totalorder %s22, 0
    %p105 = por %p103, %p104
    %p106 = scmp.ne.s32.totalorder %s98, %s100
    %p107 = scmp.eq.s32.totalorder %s27, 1
    %p108 = por %p106, %p107
    %p109 = scmp.ne.s32.totalorder %s100, %s101
    %p110 = scmp.eq.s32.totalorder %s27, 0
    %p111 = por %p109, %p110
    %p112 = scmp.ne.s32.totalorder %s100, %s101
    %p113 = scmp.eq.s32.totalorder %s28, 1
    %p114 = por %p112, %p113
    %p116 = scmp.ne.s32.totalorder %s101, %s115
    %p117 = scmp.eq.s32.totalorder %s28, 0
    %p118 = por %p116, %p117
    %s120 = sadd.s32 %s119, 1
    %p123 = scmp.eq.s32.totalorder %s22, 1
    %p124 = scmp.ne.s32.totalorder %s119, %s121
    %p125 = scmp.eq.s32.totalorder %s22, 0
    %p126 = por %p124, %p125
    %p127 = scmp.ne.s32.totalorder %s119, %s121
    %p128 = scmp.eq.s32.totalorder %s27, 1
    %p129 = por %p127, %p128
    %p130 = scmp.ne.s32.totalorder %s121, %s122
    %p131 = scmp.eq.s32.totalorder %s27, 0
    %p132 = por %p130, %p131
    %p133 = scmp.ne.s32.totalorder %s121, %s122
    %p134 = scmp.eq.s32.totalorder %s28, 1
    %p135 = por %p133, %p134
    %p137 = scmp.ne.s32.totalorder %s122, %s136
    %p138 = scmp.eq.s32.totalorder %s28, 0
    %p139 = por %p137, %p138
    %s141 = sadd.s32 %s140, 1
    %p144 = scmp.eq.s32.totalorder %s22, 1
    %p145 = scmp.ne.s32.totalorder %s140, %s142
    %p146 = scmp.eq.s32.totalorder %s22, 0
    %p147 = por %p145, %p146
    %p148 = scmp.ne.s32.totalorder %s140, %s142
    %p149 = scmp.eq.s32.totalorder %s27, 1
    %p150 = por %p148, %p149
    %p151 = scmp.ne.s32.totalorder %s142, %s143
    %p152 = scmp.eq.s32.totalorder %s27, 0
    %p153 = por %p151, %p152
    %p154 = scmp.ne.s32.totalorder %s142, %s143
    %p155 = scmp.eq.s32.totalorder %s28, 1
    %p156 = por %p154, %p155
    %p158 = scmp.ne.s32.totalorder %s143, %s157
    %p159 = scmp.eq.s32.totalorder %s28, 0
    %p160 = por %p158, %p159
    %s162 = sadd.s32 %s161, 1
    %p165 = scmp.eq.s32.totalorder %s22, 1
    %p166 = scmp.ne.s32.totalorder %s161, %s163
    %p167 = scmp.eq.s32.totalorder %s22, 0
    %p168 = por %p166, %p167
    %p169 = scmp.ne.s32.totalorder %s161, %s163
    %p170 = scmp.eq.s32.totalorder %s27, 1
    %p171 = por %p169, %p170
    %p172 = scmp.ne.s32.totalorder %s163, %s164
    %p173 = scmp.eq.s32.totalorder %s27, 0
    %p174 = por %p172, %p173
    %p175 = scmp.ne.s32.totalorder %s163, %s164
    %p176 = scmp.eq.s32.totalorder %s28, 1
    %p177 = por %p175, %p176
    %p179 = scmp.ne.s32.totalorder %s164, %s178
    %p180 = scmp.eq.s32.totalorder %s28, 0
    %p181 = por %p179, %p180
    %s183 = sadd.s32 %s182, 1
    %p186 = scmp.eq.s32.totalorder %s22, 1
    %p187 = scmp.ne.s32.totalorder %s182, %s184
    %p188 = scmp.eq.s32.totalorder %s22, 0
    %p189 = por %p187, %p188
    %p190 = scmp.ne.s32.totalorder %s182, %s184
    %p191 = scmp.eq.s32.totalorder %s27, 1
    %p192 = por %p190, %p191
    %p193 = scmp.ne.s32.totalorder %s184, %s185
    %p194 = scmp.eq.s32.totalorder %s27, 0
    %p195 = por %p193, %p194
    %p196 = scmp.ne.s32.totalorder %s184, %s185
    %p197 = scmp.eq.s32.totalorder %s28, 1
    %p198 = por %p196, %p197
    %p200 = scmp.ne.s32.totalorder %s185, %s199
    %p201 = scmp.eq.s32.totalorder %s28, 0
    %p202 = por %p200, %p201
    %s204 = sadd.s32 %s203, 1
    %p207 = scmp.eq.s32.totalorder %s22, 1
    %p208 = scmp.ne.s32.totalorder %s203, %s205
    %p209 = scmp.eq.s32.totalorder %s22, 0
    %p210 = por %p208, %p209
    %p211 = scmp.ne.s32.totalorder %s203, %s205
    %p212 = scmp.eq.s32.totalorder %s27, 1
    %p213 = por %p211, %p212
    %p214 = scmp.ne.s32.totalorder %s205, %s206
    %p215 = scmp.eq.s32.totalorder %s27, 0
    %p216 = por %p214, %p215
    %p217 = scmp.ne.s32.totalorder %s205, %s206
    %p218 = scmp.eq.s32.totalorder %s28, 1
    %p219 = por %p217, %p218
    %p221 = scmp.ne.s32.totalorder %s206, %s220
    %p222 = scmp.eq.s32.totalorder %s28, 0
    %p223 = por %p221, %p222
    %s225 = sadd.s32 %s224, 1
    %p228 = scmp.eq.s32.totalorder %s22, 1
    %p229 = scmp.ne.s32.totalorder %s224, %s226
    %p230 = scmp.eq.s32.totalorder %s22, 0
    %p231 = por %p229, %p230
    %p232 = scmp.ne.s32.totalorder %s224, %s226
    %p233 = scmp.eq.s32.totalorder %s27, 1
    %p234 = por %p232, %p233
    %p235 = scmp.ne.s32.totalorder %s226, %s227
    %p236 = scmp.eq.s32.totalorder %s27, 0
    %p237 = por %p235, %p236
    %p238 = scmp.ne.s32.totalorder %s226, %s227
    %p239 = scmp.eq.s32.totalorder %s28, 1
    %p240 = por %p238, %p239
    %p242 = scmp.ne.s32.totalorder %s227, %s241
    %p243 = scmp.eq.s32.totalorder %s28, 0
    %p244 = por %p242, %p243
    %s246 = sadd.s32 %s245, 1
    %p249 = scmp.eq.s32.totalorder %s22, 1
    %p250 = scmp.ne.s32.totalorder %s245, %s247
    %p251 = scmp.eq.s32.totalorder %s22, 0
    %p252 = por %p250, %p251
    %p253 = scmp.ne.s32.totalorder %s245, %s247
    %p254 = scmp.eq.s32.totalorder %s27, 1
    %p255 = por %p253, %p254
    %p256 = scmp.ne.s32.totalorder %s247, %s248
    %p257 = scmp.eq.s32.totalorder %s27, 0
    %p258 = por %p256, %p257
    %p259 = scmp.ne.s32.totalorder %s247, %s248
    %p260 = scmp.eq.s32.totalorder %s28, 1
    %p261 = por %p259, %p260
    %p263 = scmp.ne.s32.totalorder %s248, %s262
    %p264 = scmp.eq.s32.totalorder %s28, 0
    %p265 = por %p263, %p264
    %s267 = sadd.s32 %s266, 1
    %p270 = scmp.eq.s32.totalorder %s22, 1
    %p271 = scmp.ne.s32.totalorder %s266, %s268
    %p272 = scmp.eq.s32.totalorder %s22, 0
    %p273 = por %p271, %p272
    %p274 = scmp.ne.s32.totalorder %s266, %s268
    %p275 = scmp.eq.s32.totalorder %s27, 1
    %p276 = por %p274, %p275
    %p277 = scmp.ne.s32.totalorder %s268, %s269
    %p278 = scmp.eq.s32.totalorder %s27, 0
    %p279 = por %p277, %p278
    %p280 = scmp.ne.s32.totalorder %s268, %s269
    %p281 = scmp.eq.s32.totalorder %s28, 1
    %p282 = por %p280, %p281
    %p284 = scmp.ne.s32.totalorder %s269, %s283
    %p285 = scmp.eq.s32.totalorder %s28, 0
    %p286 = por %p284, %p285
    %s288 = sadd.s32 %s287, 1
    %p291 = scmp.eq.s32.totalorder %s22, 1
    %p292 = scmp.ne.s32.totalorder %s287, %s289
    %p293 = scmp.eq.s32.totalorder %s22, 0
    %p294 = por %p292, %p293
    %p295 = scmp.ne.s32.totalorder %s287, %s289
    %p296 = scmp.eq.s32.totalorder %s27, 1
    %p297 = por %p295, %p296
    %p298 = scmp.ne.s32.totalorder %s289, %s290
    %p299 = scmp.eq.s32.totalorder %s27, 0
    %p300 = por %p298, %p299
    %p301 = scmp.ne.s32.totalorder %s289, %s290
    %p302 = scmp.eq.s32.totalorder %s28, 1
    %p303 = por %p301, %p302
    %p305 = scmp.ne.s32.totalorder %s290, %s304
    %p306 = scmp.eq.s32.totalorder %s28, 0
    %p307 = por %p305, %p306
    %s309 = sadd.s32 %s308, 1
    %p312 = scmp.eq.s32.totalorder %s22, 1
    %p313 = scmp.ne.s32.totalorder %s308, %s310
    %p314 = scmp.eq.s32.totalorder %s22, 0
    %p315 = por %p313, %p314
    %p316 = scmp.ne.s32.totalorder %s308, %s310
    %p317 = scmp.eq.s32.totalorder %s27, 1
    %p318 = por %p316, %p317
    %p319 = scmp.ne.s32.totalorder %s310, %s311
    %p320 = scmp.eq.s32.totalorder %s27, 0
    %p321 = por %p319, %p320
    %p322 = scmp.ne.s32.totalorder %s310, %s311
    %p323 = scmp.eq.s32.totalorder %s28, 1
    %p324 = por %p322, %p323
    %p326 = scmp.ne.s32.totalorder %s311, %s325
    %p327 = scmp.eq.s32.totalorder %s28, 0
    %p328 = por %p326, %p327
    %s330 = sadd.s32 %s329, 1
    %p333 = scmp.eq.s32.totalorder %s22, 1
    %p334 = scmp.ne.s32.totalorder %s329, %s331
    %p335 = scmp.eq.s32.totalorder %s22, 0
    %p336 = por %p334, %p335
    %p337 = scmp.ne.s32.totalorder %s329, %s331
    %p338 = scmp.eq.s32.totalorder %s27, 1
    %p339 = por %p337, %p338
    %p340 = scmp.ne.s32.totalorder %s331, %s332
    %p341 = scmp.eq.s32.totalorder %s27, 0
    %p342 = por %p340, %p341
    %p343 = scmp.ne.s32.totalorder %s331, %s332
    %p344 = scmp.eq.s32.totalorder %s28, 1
    %p345 = por %p343, %p344
    %p347 = scmp.ne.s32.totalorder %s332, %s346
    %p348 = scmp.eq.s32.totalorder %s28, 0
    %p349 = por %p347, %p348
    %s351 = sadd.s32 %s350, 1
    %p354 = scmp.eq.s32.totalorder %s22, 1
    %p355 = scmp.ne.s32.totalorder %s350, %s352
    %p356 = scmp.eq.s32.totalorder %s22, 0
    %p357 = por %p355, %p356
    %p358 = scmp.ne.s32.totalorder %s350, %s352
    %p359 = scmp.eq.s32.totalorder %s27, 1
    %p360 = por %p358, %p359
    %p361 = scmp.ne.s32.totalorder %s352, %s353
    %p362 = scmp.eq.s32.totalorder %s27, 0
    %p363 = por %p361, %p362
    %p364 = scmp.ne.s32.totalorder %s352, %s353
    %p365 = scmp.eq.s32.totalorder %s28, 1
    %p366 = por %p364, %p365
    %p368 = scmp.ne.s32.totalorder %s353, %s367
    %p369 = scmp.eq.s32.totalorder %s28, 0
    %p370 = por %p368, %p369
    %s371 = ssub.s32 %s22, %s29
    %p372 = scmp.eq.s32.totalorder %s371, 0
    %s374 = sadd.s32 %s373, 1
    %s375 = scalar_select %p372, %s373, %s374
    %p378 = pneg %p372
    %p379 = scmp.eq.s32.totalorder %s22, 1
    %p380 = por %p378, %p379
    %p381 = scmp.ne.s32.totalorder %s373, %s376
    %p382 = scmp.eq.s32.totalorder %s22, 0
    %p383 = por %p381, %p382
    %p384 = scmp.ne.s32.totalorder %s373, %s376
    %p385 = scmp.eq.s32.totalorder %s27, 1
    %p386 = por %p384, %p385
    %p387 = scmp.ne.s32.totalorder %s376, %s377
    %p388 = scmp.eq.s32.totalorder %s27, 0
    %p389 = por %p387, %p388
    %p390 = scmp.ne.s32.totalorder %s376, %s377
    %p391 = scmp.eq.s32.totalorder %s28, 1
    %p392 = por %p390, %p391
    %p394 = scmp.ne.s32.totalorder %s377, %s393
    %p395 = scmp.eq.s32.totalorder %s28, 0
    %p396 = por %p394, %p395
    %p397 = scmp.le.s32.totalorder 1, %s22
    %p398 = scmp.lt.s32.totalorder %s22, 3
    %p399 = pnand %p397, %p398
    %p400 = pneg %p399
    // Predicated region
    $region9: #{bigram_lm_forward.1} parent=5 // pred_check
      _
    $region10: #{bigram_lm_forward.1} parent=5 // pred_check_branch
      %402 = sbr.rel (%p399) target = $region12
    $region11: #{bigram_lm_forward.1} parent=5 // pred_region
      %s403 = ssub.s32 %s22, 1
      // Predicated region
      $region13: #{bigram_lm_forward.1} parent=11 // pred_check
        %p404 = pneg %p69
      $region14: #{bigram_lm_forward.1} parent=11 // pred_check_branch
        %406 = sbr.rel (%p404) target = $region16
      $region15: #{bigram_lm_forward.1} parent=11 // pred_region
        _
      $region16: #{bigram_lm_forward.1} parent=11 // pred_fallthru
        _
      // Predicated region
      $region17: #{bigram_lm_forward.1} parent=11 // pred_check
        %p407 = pneg %p90
      $region18: #{bigram_lm_forward.1} parent=11 // pred_check_branch
        %409 = sbr.rel (%p407) target = $region20
      $region19: #{bigram_lm_forward.1} parent=11 // pred_region
        _
      $region20: #{bigram_lm_forward.1} parent=11 // pred_fallthru
        _
      // Predicated region
      $region21: #{bigram_lm_forward.1} parent=11 // pred_check
        %p410 = pneg %p111
      $region22: #{bigram_lm_forward.1} parent=11 // pred_check_branch
        %412 = sbr.rel (%p410) target = $region24
      $region23: #{bigram_lm_forward.1} parent=11 // pred_region
        _
      $region24: #{bigram_lm_forward.1} parent=11 // pred_fallthru
        _
      // Predicated region
      $region25: #{bigram_lm_forward.1} parent=11 // pred_check
        %p413 = pneg %p132
      $region26: #{bigram_lm_forward.1} parent=11 // pred_check_branch
        %415 = sbr.rel (%p413) target = $region28
      $region27: #{bigram_lm_forward.1} parent=11 // pred_region
        _
      $region28: #{bigram_lm_forward.1} parent=11 // pred_fallthru
        _
      // Predicated region
      $region29: #{bigram_lm_forward.1} parent=11 // pred_check
        %p416 = pneg %p153
      $region30: #{bigram_lm_forward.1} parent=11 // pred_check_branch
        %418 = sbr.rel (%p416) target = $region32
      $region31: #{bigram_lm_forward.1} parent=11 // pred_region
        _
      $region32: #{bigram_lm_forward.1} parent=11 // pred_fallthru
        _
      // Predicated region
      $region33: #{bigram_lm_forward.1} parent=11 // pred_check
        %p419 = pneg %p174
      $region34: #{bigram_lm_forward.1} parent=11 // pred_check_branch
        %421 = sbr.rel (%p419) target = $region36
      $region35: #{bigram_lm_forward.1} parent=11 // pred_region
        _
      $region36: #{bigram_lm_forward.1} parent=11 // pred_fallthru
        _
      // Predicated region
      $region37: #{bigram_lm_forward.1} parent=11 // pred_check
        %p422 = pneg %p195
      $region38: #{bigram_lm_forward.1} parent=11 // pred_check_branch
        %424 = sbr.rel (%p422) target = $region40
      $region39: #{bigram_lm_forward.1} parent=11 // pred_region
        _
      $region40: #{bigram_lm_forward.1} parent=11 // pred_fallthru
        _
      // Predicated region
      $region41: #{bigram_lm_forward.1} parent=11 // pred_check
        %p425 = pneg %p216
      $region42: #{bigram_lm_forward.1} parent=11 // pred_check_branch
        %427 = sbr.rel (%p425) target = $region44
      $region43: #{bigram_lm_forward.1} parent=11 // pred_region
        _
      $region44: #{bigram_lm_forward.1} parent=11 // pred_fallthru
        _
      // Predicated region
      $region45: #{bigram_lm_forward.1} parent=11 // pred_check
        %p428 = pneg %p237
      $region46: #{bigram_lm_forward.1} parent=11 // pred_check_branch
        %430 = sbr.rel (%p428) target = $region48
      $region47: #{bigram_lm_forward.1} parent=11 // pred_region
        _
      $region48: #{bigram_lm_forward.1} parent=11 // pred_fallthru
        _
      // Predicated region
      $region49: #{bigram_lm_forward.1} parent=11 // pred_check
        %p431 = pneg %p258
      $region50: #{bigram_lm_forward.1} parent=11 // pred_check_branch
        %433 = sbr.rel (%p431) target = $region52
      $region51: #{bigram_lm_forward.1} parent=11 // pred_region
        _
      $region52: #{bigram_lm_forward.1} parent=11 // pred_fallthru
        _
      // Predicated region
      $region53: #{bigram_lm_forward.1} parent=11 // pred_check
        %p434 = pneg %p279
      $region54: #{bigram_lm_forward.1} parent=11 // pred_check_branch
        %436 = sbr.rel (%p434) target = $region56
      $region55: #{bigram_lm_forward.1} parent=11 // pred_region
        _
      $region56: #{bigram_lm_forward.1} parent=11 // pred_fallthru
        _
      // Predicated region
      $region57: #{bigram_lm_forward.1} parent=11 // pred_check
        %p437 = pneg %p300
      $region58: #{bigram_lm_forward.1} parent=11 // pred_check_branch
        %439 = sbr.rel (%p437) target = $region60
      $region59: #{bigram_lm_forward.1} parent=11 // pred_region
        _
      $region60: #{bigram_lm_forward.1} parent=11 // pred_fallthru
        _
      // Predicated region
      $region61: #{bigram_lm_forward.1} parent=11 // pred_check
        %p440 = pneg %p321
      $region62: #{bigram_lm_forward.1} parent=11 // pred_check_branch
        %442 = sbr.rel (%p440) target = $region64
      $region63: #{bigram_lm_forward.1} parent=11 // pred_region
        _
      $region64: #{bigram_lm_forward.1} parent=11 // pred_fallthru
        _
      // Predicated region
      $region65: #{bigram_lm_forward.1} parent=11 // pred_check
        %p443 = pneg %p342
      $region66: #{bigram_lm_forward.1} parent=11 // pred_check_branch
        %445 = sbr.rel (%p443) target = $region68
      $region67: #{bigram_lm_forward.1} parent=11 // pred_region
        _
      $region68: #{bigram_lm_forward.1} parent=11 // pred_fallthru
        _
      // Predicated region
      $region69: #{bigram_lm_forward.1} parent=11 // pred_check
        %p446 = pneg %p363
      $region70: #{bigram_lm_forward.1} parent=11 // pred_check_branch
        %448 = sbr.rel (%p446) target = $region72
      $region71: #{bigram_lm_forward.1} parent=11 // pred_region
        _
      $region72: #{bigram_lm_forward.1} parent=11 // pred_fallthru
        _
    $region12: #{bigram_lm_forward.1} parent=5 // pred_fallthru
      _
    %p449 = scmp.lt.s32.totalorder %s22, 2
    // Predicated region
    $region73: #{bigram_lm_forward.1} parent=5 // pred_check
      %p450 = pneg %p449
    $region74: #{bigram_lm_forward.1} parent=5 // pred_check_branch
      %452 = sbr.rel (%p450) target = $region76
    $region75: #{bigram_lm_forward.1} parent=5 // pred_region
      // Predicated region
      $region77: #{bigram_lm_forward.1} parent=75 // pred_check
        %p453 = pneg %p42
      $region78: #{bigram_lm_forward.1} parent=75 // pred_check_branch
        %455 = sbr.rel (%p453) target = $region80
      $region79: #{bigram_lm_forward.1} parent=75 // pred_region
        %p456 = scmp.lt.s32.totalorder %s22, 1
        %s457 = scalar_select %p456, %s22, 1
        %s458 = smul.addr %s457, 16
        %s459 = smul.addr %s458, 8
        %s460 = scalar_lea.vmem %s0, %s459
      $region80: #{bigram_lm_forward.1} parent=75 // pred_fallthru
        _
    $region76: #{bigram_lm_forward.1} parent=5 // pred_fallthru
      _
    %p461 = scmp.le.s32.totalorder 1, %s22
    %p462 = scmp.lt.s32.totalorder %s22, 3
    %p463 = pnand %p461, %p462
    %p464 = pneg %p463
    // Predicated region
    $region81: #{bigram_lm_forward.1} parent=5 // pred_check
      _
    $region82: #{bigram_lm_forward.1} parent=5 // pred_check_branch
      %466 = sbr.rel (%p463) target = $region84
    $region83: #{bigram_lm_forward.1} parent=5 // pred_region
      %s467 = ssub.s32 %s22, 1
      %p468 = scmp.lt.s32.totalorder %s27, 1
      %s469 = scalar_select %p468, %s27, 1
      %s470 = smul.addr %s469, 16
      %s471 = smul.addr %s470, 8
      %s472 = scalar_lea.vmem %s0, %s471
      %p473 = pneg %p48
      %p474 = pneg %p45
      %p475 = pneg %p69
      %p476 = pneg %p66
      %p477 = pneg %p90
      %p478 = pneg %p87
      %p479 = pneg %p111
      %p480 = pneg %p108
      %p481 = pneg %p132
      %p482 = pneg %p129
      %p483 = pneg %p153
      %p484 = pneg %p150
      %p485 = pneg %p174
      %p486 = pneg %p171
      %p487 = pneg %p195
      %p488 = pneg %p192
      %p489 = pneg %p216
      %p490 = pneg %p213
      %p491 = pneg %p237
      %p492 = pneg %p234
      %p493 = pneg %p258
      %p494 = pneg %p255
      %p495 = pneg %p279
      %p496 = pneg %p276
      %p497 = pneg %p300
      %p498 = pneg %p297
      %p499 = pneg %p321
      %p500 = pneg %p318
      %p501 = pneg %p342
      %p502 = pneg %p339
      %p503 = pneg %p363
      %p504 = pneg %p360
      %p505 = pneg %p389
      %p506 = pneg %p386
      %p507 = scmp.lt.s32.totalorder %s27, 1
      %s508 = scalar_select %p507, %s27, 1
      %s509 = smul.addr %s508, 16
      %s510 = smul.addr %s509, 8
      %s511 = scalar_lea.vmem %s16, %s510
      %p512 = scmp.lt.s32.totalorder %s27, 1
      %s513 = scalar_select %p512, %s27, 1
      %s514 = smul.addr %s513, 16
      %s515 = smul.addr %s514, 8
      %s516 = scalar_lea.vmem %s0, %s515
      %p517 = scmp.lt.s32.totalorder %s27, 1
      %s518 = scalar_select %p517, %s27, 1
      %s519 = smul.addr %s518, 16
      %s520 = smul.addr %s519, 8
      %s521 = scalar_lea.vmem %s16, %s520
      %v523 = vld [vmem:[%s516] sm:$0xff]
      %v524 = vld [vmem:[%s516 + $0x8] sm:$0xff]
      %v525 = vld [vmem:[%s516 + $0x10] sm:$0xff]
      %v526 = vld [vmem:[%s516 + $0x18] sm:$0xff]
      %v527 = vld [vmem:[%s516 + $0x20] sm:$0xff]
      %v528 = vld [vmem:[%s516 + $0x28] sm:$0xff]
      %v529 = vld [vmem:[%s516 + $0x30] sm:$0xff]
      %v530 = vld [vmem:[%s516 + $0x38] sm:$0xff]
      %v531 = vld [vmem:[%s516 + $0x40] sm:$0xff]
      %v532 = vld [vmem:[%s516 + $0x48] sm:$0xff]
      %v533 = vld [vmem:[%s516 + $0x50] sm:$0xff]
      %v534 = vld [vmem:[%s516 + $0x58] sm:$0xff]
      %v535 = vld [vmem:[%s516 + $0x60] sm:$0xff]
      %v536 = vld [vmem:[%s516 + $0x68] sm:$0xff]
      %v537 = vld [vmem:[%s516 + $0x70] sm:$0xff]
      %v538 = vld [vmem:[%s516 + $0x78] sm:$0xff]
      %v539 = vlaneseq
      %v540 = vshrl.u32 %v539, 7
      %v541 = vadd.s32 %v540, 8
      %v542 = vadd.s32 %v540, 16
      %v543 = vadd.s32 %v540, 24
      %v544 = vadd.s32 %v540, 32
      %v545 = vadd.s32 %v540, 40
      %v546 = vadd.s32 %v540, 48
      %v547 = vadd.s32 %v540, 56
      %v548 = vadd.s32 %v540, 64
      %v549 = vadd.s32 %v540, 72
      %v550 = vadd.s32 %v540, 80
      %v551 = vadd.s32 %v540, 88
      %v552 = vadd.s32 %v540, 96
      %v553 = vadd.s32 %v540, 104
      %v554 = vadd.s32 %v540, 112
      %v555 = vadd.s32 %v540, 120
      %v556 = vlaneseq
      %v557 = vand.u32 %v556, 127
      %vm558 = vcmp.ge.s32.totalorder %v540, %v557
      %vm559 = vcmp.ge.s32.totalorder %v541, %v557
      %vm560 = vcmp.ge.s32.totalorder %v542, %v557
      %vm561 = vcmp.ge.s32.totalorder %v543, %v557
      %vm562 = vcmp.ge.s32.totalorder %v544, %v557
      %vm563 = vcmp.ge.s32.totalorder %v545, %v557
      %vm564 = vcmp.ge.s32.totalorder %v546, %v557
      %vm565 = vcmp.ge.s32.totalorder %v547, %v557
      %vm566 = vcmp.ge.s32.totalorder %v548, %v557
      %vm567 = vcmp.ge.s32.totalorder %v549, %v557
      %vm568 = vcmp.ge.s32.totalorder %v550, %v557
      %vm569 = vcmp.ge.s32.totalorder %v551, %v557
      %vm570 = vcmp.ge.s32.totalorder %v552, %v557
      %vm571 = vcmp.ge.s32.totalorder %v553, %v557
      %vm572 = vcmp.ge.s32.totalorder %v554, %v557
      %vm573 = vcmp.ge.s32.totalorder %v555, %v557
      %v574 = vsel %vm558, 0.0, -1e+30
      %v575 = vsel %vm559, 0.0, -1e+30
      %v576 = vsel %vm560, 0.0, -1e+30
      %v577 = vsel %vm561, 0.0, -1e+30
      %v578 = vsel %vm562, 0.0, -1e+30
      %v579 = vsel %vm563, 0.0, -1e+30
      %v580 = vsel %vm564, 0.0, -1e+30
      %v581 = vsel %vm565, 0.0, -1e+30
      %v582 = vsel %vm566, 0.0, -1e+30
      %v583 = vsel %vm567, 0.0, -1e+30
      %v584 = vsel %vm568, 0.0, -1e+30
      %v585 = vsel %vm569, 0.0, -1e+30
      %v586 = vsel %vm570, 0.0, -1e+30
      %v587 = vsel %vm571, 0.0, -1e+30
      %v588 = vsel %vm572, 0.0, -1e+30
      %v589 = vsel %vm573, 0.0, -1e+30
      %v590 = vld [vmem:[%s1] sm:$0x1]
      %v591 = vld [vmem:[%s2] sm:$0x1]
      %592 = vadd.xlane.f32.xlu0 %v523
      %v593 = vpop.xlane.xlu0 %592
      %594 = vadd.xlane.f32.xlu0 %v524
      %v595 = vpop.xlane.xlu0 %594
      %596 = vadd.xlane.f32.xlu0 %v525
      %v597 = vpop.xlane.xlu0 %596
      %598 = vadd.xlane.f32.xlu0 %v526
      %v599 = vpop.xlane.xlu0 %598
      %600 = vadd.xlane.f32.xlu0 %v527
      %v601 = vpop.xlane.xlu0 %600
      %602 = vadd.xlane.f32.xlu0 %v528
      %v603 = vpop.xlane.xlu0 %602
      %604 = vadd.xlane.f32.xlu0 %v529
      %v605 = vpop.xlane.xlu0 %604
      %606 = vadd.xlane.f32.xlu0 %v530
      %v607 = vpop.xlane.xlu0 %606
      %608 = vadd.xlane.f32.xlu0 %v531
      %v609 = vpop.xlane.xlu0 %608
      %610 = vadd.xlane.f32.xlu0 %v532
      %v611 = vpop.xlane.xlu0 %610
      %612 = vadd.xlane.f32.xlu0 %v533
      %v613 = vpop.xlane.xlu0 %612
      %614 = vadd.xlane.f32.xlu0 %v534
      %v615 = vpop.xlane.xlu0 %614
      %616 = vadd.xlane.f32.xlu0 %v535
      %v617 = vpop.xlane.xlu0 %616
      %618 = vadd.xlane.f32.xlu0 %v536
      %v619 = vpop.xlane.xlu0 %618
      %620 = vadd.xlane.f32.xlu0 %v537
      %v621 = vpop.xlane.xlu0 %620
      %622 = vadd.xlane.f32.xlu0 %v538
      %v623 = vpop.xlane.xlu0 %622
      %v624 = vrcp.pop 128.0
      %v625 = vmul.f32 128.0, %v624
      %v626 = vsub.f32 1.0, %v625
      %v627 = vmul.f32 %v624, %v626
      %v628 = vadd.f32 %v624, %v627
      %vm629 = vweird.f32 %v624
      %v630 = vsel %vm629, %v624, %v628
      %v631 = vmul.f32 %v593, %v630
      %v632 = vmul.f32 %v595, %v630
      %v633 = vmul.f32 %v597, %v630
      %v634 = vmul.f32 %v599, %v630
      %v635 = vmul.f32 %v601, %v630
      %v636 = vmul.f32 %v603, %v630
      %v637 = vmul.f32 %v605, %v630
      %v638 = vmul.f32 %v607, %v630
      %v639 = vmul.f32 %v609, %v630
      %v640 = vmul.f32 %v611, %v630
      %v641 = vmul.f32 %v613, %v630
      %v642 = vmul.f32 %v615, %v630
      %v643 = vmul.f32 %v617, %v630
      %v644 = vmul.f32 %v619, %v630
      %v645 = vmul.f32 %v621, %v630
      %v646 = vmul.f32 %v623, %v630
      %v647 = vsub.f32 %v523, %v631
      %v648 = vsub.f32 %v524, %v632
      %v649 = vsub.f32 %v525, %v633
      %v650 = vsub.f32 %v526, %v634
      %v651 = vsub.f32 %v527, %v635
      %v652 = vsub.f32 %v528, %v636
      %v653 = vsub.f32 %v529, %v637
      %v654 = vsub.f32 %v530, %v638
      %v655 = vsub.f32 %v531, %v639
      %v656 = vsub.f32 %v532, %v640
      %v657 = vsub.f32 %v533, %v641
      %v658 = vsub.f32 %v534, %v642
      %v659 = vsub.f32 %v535, %v643
      %v660 = vsub.f32 %v536, %v644
      %v661 = vsub.f32 %v537, %v645
      %v662 = vsub.f32 %v538, %v646
      %v663 = vmul.f32 %v647, %v647
      %v664 = vmul.f32 %v648, %v648
      %v665 = vmul.f32 %v649, %v649
      %v666 = vmul.f32 %v650, %v650
      %v667 = vmul.f32 %v651, %v651
      %v668 = vmul.f32 %v652, %v652
      %v669 = vmul.f32 %v653, %v653
      %v670 = vmul.f32 %v654, %v654
      %v671 = vmul.f32 %v655, %v655
      %v672 = vmul.f32 %v656, %v656
      %v673 = vmul.f32 %v657, %v657
      %v674 = vmul.f32 %v658, %v658
      %v675 = vmul.f32 %v659, %v659
      %v676 = vmul.f32 %v660, %v660
      %v677 = vmul.f32 %v661, %v661
      %v678 = vmul.f32 %v662, %v662
      %679 = vadd.xlane.f32.xlu0 %v663
      %v680 = vpop.xlane.xlu0 %679
      %681 = vadd.xlane.f32.xlu0 %v664
      %v682 = vpop.xlane.xlu0 %681
      %683 = vadd.xlane.f32.xlu0 %v665
      %v684 = vpop.xlane.xlu0 %683
      %685 = vadd.xlane.f32.xlu0 %v666
      %v686 = vpop.xlane.xlu0 %685
      %687 = vadd.xlane.f32.xlu0 %v667
      %v688 = vpop.xlane.xlu0 %687
      %689 = vadd.xlane.f32.xlu0 %v668
      %v690 = vpop.xlane.xlu0 %689
      %691 = vadd.xlane.f32.xlu0 %v669
      %v692 = vpop.xlane.xlu0 %691
      %693 = vadd.xlane.f32.xlu0 %v670
      %v694 = vpop.xlane.xlu0 %693
      %695 = vadd.xlane.f32.xlu0 %v671
      %v696 = vpop.xlane.xlu0 %695
      %697 = vadd.xlane.f32.xlu0 %v672
      %v698 = vpop.xlane.xlu0 %697
      %699 = vadd.xlane.f32.xlu0 %v673
      %v700 = vpop.xlane.xlu0 %699
      %701 = vadd.xlane.f32.xlu0 %v674
      %v702 = vpop.xlane.xlu0 %701
      %703 = vadd.xlane.f32.xlu0 %v675
      %v704 = vpop.xlane.xlu0 %703
      %705 = vadd.xlane.f32.xlu0 %v676
      %v706 = vpop.xlane.xlu0 %705
      %707 = vadd.xlane.f32.xlu0 %v677
      %v708 = vpop.xlane.xlu0 %707
      %709 = vadd.xlane.f32.xlu0 %v678
      %v710 = vpop.xlane.xlu0 %709
      %v711 = vmul.f32 %v680, %v630
      %v712 = vmul.f32 %v682, %v630
      %v713 = vmul.f32 %v684, %v630
      %v714 = vmul.f32 %v686, %v630
      %v715 = vmul.f32 %v688, %v630
      %v716 = vmul.f32 %v690, %v630
      %v717 = vmul.f32 %v692, %v630
      %v718 = vmul.f32 %v694, %v630
      %v719 = vmul.f32 %v696, %v630
      %v720 = vmul.f32 %v698, %v630
      %v721 = vmul.f32 %v700, %v630
      %v722 = vmul.f32 %v702, %v630
      %v723 = vmul.f32 %v704, %v630
      %v724 = vmul.f32 %v706, %v630
      %v725 = vmul.f32 %v708, %v630
      %v726 = vmul.f32 %v710, %v630
      %v727 = vadd.f32 %v711, 1e-05
      %v728 = vadd.f32 %v712, 1e-05
      %v729 = vadd.f32 %v713, 1e-05
      %v730 = vadd.f32 %v714, 1e-05
      %v731 = vadd.f32 %v715, 1e-05
      %v732 = vadd.f32 %v716, 1e-05
      %v733 = vadd.f32 %v717, 1e-05
      %v734 = vadd.f32 %v718, 1e-05
      %v735 = vadd.f32 %v719, 1e-05
      %v736 = vadd.f32 %v720, 1e-05
      %v737 = vadd.f32 %v721, 1e-05
      %v738 = vadd.f32 %v722, 1e-05
      %v739 = vadd.f32 %v723, 1e-05
      %v740 = vadd.f32 %v724, 1e-05
      %v741 = vadd.f32 %v725, 1e-05
      %v742 = vadd.f32 %v726, 1e-05
      %v743 = vrsqrt.pop %v727
      %v744 = vmul.f32 %v743, %v727
      %v745 = vmul.f32 %v744, %v743
      %v746 = vmul.f32 0.5, %v745
      %v747 = vsub.f32 1.5, %v746
      %v748 = vmul.f32 %v743, %v747
      %vm749 = vweird.f32 %v727
      %vm750 = vweird.f32 %v743
      %vm751 = vmor %vm749, %vm750
      %v752 = vsel %vm751, %v743, %v748
      %v753 = vrsqrt.pop %v728
      %v754 = vmul.f32 %v753, %v728
      %v755 = vmul.f32 %v754, %v753
      %v756 = vmul.f32 0.5, %v755
      %v757 = vsub.f32 1.5, %v756
      %v758 = vmul.f32 %v753, %v757
      %vm759 = vweird.f32 %v728
      %vm760 = vweird.f32 %v753
      %vm761 = vmor %vm759, %vm760
      %v762 = vsel %vm761, %v753, %v758
      %v763 = vrsqrt.pop %v729
      %v764 = vmul.f32 %v763, %v729
      %v765 = vmul.f32 %v764, %v763
      %v766 = vmul.f32 0.5, %v765
      %v767 = vsub.f32 1.5, %v766
      %v768 = vmul.f32 %v763, %v767
      %vm769 = vweird.f32 %v729
      %vm770 = vweird.f32 %v763
      %vm771 = vmor %vm769, %vm770
      %v772 = vsel %vm771, %v763, %v768
      %v773 = vrsqrt.pop %v730
      %v774 = vmul.f32 %v773, %v730
      %v775 = vmul.f32 %v774, %v773
      %v776 = vmul.f32 0.5, %v775
      %v777 = vsub.f32 1.5, %v776
      %v778 = vmul.f32 %v773, %v777
      %vm779 = vweird.f32 %v730
      %vm780 = vweird.f32 %v773
      %vm781 = vmor %vm779, %vm780
      %v782 = vsel %vm781, %v773, %v778
      %v783 = vrsqrt.pop %v731
      %v784 = vmul.f32 %v783, %v731
      %v785 = vmul.f32 %v784, %v783
      %v786 = vmul.f32 0.5, %v785
      %v787 = vsub.f32 1.5, %v786
      %v788 = vmul.f32 %v783, %v787
      %vm789 = vweird.f32 %v731
      %vm790 = vweird.f32 %v783
      %vm791 = vmor %vm789, %vm790
      %v792 = vsel %vm791, %v783, %v788
      %v793 = vrsqrt.pop %v732
      %v794 = vmul.f32 %v793, %v732
      %v795 = vmul.f32 %v794, %v793
      %v796 = vmul.f32 0.5, %v795
      %v797 = vsub.f32 1.5, %v796
      %v798 = vmul.f32 %v793, %v797
      %vm799 = vweird.f32 %v732
      %vm800 = vweird.f32 %v793
      %vm801 = vmor %vm799, %vm800
      %v802 = vsel %vm801, %v793, %v798
      %v803 = vrsqrt.pop %v733
      %v804 = vmul.f32 %v803, %v733
      %v805 = vmul.f32 %v804, %v803
      %v806 = vmul.f32 0.5, %v805
      %v807 = vsub.f32 1.5, %v806
      %v808 = vmul.f32 %v803, %v807
      %vm809 = vweird.f32 %v733
      %vm810 = vweird.f32 %v803
      %vm811 = vmor %vm809, %vm810
      %v812 = vsel %vm811, %v803, %v808
      %v813 = vrsqrt.pop %v734
      %v814 = vmul.f32 %v813, %v734
      %v815 = vmul.f32 %v814, %v813
      %v816 = vmul.f32 0.5, %v815
      %v817 = vsub.f32 1.5, %v816
      %v818 = vmul.f32 %v813, %v817
      %vm819 = vweird.f32 %v734
      %vm820 = vweird.f32 %v813
      %vm821 = vmor %vm819, %vm820
      %v822 = vsel %vm821, %v813, %v818
      %v823 = vrsqrt.pop %v735
      %v824 = vmul.f32 %v823, %v735
      %v825 = vmul.f32 %v824, %v823
      %v826 = vmul.f32 0.5, %v825
      %v827 = vsub.f32 1.5, %v826
      %v828 = vmul.f32 %v823, %v827
      %vm829 = vweird.f32 %v735
      %vm830 = vweird.f32 %v823
      %vm831 = vmor %vm829, %vm830
      %v832 = vsel %vm831, %v823, %v828
      %v833 = vrsqrt.pop %v736
      %v834 = vmul.f32 %v833, %v736
      %v835 = vmul.f32 %v834, %v833
      %v836 = vmul.f32 0.5, %v835
      %v837 = vsub.f32 1.5, %v836
      %v838 = vmul.f32 %v833, %v837
      %vm839 = vweird.f32 %v736
      %vm840 = vweird.f32 %v833
      %vm841 = vmor %vm839, %vm840
      %v842 = vsel %vm841, %v833, %v838
      %v843 = vrsqrt.pop %v737
      %v844 = vmul.f32 %v843, %v737
      %v845 = vmul.f32 %v844, %v843
      %v846 = vmul.f32 0.5, %v845
      %v847 = vsub.f32 1.5, %v846
      %v848 = vmul.f32 %v843, %v847
      %vm849 = vweird.f32 %v737
      %vm850 = vweird.f32 %v843
      %vm851 = vmor %vm849, %vm850
      %v852 = vsel %vm851, %v843, %v848
      %v853 = vrsqrt.pop %v738
      %v854 = vmul.f32 %v853, %v738
      %v855 = vmul.f32 %v854, %v853
      %v856 = vmul.f32 0.5, %v855
      %v857 = vsub.f32 1.5, %v856
      %v858 = vmul.f32 %v853, %v857
      %vm859 = vweird.f32 %v738
      %vm860 = vweird.f32 %v853
      %vm861 = vmor %vm859, %vm860
      %v862 = vsel %vm861, %v853, %v858
      %v863 = vrsqrt.pop %v739
      %v864 = vmul.f32 %v863, %v739
      %v865 = vmul.f32 %v864, %v863
      %v866 = vmul.f32 0.5, %v865
      %v867 = vsub.f32 1.5, %v866
      %v868 = vmul.f32 %v863, %v867
      %vm869 = vweird.f32 %v739
      %vm870 = vweird.f32 %v863
      %vm871 = vmor %vm869, %vm870
      %v872 = vsel %vm871, %v863, %v868
      %v873 = vrsqrt.pop %v740
      %v874 = vmul.f32 %v873, %v740
      %v875 = vmul.f32 %v874, %v873
      %v876 = vmul.f32 0.5, %v875
      %v877 = vsub.f32 1.5, %v876
      %v878 = vmul.f32 %v873, %v877
      %vm879 = vweird.f32 %v740
      %vm880 = vweird.f32 %v873
      %vm881 = vmor %vm879, %vm880
      %v882 = vsel %vm881, %v873, %v878
      %v883 = vrsqrt.pop %v741
      %v884 = vmul.f32 %v883, %v741
      %v885 = vmul.f32 %v884, %v883
      %v886 = vmul.f32 0.5, %v885
      %v887 = vsub.f32 1.5, %v886
      %v888 = vmul.f32 %v883, %v887
      %vm889 = vweird.f32 %v741
      %vm890 = vweird.f32 %v883
      %vm891 = vmor %vm889, %vm890
      %v892 = vsel %vm891, %v883, %v888
      %v893 = vrsqrt.pop %v742
      %v894 = vmul.f32 %v893, %v742
      %v895 = vmul.f32 %v894, %v893
      %v896 = vmul.f32 0.5, %v895
      %v897 = vsub.f32 1.5, %v896
      %v898 = vmul.f32 %v893, %v897
      %vm899 = vweird.f32 %v742
      %vm900 = vweird.f32 %v893
      %vm901 = vmor %vm899, %vm900
      %v902 = vsel %vm901, %v893, %v898
      %v903 = vmul.f32 %v647, %v752
      %v904 = vmul.f32 %v648, %v762
      %v905 = vmul.f32 %v649, %v772
      %v906 = vmul.f32 %v650, %v782
      %v907 = vmul.f32 %v651, %v792
      %v908 = vmul.f32 %v652, %v802
      %v909 = vmul.f32 %v653, %v812
      %v910 = vmul.f32 %v654, %v822
      %v911 = vmul.f32 %v655, %v832
      %v912 = vmul.f32 %v656, %v842
      %v913 = vmul.f32 %v657, %v852
      %v914 = vmul.f32 %v658, %v862
      %v915 = vmul.f32 %v659, %v872
      %v916 = vmul.f32 %v660, %v882
      %v917 = vmul.f32 %v661, %v892
      %v918 = vmul.f32 %v662, %v902
      %v920 = vperm.slane %v590, 0
      %v922 = vmul.f32 %v903, %v920
      %v923 = vmul.f32 %v904, %v920
      %v924 = vmul.f32 %v905, %v920
      %v925 = vmul.f32 %v906, %v920
      %v926 = vmul.f32 %v907, %v920
      %v927 = vmul.f32 %v908, %v920
      %v928 = vmul.f32 %v909, %v920
      %v929 = vmul.f32 %v910, %v920
      %v930 = vmul.f32 %v911, %v920
      %v931 = vmul.f32 %v912, %v920
      %v932 = vmul.f32 %v913, %v920
      %v933 = vmul.f32 %v914, %v920
      %v934 = vmul.f32 %v915, %v920
      %v935 = vmul.f32 %v916, %v920
      %v936 = vmul.f32 %v917, %v920
      %v937 = vmul.f32 %v918, %v920
      %v939 = vperm.slane %v591, 0
      %v941 = vadd.f32 %v922, %v939
      %v942 = vadd.f32 %v923, %v939
      %v943 = vadd.f32 %v924, %v939
      %v944 = vadd.f32 %v925, %v939
      %v945 = vadd.f32 %v926, %v939
      %v946 = vadd.f32 %v927, %v939
      %v947 = vadd.f32 %v928, %v939
      %v948 = vadd.f32 %v929, %v939
      %v949 = vadd.f32 %v930, %v939
      %v950 = vadd.f32 %v931, %v939
      %v951 = vadd.f32 %v932, %v939
      %v952 = vadd.f32 %v933, %v939
      %v953 = vadd.f32 %v934, %v939
      %v954 = vadd.f32 %v935, %v939
      %v955 = vadd.f32 %v936, %v939
      %v956 = vadd.f32 %v937, %v939
      %v957 = vpack.c.bf16 %v942, %v941
      %v958 = vpack.c.bf16 %v944, %v943
      %v959 = vpack.c.bf16 %v946, %v945
      %v960 = vpack.c.bf16 %v948, %v947
      %v961 = vpack.c.bf16 %v950, %v949
      %v962 = vpack.c.bf16 %v952, %v951
      %v963 = vpack.c.bf16 %v954, %v953
      %v964 = vpack.c.bf16 %v956, %v955
      %v965 = vld [vmem:[%s3] sm:$0xff]
      %v966 = vld [vmem:[%s3 + $0x8] sm:$0xf]
      %v967 = vld [vmem:[%s3 + $0xc] sm:$0xff]
      %v968 = vld [vmem:[%s3 + $0x14] sm:$0xf]
      %v969 = vld [vmem:[%s3 + $0x18] sm:$0xff]
      %v970 = vld [vmem:[%s3 + $0x20] sm:$0xf]
      %v971 = vld [vmem:[%s3 + $0x24] sm:$0xff]
      %v972 = vld [vmem:[%s3 + $0x2c] sm:$0xf]
      %v973 = vld [vmem:[%s3 + $0x30] sm:$0xff]
      %v974 = vld [vmem:[%s3 + $0x38] sm:$0xf]
      %v975 = vld [vmem:[%s3 + $0x3c] sm:$0xff]
      %v976 = vld [vmem:[%s3 + $0x44] sm:$0xf]
      %v977 = vld [vmem:[%s3 + $0x48] sm:$0xff]
      %v978 = vld [vmem:[%s3 + $0x50] sm:$0xf]
      %v979 = vld [vmem:[%s3 + $0x54] sm:$0xff]
      %v980 = vld [vmem:[%s3 + $0x5c] sm:$0xf]
      %v981 = vld [vmem:[%s3 + $0x60] sm:$0xff]
      %v982 = vld [vmem:[%s3 + $0x68] sm:$0xf]
      %v983 = vld [vmem:[%s3 + $0x6c] sm:$0xff]
      %v984 = vld [vmem:[%s3 + $0x74] sm:$0xf]
      %v985 = vld [vmem:[%s3 + $0x78] sm:$0xff]
      %v986 = vld [vmem:[%s3 + $0x80] sm:$0xf]
      %v987 = vld [vmem:[%s3 + $0x84] sm:$0xff]
      %v988 = vld [vmem:[%s3 + $0x8c] sm:$0xf]
      %v989 = vld [vmem:[%s3 + $0x90] sm:$0xff]
      %v990 = vld [vmem:[%s3 + $0x98] sm:$0xf]
      %v991 = vld [vmem:[%s3 + $0x9c] sm:$0xff]
      %v992 = vld [vmem:[%s3 + $0xa4] sm:$0xf]
      %v993 = vld [vmem:[%s3 + $0xa8] sm:$0xff]
      %v994 = vld [vmem:[%s3 + $0xb0] sm:$0xf]
      %v995 = vld [vmem:[%s3 + $0xb4] sm:$0xff]
      %v996 = vld [vmem:[%s3 + $0xbc] sm:$0xf]
      %v1029 = vunpack.c.l.b16 %v965
      %v1030 = vunpack.c.h.b16 %v965
      %v1031 = vunpack.c.l.b16 %v966
      %v1032 = vunpack.c.l.b16 %v967
      %v1033 = vunpack.c.h.b16 %v967
      %v1034 = vunpack.c.l.b16 %v968
      %v1035 = vunpack.c.l.b16 %v969
      %v1036 = vunpack.c.h.b16 %v969
      %v1037 = vunpack.c.l.b16 %v970
      %v1038 = vunpack.c.l.b16 %v971
      %v1039 = vunpack.c.h.b16 %v971
      %v1040 = vunpack.c.l.b16 %v972
      %v1041 = vunpack.c.l.b16 %v973
      %v1042 = vunpack.c.h.b16 %v973
      %v1043 = vunpack.c.l.b16 %v974
      %v1044 = vunpack.c.l.b16 %v975
      %v1045 = vunpack.c.h.b16 %v975
      %v1046 = vunpack.c.l.b16 %v976
      %v1047 = vunpack.c.l.b16 %v977
      %v1048 = vunpack.c.h.b16 %v977
      %v1049 = vunpack.c.l.b16 %v978
      %v1050 = vunpack.c.l.b16 %v979
      %v1051 = vunpack.c.h.b16 %v979
      %v1052 = vunpack.c.l.b16 %v980
      %v1053 = vunpack.c.l.b16 %v981
      %v1054 = vunpack.c.h.b16 %v981
      %v1055 = vunpack.c.l.b16 %v982
      %v1056 = vunpack.c.l.b16 %v983
      %v1057 = vunpack.c.h.b16 %v983
      %v1058 = vunpack.c.l.b16 %v984
      %v1059 = vunpack.c.l.b16 %v985
      %v1060 = vunpack.c.h.b16 %v985
      %v1061 = vunpack.c.l.b16 %v986
      %v1062 = vunpack.c.l.b16 %v987
      %v1063 = vunpack.c.h.b16 %v987
      %v1064 = vunpack.c.l.b16 %v988
      %v1065 = vunpack.c.l.b16 %v989
      %v1066 = vunpack.c.h.b16 %v989
      %v1067 = vunpack.c.l.b16 %v990
      %v1068 = vunpack.c.l.b16 %v991
      %v1069 = vunpack.c.h.b16 %v991
      %v1070 = vunpack.c.l.b16 %v992
      %v1071 = vunpack.c.l.b16 %v993
      %v1072 = vunpack.c.h.b16 %v993
      %v1073 = vunpack.c.l.b16 %v994
      %v1074 = vunpack.c.l.b16 %v995
      %v1075 = vunpack.c.h.b16 %v995
      %v1076 = vunpack.c.l.b16 %v996
      %v1077 = vpack.c.b16 %v1032, %v1029
      %v1078 = vpack.c.b16 %v1033, %v1030
      %v1079 = vpack.c.b16 %v1034, %v1031
      %v1080 = vpack.c.b16 %v1038, %v1035
      %v1081 = vpack.c.b16 %v1039, %v1036
      %v1082 = vpack.c.b16 %v1040, %v1037
      %v1083 = vpack.c.b16 %v1044, %v1041
      %v1084 = vpack.c.b16 %v1045, %v1042
      %v1085 = vpack.c.b16 %v1046, %v1043
      %v1086 = vpack.c.b16 %v1050, %v1047
      %v1087 = vpack.c.b16 %v1051, %v1048
      %v1088 = vpack.c.b16 %v1052, %v1049
      %v1089 = vpack.c.b16 %v1056, %v1053
      %v1090 = vpack.c.b16 %v1057, %v1054
      %v1091 = vpack.c.b16 %v1058, %v1055
      %v1092 = vpack.c.b16 %v1062, %v1059
      %v1093 = vpack.c.b16 %v1063, %v1060
      %v1094 = vpack.c.b16 %v1064, %v1061
      %v1095 = vpack.c.b16 %v1068, %v1065
      %v1096 = vpack.c.b16 %v1069, %v1066
      %v1097 = vpack.c.b16 %v1070, %v1067
      %v1098 = vpack.c.b16 %v1074, %v1071
      %v1099 = vpack.c.b16 %v1075, %v1072
      %v1100 = vpack.c.b16 %v1076, %v1073
      %1125 = vmatpush.bf16.msra.mxu0 %v1098
      %1126 = vmatpush.bf16.msra.mxu0 %v1095
      %1127 = vmatpush.bf16.msra.mxu0 %v1092
      %1128 = vmatpush.bf16.msra.mxu0 %v1089
      %1129 = vmatpush.bf16.msra.mxu0 %v1086
      %1130 = vmatpush.bf16.msra.mxu0 %v1083
      %1131 = vmatpush.bf16.msra.mxu0 %v1080
      %1132 = vmatpush.bf16.msra.mxu0 %v1077
      %1133 = vmatmul.bf16.gmra.mxu0 %v957
      %v1134 = vpop.f32.mrf.mxu0
      %v1135 = vadd.f32 0.0, %v1134
      %v1136 = vpop.f32.mrf.mxu0
      %v1137 = vadd.f32 0.0, %v1136
      %1138 = vmatmul.bf16.gmra.mxu0 %v958
      %v1139 = vpop.f32.mrf.mxu0
      %v1140 = vadd.f32 0.0, %v1139
      %v1141 = vpop.f32.mrf.mxu0
      %v1142 = vadd.f32 0.0, %v1141
      %1143 = vmatmul.bf16.gmra.mxu0 %v959
      %v1144 = vpop.f32.mrf.mxu0
      %v1145 = vadd.f32 0.0, %v1144
      %v1146 = vpop.f32.mrf.mxu0
      %v1147 = vadd.f32 0.0, %v1146
      %1148 = vmatmul.bf16.gmra.mxu0 %v960
      %v1149 = vpop.f32.mrf.mxu0
      %v1150 = vadd.f32 0.0, %v1149
      %v1151 = vpop.f32.mrf.mxu0
      %v1152 = vadd.f32 0.0, %v1151
      %1153 = vmatmul.bf16.gmra.mxu0 %v961
      %v1154 = vpop.f32.mrf.mxu0
      %v1155 = vadd.f32 0.0, %v1154
      %v1156 = vpop.f32.mrf.mxu0
      %v1157 = vadd.f32 0.0, %v1156
      %1158 = vmatmul.bf16.gmra.mxu0 %v962
      %v1159 = vpop.f32.mrf.mxu0
      %v1160 = vadd.f32 0.0, %v1159
      %v1161 = vpop.f32.mrf.mxu0
      %v1162 = vadd.f32 0.0, %v1161
      %1163 = vmatmul.bf16.gmra.mxu0 %v963
      %v1164 = vpop.f32.mrf.mxu0
      %v1165 = vadd.f32 0.0, %v1164
      %v1166 = vpop.f32.mrf.mxu0
      %v1167 = vadd.f32 0.0, %v1166
      %1168 = vmatmul.bf16.gmra.mxu0 %v964
      %v1169 = vpop.f32.mrf.mxu0
      %v1170 = vadd.f32 0.0, %v1169
      %v1171 = vpop.f32.mrf.mxu0
      %v1172 = vadd.f32 0.0, %v1171
      %1173 = vdwg.mxu0
      %1174 = vmatpush.bf16.msra.mxu0 %v1099
      %1175 = vmatpush.bf16.msra.mxu0 %v1096
      %1176 = vmatpush.bf16.msra.mxu0 %v1093
      %1177 = vmatpush.bf16.msra.mxu0 %v1090
      %1178 = vmatpush.bf16.msra.mxu0 %v1087
      %1179 = vmatpush.bf16.msra.mxu0 %v1084
      %1180 = vmatpush.bf16.msra.mxu0 %v1081
      %1181 = vmatpush.bf16.msra.mxu0 %v1078
      %1182 = vmatmul.bf16.gmra.mxu0 %v957
      %v1183 = vpop.f32.mrf.mxu0
      %v1184 = vadd.f32 0.0, %v1183
      %v1185 = vpop.f32.mrf.mxu0
      %v1186 = vadd.f32 0.0, %v1185
      %1187 = vmatmul.bf16.gmra.mxu0 %v958
      %v1188 = vpop.f32.mrf.mxu0
      %v1189 = vadd.f32 0.0, %v1188
      %v1190 = vpop.f32.mrf.mxu0
      %v1191 = vadd.f32 0.0, %v1190
      %1192 = vmatmul.bf16.gmra.mxu0 %v959
      %v1193 = vpop.f32.mrf.mxu0
      %v1194 = vadd.f32 0.0, %v1193
      %v1195 = vpop.f32.mrf.mxu0
      %v1196 = vadd.f32 0.0, %v1195
      %1197 = vmatmul.bf16.gmra.mxu0 %v960
      %v1198 = vpop.f32.mrf.mxu0
      %v1199 = vadd.f32 0.0, %v1198
      %v1200 = vpop.f32.mrf.mxu0
      %v1201 = vadd.f32 0.0, %v1200
      %1202 = vmatmul.bf16.gmra.mxu0 %v961
      %v1203 = vpop.f32.mrf.mxu0
      %v1204 = vadd.f32 0.0, %v1203
      %v1205 = vpop.f32.mrf.mxu0
      %v1206 = vadd.f32 0.0, %v1205
      %1207 = vmatmul.bf16.gmra.mxu0 %v962
      %v1208 = vpop.f32.mrf.mxu0
      %v1209 = vadd.f32 0.0, %v1208
      %v1210 = vpop.f32.mrf.mxu0
      %v1211 = vadd.f32 0.0, %v1210
      %1212 = vmatmul.bf16.gmra.mxu0 %v963
      %v1213 = vpop.f32.mrf.mxu0
      %v1214 = vadd.f32 0.0, %v1213
      %v1215 = vpop.f32.mrf.mxu0
      %v1216 = vadd.f32 0.0, %v1215
      %1217 = vmatmul.bf16.gmra.mxu0 %v964
      %v1218 = vpop.f32.mrf.mxu0
      %v1219 = vadd.f32 0.0, %v1218
      %v1220 = vpop.f32.mrf.mxu0
      %v1221 = vadd.f32 0.0, %v1220
      %1222 = vdwg.mxu0
      %1223 = vmatpush.bf16.msra.mxu0 %v1100
      %1224 = vmatpush.bf16.msra.mxu0 %v1097
      %1225 = vmatpush.bf16.msra.mxu0 %v1094
      %1226 = vmatpush.bf16.msra.mxu0 %v1091
      %1227 = vmatpush.bf16.msra.mxu0 %v1088
      %1228 = vmatpush.bf16.msra.mxu0 %v1085
      %1229 = vmatpush.bf16.msra.mxu0 %v1082
      %1230 = vmatpush.bf16.msra.mxu0 %v1079
      %1231 = vmatmul.bf16.gmra.mxu0 %v957
      %v1232 = vpop.f32.mrf.mxu0
      %v1233 = vadd.f32 0.0, %v1232
      %v1234 = vpop.f32.mrf.mxu0
      %v1235 = vadd.f32 0.0, %v1234
      %1236 = vmatmul.bf16.gmra.mxu0 %v958
      %v1237 = vpop.f32.mrf.mxu0
      %v1238 = vadd.f32 0.0, %v1237
      %v1239 = vpop.f32.mrf.mxu0
      %v1240 = vadd.f32 0.0, %v1239
      %1241 = vmatmul.bf16.gmra.mxu0 %v959
      %v1242 = vpop.f32.mrf.mxu0
      %v1243 = vadd.f32 0.0, %v1242
      %v1244 = vpop.f32.mrf.mxu0
      %v1245 = vadd.f32 0.0, %v1244
      %1246 = vmatmul.bf16.gmra.mxu0 %v960
      %v1247 = vpop.f32.mrf.mxu0
      %v1248 = vadd.f32 0.0, %v1247
      %v1249 = vpop.f32.mrf.mxu0
      %v1250 = vadd.f32 0.0, %v1249
      %1251 = vmatmul.bf16.gmra.mxu0 %v961
      %v1252 = vpop.f32.mrf.mxu0
      %v1253 = vadd.f32 0.0, %v1252
      %v1254 = vpop.f32.mrf.mxu0
      %v1255 = vadd.f32 0.0, %v1254
      %1256 = vmatmul.bf16.gmra.mxu0 %v962
      %v1257 = vpop.f32.mrf.mxu0
      %v1258 = vadd.f32 0.0, %v1257
      %v1259 = vpop.f32.mrf.mxu0
      %v1260 = vadd.f32 0.0, %v1259
      %1261 = vmatmul.bf16.gmra.mxu0 %v963
      %v1262 = vpop.f32.mrf.mxu0
      %v1263 = vadd.f32 0.0, %v1262
      %v1264 = vpop.f32.mrf.mxu0
      %v1265 = vadd.f32 0.0, %v1264
      %1266 = vmatmul.bf16.gmra.mxu0 %v964
      %v1267 = vpop.f32.mrf.mxu0
      %v1268 = vadd.f32 0.0, %v1267
      %v1269 = vpop.f32.mrf.mxu0
      %v1270 = vadd.f32 0.0, %v1269
      %1271 = vdwg.mxu0
      %v1272 = vld [vmem:[%s4] sm:$0xf]
      %v1273 = vld [vmem:[%s4 + $0x4] sm:$0xf]
      %v1274 = vld [vmem:[%s4 + $0x8] sm:$0xf]
      %v1275 = vld [vmem:[%s4 + $0xc] sm:$0xf]
      %v1276 = vld [vmem:[%s4 + $0x10] sm:$0xf]
      %v1277 = vld [vmem:[%s4 + $0x14] sm:$0xf]
      %v1278 = vld [vmem:[%s4 + $0x18] sm:$0xf]
      %v1279 = vld [vmem:[%s4 + $0x1c] sm:$0xf]
      %v1280 = vld [vmem:[%s4 + $0x20] sm:$0xf]
      %v1281 = vld [vmem:[%s4 + $0x24] sm:$0xf]
      %v1282 = vld [vmem:[%s4 + $0x28] sm:$0xf]
      %v1283 = vld [vmem:[%s4 + $0x2c] sm:$0xf]
      %v1284 = vld [vmem:[%s4 + $0x30] sm:$0xf]
      %v1285 = vld [vmem:[%s4 + $0x34] sm:$0xf]
      %v1286 = vld [vmem:[%s4 + $0x38] sm:$0xf]
      %v1287 = vld [vmem:[%s4 + $0x3c] sm:$0xf]
      %v1288 = vpack.c.bf16 %v1137, %v1135
      %v1289 = vpack.c.bf16 %v1142, %v1140
      %v1290 = vpack.c.bf16 %v1147, %v1145
      %v1291 = vpack.c.bf16 %v1152, %v1150
      %v1292 = vpack.c.bf16 %v1157, %v1155
      %v1293 = vpack.c.bf16 %v1162, %v1160
      %v1294 = vpack.c.bf16 %v1167, %v1165
      %v1295 = vpack.c.bf16 %v1172, %v1170
      %v1296 = vpack.c.bf16 %v1186, %v1184
      %v1297 = vpack.c.bf16 %v1191, %v1189
      %v1298 = vpack.c.bf16 %v1196, %v1194
      %v1299 = vpack.c.bf16 %v1201, %v1199
      %v1300 = vpack.c.bf16 %v1206, %v1204
      %v1301 = vpack.c.bf16 %v1211, %v1209
      %v1302 = vpack.c.bf16 %v1216, %v1214
      %v1303 = vpack.c.bf16 %v1221, %v1219
      %vm1304 = vcmask 523264
      %v1306 = vsel %vm1304, %v1288, 0
      %v1309 = vsel %vm1304, %v1289, 0
      %v1312 = vsel %vm1304, %v1290, 0
      %v1315 = vsel %vm1304, %v1291, 0
      %v1318 = vsel %vm1304, %v1292, 0
      %v1321 = vsel %vm1304, %v1293, 0
      %v1324 = vsel %vm1304, %v1294, 0
      %v1327 = vsel %vm1304, %v1295, 0
      %v1330 = vsel %vm1304, %v1296, 0
      %v1333 = vsel %vm1304, %v1297, 0
      %v1336 = vsel %vm1304, %v1298, 0
      %v1339 = vsel %vm1304, %v1299, 0
      %v1342 = vsel %vm1304, %v1300, 0
      %v1345 = vsel %vm1304, %v1301, 0
      %v1348 = vsel %vm1304, %v1302, 0
      %v1351 = vsel %vm1304, %v1303, 0
      %1353 = vmatpush.bf16.xpose.msra.mxu0 %v1351
      %1354 = vmatpush.bf16.xpose.msra.mxu0 %v1348
      %1355 = vmatpush.bf16.xpose.msra.mxu0 %v1345
      %1356 = vmatpush.bf16.xpose.msra.mxu0 %v1342
      %1357 = vmatpush.bf16.xpose.msra.mxu0 %v1339
      %1358 = vmatpush.bf16.xpose.msra.mxu0 %v1336
      %1359 = vmatpush.bf16.xpose.msra.mxu0 %v1333
      %1360 = vmatpush.bf16.xpose.msra.mxu0 %v1330
      %1361 = vmatmul.bf16.gmra.mxu0 %v1306
      %v1362 = vpop.f32.mrf.mxu0
      %v1363 = vadd.f32 0.0, %v1362
      %v1364 = vpop.f32.mrf.mxu0
      %v1365 = vadd.f32 0.0, %v1364
      %1366 = vmatmul.bf16.gmra.mxu0 %v1309
      %v1367 = vpop.f32.mrf.mxu0
      %v1368 = vadd.f32 0.0, %v1367
      %v1369 = vpop.f32.mrf.mxu0
      %v1370 = vadd.f32 0.0, %v1369
      %1371 = vmatmul.bf16.gmra.mxu0 %v1312
      %v1372 = vpop.f32.mrf.mxu0
      %v1373 = vadd.f32 0.0, %v1372
      %v1374 = vpop.f32.mrf.mxu0
      %v1375 = vadd.f32 0.0, %v1374
      %1376 = vmatmul.bf16.gmra.mxu0 %v1315
      %v1377 = vpop.f32.mrf.mxu0
      %v1378 = vadd.f32 0.0, %v1377
      %v1379 = vpop.f32.mrf.mxu0
      %v1380 = vadd.f32 0.0, %v1379
      %1381 = vmatmul.bf16.gmra.mxu0 %v1318
      %v1382 = vpop.f32.mrf.mxu0
      %v1383 = vadd.f32 0.0, %v1382
      %v1384 = vpop.f32.mrf.mxu0
      %v1385 = vadd.f32 0.0, %v1384
      %1386 = vmatmul.bf16.gmra.mxu0 %v1321
      %v1387 = vpop.f32.mrf.mxu0
      %v1388 = vadd.f32 0.0, %v1387
      %v1389 = vpop.f32.mrf.mxu0
      %v1390 = vadd.f32 0.0, %v1389
      %1391 = vmatmul.bf16.gmra.mxu0 %v1324
      %v1392 = vpop.f32.mrf.mxu0
      %v1393 = vadd.f32 0.0, %v1392
      %v1394 = vpop.f32.mrf.mxu0
      %v1395 = vadd.f32 0.0, %v1394
      %1396 = vmatmul.bf16.gmra.mxu0 %v1327
      %v1397 = vpop.f32.mrf.mxu0
      %v1398 = vadd.f32 0.0, %v1397
      %v1399 = vpop.f32.mrf.mxu0
      %v1400 = vadd.f32 0.0, %v1399
      %1401 = vdwg.mxu0
      %v1402 = vmul.f32 %v1363, 0.088388346
      %v1403 = vmul.f32 %v1365, 0.088388346
      %v1404 = vmul.f32 %v1368, 0.088388346
      %v1405 = vmul.f32 %v1370, 0.088388346
      %v1406 = vmul.f32 %v1373, 0.088388346
      %v1407 = vmul.f32 %v1375, 0.088388346
      %v1408 = vmul.f32 %v1378, 0.088388346
      %v1409 = vmul.f32 %v1380, 0.088388346
      %v1410 = vmul.f32 %v1383, 0.088388346
      %v1411 = vmul.f32 %v1385, 0.088388346
      %v1412 = vmul.f32 %v1388, 0.088388346
      %v1413 = vmul.f32 %v1390, 0.088388346
      %v1414 = vmul.f32 %v1393, 0.088388346
      %v1415 = vmul.f32 %v1395, 0.088388346
      %v1416 = vmul.f32 %v1398, 0.088388346
      %v1417 = vmul.f32 %v1400, 0.088388346
      %v1418 = vadd.f32 %v1402, %v574
      %v1419 = vadd.f32 %v1403, %v575
      %v1420 = vadd.f32 %v1404, %v576
      %v1421 = vadd.f32 %v1405, %v577
      %v1422 = vadd.f32 %v1406, %v578
      %v1423 = vadd.f32 %v1407, %v579
      %v1424 = vadd.f32 %v1408, %v580
      %v1425 = vadd.f32 %v1409, %v581
      %v1426 = vadd.f32 %v1410, %v582
      %v1427 = vadd.f32 %v1411, %v583
      %v1428 = vadd.f32 %v1412, %v584
      %v1429 = vadd.f32 %v1413, %v585
      %v1430 = vadd.f32 %v1414, %v586
      %v1431 = vadd.f32 %v1415, %v587
      %v1432 = vadd.f32 %v1416, %v588
      %v1433 = vadd.f32 %v1417, %v589
      %1434 = vmax.xlane.f32.xlu0 %v1418
      %v1435 = vpop.xlane.xlu0 %1434
      %1436 = vmax.xlane.f32.xlu0 %v1419
      %v1437 = vpop.xlane.xlu0 %1436
      %1438 = vmax.xlane.f32.xlu0 %v1420
      %v1439 = vpop.xlane.xlu0 %1438
      %1440 = vmax.xlane.f32.xlu0 %v1421
      %v1441 = vpop.xlane.xlu0 %1440
      %1442 = vmax.xlane.f32.xlu0 %v1422
      %v1443 = vpop.xlane.xlu0 %1442
      %1444 = vmax.xlane.f32.xlu0 %v1423
      %v1445 = vpop.xlane.xlu0 %1444
      %1446 = vmax.xlane.f32.xlu0 %v1424
      %v1447 = vpop.xlane.xlu0 %1446
      %1448 = vmax.xlane.f32.xlu0 %v1425
      %v1449 = vpop.xlane.xlu0 %1448
      %1450 = vmax.xlane.f32.xlu0 %v1426
      %v1451 = vpop.xlane.xlu0 %1450
      %1452 = vmax.xlane.f32.xlu0 %v1427
      %v1453 = vpop.xlane.xlu0 %1452
      %1454 = vmax.xlane.f32.xlu0 %v1428
      %v1455 = vpop.xlane.xlu0 %1454
      %1456 = vmax.xlane.f32.xlu0 %v1429
      %v1457 = vpop.xlane.xlu0 %1456
      %1458 = vmax.xlane.f32.xlu0 %v1430
      %v1459 = vpop.xlane.xlu0 %1458
      %1460 = vmax.xlane.f32.xlu0 %v1431
      %v1461 = vpop.xlane.xlu0 %1460
      %1462 = vmax.xlane.f32.xlu0 %v1432
      %v1463 = vpop.xlane.xlu0 %1462
      %1464 = vmax.xlane.f32.xlu0 %v1433
      %v1465 = vpop.xlane.xlu0 %1464
      %v1466 = vsub.f32 %v1418, %v1435
      %v1467 = vsub.f32 %v1419, %v1437
      %v1468 = vsub.f32 %v1420, %v1439
      %v1469 = vsub.f32 %v1421, %v1441
      %v1470 = vsub.f32 %v1422, %v1443
      %v1471 = vsub.f32 %v1423, %v1445
      %v1472 = vsub.f32 %v1424, %v1447
      %v1473 = vsub.f32 %v1425, %v1449
      %v1474 = vsub.f32 %v1426, %v1451
      %v1475 = vsub.f32 %v1427, %v1453
      %v1476 = vsub.f32 %v1428, %v1455
      %v1477 = vsub.f32 %v1429, %v1457
      %v1478 = vsub.f32 %v1430, %v1459
      %v1479 = vsub.f32 %v1431, %v1461
      %v1480 = vsub.f32 %v1432, %v1463
      %v1481 = vsub.f32 %v1433, %v1465
      %v1482 = vmul.f32 %v1466, 1.442695
      %v1483 = vpow.pop %v1482
      %v1484 = vmul.f32 %v1467, 1.442695
      %v1485 = vpow.pop %v1484
      %v1486 = vmul.f32 %v1468, 1.442695
      %v1487 = vpow.pop %v1486
      %v1488 = vmul.f32 %v1469, 1.442695
      %v1489 = vpow.pop %v1488
      %v1490 = vmul.f32 %v1470, 1.442695
      %v1491 = vpow.pop %v1490
      %v1492 = vmul.f32 %v1471, 1.442695
      %v1493 = vpow.pop %v1492
      %v1494 = vmul.f32 %v1472, 1.442695
      %v1495 = vpow.pop %v1494
      %v1496 = vmul.f32 %v1473, 1.442695
      %v1497 = vpow.pop %v1496
      %v1498 = vmul.f32 %v1474, 1.442695
      %v1499 = vpow.pop %v1498
      %v1500 = vmul.f32 %v1475, 1.442695
      %v1501 = vpow.pop %v1500
      %v1502 = vmul.f32 %v1476, 1.442695
      %v1503 = vpow.pop %v1502
      %v1504 = vmul.f32 %v1477, 1.442695
      %v1505 = vpow.pop %v1504
      %v1506 = vmul.f32 %v1478, 1.442695
      %v1507 = vpow.pop %v1506
      %v1508 = vmul.f32 %v1479, 1.442695
      %v1509 = vpow.pop %v1508
      %v1510 = vmul.f32 %v1480, 1.442695
      %v1511 = vpow.pop %v1510
      %v1512 = vmul.f32 %v1481, 1.442695
      %v1513 = vpow.pop %v1512
      %1514 = vadd.xlane.f32.xlu0 %v1483
      %v1515 = vpop.xlane.xlu0 %1514
      %1516 = vadd.xlane.f32.xlu0 %v1485
      %v1517 = vpop.xlane.xlu0 %1516
      %1518 = vadd.xlane.f32.xlu0 %v1487
      %v1519 = vpop.xlane.xlu0 %1518
      %1520 = vadd.xlane.f32.xlu0 %v1489
      %v1521 = vpop.xlane.xlu0 %1520
      %1522 = vadd.xlane.f32.xlu0 %v1491
      %v1523 = vpop.xlane.xlu0 %1522
      %1524 = vadd.xlane.f32.xlu0 %v1493
      %v1525 = vpop.xlane.xlu0 %1524
      %1526 = vadd.xlane.f32.xlu0 %v1495
      %v1527 = vpop.xlane.xlu0 %1526
      %1528 = vadd.xlane.f32.xlu0 %v1497
      %v1529 = vpop.xlane.xlu0 %1528
      %1530 = vadd.xlane.f32.xlu0 %v1499
      %v1531 = vpop.xlane.xlu0 %1530
      %1532 = vadd.xlane.f32.xlu0 %v1501
      %v1533 = vpop.xlane.xlu0 %1532
      %1534 = vadd.xlane.f32.xlu0 %v1503
      %v1535 = vpop.xlane.xlu0 %1534
      %1536 = vadd.xlane.f32.xlu0 %v1505
      %v1537 = vpop.xlane.xlu0 %1536
      %1538 = vadd.xlane.f32.xlu0 %v1507
      %v1539 = vpop.xlane.xlu0 %1538
      %1540 = vadd.xlane.f32.xlu0 %v1509
      %v1541 = vpop.xlane.xlu0 %1540
      %1542 = vadd.xlane.f32.xlu0 %v1511
      %v1543 = vpop.xlane.xlu0 %1542
      %1544 = vadd.xlane.f32.xlu0 %v1513
      %v1545 = vpop.xlane.xlu0 %1544
      %v1546 = vrcp.pop %v1515
      %v1547 = vrcp.pop %v1517
      %v1548 = vrcp.pop %v1519
      %v1549 = vrcp.pop %v1521
      %v1550 = vrcp.pop %v1523
      %v1551 = vrcp.pop %v1525
      %v1552 = vrcp.pop %v1527
      %v1553 = vrcp.pop %v1529
      %v1554 = vrcp.pop %v1531
      %v1555 = vrcp.pop %v1533
      %v1556 = vrcp.pop %v1535
      %v1557 = vrcp.pop %v1537
      %v1558 = vrcp.pop %v1539
      %v1559 = vrcp.pop %v1541
      %v1560 = vrcp.pop %v1543
      %v1561 = vrcp.pop %v1545
      %v1562 = vmul.f32 %v1483, %v1546
      %v1563 = vmul.f32 %v1485, %v1547
      %v1564 = vmul.f32 %v1487, %v1548
      %v1565 = vmul.f32 %v1489, %v1549
      %v1566 = vmul.f32 %v1491, %v1550
      %v1567 = vmul.f32 %v1493, %v1551
      %v1568 = vmul.f32 %v1495, %v1552
      %v1569 = vmul.f32 %v1497, %v1553
      %v1570 = vmul.f32 %v1499, %v1554
      %v1571 = vmul.f32 %v1501, %v1555
      %v1572 = vmul.f32 %v1503, %v1556
      %v1573 = vmul.f32 %v1505, %v1557
      %v1574 = vmul.f32 %v1507, %v1558
      %v1575 = vmul.f32 %v1509, %v1559
      %v1576 = vmul.f32 %v1511, %v1560
      %v1577 = vmul.f32 %v1513, %v1561
      %v1578 = vpack.c.bf16 %v1563, %v1562
      %v1579 = vpack.c.bf16 %v1565, %v1564
      %v1580 = vpack.c.bf16 %v1567, %v1566
      %v1581 = vpack.c.bf16 %v1569, %v1568
      %v1582 = vpack.c.bf16 %v1571, %v1570
      %v1583 = vpack.c.bf16 %v1573, %v1572
      %v1584 = vpack.c.bf16 %v1575, %v1574
      %v1585 = vpack.c.bf16 %v1577, %v1576
      %v1586 = vpack.c.bf16 %v1235, %v1233
      %v1587 = vpack.c.bf16 %v1240, %v1238
      %v1588 = vpack.c.bf16 %v1245, %v1243
      %v1589 = vpack.c.bf16 %v1250, %v1248
      %v1590 = vpack.c.bf16 %v1255, %v1253
      %v1591 = vpack.c.bf16 %v1260, %v1258
      %v1592 = vpack.c.bf16 %v1265, %v1263
      %v1593 = vpack.c.bf16 %v1270, %v1268
      %1594 = vmatpush.bf16.msra.mxu0 %v1593
      %1595 = vmatpush.bf16.msra.mxu0 %v1592
      %1596 = vmatpush.bf16.msra.mxu0 %v1591
      %1597 = vmatpush.bf16.msra.mxu0 %v1590
      %1598 = vmatpush.bf16.msra.mxu0 %v1589
      %1599 = vmatpush.bf16.msra.mxu0 %v1588
      %1600 = vmatpush.bf16.msra.mxu0 %v1587
      %1601 = vmatpush.bf16.msra.mxu0 %v1586
      %1602 = vmatmul.bf16.gmra.mxu0 %v1578
      %v1603 = vpop.f32.mrf.mxu0
      %v1604 = vadd.f32 0.0, %v1603
      %v1605 = vpop.f32.mrf.mxu0
      %v1606 = vadd.f32 0.0, %v1605
      %1607 = vmatmul.bf16.gmra.mxu0 %v1579
      %v1608 = vpop.f32.mrf.mxu0
      %v1609 = vadd.f32 0.0, %v1608
      %v1610 = vpop.f32.mrf.mxu0
      %v1611 = vadd.f32 0.0, %v1610
      %1612 = vmatmul.bf16.gmra.mxu0 %v1580
      %v1613 = vpop.f32.mrf.mxu0
      %v1614 = vadd.f32 0.0, %v1613
      %v1615 = vpop.f32.mrf.mxu0
      %v1616 = vadd.f32 0.0, %v1615
      %1617 = vmatmul.bf16.gmra.mxu0 %v1581
      %v1618 = vpop.f32.mrf.mxu0
      %v1619 = vadd.f32 0.0, %v1618
      %v1620 = vpop.f32.mrf.mxu0
      %v1621 = vadd.f32 0.0, %v1620
      %1622 = vmatmul.bf16.gmra.mxu0 %v1582
      %v1623 = vpop.f32.mrf.mxu0
      %v1624 = vadd.f32 0.0, %v1623
      %v1625 = vpop.f32.mrf.mxu0
      %v1626 = vadd.f32 0.0, %v1625
      %1627 = vmatmul.bf16.gmra.mxu0 %v1583
      %v1628 = vpop.f32.mrf.mxu0
      %v1629 = vadd.f32 0.0, %v1628
      %v1630 = vpop.f32.mrf.mxu0
      %v1631 = vadd.f32 0.0, %v1630
      %1632 = vmatmul.bf16.gmra.mxu0 %v1584
      %v1633 = vpop.f32.mrf.mxu0
      %v1634 = vadd.f32 0.0, %v1633
      %v1635 = vpop.f32.mrf.mxu0
      %v1636 = vadd.f32 0.0, %v1635
      %1637 = vmatmul.bf16.gmra.mxu0 %v1585
      %v1638 = vpop.f32.mrf.mxu0
      %v1639 = vadd.f32 0.0, %v1638
      %v1640 = vpop.f32.mrf.mxu0
      %v1641 = vadd.f32 0.0, %v1640
      %1642 = vdwg.mxu0
      %v1643 = vpack.c.bf16 %v1606, %v1604
      %v1644 = vpack.c.bf16 %v1611, %v1609
      %v1645 = vpack.c.bf16 %v1616, %v1614
      %v1646 = vpack.c.bf16 %v1621, %v1619
      %v1647 = vpack.c.bf16 %v1626, %v1624
      %v1648 = vpack.c.bf16 %v1631, %v1629
      %v1649 = vpack.c.bf16 %v1636, %v1634
      %v1650 = vpack.c.bf16 %v1641, %v1639
      %1659 = vrot.lane.b32.xlu0 %v1288, 64
      %v1660 = vpop.permute.xlu0 %1659
      %1661 = vrot.lane.b32.xlu0 %v1289, 64
      %v1662 = vpop.permute.xlu0 %1661
      %1663 = vrot.lane.b32.xlu0 %v1290, 64
      %v1664 = vpop.permute.xlu0 %1663
      %1665 = vrot.lane.b32.xlu0 %v1291, 64
      %v1666 = vpop.permute.xlu0 %1665
      %1667 = vrot.lane.b32.xlu0 %v1292, 64
      %v1668 = vpop.permute.xlu0 %1667
      %1669 = vrot.lane.b32.xlu0 %v1293, 64
      %v1670 = vpop.permute.xlu0 %1669
      %1671 = vrot.lane.b32.xlu0 %v1294, 64
      %v1672 = vpop.permute.xlu0 %1671
      %1673 = vrot.lane.b32.xlu0 %v1295, 64
      %v1674 = vpop.permute.xlu0 %1673
      %1683 = vrot.lane.b32.xlu0 %v1296, 64
      %v1684 = vpop.permute.xlu0 %1683
      %1685 = vrot.lane.b32.xlu0 %v1297, 64
      %v1686 = vpop.permute.xlu0 %1685
      %1687 = vrot.lane.b32.xlu0 %v1298, 64
      %v1688 = vpop.permute.xlu0 %1687
      %1689 = vrot.lane.b32.xlu0 %v1299, 64
      %v1690 = vpop.permute.xlu0 %1689
      %1691 = vrot.lane.b32.xlu0 %v1300, 64
      %v1692 = vpop.permute.xlu0 %1691
      %1693 = vrot.lane.b32.xlu0 %v1301, 64
      %v1694 = vpop.permute.xlu0 %1693
      %1695 = vrot.lane.b32.xlu0 %v1302, 64
      %v1696 = vpop.permute.xlu0 %1695
      %1697 = vrot.lane.b32.xlu0 %v1303, 64
      %v1698 = vpop.permute.xlu0 %1697
      %v1700 = vsel %vm1304, %v1660, 0
      %v1703 = vsel %vm1304, %v1662, 0
      %v1706 = vsel %vm1304, %v1664, 0
      %v1709 = vsel %vm1304, %v1666, 0
      %v1712 = vsel %vm1304, %v1668, 0
      %v1715 = vsel %vm1304, %v1670, 0
      %v1718 = vsel %vm1304, %v1672, 0
      %v1721 = vsel %vm1304, %v1674, 0
      %v1724 = vsel %vm1304, %v1684, 0
      %v1727 = vsel %vm1304, %v1686, 0
      %v1730 = vsel %vm1304, %v1688, 0
      %v1733 = vsel %vm1304, %v1690, 0
      %v1736 = vsel %vm1304, %v1692, 0
      %v1739 = vsel %vm1304, %v1694, 0
      %v1742 = vsel %vm1304, %v1696, 0
      %v1745 = vsel %vm1304, %v1698, 0
      %1747 = vmatpush.bf16.xpose.msra.mxu0 %v1745
      %1748 = vmatpush.bf16.xpose.msra.mxu0 %v1742
      %1749 = vmatpush.bf16.xpose.msra.mxu0 %v1739
      %1750 = vmatpush.bf16.xpose.msra.mxu0 %v1736
      %1751 = vmatpush.bf16.xpose.msra.mxu0 %v1733
      %1752 = vmatpush.bf16.xpose.msra.mxu0 %v1730
      %1753 = vmatpush.bf16.xpose.msra.mxu0 %v1727
      %1754 = vmatpush.bf16.xpose.msra.mxu0 %v1724
      %1755 = vmatmul.bf16.gmra.mxu0 %v1700
      %v1756 = vpop.f32.mrf.mxu0
      %v1757 = vadd.f32 0.0, %v1756
      %v1758 = vpop.f32.mrf.mxu0
      %v1759 = vadd.f32 0.0, %v1758
      %1760 = vmatmul.bf16.gmra.mxu0 %v1703
      %v1761 = vpop.f32.mrf.mxu0
      %v1762 = vadd.f32 0.0, %v1761
      %v1763 = vpop.f32.mrf.mxu0
      %v1764 = vadd.f32 0.0, %v1763
      %1765 = vmatmul.bf16.gmra.mxu0 %v1706
      %v1766 = vpop.f32.mrf.mxu0
      %v1767 = vadd.f32 0.0, %v1766
      %v1768 = vpop.f32.mrf.mxu0
      %v1769 = vadd.f32 0.0, %v1768
      %1770 = vmatmul.bf16.gmra.mxu0 %v1709
      %v1771 = vpop.f32.mrf.mxu0
      %v1772 = vadd.f32 0.0, %v1771
      %v1773 = vpop.f32.mrf.mxu0
      %v1774 = vadd.f32 0.0, %v1773
      %1775 = vmatmul.bf16.gmra.mxu0 %v1712
      %v1776 = vpop.f32.mrf.mxu0
      %v1777 = vadd.f32 0.0, %v1776
      %v1778 = vpop.f32.mrf.mxu0
      %v1779 = vadd.f32 0.0, %v1778
      %1780 = vmatmul.bf16.gmra.mxu0 %v1715
      %v1781 = vpop.f32.mrf.mxu0
      %v1782 = vadd.f32 0.0, %v1781
      %v1783 = vpop.f32.mrf.mxu0
      %v1784 = vadd.f32 0.0, %v1783
      %1785 = vmatmul.bf16.gmra.mxu0 %v1718
      %v1786 = vpop.f32.mrf.mxu0
      %v1787 = vadd.f32 0.0, %v1786
      %v1788 = vpop.f32.mrf.mxu0
      %v1789 = vadd.f32 0.0, %v1788
      %1790 = vmatmul.bf16.gmra.mxu0 %v1721
      %v1791 = vpop.f32.mrf.mxu0
      %v1792 = vadd.f32 0.0, %v1791
      %v1793 = vpop.f32.mrf.mxu0
      %v1794 = vadd.f32 0.0, %v1793
      %1795 = vdwg.mxu0
      %v1796 = vmul.f32 %v1757, 0.088388346
      %v1797 = vmul.f32 %v1759, 0.088388346
      %v1798 = vmul.f32 %v1762, 0.088388346
      %v1799 = vmul.f32 %v1764, 0.088388346
      %v1800 = vmul.f32 %v1767, 0.088388346
      %v1801 = vmul.f32 %v1769, 0.088388346
      %v1802 = vmul.f32 %v1772, 0.088388346
      %v1803 = vmul.f32 %v1774, 0.088388346
      %v1804 = vmul.f32 %v1777, 0.088388346
      %v1805 = vmul.f32 %v1779, 0.088388346
      %v1806 = vmul.f32 %v1782, 0.088388346
      %v1807 = vmul.f32 %v1784, 0.088388346
      %v1808 = vmul.f32 %v1787, 0.088388346
      %v1809 = vmul.f32 %v1789, 0.088388346
      %v1810 = vmul.f32 %v1792, 0.088388346
      %v1811 = vmul.f32 %v1794, 0.088388346
      %v1812 = vadd.f32 %v1796, %v574
      %v1813 = vadd.f32 %v1797, %v575
      %v1814 = vadd.f32 %v1798, %v576
      %v1815 = vadd.f32 %v1799, %v577
      %v1816 = vadd.f32 %v1800, %v578
      %v1817 = vadd.f32 %v1801, %v579
      %v1818 = vadd.f32 %v1802, %v580
      %v1819 = vadd.f32 %v1803, %v581
      %v1820 = vadd.f32 %v1804, %v582
      %v1821 = vadd.f32 %v1805, %v583
      %v1822 = vadd.f32 %v1806, %v584
      %v1823 = vadd.f32 %v1807, %v585
      %v1824 = vadd.f32 %v1808, %v586
      %v1825 = vadd.f32 %v1809, %v587
      %v1826 = vadd.f32 %v1810, %v588
      %v1827 = vadd.f32 %v1811, %v589
      %1828 = vmax.xlane.f32.xlu0 %v1812
      %v1829 = vpop.xlane.xlu0 %1828
      %1830 = vmax.xlane.f32.xlu0 %v1813
      %v1831 = vpop.xlane.xlu0 %1830
      %1832 = vmax.xlane.f32.xlu0 %v1814
      %v1833 = vpop.xlane.xlu0 %1832
      %1834 = vmax.xlane.f32.xlu0 %v1815
      %v1835 = vpop.xlane.xlu0 %1834
      %1836 = vmax.xlane.f32.xlu0 %v1816
      %v1837 = vpop.xlane.xlu0 %1836
      %1838 = vmax.xlane.f32.xlu0 %v1817
      %v1839 = vpop.xlane.xlu0 %1838
      %1840 = vmax.xlane.f32.xlu0 %v1818
      %v1841 = vpop.xlane.xlu0 %1840
      %1842 = vmax.xlane.f32.xlu0 %v1819
      %v1843 = vpop.xlane.xlu0 %1842
      %1844 = vmax.xlane.f32.xlu0 %v1820
      %v1845 = vpop.xlane.xlu0 %1844
      %1846 = vmax.xlane.f32.xlu0 %v1821
      %v1847 = vpop.xlane.xlu0 %1846
      %1848 = vmax.xlane.f32.xlu0 %v1822
      %v1849 = vpop.xlane.xlu0 %1848
      %1850 = vmax.xlane.f32.xlu0 %v1823
      %v1851 = vpop.xlane.xlu0 %1850
      %1852 = vmax.xlane.f32.xlu0 %v1824
      %v1853 = vpop.xlane.xlu0 %1852
      %1854 = vmax.xlane.f32.xlu0 %v1825
      %v1855 = vpop.xlane.xlu0 %1854
      %1856 = vmax.xlane.f32.xlu0 %v1826
      %v1857 = vpop.xlane.xlu0 %1856
      %1858 = vmax.xlane.f32.xlu0 %v1827
      %v1859 = vpop.xlane.xlu0 %1858
      %v1860 = vsub.f32 %v1812, %v1829
      %v1861 = vsub.f32 %v1813, %v1831
      %v1862 = vsub.f32 %v1814, %v1833
      %v1863 = vsub.f32 %v1815, %v1835
      %v1864 = vsub.f32 %v1816, %v1837
      %v1865 = vsub.f32 %v1817, %v1839
      %v1866 = vsub.f32 %v1818, %v1841
      %v1867 = vsub.f32 %v1819, %v1843
      %v1868 = vsub.f32 %v1820, %v1845
      %v1869 = vsub.f32 %v1821, %v1847
      %v1870 = vsub.f32 %v1822, %v1849
      %v1871 = vsub.f32 %v1823, %v1851
      %v1872 = vsub.f32 %v1824, %v1853
      %v1873 = vsub.f32 %v1825, %v1855
      %v1874 = vsub.f32 %v1826, %v1857
      %v1875 = vsub.f32 %v1827, %v1859
      %v1876 = vmul.f32 %v1860, 1.442695
      %v1877 = vpow.pop %v1876
      %v1878 = vmul.f32 %v1861, 1.442695
      %v1879 = vpow.pop %v1878
      %v1880 = vmul.f32 %v1862, 1.442695
      %v1881 = vpow.pop %v1880
      %v1882 = vmul.f32 %v1863, 1.442695
      %v1883 = vpow.pop %v1882
      %v1884 = vmul.f32 %v1864, 1.442695
      %v1885 = vpow.pop %v1884
      %v1886 = vmul.f32 %v1865, 1.442695
      %v1887 = vpow.pop %v1886
      %v1888 = vmul.f32 %v1866, 1.442695
      %v1889 = vpow.pop %v1888
      %v1890 = vmul.f32 %v1867, 1.442695
      %v1891 = vpow.pop %v1890
      %v1892 = vmul.f32 %v1868, 1.442695
      %v1893 = vpow.pop %v1892
      %v1894 = vmul.f32 %v1869, 1.442695
      %v1895 = vpow.pop %v1894
      %v1896 = vmul.f32 %v1870, 1.442695
      %v1897 = vpow.pop %v1896
      %v1898 = vmul.f32 %v1871, 1.442695
      %v1899 = vpow.pop %v1898
      %v1900 = vmul.f32 %v1872, 1.442695
      %v1901 = vpow.pop %v1900
      %v1902 = vmul.f32 %v1873, 1.442695
      %v1903 = vpow.pop %v1902
      %v1904 = vmul.f32 %v1874, 1.442695
      %v1905 = vpow.pop %v1904
      %v1906 = vmul.f32 %v1875, 1.442695
      %v1907 = vpow.pop %v1906
      %1908 = vadd.xlane.f32.xlu0 %v1877
      %v1909 = vpop.xlane.xlu0 %1908
      %1910 = vadd.xlane.f32.xlu0 %v1879
      %v1911 = vpop.xlane.xlu0 %1910
      %1912 = vadd.xlane.f32.xlu0 %v1881
      %v1913 = vpop.xlane.xlu0 %1912
      %1914 = vadd.xlane.f32.xlu0 %v1883
      %v1915 = vpop.xlane.xlu0 %1914
      %1916 = vadd.xlane.f32.xlu0 %v1885
      %v1917 = vpop.xlane.xlu0 %1916
      %1918 = vadd.xlane.f32.xlu0 %v1887
      %v1919 = vpop.xlane.xlu0 %1918
      %1920 = vadd.xlane.f32.xlu0 %v1889
      %v1921 = vpop.xlane.xlu0 %1920
      %1922 = vadd.xlane.f32.xlu0 %v1891
      %v1923 = vpop.xlane.xlu0 %1922
      %1924 = vadd.xlane.f32.xlu0 %v1893
      %v1925 = vpop.xlane.xlu0 %1924
      %1926 = vadd.xlane.f32.xlu0 %v1895
      %v1927 = vpop.xlane.xlu0 %1926
      %1928 = vadd.xlane.f32.xlu0 %v1897
      %v1929 = vpop.xlane.xlu0 %1928
      %1930 = vadd.xlane.f32.xlu0 %v1899
      %v1931 = vpop.xlane.xlu0 %1930
      %1932 = vadd.xlane.f32.xlu0 %v1901
      %v1933 = vpop.xlane.xlu0 %1932
      %1934 = vadd.xlane.f32.xlu0 %v1903
      %v1935 = vpop.xlane.xlu0 %1934
      %1936 = vadd.xlane.f32.xlu0 %v1905
      %v1937 = vpop.xlane.xlu0 %1936
      %1938 = vadd.xlane.f32.xlu0 %v1907
      %v1939 = vpop.xlane.xlu0 %1938
      %v1940 = vrcp.pop %v1909
      %v1941 = vrcp.pop %v1911
      %v1942 = vrcp.pop %v1913
      %v1943 = vrcp.pop %v1915
      %v1944 = vrcp.pop %v1917
      %v1945 = vrcp.pop %v1919
      %v1946 = vrcp.pop %v1921
      %v1947 = vrcp.pop %v1923
      %v1948 = vrcp.pop %v1925
      %v1949 = vrcp.pop %v1927
      %v1950 = vrcp.pop %v1929
      %v1951 = vrcp.pop %v1931
      %v1952 = vrcp.pop %v1933
      %v1953 = vrcp.pop %v1935
      %v1954 = vrcp.pop %v1937
      %v1955 = vrcp.pop %v1939
      %v1956 = vmul.f32 %v1877, %v1940
      %v1957 = vmul.f32 %v1879, %v1941
      %v1958 = vmul.f32 %v1881, %v1942
      %v1959 = vmul.f32 %v1883, %v1943
      %v1960 = vmul.f32 %v1885, %v1944
      %v1961 = vmul.f32 %v1887, %v1945
      %v1962 = vmul.f32 %v1889, %v1946
      %v1963 = vmul.f32 %v1891, %v1947
      %v1964 = vmul.f32 %v1893, %v1948
      %v1965 = vmul.f32 %v1895, %v1949
      %v1966 = vmul.f32 %v1897, %v1950
      %v1967 = vmul.f32 %v1899, %v1951
      %v1968 = vmul.f32 %v1901, %v1952
      %v1969 = vmul.f32 %v1903, %v1953
      %v1970 = vmul.f32 %v1905, %v1954
      %v1971 = vmul.f32 %v1907, %v1955
      %v1972 = vpack.c.bf16 %v1957, %v1956
      %v1973 = vpack.c.bf16 %v1959, %v1958
      %v1974 = vpack.c.bf16 %v1961, %v1960
      %v1975 = vpack.c.bf16 %v1963, %v1962
      %v1976 = vpack.c.bf16 %v1965, %v1964
      %v1977 = vpack.c.bf16 %v1967, %v1966
      %v1978 = vpack.c.bf16 %v1969, %v1968
      %v1979 = vpack.c.bf16 %v1971, %v1970
      %1988 = vrot.lane.b32.xlu0 %v1586, 64
      %v1989 = vpop.permute.xlu0 %1988
      %1990 = vrot.lane.b32.xlu0 %v1587, 64
      %v1991 = vpop.permute.xlu0 %1990
      %1992 = vrot.lane.b32.xlu0 %v1588, 64
      %v1993 = vpop.permute.xlu0 %1992
      %1994 = vrot.lane.b32.xlu0 %v1589, 64
      %v1995 = vpop.permute.xlu0 %1994
      %1996 = vrot.lane.b32.xlu0 %v1590, 64
      %v1997 = vpop.permute.xlu0 %1996
      %1998 = vrot.lane.b32.xlu0 %v1591, 64
      %v1999 = vpop.permute.xlu0 %1998
      %2000 = vrot.lane.b32.xlu0 %v1592, 64
      %v2001 = vpop.permute.xlu0 %2000
      %2002 = vrot.lane.b32.xlu0 %v1593, 64
      %v2003 = vpop.permute.xlu0 %2002
      %2012 = vmatpush.bf16.msra.mxu0 %v2003
      %2013 = vmatpush.bf16.msra.mxu0 %v2001
      %2014 = vmatpush.bf16.msra.mxu0 %v1999
      %2015 = vmatpush.bf16.msra.mxu0 %v1997
      %2016 = vmatpush.bf16.msra.mxu0 %v1995
      %2017 = vmatpush.bf16.msra.mxu0 %v1993
      %2018 = vmatpush.bf16.msra.mxu0 %v1991
      %2019 = vmatpush.bf16.msra.mxu0 %v1989
      %2020 = vmatmul.bf16.gmra.mxu0 %v1972
      %v2021 = vpop.f32.mrf.mxu0
      %v2022 = vadd.f32 0.0, %v2021
      %v2023 = vpop.f32.mrf.mxu0
      %v2024 = vadd.f32 0.0, %v2023
      %2025 = vmatmul.bf16.gmra.mxu0 %v1973
      %v2026 = vpop.f32.mrf.mxu0
      %v2027 = vadd.f32 0.0, %v2026
      %v2028 = vpop.f32.mrf.mxu0
      %v2029 = vadd.f32 0.0, %v2028
      %2030 = vmatmul.bf16.gmra.mxu0 %v1974
      %v2031 = vpop.f32.mrf.mxu0
      %v2032 = vadd.f32 0.0, %v2031
      %v2033 = vpop.f32.mrf.mxu0
      %v2034 = vadd.f32 0.0, %v2033
      %2035 = vmatmul.bf16.gmra.mxu0 %v1975
      %v2036 = vpop.f32.mrf.mxu0
      %v2037 = vadd.f32 0.0, %v2036
      %v2038 = vpop.f32.mrf.mxu0
      %v2039 = vadd.f32 0.0, %v2038
      %2040 = vmatmul.bf16.gmra.mxu0 %v1976
      %v2041 = vpop.f32.mrf.mxu0
      %v2042 = vadd.f32 0.0, %v2041
      %v2043 = vpop.f32.mrf.mxu0
      %v2044 = vadd.f32 0.0, %v2043
      %2045 = vmatmul.bf16.gmra.mxu0 %v1977
      %v2046 = vpop.f32.mrf.mxu0
      %v2047 = vadd.f32 0.0, %v2046
      %v2048 = vpop.f32.mrf.mxu0
      %v2049 = vadd.f32 0.0, %v2048
      %2050 = vmatmul.bf16.gmra.mxu0 %v1978
      %v2051 = vpop.f32.mrf.mxu0
      %v2052 = vadd.f32 0.0, %v2051
      %v2053 = vpop.f32.mrf.mxu0
      %v2054 = vadd.f32 0.0, %v2053
      %2055 = vmatmul.bf16.gmra.mxu0 %v1979
      %v2056 = vpop.f32.mrf.mxu0
      %v2057 = vadd.f32 0.0, %v2056
      %v2058 = vpop.f32.mrf.mxu0
      %v2059 = vadd.f32 0.0, %v2058
      %2060 = vdwg.mxu0
      %v2061 = vpack.c.bf16 %v2024, %v2022
      %v2062 = vpack.c.bf16 %v2029, %v2027
      %v2063 = vpack.c.bf16 %v2034, %v2032
      %v2064 = vpack.c.bf16 %v2039, %v2037
      %v2065 = vpack.c.bf16 %v2044, %v2042
      %v2066 = vpack.c.bf16 %v2049, %v2047
      %v2067 = vpack.c.bf16 %v2054, %v2052
      %v2068 = vpack.c.bf16 %v2059, %v2057
      %v2077 = vunpack.c.l.b16 %v1280
      %v2078 = vunpack.c.l.b16 %v1281
      %v2079 = vunpack.c.l.b16 %v1282
      %v2080 = vunpack.c.l.b16 %v1283
      %v2081 = vunpack.c.l.b16 %v1284
      %v2082 = vunpack.c.l.b16 %v1285
      %v2083 = vunpack.c.l.b16 %v1286
      %v2084 = vunpack.c.l.b16 %v1287
      %v2085 = vpack.c.b16 %v2078, %v2077
      %v2086 = vpack.c.b16 %v2080, %v2079
      %v2087 = vpack.c.b16 %v2082, %v2081
      %v2088 = vpack.c.b16 %v2084, %v2083
      %v2094 = vsel %vm1304, %v2061, 0
      %v2097 = vsel %vm1304, %v2062, 0
      %v2100 = vsel %vm1304, %v2063, 0
      %v2103 = vsel %vm1304, %v2064, 0
      %v2106 = vsel %vm1304, %v2065, 0
      %v2109 = vsel %vm1304, %v2066, 0
      %v2112 = vsel %vm1304, %v2067, 0
      %v2115 = vsel %vm1304, %v2068, 0
      %2117 = vmatpush.bf16.msra.mxu0 0
      %2118 = vmatpush.bf16.msra.mxu0 0
      %2119 = vmatpush.bf16.msra.mxu0 0
      %2120 = vmatpush.bf16.msra.mxu0 0
      %2121 = vmatpush.bf16.msra.mxu0 %v2088
      %2122 = vmatpush.bf16.msra.mxu0 %v2087
      %2123 = vmatpush.bf16.msra.mxu0 %v2086
      %2124 = vmatpush.bf16.msra.mxu0 %v2085
      %2125 = vmatmul.bf16.gmra.mxu0 %v2094
      %v2126 = vpop.f32.mrf.mxu0
      %v2127 = vadd.f32 0.0, %v2126
      %v2128 = vpop.f32.mrf.mxu0
      %v2129 = vadd.f32 0.0, %v2128
      %2130 = vmatmul.bf16.gmra.mxu0 %v2097
      %v2131 = vpop.f32.mrf.mxu0
      %v2132 = vadd.f32 0.0, %v2131
      %v2133 = vpop.f32.mrf.mxu0
      %v2134 = vadd.f32 0.0, %v2133
      %2135 = vmatmul.bf16.gmra.mxu0 %v2100
      %v2136 = vpop.f32.mrf.mxu0
      %v2137 = vadd.f32 0.0, %v2136
      %v2138 = vpop.f32.mrf.mxu0
      %v2139 = vadd.f32 0.0, %v2138
      %2140 = vmatmul.bf16.gmra.mxu0 %v2103
      %v2141 = vpop.f32.mrf.mxu0
      %v2142 = vadd.f32 0.0, %v2141
      %v2143 = vpop.f32.mrf.mxu0
      %v2144 = vadd.f32 0.0, %v2143
      %2145 = vmatmul.bf16.gmra.mxu0 %v2106
      %v2146 = vpop.f32.mrf.mxu0
      %v2147 = vadd.f32 0.0, %v2146
      %v2148 = vpop.f32.mrf.mxu0
      %v2149 = vadd.f32 0.0, %v2148
      %2150 = vmatmul.bf16.gmra.mxu0 %v2109
      %v2151 = vpop.f32.mrf.mxu0
      %v2152 = vadd.f32 0.0, %v2151
      %v2153 = vpop.f32.mrf.mxu0
      %v2154 = vadd.f32 0.0, %v2153
      %2155 = vmatmul.bf16.gmra.mxu0 %v2112
      %v2156 = vpop.f32.mrf.mxu0
      %v2157 = vadd.f32 0.0, %v2156
      %v2158 = vpop.f32.mrf.mxu0
      %v2159 = vadd.f32 0.0, %v2158
      %2160 = vmatmul.bf16.gmra.mxu0 %v2115
      %v2161 = vpop.f32.mrf.mxu0
      %v2162 = vadd.f32 0.0, %v2161
      %v2163 = vpop.f32.mrf.mxu0
      %v2164 = vadd.f32 0.0, %v2163
      %2165 = vdwg.mxu0
      %v2174 = vunpack.c.l.b16 %v1272
      %v2175 = vunpack.c.l.b16 %v1273
      %v2176 = vunpack.c.l.b16 %v1274
      %v2177 = vunpack.c.l.b16 %v1275
      %v2178 = vunpack.c.l.b16 %v1276
      %v2179 = vunpack.c.l.b16 %v1277
      %v2180 = vunpack.c.l.b16 %v1278
      %v2181 = vunpack.c.l.b16 %v1279
      %v2182 = vpack.c.b16 %v2175, %v2174
      %v2183 = vpack.c.b16 %v2177, %v2176
      %v2184 = vpack.c.b16 %v2179, %v2178
      %v2185 = vpack.c.b16 %v2181, %v2180
      %v2191 = vsel %vm1304, %v1643, 0
      %v2194 = vsel %vm1304, %v1644, 0
      %v2197 = vsel %vm1304, %v1645, 0
      %v2200 = vsel %vm1304, %v1646, 0
      %v2203 = vsel %vm1304, %v1647, 0
      %v2206 = vsel %vm1304, %v1648, 0
      %v2209 = vsel %vm1304, %v1649, 0
      %v2212 = vsel %vm1304, %v1650, 0
      %2214 = vmatpush.bf16.msra.mxu0 0
      %2215 = vmatpush.bf16.msra.mxu0 0
      %2216 = vmatpush.bf16.msra.mxu0 0
      %2217 = vmatpush.bf16.msra.mxu0 0
      %2218 = vmatpush.bf16.msra.mxu0 %v2185
      %2219 = vmatpush.bf16.msra.mxu0 %v2184
      %2220 = vmatpush.bf16.msra.mxu0 %v2183
      %2221 = vmatpush.bf16.msra.mxu0 %v2182
      %2222 = vmatmul.bf16.gmra.mxu0 %v2191
      %v2223 = vpop.f32.mrf.mxu0
      %v2224 = vadd.f32 %v2127, %v2223
      %v2225 = vpop.f32.mrf.mxu0
      %v2226 = vadd.f32 %v2129, %v2225
      %2227 = vmatmul.bf16.gmra.mxu0 %v2194
      %v2228 = vpop.f32.mrf.mxu0
      %v2229 = vadd.f32 %v2132, %v2228
      %v2230 = vpop.f32.mrf.mxu0
      %v2231 = vadd.f32 %v2134, %v2230
      %2232 = vmatmul.bf16.gmra.mxu0 %v2197
      %v2233 = vpop.f32.mrf.mxu0
      %v2234 = vadd.f32 %v2137, %v2233
      %v2235 = vpop.f32.mrf.mxu0
      %v2236 = vadd.f32 %v2139, %v2235
      %2237 = vmatmul.bf16.gmra.mxu0 %v2200
      %v2238 = vpop.f32.mrf.mxu0
      %v2239 = vadd.f32 %v2142, %v2238
      %v2240 = vpop.f32.mrf.mxu0
      %v2241 = vadd.f32 %v2144, %v2240
      %2242 = vmatmul.bf16.gmra.mxu0 %v2203
      %v2243 = vpop.f32.mrf.mxu0
      %v2244 = vadd.f32 %v2147, %v2243
      %v2245 = vpop.f32.mrf.mxu0
      %v2246 = vadd.f32 %v2149, %v2245
      %2247 = vmatmul.bf16.gmra.mxu0 %v2206
      %v2248 = vpop.f32.mrf.mxu0
      %v2249 = vadd.f32 %v2152, %v2248
      %v2250 = vpop.f32.mrf.mxu0
      %v2251 = vadd.f32 %v2154, %v2250
      %2252 = vmatmul.bf16.gmra.mxu0 %v2209
      %v2253 = vpop.f32.mrf.mxu0
      %v2254 = vadd.f32 %v2157, %v2253
      %v2255 = vpop.f32.mrf.mxu0
      %v2256 = vadd.f32 %v2159, %v2255
      %2257 = vmatmul.bf16.gmra.mxu0 %v2212
      %v2258 = vpop.f32.mrf.mxu0
      %v2259 = vadd.f32 %v2162, %v2258
      %v2260 = vpop.f32.mrf.mxu0
      %v2261 = vadd.f32 %v2164, %v2260
      %2262 = vdwg.mxu0
      %v2263 = vld [vmem:[%s5] sm:$0x1]
      %v2265 = vperm.slane %v2263, 0
      %v2267 = vadd.f32 %v2224, %v2265
      %v2268 = vadd.f32 %v2226, %v2265
      %v2269 = vadd.f32 %v2229, %v2265
      %v2270 = vadd.f32 %v2231, %v2265
      %v2271 = vadd.f32 %v2234, %v2265
      %v2272 = vadd.f32 %v2236, %v2265
      %v2273 = vadd.f32 %v2239, %v2265
      %v2274 = vadd.f32 %v2241, %v2265
      %v2275 = vadd.f32 %v2244, %v2265
      %v2276 = vadd.f32 %v2246, %v2265
      %v2277 = vadd.f32 %v2249, %v2265
      %v2278 = vadd.f32 %v2251, %v2265
      %v2279 = vadd.f32 %v2254, %v2265
      %v2280 = vadd.f32 %v2256, %v2265
      %v2281 = vadd.f32 %v2259, %v2265
      %v2282 = vadd.f32 %v2261, %v2265
      %v2283 = vadd.f32 %v523, %v2267
      %v2284 = vadd.f32 %v524, %v2268
      %v2285 = vadd.f32 %v525, %v2269
      %v2286 = vadd.f32 %v526, %v2270
      %v2287 = vadd.f32 %v527, %v2271
      %v2288 = vadd.f32 %v528, %v2272
      %v2289 = vadd.f32 %v529, %v2273
      %v2290 = vadd.f32 %v530, %v2274
      %v2291 = vadd.f32 %v531, %v2275
      %v2292 = vadd.f32 %v532, %v2276
      %v2293 = vadd.f32 %v533, %v2277
      %v2294 = vadd.f32 %v534, %v2278
      %v2295 = vadd.f32 %v535, %v2279
      %v2296 = vadd.f32 %v536, %v2280
      %v2297 = vadd.f32 %v537, %v2281
      %v2298 = vadd.f32 %v538, %v2282
      %v2299 = vld [vmem:[%s6] sm:$0x1]
      %v2300 = vld [vmem:[%s7] sm:$0x1]
      %2301 = vadd.xlane.f32.xlu0 %v2283
      %v2302 = vpop.xlane.xlu0 %2301
      %2303 = vadd.xlane.f32.xlu0 %v2284
      %v2304 = vpop.xlane.xlu0 %2303
      %2305 = vadd.xlane.f32.xlu0 %v2285
      %v2306 = vpop.xlane.xlu0 %2305
      %2307 = vadd.xlane.f32.xlu0 %v2286
      %v2308 = vpop.xlane.xlu0 %2307
      %2309 = vadd.xlane.f32.xlu0 %v2287
      %v2310 = vpop.xlane.xlu0 %2309
      %2311 = vadd.xlane.f32.xlu0 %v2288
      %v2312 = vpop.xlane.xlu0 %2311
      %2313 = vadd.xlane.f32.xlu0 %v2289
      %v2314 = vpop.xlane.xlu0 %2313
      %2315 = vadd.xlane.f32.xlu0 %v2290
      %v2316 = vpop.xlane.xlu0 %2315
      %2317 = vadd.xlane.f32.xlu0 %v2291
      %v2318 = vpop.xlane.xlu0 %2317
      %2319 = vadd.xlane.f32.xlu0 %v2292
      %v2320 = vpop.xlane.xlu0 %2319
      %2321 = vadd.xlane.f32.xlu0 %v2293
      %v2322 = vpop.xlane.xlu0 %2321
      %2323 = vadd.xlane.f32.xlu0 %v2294
      %v2324 = vpop.xlane.xlu0 %2323
      %2325 = vadd.xlane.f32.xlu0 %v2295
      %v2326 = vpop.xlane.xlu0 %2325
      %2327 = vadd.xlane.f32.xlu0 %v2296
      %v2328 = vpop.xlane.xlu0 %2327
      %2329 = vadd.xlane.f32.xlu0 %v2297
      %v2330 = vpop.xlane.xlu0 %2329
      %2331 = vadd.xlane.f32.xlu0 %v2298
      %v2332 = vpop.xlane.xlu0 %2331
      %v2333 = vmul.f32 %v2302, %v630
      %v2334 = vmul.f32 %v2304, %v630
      %v2335 = vmul.f32 %v2306, %v630
      %v2336 = vmul.f32 %v2308, %v630
      %v2337 = vmul.f32 %v2310, %v630
      %v2338 = vmul.f32 %v2312, %v630
      %v2339 = vmul.f32 %v2314, %v630
      %v2340 = vmul.f32 %v2316, %v630
      %v2341 = vmul.f32 %v2318, %v630
      %v2342 = vmul.f32 %v2320, %v630
      %v2343 = vmul.f32 %v2322, %v630
      %v2344 = vmul.f32 %v2324, %v630
      %v2345 = vmul.f32 %v2326, %v630
      %v2346 = vmul.f32 %v2328, %v630
      %v2347 = vmul.f32 %v2330, %v630
      %v2348 = vmul.f32 %v2332, %v630
      %v2349 = vsub.f32 %v2283, %v2333
      %v2350 = vsub.f32 %v2284, %v2334
      %v2351 = vsub.f32 %v2285, %v2335
      %v2352 = vsub.f32 %v2286, %v2336
      %v2353 = vsub.f32 %v2287, %v2337
      %v2354 = vsub.f32 %v2288, %v2338
      %v2355 = vsub.f32 %v2289, %v2339
      %v2356 = vsub.f32 %v2290, %v2340
      %v2357 = vsub.f32 %v2291, %v2341
      %v2358 = vsub.f32 %v2292, %v2342
      %v2359 = vsub.f32 %v2293, %v2343
      %v2360 = vsub.f32 %v2294, %v2344
      %v2361 = vsub.f32 %v2295, %v2345
      %v2362 = vsub.f32 %v2296, %v2346
      %v2363 = vsub.f32 %v2297, %v2347
      %v2364 = vsub.f32 %v2298, %v2348
      %v2365 = vmul.f32 %v2349, %v2349
      %v2366 = vmul.f32 %v2350, %v2350
      %v2367 = vmul.f32 %v2351, %v2351
      %v2368 = vmul.f32 %v2352, %v2352
      %v2369 = vmul.f32 %v2353, %v2353
      %v2370 = vmul.f32 %v2354, %v2354
      %v2371 = vmul.f32 %v2355, %v2355
      %v2372 = vmul.f32 %v2356, %v2356
      %v2373 = vmul.f32 %v2357, %v2357
      %v2374 = vmul.f32 %v2358, %v2358
      %v2375 = vmul.f32 %v2359, %v2359
      %v2376 = vmul.f32 %v2360, %v2360
      %v2377 = vmul.f32 %v2361, %v2361
      %v2378 = vmul.f32 %v2362, %v2362
      %v2379 = vmul.f32 %v2363, %v2363
      %v2380 = vmul.f32 %v2364, %v2364
      %2381 = vadd.xlane.f32.xlu0 %v2365
      %v2382 = vpop.xlane.xlu0 %2381
      %2383 = vadd.xlane.f32.xlu0 %v2366
      %v2384 = vpop.xlane.xlu0 %2383
      %2385 = vadd.xlane.f32.xlu0 %v2367
      %v2386 = vpop.xlane.xlu0 %2385
      %2387 = vadd.xlane.f32.xlu0 %v2368
      %v2388 = vpop.xlane.xlu0 %2387
      %2389 = vadd.xlane.f32.xlu0 %v2369
      %v2390 = vpop.xlane.xlu0 %2389
      %2391 = vadd.xlane.f32.xlu0 %v2370
      %v2392 = vpop.xlane.xlu0 %2391
      %2393 = vadd.xlane.f32.xlu0 %v2371
      %v2394 = vpop.xlane.xlu0 %2393
      %2395 = vadd.xlane.f32.xlu0 %v2372
      %v2396 = vpop.xlane.xlu0 %2395
      %2397 = vadd.xlane.f32.xlu0 %v2373
      %v2398 = vpop.xlane.xlu0 %2397
      %2399 = vadd.xlane.f32.xlu0 %v2374
      %v2400 = vpop.xlane.xlu0 %2399
      %2401 = vadd.xlane.f32.xlu0 %v2375
      %v2402 = vpop.xlane.xlu0 %2401
      %2403 = vadd.xlane.f32.xlu0 %v2376
      %v2404 = vpop.xlane.xlu0 %2403
      %2405 = vadd.xlane.f32.xlu0 %v2377
      %v2406 = vpop.xlane.xlu0 %2405
      %2407 = vadd.xlane.f32.xlu0 %v2378
      %v2408 = vpop.xlane.xlu0 %2407
      %2409 = vadd.xlane.f32.xlu0 %v2379
      %v2410 = vpop.xlane.xlu0 %2409
      %2411 = vadd.xlane.f32.xlu0 %v2380
      %v2412 = vpop.xlane.xlu0 %2411
      %v2413 = vmul.f32 %v2382, %v630
      %v2414 = vmul.f32 %v2384, %v630
      %v2415 = vmul.f32 %v2386, %v630
      %v2416 = vmul.f32 %v2388, %v630
      %v2417 = vmul.f32 %v2390, %v630
      %v2418 = vmul.f32 %v2392, %v630
      %v2419 = vmul.f32 %v2394, %v630
      %v2420 = vmul.f32 %v2396, %v630
      %v2421 = vmul.f32 %v2398, %v630
      %v2422 = vmul.f32 %v2400, %v630
      %v2423 = vmul.f32 %v2402, %v630
      %v2424 = vmul.f32 %v2404, %v630
      %v2425 = vmul.f32 %v2406, %v630
      %v2426 = vmul.f32 %v2408, %v630
      %v2427 = vmul.f32 %v2410, %v630
      %v2428 = vmul.f32 %v2412, %v630
      %v2429 = vadd.f32 %v2413, 1e-05
      %v2430 = vadd.f32 %v2414, 1e-05
      %v2431 = vadd.f32 %v2415, 1e-05
      %v2432 = vadd.f32 %v2416, 1e-05
      %v2433 = vadd.f32 %v2417, 1e-05
      %v2434 = vadd.f32 %v2418, 1e-05
      %v2435 = vadd.f32 %v2419, 1e-05
      %v2436 = vadd.f32 %v2420, 1e-05
      %v2437 = vadd.f32 %v2421, 1e-05
      %v2438 = vadd.f32 %v2422, 1e-05
      %v2439 = vadd.f32 %v2423, 1e-05
      %v2440 = vadd.f32 %v2424, 1e-05
      %v2441 = vadd.f32 %v2425, 1e-05
      %v2442 = vadd.f32 %v2426, 1e-05
      %v2443 = vadd.f32 %v2427, 1e-05
      %v2444 = vadd.f32 %v2428, 1e-05
      %v2445 = vrsqrt.pop %v2429
      %v2446 = vmul.f32 %v2445, %v2429
      %v2447 = vmul.f32 %v2446, %v2445
      %v2448 = vmul.f32 0.5, %v2447
      %v2449 = vsub.f32 1.5, %v2448
      %v2450 = vmul.f32 %v2445, %v2449
      %vm2451 = vweird.f32 %v2429
      %vm2452 = vweird.f32 %v2445
      %vm2453 = vmor %vm2451, %vm2452
      %v2454 = vsel %vm2453, %v2445, %v2450
      %v2455 = vrsqrt.pop %v2430
      %v2456 = vmul.f32 %v2455, %v2430
      %v2457 = vmul.f32 %v2456, %v2455
      %v2458 = vmul.f32 0.5, %v2457
      %v2459 = vsub.f32 1.5, %v2458
      %v2460 = vmul.f32 %v2455, %v2459
      %vm2461 = vweird.f32 %v2430
      %vm2462 = vweird.f32 %v2455
      %vm2463 = vmor %vm2461, %vm2462
      %v2464 = vsel %vm2463, %v2455, %v2460
      %v2465 = vrsqrt.pop %v2431
      %v2466 = vmul.f32 %v2465, %v2431
      %v2467 = vmul.f32 %v2466, %v2465
      %v2468 = vmul.f32 0.5, %v2467
      %v2469 = vsub.f32 1.5, %v2468
      %v2470 = vmul.f32 %v2465, %v2469
      %vm2471 = vweird.f32 %v2431
      %vm2472 = vweird.f32 %v2465
      %vm2473 = vmor %vm2471, %vm2472
      %v2474 = vsel %vm2473, %v2465, %v2470
      %v2475 = vrsqrt.pop %v2432
      %v2476 = vmul.f32 %v2475, %v2432
      %v2477 = vmul.f32 %v2476, %v2475
      %v2478 = vmul.f32 0.5, %v2477
      %v2479 = vsub.f32 1.5, %v2478
      %v2480 = vmul.f32 %v2475, %v2479
      %vm2481 = vweird.f32 %v2432
      %vm2482 = vweird.f32 %v2475
      %vm2483 = vmor %vm2481, %vm2482
      %v2484 = vsel %vm2483, %v2475, %v2480
      %v2485 = vrsqrt.pop %v2433
      %v2486 = vmul.f32 %v2485, %v2433
      %v2487 = vmul.f32 %v2486, %v2485
      %v2488 = vmul.f32 0.5, %v2487
      %v2489 = vsub.f32 1.5, %v2488
      %v2490 = vmul.f32 %v2485, %v2489
      %vm2491 = vweird.f32 %v2433
      %vm2492 = vweird.f32 %v2485
      %vm2493 = vmor %vm2491, %vm2492
      %v2494 = vsel %vm2493, %v2485, %v2490
      %v2495 = vrsqrt.pop %v2434
      %v2496 = vmul.f32 %v2495, %v2434
      %v2497 = vmul.f32 %v2496, %v2495
      %v2498 = vmul.f32 0.5, %v2497
      %v2499 = vsub.f32 1.5, %v2498
      %v2500 = vmul.f32 %v2495, %v2499
      %vm2501 = vweird.f32 %v2434
      %vm2502 = vweird.f32 %v2495
      %vm2503 = vmor %vm2501, %vm2502
      %v2504 = vsel %vm2503, %v2495, %v2500
      %v2505 = vrsqrt.pop %v2435
      %v2506 = vmul.f32 %v2505, %v2435
      %v2507 = vmul.f32 %v2506, %v2505
      %v2508 = vmul.f32 0.5, %v2507
      %v2509 = vsub.f32 1.5, %v2508
      %v2510 = vmul.f32 %v2505, %v2509
      %vm2511 = vweird.f32 %v2435
      %vm2512 = vweird.f32 %v2505
      %vm2513 = vmor %vm2511, %vm2512
      %v2514 = vsel %vm2513, %v2505, %v2510
      %v2515 = vrsqrt.pop %v2436
      %v2516 = vmul.f32 %v2515, %v2436
      %v2517 = vmul.f32 %v2516, %v2515
      %v2518 = vmul.f32 0.5, %v2517
      %v2519 = vsub.f32 1.5, %v2518
      %v2520 = vmul.f32 %v2515, %v2519
      %vm2521 = vweird.f32 %v2436
      %vm2522 = vweird.f32 %v2515
      %vm2523 = vmor %vm2521, %vm2522
      %v2524 = vsel %vm2523, %v2515, %v2520
      %v2525 = vrsqrt.pop %v2437
      %v2526 = vmul.f32 %v2525, %v2437
      %v2527 = vmul.f32 %v2526, %v2525
      %v2528 = vmul.f32 0.5, %v2527
      %v2529 = vsub.f32 1.5, %v2528
      %v2530 = vmul.f32 %v2525, %v2529
      %vm2531 = vweird.f32 %v2437
      %vm2532 = vweird.f32 %v2525
      %vm2533 = vmor %vm2531, %vm2532
      %v2534 = vsel %vm2533, %v2525, %v2530
      %v2535 = vrsqrt.pop %v2438
      %v2536 = vmul.f32 %v2535, %v2438
      %v2537 = vmul.f32 %v2536, %v2535
      %v2538 = vmul.f32 0.5, %v2537
      %v2539 = vsub.f32 1.5, %v2538
      %v2540 = vmul.f32 %v2535, %v2539
      %vm2541 = vweird.f32 %v2438
      %vm2542 = vweird.f32 %v2535
      %vm2543 = vmor %vm2541, %vm2542
      %v2544 = vsel %vm2543, %v2535, %v2540
      %v2545 = vrsqrt.pop %v2439
      %v2546 = vmul.f32 %v2545, %v2439
      %v2547 = vmul.f32 %v2546, %v2545
      %v2548 = vmul.f32 0.5, %v2547
      %v2549 = vsub.f32 1.5, %v2548
      %v2550 = vmul.f32 %v2545, %v2549
      %vm2551 = vweird.f32 %v2439
      %vm2552 = vweird.f32 %v2545
      %vm2553 = vmor %vm2551, %vm2552
      %v2554 = vsel %vm2553, %v2545, %v2550
      %v2555 = vrsqrt.pop %v2440
      %v2556 = vmul.f32 %v2555, %v2440
      %v2557 = vmul.f32 %v2556, %v2555
      %v2558 = vmul.f32 0.5, %v2557
      %v2559 = vsub.f32 1.5, %v2558
      %v2560 = vmul.f32 %v2555, %v2559
      %vm2561 = vweird.f32 %v2440
      %vm2562 = vweird.f32 %v2555
      %vm2563 = vmor %vm2561, %vm2562
      %v2564 = vsel %vm2563, %v2555, %v2560
      %v2565 = vrsqrt.pop %v2441
      %v2566 = vmul.f32 %v2565, %v2441
      %v2567 = vmul.f32 %v2566, %v2565
      %v2568 = vmul.f32 0.5, %v2567
      %v2569 = vsub.f32 1.5, %v2568
      %v2570 = vmul.f32 %v2565, %v2569
      %vm2571 = vweird.f32 %v2441
      %vm2572 = vweird.f32 %v2565
      %vm2573 = vmor %vm2571, %vm2572
      %v2574 = vsel %vm2573, %v2565, %v2570
      %v2575 = vrsqrt.pop %v2442
      %v2576 = vmul.f32 %v2575, %v2442
      %v2577 = vmul.f32 %v2576, %v2575
      %v2578 = vmul.f32 0.5, %v2577
      %v2579 = vsub.f32 1.5, %v2578
      %v2580 = vmul.f32 %v2575, %v2579
      %vm2581 = vweird.f32 %v2442
      %vm2582 = vweird.f32 %v2575
      %vm2583 = vmor %vm2581, %vm2582
      %v2584 = vsel %vm2583, %v2575, %v2580
      %v2585 = vrsqrt.pop %v2443
      %v2586 = vmul.f32 %v2585, %v2443
      %v2587 = vmul.f32 %v2586, %v2585
      %v2588 = vmul.f32 0.5, %v2587
      %v2589 = vsub.f32 1.5, %v2588
      %v2590 = vmul.f32 %v2585, %v2589
      %vm2591 = vweird.f32 %v2443
      %vm2592 = vweird.f32 %v2585
      %vm2593 = vmor %vm2591, %vm2592
      %v2594 = vsel %vm2593, %v2585, %v2590
      %v2595 = vrsqrt.pop %v2444
      %v2596 = vmul.f32 %v2595, %v2444
      %v2597 = vmul.f32 %v2596, %v2595
      %v2598 = vmul.f32 0.5, %v2597
      %v2599 = vsub.f32 1.5, %v2598
      %v2600 = vmul.f32 %v2595, %v2599
      %vm2601 = vweird.f32 %v2444
      %vm2602 = vweird.f32 %v2595
      %vm2603 = vmor %vm2601, %vm2602
      %v2604 = vsel %vm2603, %v2595, %v2600
      %v2605 = vmul.f32 %v2349, %v2454
      %v2606 = vmul.f32 %v2350, %v2464
      %v2607 = vmul.f32 %v2351, %v2474
      %v2608 = vmul.f32 %v2352, %v2484
      %v2609 = vmul.f32 %v2353, %v2494
      %v2610 = vmul.f32 %v2354, %v2504
      %v2611 = vmul.f32 %v2355, %v2514
      %v2612 = vmul.f32 %v2356, %v2524
      %v2613 = vmul.f32 %v2357, %v2534
      %v2614 = vmul.f32 %v2358, %v2544
      %v2615 = vmul.f32 %v2359, %v2554
      %v2616 = vmul.f32 %v2360, %v2564
      %v2617 = vmul.f32 %v2361, %v2574
      %v2618 = vmul.f32 %v2362, %v2584
      %v2619 = vmul.f32 %v2363, %v2594
      %v2620 = vmul.f32 %v2364, %v2604
      %v2622 = vperm.slane %v2299, 0
      %v2624 = vmul.f32 %v2605, %v2622
      %v2625 = vmul.f32 %v2606, %v2622
      %v2626 = vmul.f32 %v2607, %v2622
      %v2627 = vmul.f32 %v2608, %v2622
      %v2628 = vmul.f32 %v2609, %v2622
      %v2629 = vmul.f32 %v2610, %v2622
      %v2630 = vmul.f32 %v2611, %v2622
      %v2631 = vmul.f32 %v2612, %v2622
      %v2632 = vmul.f32 %v2613, %v2622
      %v2633 = vmul.f32 %v2614, %v2622
      %v2634 = vmul.f32 %v2615, %v2622
      %v2635 = vmul.f32 %v2616, %v2622
      %v2636 = vmul.f32 %v2617, %v2622
      %v2637 = vmul.f32 %v2618, %v2622
      %v2638 = vmul.f32 %v2619, %v2622
      %v2639 = vmul.f32 %v2620, %v2622
      %v2641 = vperm.slane %v2300, 0
      %v2643 = vadd.f32 %v2624, %v2641
      %v2644 = vadd.f32 %v2625, %v2641
      %v2645 = vadd.f32 %v2626, %v2641
      %v2646 = vadd.f32 %v2627, %v2641
      %v2647 = vadd.f32 %v2628, %v2641
      %v2648 = vadd.f32 %v2629, %v2641
      %v2649 = vadd.f32 %v2630, %v2641
      %v2650 = vadd.f32 %v2631, %v2641
      %v2651 = vadd.f32 %v2632, %v2641
      %v2652 = vadd.f32 %v2633, %v2641
      %v2653 = vadd.f32 %v2634, %v2641
      %v2654 = vadd.f32 %v2635, %v2641
      %v2655 = vadd.f32 %v2636, %v2641
      %v2656 = vadd.f32 %v2637, %v2641
      %v2657 = vadd.f32 %v2638, %v2641
      %v2658 = vadd.f32 %v2639, %v2641
      %v2659 = vpack.c.bf16 %v2644, %v2643
      %v2660 = vpack.c.bf16 %v2646, %v2645
      %v2661 = vpack.c.bf16 %v2648, %v2647
      %v2662 = vpack.c.bf16 %v2650, %v2649
      %v2663 = vpack.c.bf16 %v2652, %v2651
      %v2664 = vpack.c.bf16 %v2654, %v2653
      %v2665 = vpack.c.bf16 %v2656, %v2655
      %v2666 = vpack.c.bf16 %v2658, %v2657
      %v2667 = vld [vmem:[%s8] sm:$0xff]
      %v2668 = vld [vmem:[%s8 + $0x8] sm:$0xff]
      %v2669 = vld [vmem:[%s8 + $0x10] sm:$0xff]
      %v2670 = vld [vmem:[%s8 + $0x18] sm:$0xff]
      %v2671 = vld [vmem:[%s8 + $0x20] sm:$0xff]
      %v2672 = vld [vmem:[%s8 + $0x28] sm:$0xff]
      %v2673 = vld [vmem:[%s8 + $0x30] sm:$0xff]
      %v2674 = vld [vmem:[%s8 + $0x38] sm:$0xff]
      %v2675 = vld [vmem:[%s8 + $0x40] sm:$0xff]
      %v2676 = vld [vmem:[%s8 + $0x48] sm:$0xff]
      %v2677 = vld [vmem:[%s8 + $0x50] sm:$0xff]
      %v2678 = vld [vmem:[%s8 + $0x58] sm:$0xff]
      %v2679 = vld [vmem:[%s8 + $0x60] sm:$0xff]
      %v2680 = vld [vmem:[%s8 + $0x68] sm:$0xff]
      %v2681 = vld [vmem:[%s8 + $0x70] sm:$0xff]
      %v2682 = vld [vmem:[%s8 + $0x78] sm:$0xff]
      %v2683 = vld [vmem:[%s8 + $0x80] sm:$0xff]
      %v2684 = vld [vmem:[%s8 + $0x88] sm:$0xff]
      %v2685 = vld [vmem:[%s8 + $0x90] sm:$0xff]
      %v2686 = vld [vmem:[%s8 + $0x98] sm:$0xff]
      %v2687 = vld [vmem:[%s8 + $0xa0] sm:$0xff]
      %v2688 = vld [vmem:[%s8 + $0xa8] sm:$0xff]
      %v2689 = vld [vmem:[%s8 + $0xb0] sm:$0xff]
      %v2690 = vld [vmem:[%s8 + $0xb8] sm:$0xff]
      %v2691 = vld [vmem:[%s8 + $0xc0] sm:$0xff]
      %v2692 = vld [vmem:[%s8 + $0xc8] sm:$0xff]
      %v2693 = vld [vmem:[%s8 + $0xd0] sm:$0xff]
      %v2694 = vld [vmem:[%s8 + $0xd8] sm:$0xff]
      %v2695 = vld [vmem:[%s8 + $0xe0] sm:$0xff]
      %v2696 = vld [vmem:[%s8 + $0xe8] sm:$0xff]
      %v2697 = vld [vmem:[%s8 + $0xf0] sm:$0xff]
      %v2698 = vld [vmem:[%s8 + $0xf8] sm:$0xff]
      %v2699 = vld [vmem:[%s9] sm:$0xf]
      %v2701 = vperm.slane %v2699, 0
      %v2702 = vperm.slane %v2699, 1
      %v2703 = vperm.slane %v2699, 2
      %v2704 = vperm.slane %v2699, 3
      %v2741 = vunpack.c.l.b16 %v2667
      %v2742 = vunpack.c.h.b16 %v2667
      %v2743 = vunpack.c.l.b16 %v2668
      %v2744 = vunpack.c.h.b16 %v2668
      %v2745 = vunpack.c.l.b16 %v2669
      %v2746 = vunpack.c.h.b16 %v2669
      %v2747 = vunpack.c.l.b16 %v2670
      %v2748 = vunpack.c.h.b16 %v2670
      %v2749 = vunpack.c.l.b16 %v2671
      %v2750 = vunpack.c.h.b16 %v2671
      %v2751 = vunpack.c.l.b16 %v2672
      %v2752 = vunpack.c.h.b16 %v2672
      %v2753 = vunpack.c.l.b16 %v2673
      %v2754 = vunpack.c.h.b16 %v2673
      %v2755 = vunpack.c.l.b16 %v2674
      %v2756 = vunpack.c.h.b16 %v2674
      %v2757 = vunpack.c.l.b16 %v2675
      %v2758 = vunpack.c.h.b16 %v2675
      %v2759 = vunpack.c.l.b16 %v2676
      %v2760 = vunpack.c.h.b16 %v2676
      %v2761 = vunpack.c.l.b16 %v2677
      %v2762 = vunpack.c.h.b16 %v2677
      %v2763 = vunpack.c.l.b16 %v2678
      %v2764 = vunpack.c.h.b16 %v2678
      %v2765 = vunpack.c.l.b16 %v2679
      %v2766 = vunpack.c.h.b16 %v2679
      %v2767 = vunpack.c.l.b16 %v2680
      %v2768 = vunpack.c.h.b16 %v2680
      %v2769 = vunpack.c.l.b16 %v2681
      %v2770 = vunpack.c.h.b16 %v2681
      %v2771 = vunpack.c.l.b16 %v2682
      %v2772 = vunpack.c.h.b16 %v2682
      %v2773 = vunpack.c.l.b16 %v2683
      %v2774 = vunpack.c.h.b16 %v2683
      %v2775 = vunpack.c.l.b16 %v2684
      %v2776 = vunpack.c.h.b16 %v2684
      %v2777 = vunpack.c.l.b16 %v2685
      %v2778 = vunpack.c.h.b16 %v2685
      %v2779 = vunpack.c.l.b16 %v2686
      %v2780 = vunpack.c.h.b16 %v2686
      %v2781 = vunpack.c.l.b16 %v2687
      %v2782 = vunpack.c.h.b16 %v2687
      %v2783 = vunpack.c.l.b16 %v2688
      %v2784 = vunpack.c.h.b16 %v2688
      %v2785 = vunpack.c.l.b16 %v2689
      %v2786 = vunpack.c.h.b16 %v2689
      %v2787 = vunpack.c.l.b16 %v2690
      %v2788 = vunpack.c.h.b16 %v2690
      %v2789 = vunpack.c.l.b16 %v2691
      %v2790 = vunpack.c.h.b16 %v2691
      %v2791 = vunpack.c.l.b16 %v2692
      %v2792 = vunpack.c.h.b16 %v2692
      %v2793 = vunpack.c.l.b16 %v2693
      %v2794 = vunpack.c.h.b16 %v2693
      %v2795 = vunpack.c.l.b16 %v2694
      %v2796 = vunpack.c.h.b16 %v2694
      %v2797 = vunpack.c.l.b16 %v2695
      %v2798 = vunpack.c.h.b16 %v2695
      %v2799 = vunpack.c.l.b16 %v2696
      %v2800 = vunpack.c.h.b16 %v2696
      %v2801 = vunpack.c.l.b16 %v2697
      %v2802 = vunpack.c.h.b16 %v2697
      %v2803 = vunpack.c.l.b16 %v2698
      %v2804 = vunpack.c.h.b16 %v2698
      %v2805 = vpack.c.b16 %v2745, %v2741
      %v2806 = vpack.c.b16 %v2746, %v2742
      %v2807 = vpack.c.b16 %v2747, %v2743
      %v2808 = vpack.c.b16 %v2748, %v2744
      %v2809 = vpack.c.b16 %v2753, %v2749
      %v2810 = vpack.c.b16 %v2754, %v2750
      %v2811 = vpack.c.b16 %v2755, %v2751
      %v2812 = vpack.c.b16 %v2756, %v2752
      %v2813 = vpack.c.b16 %v2761, %v2757
      %v2814 = vpack.c.b16 %v2762, %v2758
      %v2815 = vpack.c.b16 %v2763, %v2759
      %v2816 = vpack.c.b16 %v2764, %v2760
      %v2817 = vpack.c.b16 %v2769, %v2765
      %v2818 = vpack.c.b16 %v2770, %v2766
      %v2819 = vpack.c.b16 %v2771, %v2767
      %v2820 = vpack.c.b16 %v2772, %v2768
      %v2821 = vpack.c.b16 %v2777, %v2773
      %v2822 = vpack.c.b16 %v2778, %v2774
      %v2823 = vpack.c.b16 %v2779, %v2775
      %v2824 = vpack.c.b16 %v2780, %v2776
      %v2825 = vpack.c.b16 %v2785, %v2781
      %v2826 = vpack.c.b16 %v2786, %v2782
      %v2827 = vpack.c.b16 %v2787, %v2783
      %v2828 = vpack.c.b16 %v2788, %v2784
      %v2829 = vpack.c.b16 %v2793, %v2789
      %v2830 = vpack.c.b16 %v2794, %v2790
      %v2831 = vpack.c.b16 %v2795, %v2791
      %v2832 = vpack.c.b16 %v2796, %v2792
      %v2833 = vpack.c.b16 %v2801, %v2797
      %v2834 = vpack.c.b16 %v2802, %v2798
      %v2835 = vpack.c.b16 %v2803, %v2799
      %v2836 = vpack.c.b16 %v2804, %v2800
      %2869 = vmatpush.bf16.msra.mxu0 %v2833
      %2870 = vmatpush.bf16.msra.mxu0 %v2829
      %2871 = vmatpush.bf16.msra.mxu0 %v2825
      %2872 = vmatpush.bf16.msra.mxu0 %v2821
      %2873 = vmatpush.bf16.msra.mxu0 %v2817
      %2874 = vmatpush.bf16.msra.mxu0 %v2813
      %2875 = vmatpush.bf16.msra.mxu0 %v2809
      %2876 = vmatpush.bf16.msra.mxu0 %v2805
      %2877 = vmatmul.bf16.gmra.mxu0 %v2659
      %v2878 = vpop.f32.mrf.mxu0
      %v2879 = vadd.f32 %v2701, %v2878
      %v2880 = vpop.f32.mrf.mxu0
      %v2881 = vadd.f32 %v2701, %v2880
      %2882 = vmatmul.bf16.gmra.mxu0 %v2660
      %v2883 = vpop.f32.mrf.mxu0
      %v2884 = vadd.f32 %v2701, %v2883
      %v2885 = vpop.f32.mrf.mxu0
      %v2886 = vadd.f32 %v2701, %v2885
      %2887 = vmatmul.bf16.gmra.mxu0 %v2661
      %v2888 = vpop.f32.mrf.mxu0
      %v2889 = vadd.f32 %v2701, %v2888
      %v2890 = vpop.f32.mrf.mxu0
      %v2891 = vadd.f32 %v2701, %v2890
      %2892 = vmatmul.bf16.gmra.mxu0 %v2662
      %v2893 = vpop.f32.mrf.mxu0
      %v2894 = vadd.f32 %v2701, %v2893
      %v2895 = vpop.f32.mrf.mxu0
      %v2896 = vadd.f32 %v2701, %v2895
      %2897 = vmatmul.bf16.gmra.mxu0 %v2663
      %v2898 = vpop.f32.mrf.mxu0
      %v2899 = vadd.f32 %v2701, %v2898
      %v2900 = vpop.f32.mrf.mxu0
      %v2901 = vadd.f32 %v2701, %v2900
      %2902 = vmatmul.bf16.gmra.mxu0 %v2664
      %v2903 = vpop.f32.mrf.mxu0
      %v2904 = vadd.f32 %v2701, %v2903
      %v2905 = vpop.f32.mrf.mxu0
      %v2906 = vadd.f32 %v2701, %v2905
      %2907 = vmatmul.bf16.gmra.mxu0 %v2665
      %v2908 = vpop.f32.mrf.mxu0
      %v2909 = vadd.f32 %v2701, %v2908
      %v2910 = vpop.f32.mrf.mxu0
      %v2911 = vadd.f32 %v2701, %v2910
      %2912 = vmatmul.bf16.gmra.mxu0 %v2666
      %v2913 = vpop.f32.mrf.mxu0
      %v2914 = vadd.f32 %v2701, %v2913
      %v2915 = vpop.f32.mrf.mxu0
      %v2916 = vadd.f32 %v2701, %v2915
      %2917 = vdwg.mxu0
      %2918 = vmatpush.bf16.msra.mxu0 %v2834
      %2919 = vmatpush.bf16.msra.mxu0 %v2830
      %2920 = vmatpush.bf16.msra.mxu0 %v2826
      %2921 = vmatpush.bf16.msra.mxu0 %v2822
      %2922 = vmatpush.bf16.msra.mxu0 %v2818
      %2923 = vmatpush.bf16.msra.mxu0 %v2814
      %2924 = vmatpush.bf16.msra.mxu0 %v2810
      %2925 = vmatpush.bf16.msra.mxu0 %v2806
      %2926 = vmatmul.bf16.gmra.mxu0 %v2659
      %v2927 = vpop.f32.mrf.mxu0
      %v2928 = vadd.f32 %v2702, %v2927
      %v2929 = vpop.f32.mrf.mxu0
      %v2930 = vadd.f32 %v2702, %v2929
      %2931 = vmatmul.bf16.gmra.mxu0 %v2660
      %v2932 = vpop.f32.mrf.mxu0
      %v2933 = vadd.f32 %v2702, %v2932
      %v2934 = vpop.f32.mrf.mxu0
      %v2935 = vadd.f32 %v2702, %v2934
      %2936 = vmatmul.bf16.gmra.mxu0 %v2661
      %v2937 = vpop.f32.mrf.mxu0
      %v2938 = vadd.f32 %v2702, %v2937
      %v2939 = vpop.f32.mrf.mxu0
      %v2940 = vadd.f32 %v2702, %v2939
      %2941 = vmatmul.bf16.gmra.mxu0 %v2662
      %v2942 = vpop.f32.mrf.mxu0
      %v2943 = vadd.f32 %v2702, %v2942
      %v2944 = vpop.f32.mrf.mxu0
      %v2945 = vadd.f32 %v2702, %v2944
      %2946 = vmatmul.bf16.gmra.mxu0 %v2663
      %v2947 = vpop.f32.mrf.mxu0
      %v2948 = vadd.f32 %v2702, %v2947
      %v2949 = vpop.f32.mrf.mxu0
      %v2950 = vadd.f32 %v2702, %v2949
      %2951 = vmatmul.bf16.gmra.mxu0 %v2664
      %v2952 = vpop.f32.mrf.mxu0
      %v2953 = vadd.f32 %v2702, %v2952
      %v2954 = vpop.f32.mrf.mxu0
      %v2955 = vadd.f32 %v2702, %v2954
      %2956 = vmatmul.bf16.gmra.mxu0 %v2665
      %v2957 = vpop.f32.mrf.mxu0
      %v2958 = vadd.f32 %v2702, %v2957
      %v2959 = vpop.f32.mrf.mxu0
      %v2960 = vadd.f32 %v2702, %v2959
      %2961 = vmatmul.bf16.gmra.mxu0 %v2666
      %v2962 = vpop.f32.mrf.mxu0
      %v2963 = vadd.f32 %v2702, %v2962
      %v2964 = vpop.f32.mrf.mxu0
      %v2965 = vadd.f32 %v2702, %v2964
      %2966 = vdwg.mxu0
      %2967 = vmatpush.bf16.msra.mxu0 %v2835
      %2968 = vmatpush.bf16.msra.mxu0 %v2831
      %2969 = vmatpush.bf16.msra.mxu0 %v2827
      %2970 = vmatpush.bf16.msra.mxu0 %v2823
      %2971 = vmatpush.bf16.msra.mxu0 %v2819
      %2972 = vmatpush.bf16.msra.mxu0 %v2815
      %2973 = vmatpush.bf16.msra.mxu0 %v2811
      %2974 = vmatpush.bf16.msra.mxu0 %v2807
      %2975 = vmatmul.bf16.gmra.mxu0 %v2659
      %v2976 = vpop.f32.mrf.mxu0
      %v2977 = vadd.f32 %v2703, %v2976
      %v2978 = vpop.f32.mrf.mxu0
      %v2979 = vadd.f32 %v2703, %v2978
      %2980 = vmatmul.bf16.gmra.mxu0 %v2660
      %v2981 = vpop.f32.mrf.mxu0
      %v2982 = vadd.f32 %v2703, %v2981
      %v2983 = vpop.f32.mrf.mxu0
      %v2984 = vadd.f32 %v2703, %v2983
      %2985 = vmatmul.bf16.gmra.mxu0 %v2661
      %v2986 = vpop.f32.mrf.mxu0
      %v2987 = vadd.f32 %v2703, %v2986
      %v2988 = vpop.f32.mrf.mxu0
      %v2989 = vadd.f32 %v2703, %v2988
      %2990 = vmatmul.bf16.gmra.mxu0 %v2662
      %v2991 = vpop.f32.mrf.mxu0
      %v2992 = vadd.f32 %v2703, %v2991
      %v2993 = vpop.f32.mrf.mxu0
      %v2994 = vadd.f32 %v2703, %v2993
      %2995 = vmatmul.bf16.gmra.mxu0 %v2663
      %v2996 = vpop.f32.mrf.mxu0
      %v2997 = vadd.f32 %v2703, %v2996
      %v2998 = vpop.f32.mrf.mxu0
      %v2999 = vadd.f32 %v2703, %v2998
      %3000 = vmatmul.bf16.gmra.mxu0 %v2664
      %v3001 = vpop.f32.mrf.mxu0
      %v3002 = vadd.f32 %v2703, %v3001
      %v3003 = vpop.f32.mrf.mxu0
      %v3004 = vadd.f32 %v2703, %v3003
      %3005 = vmatmul.bf16.gmra.mxu0 %v2665
      %v3006 = vpop.f32.mrf.mxu0
      %v3007 = vadd.f32 %v2703, %v3006
      %v3008 = vpop.f32.mrf.mxu0
      %v3009 = vadd.f32 %v2703, %v3008
      %3010 = vmatmul.bf16.gmra.mxu0 %v2666
      %v3011 = vpop.f32.mrf.mxu0
      %v3012 = vadd.f32 %v2703, %v3011
      %v3013 = vpop.f32.mrf.mxu0
      %v3014 = vadd.f32 %v2703, %v3013
      %3015 = vdwg.mxu0
      %3016 = vmatpush.bf16.msra.mxu0 %v2836
      %3017 = vmatpush.bf16.msra.mxu0 %v2832
      %3018 = vmatpush.bf16.msra.mxu0 %v2828
      %3019 = vmatpush.bf16.msra.mxu0 %v2824
      %3020 = vmatpush.bf16.msra.mxu0 %v2820
      %3021 = vmatpush.bf16.msra.mxu0 %v2816
      %3022 = vmatpush.bf16.msra.mxu0 %v2812
      %3023 = vmatpush.bf16.msra.mxu0 %v2808
      %3024 = vmatmul.bf16.gmra.mxu0 %v2659
      %v3025 = vpop.f32.mrf.mxu0
      %v3026 = vadd.f32 %v2704, %v3025
      %v3027 = vpop.f32.mrf.mxu0
      %v3028 = vadd.f32 %v2704, %v3027
      %3029 = vmatmul.bf16.gmra.mxu0 %v2660
      %v3030 = vpop.f32.mrf.mxu0
      %v3031 = vadd.f32 %v2704, %v3030
      %v3032 = vpop.f32.mrf.mxu0
      %v3033 = vadd.f32 %v2704, %v3032
      %3034 = vmatmul.bf16.gmra.mxu0 %v2661
      %v3035 = vpop.f32.mrf.mxu0
      %v3036 = vadd.f32 %v2704, %v3035
      %v3037 = vpop.f32.mrf.mxu0
      %v3038 = vadd.f32 %v2704, %v3037
      %3039 = vmatmul.bf16.gmra.mxu0 %v2662
      %v3040 = vpop.f32.mrf.mxu0
      %v3041 = vadd.f32 %v2704, %v3040
      %v3042 = vpop.f32.mrf.mxu0
      %v3043 = vadd.f32 %v2704, %v3042
      %3044 = vmatmul.bf16.gmra.mxu0 %v2663
      %v3045 = vpop.f32.mrf.mxu0
      %v3046 = vadd.f32 %v2704, %v3045
      %v3047 = vpop.f32.mrf.mxu0
      %v3048 = vadd.f32 %v2704, %v3047
      %3049 = vmatmul.bf16.gmra.mxu0 %v2664
      %v3050 = vpop.f32.mrf.mxu0
      %v3051 = vadd.f32 %v2704, %v3050
      %v3052 = vpop.f32.mrf.mxu0
      %v3053 = vadd.f32 %v2704, %v3052
      %3054 = vmatmul.bf16.gmra.mxu0 %v2665
      %v3055 = vpop.f32.mrf.mxu0
      %v3056 = vadd.f32 %v2704, %v3055
      %v3057 = vpop.f32.mrf.mxu0
      %v3058 = vadd.f32 %v2704, %v3057
      %3059 = vmatmul.bf16.gmra.mxu0 %v2666
      %v3060 = vpop.f32.mrf.mxu0
      %v3061 = vadd.f32 %v2704, %v3060
      %v3062 = vpop.f32.mrf.mxu0
      %v3063 = vadd.f32 %v2704, %v3062
      %3064 = vdwg.mxu0
      %v3065 = vmax.f32 %v2879, 0.0
      %v3066 = vmax.f32 %v2928, 0.0
      %v3067 = vmax.f32 %v2977, 0.0
      %v3068 = vmax.f32 %v3026, 0.0
      %v3069 = vmax.f32 %v2881, 0.0
      %v3070 = vmax.f32 %v2930, 0.0
      %v3071 = vmax.f32 %v2979, 0.0
      %v3072 = vmax.f32 %v3028, 0.0
      %v3073 = vmax.f32 %v2884, 0.0
      %v3074 = vmax.f32 %v2933, 0.0
      %v3075 = vmax.f32 %v2982, 0.0
      %v3076 = vmax.f32 %v3031, 0.0
      %v3077 = vmax.f32 %v2886, 0.0
      %v3078 = vmax.f32 %v2935, 0.0
      %v3079 = vmax.f32 %v2984, 0.0
      %v3080 = vmax.f32 %v3033, 0.0
      %v3081 = vmax.f32 %v2889, 0.0
      %v3082 = vmax.f32 %v2938, 0.0
      %v3083 = vmax.f32 %v2987, 0.0
      %v3084 = vmax.f32 %v3036, 0.0
      %v3085 = vmax.f32 %v2891, 0.0
      %v3086 = vmax.f32 %v2940, 0.0
      %v3087 = vmax.f32 %v2989, 0.0
      %v3088 = vmax.f32 %v3038, 0.0
      %v3089 = vmax.f32 %v2894, 0.0
      %v3090 = vmax.f32 %v2943, 0.0
      %v3091 = vmax.f32 %v2992, 0.0
      %v3092 = vmax.f32 %v3041, 0.0
      %v3093 = vmax.f32 %v2896, 0.0
      %v3094 = vmax.f32 %v2945, 0.0
      %v3095 = vmax.f32 %v2994, 0.0
      %v3096 = vmax.f32 %v3043, 0.0
      %v3097 = vmax.f32 %v2899, 0.0
      %v3098 = vmax.f32 %v2948, 0.0
      %v3099 = vmax.f32 %v2997, 0.0
      %v3100 = vmax.f32 %v3046, 0.0
      %v3101 = vmax.f32 %v2901, 0.0
      %v3102 = vmax.f32 %v2950, 0.0
      %v3103 = vmax.f32 %v2999, 0.0
      %v3104 = vmax.f32 %v3048, 0.0
      %v3105 = vmax.f32 %v2904, 0.0
      %v3106 = vmax.f32 %v2953, 0.0
      %v3107 = vmax.f32 %v3002, 0.0
      %v3108 = vmax.f32 %v3051, 0.0
      %v3109 = vmax.f32 %v2906, 0.0
      %v3110 = vmax.f32 %v2955, 0.0
      %v3111 = vmax.f32 %v3004, 0.0
      %v3112 = vmax.f32 %v3053, 0.0
      %v3113 = vmax.f32 %v2909, 0.0
      %v3114 = vmax.f32 %v2958, 0.0
      %v3115 = vmax.f32 %v3007, 0.0
      %v3116 = vmax.f32 %v3056, 0.0
      %v3117 = vmax.f32 %v2911, 0.0
      %v3118 = vmax.f32 %v2960, 0.0
      %v3119 = vmax.f32 %v3009, 0.0
      %v3120 = vmax.f32 %v3058, 0.0
      %v3121 = vmax.f32 %v2914, 0.0
      %v3122 = vmax.f32 %v2963, 0.0
      %v3123 = vmax.f32 %v3012, 0.0
      %v3124 = vmax.f32 %v3061, 0.0
      %v3125 = vmax.f32 %v2916, 0.0
      %v3126 = vmax.f32 %v2965, 0.0
      %v3127 = vmax.f32 %v3014, 0.0
      %v3128 = vmax.f32 %v3063, 0.0
      %v3129 = vpack.c.bf16 %v3069, %v3065
      %v3130 = vpack.c.bf16 %v3070, %v3066
      %v3131 = vpack.c.bf16 %v3071, %v3067
      %v3132 = vpack.c.bf16 %v3072, %v3068
      %v3133 = vpack.c.bf16 %v3077, %v3073
      %v3134 = vpack.c.bf16 %v3078, %v3074
      %v3135 = vpack.c.bf16 %v3079, %v3075
      %v3136 = vpack.c.bf16 %v3080, %v3076
      %v3137 = vpack.c.bf16 %v3085, %v3081
      %v3138 = vpack.c.bf16 %v3086, %v3082
      %v3139 = vpack.c.bf16 %v3087, %v3083
      %v3140 = vpack.c.bf16 %v3088, %v3084
      %v3141 = vpack.c.bf16 %v3093, %v3089
      %v3142 = vpack.c.bf16 %v3094, %v3090
      %v3143 = vpack.c.bf16 %v3095, %v3091
      %v3144 = vpack.c.bf16 %v3096, %v3092
      %v3145 = vpack.c.bf16 %v3101, %v3097
      %v3146 = vpack.c.bf16 %v3102, %v3098
      %v3147 = vpack.c.bf16 %v3103, %v3099
      %v3148 = vpack.c.bf16 %v3104, %v3100
      %v3149 = vpack.c.bf16 %v3109, %v3105
      %v3150 = vpack.c.bf16 %v3110, %v3106
      %v3151 = vpack.c.bf16 %v3111, %v3107
      %v3152 = vpack.c.bf16 %v3112, %v3108
      %v3153 = vpack.c.bf16 %v3117, %v3113
      %v3154 = vpack.c.bf16 %v3118, %v3114
      %v3155 = vpack.c.bf16 %v3119, %v3115
      %v3156 = vpack.c.bf16 %v3120, %v3116
      %v3157 = vpack.c.bf16 %v3125, %v3121
      %v3158 = vpack.c.bf16 %v3126, %v3122
      %v3159 = vpack.c.bf16 %v3127, %v3123
      %v3160 = vpack.c.bf16 %v3128, %v3124
      %v3161 = vld [vmem:[%s10] sm:$0xf]
      %v3162 = vld [vmem:[%s10 + $0x4] sm:$0xf]
      %v3163 = vld [vmem:[%s10 + $0x8] sm:$0xf]
      %v3164 = vld [vmem:[%s10 + $0xc] sm:$0xf]
      %v3165 = vld [vmem:[%s10 + $0x10] sm:$0xf]
      %v3166 = vld [vmem:[%s10 + $0x14] sm:$0xf]
      %v3167 = vld [vmem:[%s10 + $0x18] sm:$0xf]
      %v3168 = vld [vmem:[%s10 + $0x1c] sm:$0xf]
      %v3169 = vld [vmem:[%s10 + $0x20] sm:$0xf]
      %v3170 = vld [vmem:[%s10 + $0x24] sm:$0xf]
      %v3171 = vld [vmem:[%s10 + $0x28] sm:$0xf]
      %v3172 = vld [vmem:[%s10 + $0x2c] sm:$0xf]
      %v3173 = vld [vmem:[%s10 + $0x30] sm:$0xf]
      %v3174 = vld [vmem:[%s10 + $0x34] sm:$0xf]
      %v3175 = vld [vmem:[%s10 + $0x38] sm:$0xf]
      %v3176 = vld [vmem:[%s10 + $0x3c] sm:$0xf]
      %v3177 = vld [vmem:[%s10 + $0x40] sm:$0xf]
      %v3178 = vld [vmem:[%s10 + $0x44] sm:$0xf]
      %v3179 = vld [vmem:[%s10 + $0x48] sm:$0xf]
      %v3180 = vld [vmem:[%s10 + $0x4c] sm:$0xf]
      %v3181 = vld [vmem:[%s10 + $0x50] sm:$0xf]
      %v3182 = vld [vmem:[%s10 + $0x54] sm:$0xf]
      %v3183 = vld [vmem:[%s10 + $0x58] sm:$0xf]
      %v3184 = vld [vmem:[%s10 + $0x5c] sm:$0xf]
      %v3185 = vld [vmem:[%s10 + $0x60] sm:$0xf]
      %v3186 = vld [vmem:[%s10 + $0x64] sm:$0xf]
      %v3187 = vld [vmem:[%s10 + $0x68] sm:$0xf]
      %v3188 = vld [vmem:[%s10 + $0x6c] sm:$0xf]
      %v3189 = vld [vmem:[%s10 + $0x70] sm:$0xf]
      %v3190 = vld [vmem:[%s10 + $0x74] sm:$0xf]
      %v3191 = vld [vmem:[%s10 + $0x78] sm:$0xf]
      %v3192 = vld [vmem:[%s10 + $0x7c] sm:$0xf]
      %v3193 = vld [vmem:[%s10 + $0x80] sm:$0xf]
      %v3194 = vld [vmem:[%s10 + $0x84] sm:$0xf]
      %v3195 = vld [vmem:[%s10 + $0x88] sm:$0xf]
      %v3196 = vld [vmem:[%s10 + $0x8c] sm:$0xf]
      %v3197 = vld [vmem:[%s10 + $0x90] sm:$0xf]
      %v3198 = vld [vmem:[%s10 + $0x94] sm:$0xf]
      %v3199 = vld [vmem:[%s10 + $0x98] sm:$0xf]
      %v3200 = vld [vmem:[%s10 + $0x9c] sm:$0xf]
      %v3201 = vld [vmem:[%s10 + $0xa0] sm:$0xf]
      %v3202 = vld [vmem:[%s10 + $0xa4] sm:$0xf]
      %v3203 = vld [vmem:[%s10 + $0xa8] sm:$0xf]
      %v3204 = vld [vmem:[%s10 + $0xac] sm:$0xf]
      %v3205 = vld [vmem:[%s10 + $0xb0] sm:$0xf]
      %v3206 = vld [vmem:[%s10 + $0xb4] sm:$0xf]
      %v3207 = vld [vmem:[%s10 + $0xb8] sm:$0xf]
      %v3208 = vld [vmem:[%s10 + $0xbc] sm:$0xf]
      %v3209 = vld [vmem:[%s10 + $0xc0] sm:$0xf]
      %v3210 = vld [vmem:[%s10 + $0xc4] sm:$0xf]
      %v3211 = vld [vmem:[%s10 + $0xc8] sm:$0xf]
      %v3212 = vld [vmem:[%s10 + $0xcc] sm:$0xf]
      %v3213 = vld [vmem:[%s10 + $0xd0] sm:$0xf]
      %v3214 = vld [vmem:[%s10 + $0xd4] sm:$0xf]
      %v3215 = vld [vmem:[%s10 + $0xd8] sm:$0xf]
      %v3216 = vld [vmem:[%s10 + $0xdc] sm:$0xf]
      %v3217 = vld [vmem:[%s10 + $0xe0] sm:$0xf]
      %v3218 = vld [vmem:[%s10 + $0xe4] sm:$0xf]
      %v3219 = vld [vmem:[%s10 + $0xe8] sm:$0xf]
      %v3220 = vld [vmem:[%s10 + $0xec] sm:$0xf]
      %v3221 = vld [vmem:[%s10 + $0xf0] sm:$0xf]
      %v3222 = vld [vmem:[%s10 + $0xf4] sm:$0xf]
      %v3223 = vld [vmem:[%s10 + $0xf8] sm:$0xf]
      %v3224 = vld [vmem:[%s10 + $0xfc] sm:$0xf]
      %v3225 = vld [vmem:[%s11] sm:$0x1]
      %v3227 = vperm.slane %v3225, 0
      %v3293 = vunpack.c.l.b16 %v3161
      %v3294 = vunpack.c.l.b16 %v3162
      %v3295 = vunpack.c.l.b16 %v3163
      %v3296 = vunpack.c.l.b16 %v3164
      %v3297 = vunpack.c.l.b16 %v3165
      %v3298 = vunpack.c.l.b16 %v3166
      %v3299 = vunpack.c.l.b16 %v3167
      %v3300 = vunpack.c.l.b16 %v3168
      %v3301 = vunpack.c.l.b16 %v3169
      %v3302 = vunpack.c.l.b16 %v3170
      %v3303 = vunpack.c.l.b16 %v3171
      %v3304 = vunpack.c.l.b16 %v3172
      %v3305 = vunpack.c.l.b16 %v3173
      %v3306 = vunpack.c.l.b16 %v3174
      %v3307 = vunpack.c.l.b16 %v3175
      %v3308 = vunpack.c.l.b16 %v3176
      %v3309 = vunpack.c.l.b16 %v3177
      %v3310 = vunpack.c.l.b16 %v3178
      %v3311 = vunpack.c.l.b16 %v3179
      %v3312 = vunpack.c.l.b16 %v3180
      %v3313 = vunpack.c.l.b16 %v3181
      %v3314 = vunpack.c.l.b16 %v3182
      %v3315 = vunpack.c.l.b16 %v3183
      %v3316 = vunpack.c.l.b16 %v3184
      %v3317 = vunpack.c.l.b16 %v3185
      %v3318 = vunpack.c.l.b16 %v3186
      %v3319 = vunpack.c.l.b16 %v3187
      %v3320 = vunpack.c.l.b16 %v3188
      %v3321 = vunpack.c.l.b16 %v3189
      %v3322 = vunpack.c.l.b16 %v3190
      %v3323 = vunpack.c.l.b16 %v3191
      %v3324 = vunpack.c.l.b16 %v3192
      %v3325 = vunpack.c.l.b16 %v3193
      %v3326 = vunpack.c.l.b16 %v3194
      %v3327 = vunpack.c.l.b16 %v3195
      %v3328 = vunpack.c.l.b16 %v3196
      %v3329 = vunpack.c.l.b16 %v3197
      %v3330 = vunpack.c.l.b16 %v3198
      %v3331 = vunpack.c.l.b16 %v3199
      %v3332 = vunpack.c.l.b16 %v3200
      %v3333 = vunpack.c.l.b16 %v3201
      %v3334 = vunpack.c.l.b16 %v3202
      %v3335 = vunpack.c.l.b16 %v3203
      %v3336 = vunpack.c.l.b16 %v3204
      %v3337 = vunpack.c.l.b16 %v3205
      %v3338 = vunpack.c.l.b16 %v3206
      %v3339 = vunpack.c.l.b16 %v3207
      %v3340 = vunpack.c.l.b16 %v3208
      %v3341 = vunpack.c.l.b16 %v3209
      %v3342 = vunpack.c.l.b16 %v3210
      %v3343 = vunpack.c.l.b16 %v3211
      %v3344 = vunpack.c.l.b16 %v3212
      %v3345 = vunpack.c.l.b16 %v3213
      %v3346 = vunpack.c.l.b16 %v3214
      %v3347 = vunpack.c.l.b16 %v3215
      %v3348 = vunpack.c.l.b16 %v3216
      %v3349 = vunpack.c.l.b16 %v3217
      %v3350 = vunpack.c.l.b16 %v3218
      %v3351 = vunpack.c.l.b16 %v3219
      %v3352 = vunpack.c.l.b16 %v3220
      %v3353 = vunpack.c.l.b16 %v3221
      %v3354 = vunpack.c.l.b16 %v3222
      %v3355 = vunpack.c.l.b16 %v3223
      %v3356 = vunpack.c.l.b16 %v3224
      %v3357 = vpack.c.b16 %v3294, %v3293
      %v3358 = vpack.c.b16 %v3296, %v3295
      %v3359 = vpack.c.b16 %v3298, %v3297
      %v3360 = vpack.c.b16 %v3300, %v3299
      %v3361 = vpack.c.b16 %v3302, %v3301
      %v3362 = vpack.c.b16 %v3304, %v3303
      %v3363 = vpack.c.b16 %v3306, %v3305
      %v3364 = vpack.c.b16 %v3308, %v3307
      %v3365 = vpack.c.b16 %v3310, %v3309
      %v3366 = vpack.c.b16 %v3312, %v3311
      %v3367 = vpack.c.b16 %v3314, %v3313
      %v3368 = vpack.c.b16 %v3316, %v3315
      %v3369 = vpack.c.b16 %v3318, %v3317
      %v3370 = vpack.c.b16 %v3320, %v3319
      %v3371 = vpack.c.b16 %v3322, %v3321
      %v3372 = vpack.c.b16 %v3324, %v3323
      %v3373 = vpack.c.b16 %v3326, %v3325
      %v3374 = vpack.c.b16 %v3328, %v3327
      %v3375 = vpack.c.b16 %v3330, %v3329
      %v3376 = vpack.c.b16 %v3332, %v3331
      %v3377 = vpack.c.b16 %v3334, %v3333
      %v3378 = vpack.c.b16 %v3336, %v3335
      %v3379 = vpack.c.b16 %v3338, %v3337
      %v3380 = vpack.c.b16 %v3340, %v3339
      %v3381 = vpack.c.b16 %v3342, %v3341
      %v3382 = vpack.c.b16 %v3344, %v3343
      %v3383 = vpack.c.b16 %v3346, %v3345
      %v3384 = vpack.c.b16 %v3348, %v3347
      %v3385 = vpack.c.b16 %v3350, %v3349
      %v3386 = vpack.c.b16 %v3352, %v3351
      %v3387 = vpack.c.b16 %v3354, %v3353
      %v3388 = vpack.c.b16 %v3356, %v3355
      %3421 = vmatpush.bf16.msra.mxu0 %v3364
      %3422 = vmatpush.bf16.msra.mxu0 %v3363
      %3423 = vmatpush.bf16.msra.mxu0 %v3362
      %3424 = vmatpush.bf16.msra.mxu0 %v3361
      %3425 = vmatpush.bf16.msra.mxu0 %v3360
      %3426 = vmatpush.bf16.msra.mxu0 %v3359
      %3427 = vmatpush.bf16.msra.mxu0 %v3358
      %3428 = vmatpush.bf16.msra.mxu0 %v3357
      %3429 = vmatmul.bf16.gmra.mxu0 %v3129
      %v3430 = vpop.f32.mrf.mxu0
      %v3431 = vadd.f32 %v3227, %v3430
      %v3432 = vpop.f32.mrf.mxu0
      %v3433 = vadd.f32 %v3227, %v3432
      %3434 = vmatmul.bf16.gmra.mxu0 %v3133
      %v3435 = vpop.f32.mrf.mxu0
      %v3436 = vadd.f32 %v3227, %v3435
      %v3437 = vpop.f32.mrf.mxu0
      %v3438 = vadd.f32 %v3227, %v3437
      %3439 = vmatmul.bf16.gmra.mxu0 %v3137
      %v3440 = vpop.f32.mrf.mxu0
      %v3441 = vadd.f32 %v3227, %v3440
      %v3442 = vpop.f32.mrf.mxu0
      %v3443 = vadd.f32 %v3227, %v3442
      %3444 = vmatmul.bf16.gmra.mxu0 %v3141
      %v3445 = vpop.f32.mrf.mxu0
      %v3446 = vadd.f32 %v3227, %v3445
      %v3447 = vpop.f32.mrf.mxu0
      %v3448 = vadd.f32 %v3227, %v3447
      %3449 = vmatmul.bf16.gmra.mxu0 %v3145
      %v3450 = vpop.f32.mrf.mxu0
      %v3451 = vadd.f32 %v3227, %v3450
      %v3452 = vpop.f32.mrf.mxu0
      %v3453 = vadd.f32 %v3227, %v3452
      %3454 = vmatmul.bf16.gmra.mxu0 %v3149
      %v3455 = vpop.f32.mrf.mxu0
      %v3456 = vadd.f32 %v3227, %v3455
      %v3457 = vpop.f32.mrf.mxu0
      %v3458 = vadd.f32 %v3227, %v3457
      %3459 = vmatmul.bf16.gmra.mxu0 %v3153
      %v3460 = vpop.f32.mrf.mxu0
      %v3461 = vadd.f32 %v3227, %v3460
      %v3462 = vpop.f32.mrf.mxu0
      %v3463 = vadd.f32 %v3227, %v3462
      %3464 = vmatmul.bf16.gmra.mxu0 %v3157
      %v3465 = vpop.f32.mrf.mxu0
      %v3466 = vadd.f32 %v3227, %v3465
      %v3467 = vpop.f32.mrf.mxu0
      %v3468 = vadd.f32 %v3227, %v3467
      %3469 = vdwg.mxu0
      %3470 = vmatpush.bf16.msra.mxu0 %v3372
      %3471 = vmatpush.bf16.msra.mxu0 %v3371
      %3472 = vmatpush.bf16.msra.mxu0 %v3370
      %3473 = vmatpush.bf16.msra.mxu0 %v3369
      %3474 = vmatpush.bf16.msra.mxu0 %v3368
      %3475 = vmatpush.bf16.msra.mxu0 %v3367
      %3476 = vmatpush.bf16.msra.mxu0 %v3366
      %3477 = vmatpush.bf16.msra.mxu0 %v3365
      %3478 = vmatmul.bf16.gmra.mxu0 %v3130
      %v3479 = vpop.f32.mrf.mxu0
      %v3480 = vadd.f32 %v3431, %v3479
      %v3481 = vpop.f32.mrf.mxu0
      %v3482 = vadd.f32 %v3433, %v3481
      %3483 = vmatmul.bf16.gmra.mxu0 %v3134
      %v3484 = vpop.f32.mrf.mxu0
      %v3485 = vadd.f32 %v3436, %v3484
      %v3486 = vpop.f32.mrf.mxu0
      %v3487 = vadd.f32 %v3438, %v3486
      %3488 = vmatmul.bf16.gmra.mxu0 %v3138
      %v3489 = vpop.f32.mrf.mxu0
      %v3490 = vadd.f32 %v3441, %v3489
      %v3491 = vpop.f32.mrf.mxu0
      %v3492 = vadd.f32 %v3443, %v3491
      %3493 = vmatmul.bf16.gmra.mxu0 %v3142
      %v3494 = vpop.f32.mrf.mxu0
      %v3495 = vadd.f32 %v3446, %v3494
      %v3496 = vpop.f32.mrf.mxu0
      %v3497 = vadd.f32 %v3448, %v3496
      %3498 = vmatmul.bf16.gmra.mxu0 %v3146
      %v3499 = vpop.f32.mrf.mxu0
      %v3500 = vadd.f32 %v3451, %v3499
      %v3501 = vpop.f32.mrf.mxu0
      %v3502 = vadd.f32 %v3453, %v3501
      %3503 = vmatmul.bf16.gmra.mxu0 %v3150
      %v3504 = vpop.f32.mrf.mxu0
      %v3505 = vadd.f32 %v3456, %v3504
      %v3506 = vpop.f32.mrf.mxu0
      %v3507 = vadd.f32 %v3458, %v3506
      %3508 = vmatmul.bf16.gmra.mxu0 %v3154
      %v3509 = vpop.f32.mrf.mxu0
      %v3510 = vadd.f32 %v3461, %v3509
      %v3511 = vpop.f32.mrf.mxu0
      %v3512 = vadd.f32 %v3463, %v3511
      %3513 = vmatmul.bf16.gmra.mxu0 %v3158
      %v3514 = vpop.f32.mrf.mxu0
      %v3515 = vadd.f32 %v3466, %v3514
      %v3516 = vpop.f32.mrf.mxu0
      %v3517 = vadd.f32 %v3468, %v3516
      %3518 = vdwg.mxu0
      %3519 = vmatpush.bf16.msra.mxu0 %v3380
      %3520 = vmatpush.bf16.msra.mxu0 %v3379
      %3521 = vmatpush.bf16.msra.mxu0 %v3378
      %3522 = vmatpush.bf16.msra.mxu0 %v3377
      %3523 = vmatpush.bf16.msra.mxu0 %v3376
      %3524 = vmatpush.bf16.msra.mxu0 %v3375
      %3525 = vmatpush.bf16.msra.mxu0 %v3374
      %3526 = vmatpush.bf16.msra.mxu0 %v3373
      %3527 = vmatmul.bf16.gmra.mxu0 %v3131
      %v3528 = vpop.f32.mrf.mxu0
      %v3529 = vadd.f32 %v3480, %v3528
      %v3530 = vpop.f32.mrf.mxu0
      %v3531 = vadd.f32 %v3482, %v3530
      %3532 = vmatmul.bf16.gmra.mxu0 %v3135
      %v3533 = vpop.f32.mrf.mxu0
      %v3534 = vadd.f32 %v3485, %v3533
      %v3535 = vpop.f32.mrf.mxu0
      %v3536 = vadd.f32 %v3487, %v3535
      %3537 = vmatmul.bf16.gmra.mxu0 %v3139
      %v3538 = vpop.f32.mrf.mxu0
      %v3539 = vadd.f32 %v3490, %v3538
      %v3540 = vpop.f32.mrf.mxu0
      %v3541 = vadd.f32 %v3492, %v3540
      %3542 = vmatmul.bf16.gmra.mxu0 %v3143
      %v3543 = vpop.f32.mrf.mxu0
      %v3544 = vadd.f32 %v3495, %v3543
      %v3545 = vpop.f32.mrf.mxu0
      %v3546 = vadd.f32 %v3497, %v3545
      %3547 = vmatmul.bf16.gmra.mxu0 %v3147
      %v3548 = vpop.f32.mrf.mxu0
      %v3549 = vadd.f32 %v3500, %v3548
      %v3550 = vpop.f32.mrf.mxu0
      %v3551 = vadd.f32 %v3502, %v3550
      %3552 = vmatmul.bf16.gmra.mxu0 %v3151
      %v3553 = vpop.f32.mrf.mxu0
      %v3554 = vadd.f32 %v3505, %v3553
      %v3555 = vpop.f32.mrf.mxu0
      %v3556 = vadd.f32 %v3507, %v3555
      %3557 = vmatmul.bf16.gmra.mxu0 %v3155
      %v3558 = vpop.f32.mrf.mxu0
      %v3559 = vadd.f32 %v3510, %v3558
      %v3560 = vpop.f32.mrf.mxu0
      %v3561 = vadd.f32 %v3512, %v3560
      %3562 = vmatmul.bf16.gmra.mxu0 %v3159
      %v3563 = vpop.f32.mrf.mxu0
      %v3564 = vadd.f32 %v3515, %v3563
      %v3565 = vpop.f32.mrf.mxu0
      %v3566 = vadd.f32 %v3517, %v3565
      %3567 = vdwg.mxu0
      %3568 = vmatpush.bf16.msra.mxu0 %v3388
      %3569 = vmatpush.bf16.msra.mxu0 %v3387
      %3570 = vmatpush.bf16.msra.mxu0 %v3386
      %3571 = vmatpush.bf16.msra.mxu0 %v3385
      %3572 = vmatpush.bf16.msra.mxu0 %v3384
      %3573 = vmatpush.bf16.msra.mxu0 %v3383
      %3574 = vmatpush.bf16.msra.mxu0 %v3382
      %3575 = vmatpush.bf16.msra.mxu0 %v3381
      %3576 = vmatmul.bf16.gmra.mxu0 %v3132
      %v3577 = vpop.f32.mrf.mxu0
      %v3578 = vadd.f32 %v3529, %v3577
      %v3579 = vpop.f32.mrf.mxu0
      %v3580 = vadd.f32 %v3531, %v3579
      %3581 = vmatmul.bf16.gmra.mxu0 %v3136
      %v3582 = vpop.f32.mrf.mxu0
      %v3583 = vadd.f32 %v3534, %v3582
      %v3584 = vpop.f32.mrf.mxu0
      %v3585 = vadd.f32 %v3536, %v3584
      %3586 = vmatmul.bf16.gmra.mxu0 %v3140
      %v3587 = vpop.f32.mrf.mxu0
      %v3588 = vadd.f32 %v3539, %v3587
      %v3589 = vpop.f32.mrf.mxu0
      %v3590 = vadd.f32 %v3541, %v3589
      %3591 = vmatmul.bf16.gmra.mxu0 %v3144
      %v3592 = vpop.f32.mrf.mxu0
      %v3593 = vadd.f32 %v3544, %v3592
      %v3594 = vpop.f32.mrf.mxu0
      %v3595 = vadd.f32 %v3546, %v3594
      %3596 = vmatmul.bf16.gmra.mxu0 %v3148
      %v3597 = vpop.f32.mrf.mxu0
      %v3598 = vadd.f32 %v3549, %v3597
      %v3599 = vpop.f32.mrf.mxu0
      %v3600 = vadd.f32 %v3551, %v3599
      %3601 = vmatmul.bf16.gmra.mxu0 %v3152
      %v3602 = vpop.f32.mrf.mxu0
      %v3603 = vadd.f32 %v3554, %v3602
      %v3604 = vpop.f32.mrf.mxu0
      %v3605 = vadd.f32 %v3556, %v3604
      %3606 = vmatmul.bf16.gmra.mxu0 %v3156
      %v3607 = vpop.f32.mrf.mxu0
      %v3608 = vadd.f32 %v3559, %v3607
      %v3609 = vpop.f32.mrf.mxu0
      %v3610 = vadd.f32 %v3561, %v3609
      %3611 = vmatmul.bf16.gmra.mxu0 %v3160
      %v3612 = vpop.f32.mrf.mxu0
      %v3613 = vadd.f32 %v3564, %v3612
      %v3614 = vpop.f32.mrf.mxu0
      %v3615 = vadd.f32 %v3566, %v3614
      %3616 = vdwg.mxu0
      %v3617 = vadd.f32 %v2283, %v3578
      %v3618 = vadd.f32 %v2284, %v3580
      %v3619 = vadd.f32 %v2285, %v3583
      %v3620 = vadd.f32 %v2286, %v3585
      %v3621 = vadd.f32 %v2287, %v3588
      %v3622 = vadd.f32 %v2288, %v3590
      %v3623 = vadd.f32 %v2289, %v3593
      %v3624 = vadd.f32 %v2290, %v3595
      %v3625 = vadd.f32 %v2291, %v3598
      %v3626 = vadd.f32 %v2292, %v3600
      %v3627 = vadd.f32 %v2293, %v3603
      %v3628 = vadd.f32 %v2294, %v3605
      %v3629 = vadd.f32 %v2295, %v3608
      %v3630 = vadd.f32 %v2296, %v3610
      %v3631 = vadd.f32 %v2297, %v3613
      %v3632 = vadd.f32 %v2298, %v3615
      %s3633 = scalar_lea.vmem %s1, 1
      %v3634 = vld [vmem:[%s3633] sm:$0x1]
      %s3635 = scalar_lea.vmem %s2, 1
      %v3636 = vld [vmem:[%s3635] sm:$0x1]
      %3637 = vadd.xlane.f32.xlu0 %v3617
      %v3638 = vpop.xlane.xlu0 %3637
      %3639 = vadd.xlane.f32.xlu0 %v3618
      %v3640 = vpop.xlane.xlu0 %3639
      %3641 = vadd.xlane.f32.xlu0 %v3619
      %v3642 = vpop.xlane.xlu0 %3641
      %3643 = vadd.xlane.f32.xlu0 %v3620
      %v3644 = vpop.xlane.xlu0 %3643
      %3645 = vadd.xlane.f32.xlu0 %v3621
      %v3646 = vpop.xlane.xlu0 %3645
      %3647 = vadd.xlane.f32.xlu0 %v3622
      %v3648 = vpop.xlane.xlu0 %3647
      %3649 = vadd.xlane.f32.xlu0 %v3623
      %v3650 = vpop.xlane.xlu0 %3649
      %3651 = vadd.xlane.f32.xlu0 %v3624
      %v3652 = vpop.xlane.xlu0 %3651
      %3653 = vadd.xlane.f32.xlu0 %v3625
      %v3654 = vpop.xlane.xlu0 %3653
      %3655 = vadd.xlane.f32.xlu0 %v3626
      %v3656 = vpop.xlane.xlu0 %3655
      %3657 = vadd.xlane.f32.xlu0 %v3627
      %v3658 = vpop.xlane.xlu0 %3657
      %3659 = vadd.xlane.f32.xlu0 %v3628
      %v3660 = vpop.xlane.xlu0 %3659
      %3661 = vadd.xlane.f32.xlu0 %v3629
      %v3662 = vpop.xlane.xlu0 %3661
      %3663 = vadd.xlane.f32.xlu0 %v3630
      %v3664 = vpop.xlane.xlu0 %3663
      %3665 = vadd.xlane.f32.xlu0 %v3631
      %v3666 = vpop.xlane.xlu0 %3665
      %3667 = vadd.xlane.f32.xlu0 %v3632
      %v3668 = vpop.xlane.xlu0 %3667
      %v3669 = vmul.f32 %v3638, %v630
      %v3670 = vmul.f32 %v3640, %v630
      %v3671 = vmul.f32 %v3642, %v630
      %v3672 = vmul.f32 %v3644, %v630
      %v3673 = vmul.f32 %v3646, %v630
      %v3674 = vmul.f32 %v3648, %v630
      %v3675 = vmul.f32 %v3650, %v630
      %v3676 = vmul.f32 %v3652, %v630
      %v3677 = vmul.f32 %v3654, %v630
      %v3678 = vmul.f32 %v3656, %v630
      %v3679 = vmul.f32 %v3658, %v630
      %v3680 = vmul.f32 %v3660, %v630
      %v3681 = vmul.f32 %v3662, %v630
      %v3682 = vmul.f32 %v3664, %v630
      %v3683 = vmul.f32 %v3666, %v630
      %v3684 = vmul.f32 %v3668, %v630
      %v3685 = vsub.f32 %v3617, %v3669
      %v3686 = vsub.f32 %v3618, %v3670
      %v3687 = vsub.f32 %v3619, %v3671
      %v3688 = vsub.f32 %v3620, %v3672
      %v3689 = vsub.f32 %v3621, %v3673
      %v3690 = vsub.f32 %v3622, %v3674
      %v3691 = vsub.f32 %v3623, %v3675
      %v3692 = vsub.f32 %v3624, %v3676
      %v3693 = vsub.f32 %v3625, %v3677
      %v3694 = vsub.f32 %v3626, %v3678
      %v3695 = vsub.f32 %v3627, %v3679
      %v3696 = vsub.f32 %v3628, %v3680
      %v3697 = vsub.f32 %v3629, %v3681
      %v3698 = vsub.f32 %v3630, %v3682
      %v3699 = vsub.f32 %v3631, %v3683
      %v3700 = vsub.f32 %v3632, %v3684
      %v3701 = vmul.f32 %v3685, %v3685
      %v3702 = vmul.f32 %v3686, %v3686
      %v3703 = vmul.f32 %v3687, %v3687
      %v3704 = vmul.f32 %v3688, %v3688
      %v3705 = vmul.f32 %v3689, %v3689
      %v3706 = vmul.f32 %v3690, %v3690
      %v3707 = vmul.f32 %v3691, %v3691
      %v3708 = vmul.f32 %v3692, %v3692
      %v3709 = vmul.f32 %v3693, %v3693
      %v3710 = vmul.f32 %v3694, %v3694
      %v3711 = vmul.f32 %v3695, %v3695
      %v3712 = vmul.f32 %v3696, %v3696
      %v3713 = vmul.f32 %v3697, %v3697
      %v3714 = vmul.f32 %v3698, %v3698
      %v3715 = vmul.f32 %v3699, %v3699
      %v3716 = vmul.f32 %v3700, %v3700
      %3717 = vadd.xlane.f32.xlu0 %v3701
      %v3718 = vpop.xlane.xlu0 %3717
      %3719 = vadd.xlane.f32.xlu0 %v3702
      %v3720 = vpop.xlane.xlu0 %3719
      %3721 = vadd.xlane.f32.xlu0 %v3703
      %v3722 = vpop.xlane.xlu0 %3721
      %3723 = vadd.xlane.f32.xlu0 %v3704
      %v3724 = vpop.xlane.xlu0 %3723
      %3725 = vadd.xlane.f32.xlu0 %v3705
      %v3726 = vpop.xlane.xlu0 %3725
      %3727 = vadd.xlane.f32.xlu0 %v3706
      %v3728 = vpop.xlane.xlu0 %3727
      %3729 = vadd.xlane.f32.xlu0 %v3707
      %v3730 = vpop.xlane.xlu0 %3729
      %3731 = vadd.xlane.f32.xlu0 %v3708
      %v3732 = vpop.xlane.xlu0 %3731
      %3733 = vadd.xlane.f32.xlu0 %v3709
      %v3734 = vpop.xlane.xlu0 %3733
      %3735 = vadd.xlane.f32.xlu0 %v3710
      %v3736 = vpop.xlane.xlu0 %3735
      %3737 = vadd.xlane.f32.xlu0 %v3711
      %v3738 = vpop.xlane.xlu0 %3737
      %3739 = vadd.xlane.f32.xlu0 %v3712
      %v3740 = vpop.xlane.xlu0 %3739
      %3741 = vadd.xlane.f32.xlu0 %v3713
      %v3742 = vpop.xlane.xlu0 %3741
      %3743 = vadd.xlane.f32.xlu0 %v3714
      %v3744 = vpop.xlane.xlu0 %3743
      %3745 = vadd.xlane.f32.xlu0 %v3715
      %v3746 = vpop.xlane.xlu0 %3745
      %3747 = vadd.xlane.f32.xlu0 %v3716
      %v3748 = vpop.xlane.xlu0 %3747
      %v3749 = vmul.f32 %v3718, %v630
      %v3750 = vmul.f32 %v3720, %v630
      %v3751 = vmul.f32 %v3722, %v630
      %v3752 = vmul.f32 %v3724, %v630
      %v3753 = vmul.f32 %v3726, %v630
      %v3754 = vmul.f32 %v3728, %v630
      %v3755 = vmul.f32 %v3730, %v630
      %v3756 = vmul.f32 %v3732, %v630
      %v3757 = vmul.f32 %v3734, %v630
      %v3758 = vmul.f32 %v3736, %v630
      %v3759 = vmul.f32 %v3738, %v630
      %v3760 = vmul.f32 %v3740, %v630
      %v3761 = vmul.f32 %v3742, %v630
      %v3762 = vmul.f32 %v3744, %v630
      %v3763 = vmul.f32 %v3746, %v630
      %v3764 = vmul.f32 %v3748, %v630
      %v3765 = vadd.f32 %v3749, 1e-05
      %v3766 = vadd.f32 %v3750, 1e-05
      %v3767 = vadd.f32 %v3751, 1e-05
      %v3768 = vadd.f32 %v3752, 1e-05
      %v3769 = vadd.f32 %v3753, 1e-05
      %v3770 = vadd.f32 %v3754, 1e-05
      %v3771 = vadd.f32 %v3755, 1e-05
      %v3772 = vadd.f32 %v3756, 1e-05
      %v3773 = vadd.f32 %v3757, 1e-05
      %v3774 = vadd.f32 %v3758, 1e-05
      %v3775 = vadd.f32 %v3759, 1e-05
      %v3776 = vadd.f32 %v3760, 1e-05
      %v3777 = vadd.f32 %v3761, 1e-05
      %v3778 = vadd.f32 %v3762, 1e-05
      %v3779 = vadd.f32 %v3763, 1e-05
      %v3780 = vadd.f32 %v3764, 1e-05
      %v3781 = vrsqrt.pop %v3765
      %v3782 = vmul.f32 %v3781, %v3765
      %v3783 = vmul.f32 %v3782, %v3781
      %v3784 = vmul.f32 0.5, %v3783
      %v3785 = vsub.f32 1.5, %v3784
      %v3786 = vmul.f32 %v3781, %v3785
      %vm3787 = vweird.f32 %v3765
      %vm3788 = vweird.f32 %v3781
      %vm3789 = vmor %vm3787, %vm3788
      %v3790 = vsel %vm3789, %v3781, %v3786
      %v3791 = vrsqrt.pop %v3766
      %v3792 = vmul.f32 %v3791, %v3766
      %v3793 = vmul.f32 %v3792, %v3791
      %v3794 = vmul.f32 0.5, %v3793
      %v3795 = vsub.f32 1.5, %v3794
      %v3796 = vmul.f32 %v3791, %v3795
      %vm3797 = vweird.f32 %v3766
      %vm3798 = vweird.f32 %v3791
      %vm3799 = vmor %vm3797, %vm3798
      %v3800 = vsel %vm3799, %v3791, %v3796
      %v3801 = vrsqrt.pop %v3767
      %v3802 = vmul.f32 %v3801, %v3767
      %v3803 = vmul.f32 %v3802, %v3801
      %v3804 = vmul.f32 0.5, %v3803
      %v3805 = vsub.f32 1.5, %v3804
      %v3806 = vmul.f32 %v3801, %v3805
      %vm3807 = vweird.f32 %v3767
      %vm3808 = vweird.f32 %v3801
      %vm3809 = vmor %vm3807, %vm3808
      %v3810 = vsel %vm3809, %v3801, %v3806
      %v3811 = vrsqrt.pop %v3768
      %v3812 = vmul.f32 %v3811, %v3768
      %v3813 = vmul.f32 %v3812, %v3811
      %v3814 = vmul.f32 0.5, %v3813
      %v3815 = vsub.f32 1.5, %v3814
      %v3816 = vmul.f32 %v3811, %v3815
      %vm3817 = vweird.f32 %v3768
      %vm3818 = vweird.f32 %v3811
      %vm3819 = vmor %vm3817, %vm3818
      %v3820 = vsel %vm3819, %v3811, %v3816
      %v3821 = vrsqrt.pop %v3769
      %v3822 = vmul.f32 %v3821, %v3769
      %v3823 = vmul.f32 %v3822, %v3821
      %v3824 = vmul.f32 0.5, %v3823
      %v3825 = vsub.f32 1.5, %v3824
      %v3826 = vmul.f32 %v3821, %v3825
      %vm3827 = vweird.f32 %v3769
      %vm3828 = vweird.f32 %v3821
      %vm3829 = vmor %vm3827, %vm3828
      %v3830 = vsel %vm3829, %v3821, %v3826
      %v3831 = vrsqrt.pop %v3770
      %v3832 = vmul.f32 %v3831, %v3770
      %v3833 = vmul.f32 %v3832, %v3831
      %v3834 = vmul.f32 0.5, %v3833
      %v3835 = vsub.f32 1.5, %v3834
      %v3836 = vmul.f32 %v3831, %v3835
      %vm3837 = vweird.f32 %v3770
      %vm3838 = vweird.f32 %v3831
      %vm3839 = vmor %vm3837, %vm3838
      %v3840 = vsel %vm3839, %v3831, %v3836
      %v3841 = vrsqrt.pop %v3771
      %v3842 = vmul.f32 %v3841, %v3771
      %v3843 = vmul.f32 %v3842, %v3841
      %v3844 = vmul.f32 0.5, %v3843
      %v3845 = vsub.f32 1.5, %v3844
      %v3846 = vmul.f32 %v3841, %v3845
      %vm3847 = vweird.f32 %v3771
      %vm3848 = vweird.f32 %v3841
      %vm3849 = vmor %vm3847, %vm3848
      %v3850 = vsel %vm3849, %v3841, %v3846
      %v3851 = vrsqrt.pop %v3772
      %v3852 = vmul.f32 %v3851, %v3772
      %v3853 = vmul.f32 %v3852, %v3851
      %v3854 = vmul.f32 0.5, %v3853
      %v3855 = vsub.f32 1.5, %v3854
      %v3856 = vmul.f32 %v3851, %v3855
      %vm3857 = vweird.f32 %v3772
      %vm3858 = vweird.f32 %v3851
      %vm3859 = vmor %vm3857, %vm3858
      %v3860 = vsel %vm3859, %v3851, %v3856
      %v3861 = vrsqrt.pop %v3773
      %v3862 = vmul.f32 %v3861, %v3773
      %v3863 = vmul.f32 %v3862, %v3861
      %v3864 = vmul.f32 0.5, %v3863
      %v3865 = vsub.f32 1.5, %v3864
      %v3866 = vmul.f32 %v3861, %v3865
      %vm3867 = vweird.f32 %v3773
      %vm3868 = vweird.f32 %v3861
      %vm3869 = vmor %vm3867, %vm3868
      %v3870 = vsel %vm3869, %v3861, %v3866
      %v3871 = vrsqrt.pop %v3774
      %v3872 = vmul.f32 %v3871, %v3774
      %v3873 = vmul.f32 %v3872, %v3871
      %v3874 = vmul.f32 0.5, %v3873
      %v3875 = vsub.f32 1.5, %v3874
      %v3876 = vmul.f32 %v3871, %v3875
      %vm3877 = vweird.f32 %v3774
      %vm3878 = vweird.f32 %v3871
      %vm3879 = vmor %vm3877, %vm3878
      %v3880 = vsel %vm3879, %v3871, %v3876
      %v3881 = vrsqrt.pop %v3775
      %v3882 = vmul.f32 %v3881, %v3775
      %v3883 = vmul.f32 %v3882, %v3881
      %v3884 = vmul.f32 0.5, %v3883
      %v3885 = vsub.f32 1.5, %v3884
      %v3886 = vmul.f32 %v3881, %v3885
      %vm3887 = vweird.f32 %v3775
      %vm3888 = vweird.f32 %v3881
      %vm3889 = vmor %vm3887, %vm3888
      %v3890 = vsel %vm3889, %v3881, %v3886
      %v3891 = vrsqrt.pop %v3776
      %v3892 = vmul.f32 %v3891, %v3776
      %v3893 = vmul.f32 %v3892, %v3891
      %v3894 = vmul.f32 0.5, %v3893
      %v3895 = vsub.f32 1.5, %v3894
      %v3896 = vmul.f32 %v3891, %v3895
      %vm3897 = vweird.f32 %v3776
      %vm3898 = vweird.f32 %v3891
      %vm3899 = vmor %vm3897, %vm3898
      %v3900 = vsel %vm3899, %v3891, %v3896
      %v3901 = vrsqrt.pop %v3777
      %v3902 = vmul.f32 %v3901, %v3777
      %v3903 = vmul.f32 %v3902, %v3901
      %v3904 = vmul.f32 0.5, %v3903
      %v3905 = vsub.f32 1.5, %v3904
      %v3906 = vmul.f32 %v3901, %v3905
      %vm3907 = vweird.f32 %v3777
      %vm3908 = vweird.f32 %v3901
      %vm3909 = vmor %vm3907, %vm3908
      %v3910 = vsel %vm3909, %v3901, %v3906
      %v3911 = vrsqrt.pop %v3778
      %v3912 = vmul.f32 %v3911, %v3778
      %v3913 = vmul.f32 %v3912, %v3911
      %v3914 = vmul.f32 0.5, %v3913
      %v3915 = vsub.f32 1.5, %v3914
      %v3916 = vmul.f32 %v3911, %v3915
      %vm3917 = vweird.f32 %v3778
      %vm3918 = vweird.f32 %v3911
      %vm3919 = vmor %vm3917, %vm3918
      %v3920 = vsel %vm3919, %v3911, %v3916
      %v3921 = vrsqrt.pop %v3779
      %v3922 = vmul.f32 %v3921, %v3779
      %v3923 = vmul.f32 %v3922, %v3921
      %v3924 = vmul.f32 0.5, %v3923
      %v3925 = vsub.f32 1.5, %v3924
      %v3926 = vmul.f32 %v3921, %v3925
      %vm3927 = vweird.f32 %v3779
      %vm3928 = vweird.f32 %v3921
      %vm3929 = vmor %vm3927, %vm3928
      %v3930 = vsel %vm3929, %v3921, %v3926
      %v3931 = vrsqrt.pop %v3780
      %v3932 = vmul.f32 %v3931, %v3780
      %v3933 = vmul.f32 %v3932, %v3931
      %v3934 = vmul.f32 0.5, %v3933
      %v3935 = vsub.f32 1.5, %v3934
      %v3936 = vmul.f32 %v3931, %v3935
      %vm3937 = vweird.f32 %v3780
      %vm3938 = vweird.f32 %v3931
      %vm3939 = vmor %vm3937, %vm3938
      %v3940 = vsel %vm3939, %v3931, %v3936
      %v3941 = vmul.f32 %v3685, %v3790
      %v3942 = vmul.f32 %v3686, %v3800
      %v3943 = vmul.f32 %v3687, %v3810
      %v3944 = vmul.f32 %v3688, %v3820
      %v3945 = vmul.f32 %v3689, %v3830
      %v3946 = vmul.f32 %v3690, %v3840
      %v3947 = vmul.f32 %v3691, %v3850
      %v3948 = vmul.f32 %v3692, %v3860
      %v3949 = vmul.f32 %v3693, %v3870
      %v3950 = vmul.f32 %v3694, %v3880
      %v3951 = vmul.f32 %v3695, %v3890
      %v3952 = vmul.f32 %v3696, %v3900
      %v3953 = vmul.f32 %v3697, %v3910
      %v3954 = vmul.f32 %v3698, %v3920
      %v3955 = vmul.f32 %v3699, %v3930
      %v3956 = vmul.f32 %v3700, %v3940
      %v3958 = vperm.slane %v3634, 0
      %v3960 = vmul.f32 %v3941, %v3958
      %v3961 = vmul.f32 %v3942, %v3958
      %v3962 = vmul.f32 %v3943, %v3958
      %v3963 = vmul.f32 %v3944, %v3958
      %v3964 = vmul.f32 %v3945, %v3958
      %v3965 = vmul.f32 %v3946, %v3958
      %v3966 = vmul.f32 %v3947, %v3958
      %v3967 = vmul.f32 %v3948, %v3958
      %v3968 = vmul.f32 %v3949, %v3958
      %v3969 = vmul.f32 %v3950, %v3958
      %v3970 = vmul.f32 %v3951, %v3958
      %v3971 = vmul.f32 %v3952, %v3958
      %v3972 = vmul.f32 %v3953, %v3958
      %v3973 = vmul.f32 %v3954, %v3958
      %v3974 = vmul.f32 %v3955, %v3958
      %v3975 = vmul.f32 %v3956, %v3958
      %v3977 = vperm.slane %v3636, 0
      %v3979 = vadd.f32 %v3960, %v3977
      %v3980 = vadd.f32 %v3961, %v3977
      %v3981 = vadd.f32 %v3962, %v3977
      %v3982 = vadd.f32 %v3963, %v3977
      %v3983 = vadd.f32 %v3964, %v3977
      %v3984 = vadd.f32 %v3965, %v3977
      %v3985 = vadd.f32 %v3966, %v3977
      %v3986 = vadd.f32 %v3967, %v3977
      %v3987 = vadd.f32 %v3968, %v3977
      %v3988 = vadd.f32 %v3969, %v3977
      %v3989 = vadd.f32 %v3970, %v3977
      %v3990 = vadd.f32 %v3971, %v3977
      %v3991 = vadd.f32 %v3972, %v3977
      %v3992 = vadd.f32 %v3973, %v3977
      %v3993 = vadd.f32 %v3974, %v3977
      %v3994 = vadd.f32 %v3975, %v3977
      %v3995 = vpack.c.bf16 %v3980, %v3979
      %v3996 = vpack.c.bf16 %v3982, %v3981
      %v3997 = vpack.c.bf16 %v3984, %v3983
      %v3998 = vpack.c.bf16 %v3986, %v3985
      %v3999 = vpack.c.bf16 %v3988, %v3987
      %v4000 = vpack.c.bf16 %v3990, %v3989
      %v4001 = vpack.c.bf16 %v3992, %v3991
      %v4002 = vpack.c.bf16 %v3994, %v3993
      %s4003 = scalar_lea.vmem %s3, 192
      %v4004 = vld [vmem:[%s4003] sm:$0xff]
      %v4005 = vld [vmem:[%s4003 + $0x8] sm:$0xf]
      %v4006 = vld [vmem:[%s4003 + $0xc] sm:$0xff]
      %v4007 = vld [vmem:[%s4003 + $0x14] sm:$0xf]
      %v4008 = vld [vmem:[%s4003 + $0x18] sm:$0xff]
      %v4009 = vld [vmem:[%s4003 + $0x20] sm:$0xf]
      %v4010 = vld [vmem:[%s4003 + $0x24] sm:$0xff]
      %v4011 = vld [vmem:[%s4003 + $0x2c] sm:$0xf]
      %v4012 = vld [vmem:[%s4003 + $0x30] sm:$0xff]
      %v4013 = vld [vmem:[%s4003 + $0x38] sm:$0xf]
      %v4014 = vld [vmem:[%s4003 + $0x3c] sm:$0xff]
      %v4015 = vld [vmem:[%s4003 + $0x44] sm:$0xf]
      %v4016 = vld [vmem:[%s4003 + $0x48] sm:$0xff]
      %v4017 = vld [vmem:[%s4003 + $0x50] sm:$0xf]
      %v4018 = vld [vmem:[%s4003 + $0x54] sm:$0xff]
      %v4019 = vld [vmem:[%s4003 + $0x5c] sm:$0xf]
      %v4020 = vld [vmem:[%s4003 + $0x60] sm:$0xff]
      %v4021 = vld [vmem:[%s4003 + $0x68] sm:$0xf]
      %v4022 = vld [vmem:[%s4003 + $0x6c] sm:$0xff]
      %v4023 = vld [vmem:[%s4003 + $0x74] sm:$0xf]
      %v4024 = vld [vmem:[%s4003 + $0x78] sm:$0xff]
      %v4025 = vld [vmem:[%s4003 + $0x80] sm:$0xf]
      %v4026 = vld [vmem:[%s4003 + $0x84] sm:$0xff]
      %v4027 = vld [vmem:[%s4003 + $0x8c] sm:$0xf]
      %v4028 = vld [vmem:[%s4003 + $0x90] sm:$0xff]
      %v4029 = vld [vmem:[%s4003 + $0x98] sm:$0xf]
      %v4030 = vld [vmem:[%s4003 + $0x9c] sm:$0xff]
      %v4031 = vld [vmem:[%s4003 + $0xa4] sm:$0xf]
      %v4032 = vld [vmem:[%s4003 + $0xa8] sm:$0xff]
      %v4033 = vld [vmem:[%s4003 + $0xb0] sm:$0xf]
      %v4034 = vld [vmem:[%s4003 + $0xb4] sm:$0xff]
      %v4035 = vld [vmem:[%s4003 + $0xbc] sm:$0xf]
      %v4068 = vunpack.c.l.b16 %v4004
      %v4069 = vunpack.c.h.b16 %v4004
      %v4070 = vunpack.c.l.b16 %v4005
      %v4071 = vunpack.c.l.b16 %v4006
      %v4072 = vunpack.c.h.b16 %v4006
      %v4073 = vunpack.c.l.b16 %v4007
      %v4074 = vunpack.c.l.b16 %v4008
      %v4075 = vunpack.c.h.b16 %v4008
      %v4076 = vunpack.c.l.b16 %v4009
      %v4077 = vunpack.c.l.b16 %v4010
      %v4078 = vunpack.c.h.b16 %v4010
      %v4079 = vunpack.c.l.b16 %v4011
      %v4080 = vunpack.c.l.b16 %v4012
      %v4081 = vunpack.c.h.b16 %v4012
      %v4082 = vunpack.c.l.b16 %v4013
      %v4083 = vunpack.c.l.b16 %v4014
      %v4084 = vunpack.c.h.b16 %v4014
      %v4085 = vunpack.c.l.b16 %v4015
      %v4086 = vunpack.c.l.b16 %v4016
      %v4087 = vunpack.c.h.b16 %v4016
      %v4088 = vunpack.c.l.b16 %v4017
      %v4089 = vunpack.c.l.b16 %v4018
      %v4090 = vunpack.c.h.b16 %v4018
      %v4091 = vunpack.c.l.b16 %v4019
      %v4092 = vunpack.c.l.b16 %v4020
      %v4093 = vunpack.c.h.b16 %v4020
      %v4094 = vunpack.c.l.b16 %v4021
      %v4095 = vunpack.c.l.b16 %v4022
      %v4096 = vunpack.c.h.b16 %v4022
      %v4097 = vunpack.c.l.b16 %v4023
      %v4098 = vunpack.c.l.b16 %v4024
      %v4099 = vunpack.c.h.b16 %v4024
      %v4100 = vunpack.c.l.b16 %v4025
      %v4101 = vunpack.c.l.b16 %v4026
      %v4102 = vunpack.c.h.b16 %v4026
      %v4103 = vunpack.c.l.b16 %v4027
      %v4104 = vunpack.c.l.b16 %v4028
      %v4105 = vunpack.c.h.b16 %v4028
      %v4106 = vunpack.c.l.b16 %v4029
      %v4107 = vunpack.c.l.b16 %v4030
      %v4108 = vunpack.c.h.b16 %v4030
      %v4109 = vunpack.c.l.b16 %v4031
      %v4110 = vunpack.c.l.b16 %v4032
      %v4111 = vunpack.c.h.b16 %v4032
      %v4112 = vunpack.c.l.b16 %v4033
      %v4113 = vunpack.c.l.b16 %v4034
      %v4114 = vunpack.c.h.b16 %v4034
      %v4115 = vunpack.c.l.b16 %v4035
      %v4116 = vpack.c.b16 %v4071, %v4068
      %v4117 = vpack.c.b16 %v4072, %v4069
      %v4118 = vpack.c.b16 %v4073, %v4070
      %v4119 = vpack.c.b16 %v4077, %v4074
      %v4120 = vpack.c.b16 %v4078, %v4075
      %v4121 = vpack.c.b16 %v4079, %v4076
      %v4122 = vpack.c.b16 %v4083, %v4080
      %v4123 = vpack.c.b16 %v4084, %v4081
      %v4124 = vpack.c.b16 %v4085, %v4082
      %v4125 = vpack.c.b16 %v4089, %v4086
      %v4126 = vpack.c.b16 %v4090, %v4087
      %v4127 = vpack.c.b16 %v4091, %v4088
      %v4128 = vpack.c.b16 %v4095, %v4092
      %v4129 = vpack.c.b16 %v4096, %v4093
      %v4130 = vpack.c.b16 %v4097, %v4094
      %v4131 = vpack.c.b16 %v4101, %v4098
      %v4132 = vpack.c.b16 %v4102, %v4099
      %v4133 = vpack.c.b16 %v4103, %v4100
      %v4134 = vpack.c.b16 %v4107, %v4104
      %v4135 = vpack.c.b16 %v4108, %v4105
      %v4136 = vpack.c.b16 %v4109, %v4106
      %v4137 = vpack.c.b16 %v4113, %v4110
      %v4138 = vpack.c.b16 %v4114, %v4111
      %v4139 = vpack.c.b16 %v4115, %v4112
      %4164 = vmatpush.bf16.msra.mxu0 %v4137
      %4165 = vmatpush.bf16.msra.mxu0 %v4134
      %4166 = vmatpush.bf16.msra.mxu0 %v4131
      %4167 = vmatpush.bf16.msra.mxu0 %v4128
      %4168 = vmatpush.bf16.msra.mxu0 %v4125
      %4169 = vmatpush.bf16.msra.mxu0 %v4122
      %4170 = vmatpush.bf16.msra.mxu0 %v4119
      %4171 = vmatpush.bf16.msra.mxu0 %v4116
      %4172 = vmatmul.bf16.gmra.mxu0 %v3995
      %v4173 = vpop.f32.mrf.mxu0
      %v4174 = vadd.f32 0.0, %v4173
      %v4175 = vpop.f32.mrf.mxu0
      %v4176 = vadd.f32 0.0, %v4175
      %4177 = vmatmul.bf16.gmra.mxu0 %v3996
      %v4178 = vpop.f32.mrf.mxu0
      %v4179 = vadd.f32 0.0, %v4178
      %v4180 = vpop.f32.mrf.mxu0
      %v4181 = vadd.f32 0.0, %v4180
      %4182 = vmatmul.bf16.gmra.mxu0 %v3997
      %v4183 = vpop.f32.mrf.mxu0
      %v4184 = vadd.f32 0.0, %v4183
      %v4185 = vpop.f32.mrf.mxu0
      %v4186 = vadd.f32 0.0, %v4185
      %4187 = vmatmul.bf16.gmra.mxu0 %v3998
      %v4188 = vpop.f32.mrf.mxu0
      %v4189 = vadd.f32 0.0, %v4188
      %v4190 = vpop.f32.mrf.mxu0
      %v4191 = vadd.f32 0.0, %v4190
      %4192 = vmatmul.bf16.gmra.mxu0 %v3999
      %v4193 = vpop.f32.mrf.mxu0
      %v4194 = vadd.f32 0.0, %v4193
      %v4195 = vpop.f32.mrf.mxu0
      %v4196 = vadd.f32 0.0, %v4195
      %4197 = vmatmul.bf16.gmra.mxu0 %v4000
      %v4198 = vpop.f32.mrf.mxu0
      %v4199 = vadd.f32 0.0, %v4198
      %v4200 = vpop.f32.mrf.mxu0
      %v4201 = vadd.f32 0.0, %v4200
      %4202 = vmatmul.bf16.gmra.mxu0 %v4001
      %v4203 = vpop.f32.mrf.mxu0
      %v4204 = vadd.f32 0.0, %v4203
      %v4205 = vpop.f32.mrf.mxu0
      %v4206 = vadd.f32 0.0, %v4205
      %4207 = vmatmul.bf16.gmra.mxu0 %v4002
      %v4208 = vpop.f32.mrf.mxu0
      %v4209 = vadd.f32 0.0, %v4208
      %v4210 = vpop.f32.mrf.mxu0
      %v4211 = vadd.f32 0.0, %v4210
      %4212 = vdwg.mxu0
      %4213 = vmatpush.bf16.msra.mxu0 %v4138
      %4214 = vmatpush.bf16.msra.mxu0 %v4135
      %4215 = vmatpush.bf16.msra.mxu0 %v4132
      %4216 = vmatpush.bf16.msra.mxu0 %v4129
      %4217 = vmatpush.bf16.msra.mxu0 %v4126
      %4218 = vmatpush.bf16.msra.mxu0 %v4123
      %4219 = vmatpush.bf16.msra.mxu0 %v4120
      %4220 = vmatpush.bf16.msra.mxu0 %v4117
      %4221 = vmatmul.bf16.gmra.mxu0 %v3995
      %v4222 = vpop.f32.mrf.mxu0
      %v4223 = vadd.f32 0.0, %v4222
      %v4224 = vpop.f32.mrf.mxu0
      %v4225 = vadd.f32 0.0, %v4224
      %4226 = vmatmul.bf16.gmra.mxu0 %v3996
      %v4227 = vpop.f32.mrf.mxu0
      %v4228 = vadd.f32 0.0, %v4227
      %v4229 = vpop.f32.mrf.mxu0
      %v4230 = vadd.f32 0.0, %v4229
      %4231 = vmatmul.bf16.gmra.mxu0 %v3997
      %v4232 = vpop.f32.mrf.mxu0
      %v4233 = vadd.f32 0.0, %v4232
      %v4234 = vpop.f32.mrf.mxu0
      %v4235 = vadd.f32 0.0, %v4234
      %4236 = vmatmul.bf16.gmra.mxu0 %v3998
      %v4237 = vpop.f32.mrf.mxu0
      %v4238 = vadd.f32 0.0, %v4237
      %v4239 = vpop.f32.mrf.mxu0
      %v4240 = vadd.f32 0.0, %v4239
      %4241 = vmatmul.bf16.gmra.mxu0 %v3999
      %v4242 = vpop.f32.mrf.mxu0
      %v4243 = vadd.f32 0.0, %v4242
      %v4244 = vpop.f32.mrf.mxu0
      %v4245 = vadd.f32 0.0, %v4244
      %4246 = vmatmul.bf16.gmra.mxu0 %v4000
      %v4247 = vpop.f32.mrf.mxu0
      %v4248 = vadd.f32 0.0, %v4247
      %v4249 = vpop.f32.mrf.mxu0
      %v4250 = vadd.f32 0.0, %v4249
      %4251 = vmatmul.bf16.gmra.mxu0 %v4001
      %v4252 = vpop.f32.mrf.mxu0
      %v4253 = vadd.f32 0.0, %v4252
      %v4254 = vpop.f32.mrf.mxu0
      %v4255 = vadd.f32 0.0, %v4254
      %4256 = vmatmul.bf16.gmra.mxu0 %v4002
      %v4257 = vpop.f32.mrf.mxu0
      %v4258 = vadd.f32 0.0, %v4257
      %v4259 = vpop.f32.mrf.mxu0
      %v4260 = vadd.f32 0.0, %v4259
      %4261 = vdwg.mxu0
      %4262 = vmatpush.bf16.msra.mxu0 %v4139
      %4263 = vmatpush.bf16.msra.mxu0 %v4136
      %4264 = vmatpush.bf16.msra.mxu0 %v4133
      %4265 = vmatpush.bf16.msra.mxu0 %v4130
      %4266 = vmatpush.bf16.msra.mxu0 %v4127
      %4267 = vmatpush.bf16.msra.mxu0 %v4124
      %4268 = vmatpush.bf16.msra.mxu0 %v4121
      %4269 = vmatpush.bf16.msra.mxu0 %v4118
      %4270 = vmatmul.bf16.gmra.mxu0 %v3995
      %v4271 = vpop.f32.mrf.mxu0
      %v4272 = vadd.f32 0.0, %v4271
      %v4273 = vpop.f32.mrf.mxu0
      %v4274 = vadd.f32 0.0, %v4273
      %4275 = vmatmul.bf16.gmra.mxu0 %v3996
      %v4276 = vpop.f32.mrf.mxu0
      %v4277 = vadd.f32 0.0, %v4276
      %v4278 = vpop.f32.mrf.mxu0
      %v4279 = vadd.f32 0.0, %v4278
      %4280 = vmatmul.bf16.gmra.mxu0 %v3997
      %v4281 = vpop.f32.mrf.mxu0
      %v4282 = vadd.f32 0.0, %v4281
      %v4283 = vpop.f32.mrf.mxu0
      %v4284 = vadd.f32 0.0, %v4283
      %4285 = vmatmul.bf16.gmra.mxu0 %v3998
      %v4286 = vpop.f32.mrf.mxu0
      %v4287 = vadd.f32 0.0, %v4286
      %v4288 = vpop.f32.mrf.mxu0
      %v4289 = vadd.f32 0.0, %v4288
      %4290 = vmatmul.bf16.gmra.mxu0 %v3999
      %v4291 = vpop.f32.mrf.mxu0
      %v4292 = vadd.f32 0.0, %v4291
      %v4293 = vpop.f32.mrf.mxu0
      %v4294 = vadd.f32 0.0, %v4293
      %4295 = vmatmul.bf16.gmra.mxu0 %v4000
      %v4296 = vpop.f32.mrf.mxu0
      %v4297 = vadd.f32 0.0, %v4296
      %v4298 = vpop.f32.mrf.mxu0
      %v4299 = vadd.f32 0.0, %v4298
      %4300 = vmatmul.bf16.gmra.mxu0 %v4001
      %v4301 = vpop.f32.mrf.mxu0
      %v4302 = vadd.f32 0.0, %v4301
      %v4303 = vpop.f32.mrf.mxu0
      %v4304 = vadd.f32 0.0, %v4303
      %4305 = vmatmul.bf16.gmra.mxu0 %v4002
      %v4306 = vpop.f32.mrf.mxu0
      %v4307 = vadd.f32 0.0, %v4306
      %v4308 = vpop.f32.mrf.mxu0
      %v4309 = vadd.f32 0.0, %v4308
      %4310 = vdwg.mxu0
      %s4311 = scalar_lea.vmem %s4, 64
      %v4312 = vld [vmem:[%s4311] sm:$0xf]
      %v4313 = vld [vmem:[%s4311 + $0x4] sm:$0xf]
      %v4314 = vld [vmem:[%s4311 + $0x8] sm:$0xf]
      %v4315 = vld [vmem:[%s4311 + $0xc] sm:$0xf]
      %v4316 = vld [vmem:[%s4311 + $0x10] sm:$0xf]
      %v4317 = vld [vmem:[%s4311 + $0x14] sm:$0xf]
      %v4318 = vld [vmem:[%s4311 + $0x18] sm:$0xf]
      %v4319 = vld [vmem:[%s4311 + $0x1c] sm:$0xf]
      %v4320 = vld [vmem:[%s4311 + $0x20] sm:$0xf]
      %v4321 = vld [vmem:[%s4311 + $0x24] sm:$0xf]
      %v4322 = vld [vmem:[%s4311 + $0x28] sm:$0xf]
      %v4323 = vld [vmem:[%s4311 + $0x2c] sm:$0xf]
      %v4324 = vld [vmem:[%s4311 + $0x30] sm:$0xf]
      %v4325 = vld [vmem:[%s4311 + $0x34] sm:$0xf]
      %v4326 = vld [vmem:[%s4311 + $0x38] sm:$0xf]
      %v4327 = vld [vmem:[%s4311 + $0x3c] sm:$0xf]
      %v4328 = vpack.c.bf16 %v4176, %v4174
      %v4329 = vpack.c.bf16 %v4181, %v4179
      %v4330 = vpack.c.bf16 %v4186, %v4184
      %v4331 = vpack.c.bf16 %v4191, %v4189
      %v4332 = vpack.c.bf16 %v4196, %v4194
      %v4333 = vpack.c.bf16 %v4201, %v4199
      %v4334 = vpack.c.bf16 %v4206, %v4204
      %v4335 = vpack.c.bf16 %v4211, %v4209
      %v4336 = vpack.c.bf16 %v4225, %v4223
      %v4337 = vpack.c.bf16 %v4230, %v4228
      %v4338 = vpack.c.bf16 %v4235, %v4233
      %v4339 = vpack.c.bf16 %v4240, %v4238
      %v4340 = vpack.c.bf16 %v4245, %v4243
      %v4341 = vpack.c.bf16 %v4250, %v4248
      %v4342 = vpack.c.bf16 %v4255, %v4253
      %v4343 = vpack.c.bf16 %v4260, %v4258
      %v4345 = vsel %vm1304, %v4328, 0
      %v4348 = vsel %vm1304, %v4329, 0
      %v4351 = vsel %vm1304, %v4330, 0
      %v4354 = vsel %vm1304, %v4331, 0
      %v4357 = vsel %vm1304, %v4332, 0
      %v4360 = vsel %vm1304, %v4333, 0
      %v4363 = vsel %vm1304, %v4334, 0
      %v4366 = vsel %vm1304, %v4335, 0
      %v4369 = vsel %vm1304, %v4336, 0
      %v4372 = vsel %vm1304, %v4337, 0
      %v4375 = vsel %vm1304, %v4338, 0
      %v4378 = vsel %vm1304, %v4339, 0
      %v4381 = vsel %vm1304, %v4340, 0
      %v4384 = vsel %vm1304, %v4341, 0
      %v4387 = vsel %vm1304, %v4342, 0
      %v4390 = vsel %vm1304, %v4343, 0
      %4392 = vmatpush.bf16.xpose.msra.mxu0 %v4390
      %4393 = vmatpush.bf16.xpose.msra.mxu0 %v4387
      %4394 = vmatpush.bf16.xpose.msra.mxu0 %v4384
      %4395 = vmatpush.bf16.xpose.msra.mxu0 %v4381
      %4396 = vmatpush.bf16.xpose.msra.mxu0 %v4378
      %4397 = vmatpush.bf16.xpose.msra.mxu0 %v4375
      %4398 = vmatpush.bf16.xpose.msra.mxu0 %v4372
      %4399 = vmatpush.bf16.xpose.msra.mxu0 %v4369
      %4400 = vmatmul.bf16.gmra.mxu0 %v4345
      %v4401 = vpop.f32.mrf.mxu0
      %v4402 = vadd.f32 0.0, %v4401
      %v4403 = vpop.f32.mrf.mxu0
      %v4404 = vadd.f32 0.0, %v4403
      %4405 = vmatmul.bf16.gmra.mxu0 %v4348
      %v4406 = vpop.f32.mrf.mxu0
      %v4407 = vadd.f32 0.0, %v4406
      %v4408 = vpop.f32.mrf.mxu0
      %v4409 = vadd.f32 0.0, %v4408
      %4410 = vmatmul.bf16.gmra.mxu0 %v4351
      %v4411 = vpop.f32.mrf.mxu0
      %v4412 = vadd.f32 0.0, %v4411
      %v4413 = vpop.f32.mrf.mxu0
      %v4414 = vadd.f32 0.0, %v4413
      %4415 = vmatmul.bf16.gmra.mxu0 %v4354
      %v4416 = vpop.f32.mrf.mxu0
      %v4417 = vadd.f32 0.0, %v4416
      %v4418 = vpop.f32.mrf.mxu0
      %v4419 = vadd.f32 0.0, %v4418
      %4420 = vmatmul.bf16.gmra.mxu0 %v4357
      %v4421 = vpop.f32.mrf.mxu0
      %v4422 = vadd.f32 0.0, %v4421
      %v4423 = vpop.f32.mrf.mxu0
      %v4424 = vadd.f32 0.0, %v4423
      %4425 = vmatmul.bf16.gmra.mxu0 %v4360
      %v4426 = vpop.f32.mrf.mxu0
      %v4427 = vadd.f32 0.0, %v4426
      %v4428 = vpop.f32.mrf.mxu0
      %v4429 = vadd.f32 0.0, %v4428
      %4430 = vmatmul.bf16.gmra.mxu0 %v4363
      %v4431 = vpop.f32.mrf.mxu0
      %v4432 = vadd.f32 0.0, %v4431
      %v4433 = vpop.f32.mrf.mxu0
      %v4434 = vadd.f32 0.0, %v4433
      %4435 = vmatmul.bf16.gmra.mxu0 %v4366
      %v4436 = vpop.f32.mrf.mxu0
      %v4437 = vadd.f32 0.0, %v4436
      %v4438 = vpop.f32.mrf.mxu0
      %v4439 = vadd.f32 0.0, %v4438
      %4440 = vdwg.mxu0
      %v4441 = vmul.f32 %v4402, 0.088388346
      %v4442 = vmul.f32 %v4404, 0.088388346
      %v4443 = vmul.f32 %v4407, 0.088388346
      %v4444 = vmul.f32 %v4409, 0.088388346
      %v4445 = vmul.f32 %v4412, 0.088388346
      %v4446 = vmul.f32 %v4414, 0.088388346
      %v4447 = vmul.f32 %v4417, 0.088388346
      %v4448 = vmul.f32 %v4419, 0.088388346
      %v4449 = vmul.f32 %v4422, 0.088388346
      %v4450 = vmul.f32 %v4424, 0.088388346
      %v4451 = vmul.f32 %v4427, 0.088388346
      %v4452 = vmul.f32 %v4429, 0.088388346
      %v4453 = vmul.f32 %v4432, 0.088388346
      %v4454 = vmul.f32 %v4434, 0.088388346
      %v4455 = vmul.f32 %v4437, 0.088388346
      %v4456 = vmul.f32 %v4439, 0.088388346
      %v4457 = vadd.f32 %v4441, %v574
      %v4458 = vadd.f32 %v4442, %v575
      %v4459 = vadd.f32 %v4443, %v576
      %v4460 = vadd.f32 %v4444, %v577
      %v4461 = vadd.f32 %v4445, %v578
      %v4462 = vadd.f32 %v4446, %v579
      %v4463 = vadd.f32 %v4447, %v580
      %v4464 = vadd.f32 %v4448, %v581
      %v4465 = vadd.f32 %v4449, %v582
      %v4466 = vadd.f32 %v4450, %v583
      %v4467 = vadd.f32 %v4451, %v584
      %v4468 = vadd.f32 %v4452, %v585
      %v4469 = vadd.f32 %v4453, %v586
      %v4470 = vadd.f32 %v4454, %v587
      %v4471 = vadd.f32 %v4455, %v588
      %v4472 = vadd.f32 %v4456, %v589
      %4473 = vmax.xlane.f32.xlu0 %v4457
      %v4474 = vpop.xlane.xlu0 %4473
      %4475 = vmax.xlane.f32.xlu0 %v4458
      %v4476 = vpop.xlane.xlu0 %4475
      %4477 = vmax.xlane.f32.xlu0 %v4459
      %v4478 = vpop.xlane.xlu0 %4477
      %4479 = vmax.xlane.f32.xlu0 %v4460
      %v4480 = vpop.xlane.xlu0 %4479
      %4481 = vmax.xlane.f32.xlu0 %v4461
      %v4482 = vpop.xlane.xlu0 %4481
      %4483 = vmax.xlane.f32.xlu0 %v4462
      %v4484 = vpop.xlane.xlu0 %4483
      %4485 = vmax.xlane.f32.xlu0 %v4463
      %v4486 = vpop.xlane.xlu0 %4485
      %4487 = vmax.xlane.f32.xlu0 %v4464
      %v4488 = vpop.xlane.xlu0 %4487
      %4489 = vmax.xlane.f32.xlu0 %v4465
      %v4490 = vpop.xlane.xlu0 %4489
      %4491 = vmax.xlane.f32.xlu0 %v4466
      %v4492 = vpop.xlane.xlu0 %4491
      %4493 = vmax.xlane.f32.xlu0 %v4467
      %v4494 = vpop.xlane.xlu0 %4493
      %4495 = vmax.xlane.f32.xlu0 %v4468
      %v4496 = vpop.xlane.xlu0 %4495
      %4497 = vmax.xlane.f32.xlu0 %v4469
      %v4498 = vpop.xlane.xlu0 %4497
      %4499 = vmax.xlane.f32.xlu0 %v4470
      %v4500 = vpop.xlane.xlu0 %4499
      %4501 = vmax.xlane.f32.xlu0 %v4471
      %v4502 = vpop.xlane.xlu0 %4501
      %4503 = vmax.xlane.f32.xlu0 %v4472
      %v4504 = vpop.xlane.xlu0 %4503
      %v4505 = vsub.f32 %v4457, %v4474
      %v4506 = vsub.f32 %v4458, %v4476
      %v4507 = vsub.f32 %v4459, %v4478
      %v4508 = vsub.f32 %v4460, %v4480
      %v4509 = vsub.f32 %v4461, %v4482
      %v4510 = vsub.f32 %v4462, %v4484
      %v4511 = vsub.f32 %v4463, %v4486
      %v4512 = vsub.f32 %v4464, %v4488
      %v4513 = vsub.f32 %v4465, %v4490
      %v4514 = vsub.f32 %v4466, %v4492
      %v4515 = vsub.f32 %v4467, %v4494
      %v4516 = vsub.f32 %v4468, %v4496
      %v4517 = vsub.f32 %v4469, %v4498
      %v4518 = vsub.f32 %v4470, %v4500
      %v4519 = vsub.f32 %v4471, %v4502
      %v4520 = vsub.f32 %v4472, %v4504
      %v4521 = vmul.f32 %v4505, 1.442695
      %v4522 = vpow.pop %v4521
      %v4523 = vmul.f32 %v4506, 1.442695
      %v4524 = vpow.pop %v4523
      %v4525 = vmul.f32 %v4507, 1.442695
      %v4526 = vpow.pop %v4525
      %v4527 = vmul.f32 %v4508, 1.442695
      %v4528 = vpow.pop %v4527
      %v4529 = vmul.f32 %v4509, 1.442695
      %v4530 = vpow.pop %v4529
      %v4531 = vmul.f32 %v4510, 1.442695
      %v4532 = vpow.pop %v4531
      %v4533 = vmul.f32 %v4511, 1.442695
      %v4534 = vpow.pop %v4533
      %v4535 = vmul.f32 %v4512, 1.442695
      %v4536 = vpow.pop %v4535
      %v4537 = vmul.f32 %v4513, 1.442695
      %v4538 = vpow.pop %v4537
      %v4539 = vmul.f32 %v4514, 1.442695
      %v4540 = vpow.pop %v4539
      %v4541 = vmul.f32 %v4515, 1.442695
      %v4542 = vpow.pop %v4541
      %v4543 = vmul.f32 %v4516, 1.442695
      %v4544 = vpow.pop %v4543
      %v4545 = vmul.f32 %v4517, 1.442695
      %v4546 = vpow.pop %v4545
      %v4547 = vmul.f32 %v4518, 1.442695
      %v4548 = vpow.pop %v4547
      %v4549 = vmul.f32 %v4519, 1.442695
      %v4550 = vpow.pop %v4549
      %v4551 = vmul.f32 %v4520, 1.442695
      %v4552 = vpow.pop %v4551
      %4553 = vadd.xlane.f32.xlu0 %v4522
      %v4554 = vpop.xlane.xlu0 %4553
      %4555 = vadd.xlane.f32.xlu0 %v4524
      %v4556 = vpop.xlane.xlu0 %4555
      %4557 = vadd.xlane.f32.xlu0 %v4526
      %v4558 = vpop.xlane.xlu0 %4557
      %4559 = vadd.xlane.f32.xlu0 %v4528
      %v4560 = vpop.xlane.xlu0 %4559
      %4561 = vadd.xlane.f32.xlu0 %v4530
      %v4562 = vpop.xlane.xlu0 %4561
      %4563 = vadd.xlane.f32.xlu0 %v4532
      %v4564 = vpop.xlane.xlu0 %4563
      %4565 = vadd.xlane.f32.xlu0 %v4534
      %v4566 = vpop.xlane.xlu0 %4565
      %4567 = vadd.xlane.f32.xlu0 %v4536
      %v4568 = vpop.xlane.xlu0 %4567
      %4569 = vadd.xlane.f32.xlu0 %v4538
      %v4570 = vpop.xlane.xlu0 %4569
      %4571 = vadd.xlane.f32.xlu0 %v4540
      %v4572 = vpop.xlane.xlu0 %4571
      %4573 = vadd.xlane.f32.xlu0 %v4542
      %v4574 = vpop.xlane.xlu0 %4573
      %4575 = vadd.xlane.f32.xlu0 %v4544
      %v4576 = vpop.xlane.xlu0 %4575
      %4577 = vadd.xlane.f32.xlu0 %v4546
      %v4578 = vpop.xlane.xlu0 %4577
      %4579 = vadd.xlane.f32.xlu0 %v4548
      %v4580 = vpop.xlane.xlu0 %4579
      %4581 = vadd.xlane.f32.xlu0 %v4550
      %v4582 = vpop.xlane.xlu0 %4581
      %4583 = vadd.xlane.f32.xlu0 %v4552
      %v4584 = vpop.xlane.xlu0 %4583
      %v4585 = vrcp.pop %v4554
      %v4586 = vrcp.pop %v4556
      %v4587 = vrcp.pop %v4558
      %v4588 = vrcp.pop %v4560
      %v4589 = vrcp.pop %v4562
      %v4590 = vrcp.pop %v4564
      %v4591 = vrcp.pop %v4566
      %v4592 = vrcp.pop %v4568
      %v4593 = vrcp.pop %v4570
      %v4594 = vrcp.pop %v4572
      %v4595 = vrcp.pop %v4574
      %v4596 = vrcp.pop %v4576
      %v4597 = vrcp.pop %v4578
      %v4598 = vrcp.pop %v4580
      %v4599 = vrcp.pop %v4582
      %v4600 = vrcp.pop %v4584
      %v4601 = vmul.f32 %v4522, %v4585
      %v4602 = vmul.f32 %v4524, %v4586
      %v4603 = vmul.f32 %v4526, %v4587
      %v4604 = vmul.f32 %v4528, %v4588
      %v4605 = vmul.f32 %v4530, %v4589
      %v4606 = vmul.f32 %v4532, %v4590
      %v4607 = vmul.f32 %v4534, %v4591
      %v4608 = vmul.f32 %v4536, %v4592
      %v4609 = vmul.f32 %v4538, %v4593
      %v4610 = vmul.f32 %v4540, %v4594
      %v4611 = vmul.f32 %v4542, %v4595
      %v4612 = vmul.f32 %v4544, %v4596
      %v4613 = vmul.f32 %v4546, %v4597
      %v4614 = vmul.f32 %v4548, %v4598
      %v4615 = vmul.f32 %v4550, %v4599
      %v4616 = vmul.f32 %v4552, %v4600
      %v4617 = vpack.c.bf16 %v4602, %v4601
      %v4618 = vpack.c.bf16 %v4604, %v4603
      %v4619 = vpack.c.bf16 %v4606, %v4605
      %v4620 = vpack.c.bf16 %v4608, %v4607
      %v4621 = vpack.c.bf16 %v4610, %v4609
      %v4622 = vpack.c.bf16 %v4612, %v4611
      %v4623 = vpack.c.bf16 %v4614, %v4613
      %v4624 = vpack.c.bf16 %v4616, %v4615
      %v4625 = vpack.c.bf16 %v4274, %v4272
      %v4626 = vpack.c.bf16 %v4279, %v4277
      %v4627 = vpack.c.bf16 %v4284, %v4282
      %v4628 = vpack.c.bf16 %v4289, %v4287
      %v4629 = vpack.c.bf16 %v4294, %v4292
      %v4630 = vpack.c.bf16 %v4299, %v4297
      %v4631 = vpack.c.bf16 %v4304, %v4302
      %v4632 = vpack.c.bf16 %v4309, %v4307
      %4633 = vmatpush.bf16.msra.mxu0 %v4632
      %4634 = vmatpush.bf16.msra.mxu0 %v4631
      %4635 = vmatpush.bf16.msra.mxu0 %v4630
      %4636 = vmatpush.bf16.msra.mxu0 %v4629
      %4637 = vmatpush.bf16.msra.mxu0 %v4628
      %4638 = vmatpush.bf16.msra.mxu0 %v4627
      %4639 = vmatpush.bf16.msra.mxu0 %v4626
      %4640 = vmatpush.bf16.msra.mxu0 %v4625
      %4641 = vmatmul.bf16.gmra.mxu0 %v4617
      %v4642 = vpop.f32.mrf.mxu0
      %v4643 = vadd.f32 0.0, %v4642
      %v4644 = vpop.f32.mrf.mxu0
      %v4645 = vadd.f32 0.0, %v4644
      %4646 = vmatmul.bf16.gmra.mxu0 %v4618
      %v4647 = vpop.f32.mrf.mxu0
      %v4648 = vadd.f32 0.0, %v4647
      %v4649 = vpop.f32.mrf.mxu0
      %v4650 = vadd.f32 0.0, %v4649
      %4651 = vmatmul.bf16.gmra.mxu0 %v4619
      %v4652 = vpop.f32.mrf.mxu0
      %v4653 = vadd.f32 0.0, %v4652
      %v4654 = vpop.f32.mrf.mxu0
      %v4655 = vadd.f32 0.0, %v4654
      %4656 = vmatmul.bf16.gmra.mxu0 %v4620
      %v4657 = vpop.f32.mrf.mxu0
      %v4658 = vadd.f32 0.0, %v4657
      %v4659 = vpop.f32.mrf.mxu0
      %v4660 = vadd.f32 0.0, %v4659
      %4661 = vmatmul.bf16.gmra.mxu0 %v4621
      %v4662 = vpop.f32.mrf.mxu0
      %v4663 = vadd.f32 0.0, %v4662
      %v4664 = vpop.f32.mrf.mxu0
      %v4665 = vadd.f32 0.0, %v4664
      %4666 = vmatmul.bf16.gmra.mxu0 %v4622
      %v4667 = vpop.f32.mrf.mxu0
      %v4668 = vadd.f32 0.0, %v4667
      %v4669 = vpop.f32.mrf.mxu0
      %v4670 = vadd.f32 0.0, %v4669
      %4671 = vmatmul.bf16.gmra.mxu0 %v4623
      %v4672 = vpop.f32.mrf.mxu0
      %v4673 = vadd.f32 0.0, %v4672
      %v4674 = vpop.f32.mrf.mxu0
      %v4675 = vadd.f32 0.0, %v4674
      %4676 = vmatmul.bf16.gmra.mxu0 %v4624
      %v4677 = vpop.f32.mrf.mxu0
      %v4678 = vadd.f32 0.0, %v4677
      %v4679 = vpop.f32.mrf.mxu0
      %v4680 = vadd.f32 0.0, %v4679
      %4681 = vdwg.mxu0
      %v4682 = vpack.c.bf16 %v4645, %v4643
      %v4683 = vpack.c.bf16 %v4650, %v4648
      %v4684 = vpack.c.bf16 %v4655, %v4653
      %v4685 = vpack.c.bf16 %v4660, %v4658
      %v4686 = vpack.c.bf16 %v4665, %v4663
      %v4687 = vpack.c.bf16 %v4670, %v4668
      %v4688 = vpack.c.bf16 %v4675, %v4673
      %v4689 = vpack.c.bf16 %v4680, %v4678
      %4698 = vrot.lane.b32.xlu0 %v4328, 64
      %v4699 = vpop.permute.xlu0 %4698
      %4700 = vrot.lane.b32.xlu0 %v4329, 64
      %v4701 = vpop.permute.xlu0 %4700
      %4702 = vrot.lane.b32.xlu0 %v4330, 64
      %v4703 = vpop.permute.xlu0 %4702
      %4704 = vrot.lane.b32.xlu0 %v4331, 64
      %v4705 = vpop.permute.xlu0 %4704
      %4706 = vrot.lane.b32.xlu0 %v4332, 64
      %v4707 = vpop.permute.xlu0 %4706
      %4708 = vrot.lane.b32.xlu0 %v4333, 64
      %v4709 = vpop.permute.xlu0 %4708
      %4710 = vrot.lane.b32.xlu0 %v4334, 64
      %v4711 = vpop.permute.xlu0 %4710
      %4712 = vrot.lane.b32.xlu0 %v4335, 64
      %v4713 = vpop.permute.xlu0 %4712
      %4722 = vrot.lane.b32.xlu0 %v4336, 64
      %v4723 = vpop.permute.xlu0 %4722
      %4724 = vrot.lane.b32.xlu0 %v4337, 64
      %v4725 = vpop.permute.xlu0 %4724
      %4726 = vrot.lane.b32.xlu0 %v4338, 64
      %v4727 = vpop.permute.xlu0 %4726
      %4728 = vrot.lane.b32.xlu0 %v4339, 64
      %v4729 = vpop.permute.xlu0 %4728
      %4730 = vrot.lane.b32.xlu0 %v4340, 64
      %v4731 = vpop.permute.xlu0 %4730
      %4732 = vrot.lane.b32.xlu0 %v4341, 64
      %v4733 = vpop.permute.xlu0 %4732
      %4734 = vrot.lane.b32.xlu0 %v4342, 64
      %v4735 = vpop.permute.xlu0 %4734
      %4736 = vrot.lane.b32.xlu0 %v4343, 64
      %v4737 = vpop.permute.xlu0 %4736
      %v4739 = vsel %vm1304, %v4699, 0
      %v4742 = vsel %vm1304, %v4701, 0
      %v4745 = vsel %vm1304, %v4703, 0
      %v4748 = vsel %vm1304, %v4705, 0
      %v4751 = vsel %vm1304, %v4707, 0
      %v4754 = vsel %vm1304, %v4709, 0
      %v4757 = vsel %vm1304, %v4711, 0
      %v4760 = vsel %vm1304, %v4713, 0
      %v4763 = vsel %vm1304, %v4723, 0
      %v4766 = vsel %vm1304, %v4725, 0
      %v4769 = vsel %vm1304, %v4727, 0
      %v4772 = vsel %vm1304, %v4729, 0
      %v4775 = vsel %vm1304, %v4731, 0
      %v4778 = vsel %vm1304, %v4733, 0
      %v4781 = vsel %vm1304, %v4735, 0
      %v4784 = vsel %vm1304, %v4737, 0
      %4786 = vmatpush.bf16.xpose.msra.mxu0 %v4784
      %4787 = vmatpush.bf16.xpose.msra.mxu0 %v4781
      %4788 = vmatpush.bf16.xpose.msra.mxu0 %v4778
      %4789 = vmatpush.bf16.xpose.msra.mxu0 %v4775
      %4790 = vmatpush.bf16.xpose.msra.mxu0 %v4772
      %4791 = vmatpush.bf16.xpose.msra.mxu0 %v4769
      %4792 = vmatpush.bf16.xpose.msra.mxu0 %v4766
      %4793 = vmatpush.bf16.xpose.msra.mxu0 %v4763
      %4794 = vmatmul.bf16.gmra.mxu0 %v4739
      %v4795 = vpop.f32.mrf.mxu0
      %v4796 = vadd.f32 0.0, %v4795
      %v4797 = vpop.f32.mrf.mxu0
      %v4798 = vadd.f32 0.0, %v4797
      %4799 = vmatmul.bf16.gmra.mxu0 %v4742
      %v4800 = vpop.f32.mrf.mxu0
      %v4801 = vadd.f32 0.0, %v4800
      %v4802 = vpop.f32.mrf.mxu0
      %v4803 = vadd.f32 0.0, %v4802
      %4804 = vmatmul.bf16.gmra.mxu0 %v4745
      %v4805 = vpop.f32.mrf.mxu0
      %v4806 = vadd.f32 0.0, %v4805
      %v4807 = vpop.f32.mrf.mxu0
      %v4808 = vadd.f32 0.0, %v4807
      %4809 = vmatmul.bf16.gmra.mxu0 %v4748
      %v4810 = vpop.f32.mrf.mxu0
      %v4811 = vadd.f32 0.0, %v4810
      %v4812 = vpop.f32.mrf.mxu0
      %v4813 = vadd.f32 0.0, %v4812
      %4814 = vmatmul.bf16.gmra.mxu0 %v4751
      %v4815 = vpop.f32.mrf.mxu0
      %v4816 = vadd.f32 0.0, %v4815
      %v4817 = vpop.f32.mrf.mxu0
      %v4818 = vadd.f32 0.0, %v4817
      %4819 = vmatmul.bf16.gmra.mxu0 %v4754
      %v4820 = vpop.f32.mrf.mxu0
      %v4821 = vadd.f32 0.0, %v4820
      %v4822 = vpop.f32.mrf.mxu0
      %v4823 = vadd.f32 0.0, %v4822
      %4824 = vmatmul.bf16.gmra.mxu0 %v4757
      %v4825 = vpop.f32.mrf.mxu0
      %v4826 = vadd.f32 0.0, %v4825
      %v4827 = vpop.f32.mrf.mxu0
      %v4828 = vadd.f32 0.0, %v4827
      %4829 = vmatmul.bf16.gmra.mxu0 %v4760
      %v4830 = vpop.f32.mrf.mxu0
      %v4831 = vadd.f32 0.0, %v4830
      %v4832 = vpop.f32.mrf.mxu0
      %v4833 = vadd.f32 0.0, %v4832
      %4834 = vdwg.mxu0
      %v4835 = vmul.f32 %v4796, 0.088388346
      %v4836 = vmul.f32 %v4798, 0.088388346
      %v4837 = vmul.f32 %v4801, 0.088388346
      %v4838 = vmul.f32 %v4803, 0.088388346
      %v4839 = vmul.f32 %v4806, 0.088388346
      %v4840 = vmul.f32 %v4808, 0.088388346
      %v4841 = vmul.f32 %v4811, 0.088388346
      %v4842 = vmul.f32 %v4813, 0.088388346
      %v4843 = vmul.f32 %v4816, 0.088388346
      %v4844 = vmul.f32 %v4818, 0.088388346
      %v4845 = vmul.f32 %v4821, 0.088388346
      %v4846 = vmul.f32 %v4823, 0.088388346
      %v4847 = vmul.f32 %v4826, 0.088388346
      %v4848 = vmul.f32 %v4828, 0.088388346
      %v4849 = vmul.f32 %v4831, 0.088388346
      %v4850 = vmul.f32 %v4833, 0.088388346
      %v4851 = vadd.f32 %v4835, %v574
      %v4852 = vadd.f32 %v4836, %v575
      %v4853 = vadd.f32 %v4837, %v576
      %v4854 = vadd.f32 %v4838, %v577
      %v4855 = vadd.f32 %v4839, %v578
      %v4856 = vadd.f32 %v4840, %v579
      %v4857 = vadd.f32 %v4841, %v580
      %v4858 = vadd.f32 %v4842, %v581
      %v4859 = vadd.f32 %v4843, %v582
      %v4860 = vadd.f32 %v4844, %v583
      %v4861 = vadd.f32 %v4845, %v584
      %v4862 = vadd.f32 %v4846, %v585
      %v4863 = vadd.f32 %v4847, %v586
      %v4864 = vadd.f32 %v4848, %v587
      %v4865 = vadd.f32 %v4849, %v588
      %v4866 = vadd.f32 %v4850, %v589
      %4867 = vmax.xlane.f32.xlu0 %v4851
      %v4868 = vpop.xlane.xlu0 %4867
      %4869 = vmax.xlane.f32.xlu0 %v4852
      %v4870 = vpop.xlane.xlu0 %4869
      %4871 = vmax.xlane.f32.xlu0 %v4853
      %v4872 = vpop.xlane.xlu0 %4871
      %4873 = vmax.xlane.f32.xlu0 %v4854
      %v4874 = vpop.xlane.xlu0 %4873
      %4875 = vmax.xlane.f32.xlu0 %v4855
      %v4876 = vpop.xlane.xlu0 %4875
      %4877 = vmax.xlane.f32.xlu0 %v4856
      %v4878 = vpop.xlane.xlu0 %4877
      %4879 = vmax.xlane.f32.xlu0 %v4857
      %v4880 = vpop.xlane.xlu0 %4879
      %4881 = vmax.xlane.f32.xlu0 %v4858
      %v4882 = vpop.xlane.xlu0 %4881
      %4883 = vmax.xlane.f32.xlu0 %v4859
      %v4884 = vpop.xlane.xlu0 %4883
      %4885 = vmax.xlane.f32.xlu0 %v4860
      %v4886 = vpop.xlane.xlu0 %4885
      %4887 = vmax.xlane.f32.xlu0 %v4861
      %v4888 = vpop.xlane.xlu0 %4887
      %4889 = vmax.xlane.f32.xlu0 %v4862
      %v4890 = vpop.xlane.xlu0 %4889
      %4891 = vmax.xlane.f32.xlu0 %v4863
      %v4892 = vpop.xlane.xlu0 %4891
      %4893 = vmax.xlane.f32.xlu0 %v4864
      %v4894 = vpop.xlane.xlu0 %4893
      %4895 = vmax.xlane.f32.xlu0 %v4865
      %v4896 = vpop.xlane.xlu0 %4895
      %4897 = vmax.xlane.f32.xlu0 %v4866
      %v4898 = vpop.xlane.xlu0 %4897
      %v4899 = vsub.f32 %v4851, %v4868
      %v4900 = vsub.f32 %v4852, %v4870
      %v4901 = vsub.f32 %v4853, %v4872
      %v4902 = vsub.f32 %v4854, %v4874
      %v4903 = vsub.f32 %v4855, %v4876
      %v4904 = vsub.f32 %v4856, %v4878
      %v4905 = vsub.f32 %v4857, %v4880
      %v4906 = vsub.f32 %v4858, %v4882
      %v4907 = vsub.f32 %v4859, %v4884
      %v4908 = vsub.f32 %v4860, %v4886
      %v4909 = vsub.f32 %v4861, %v4888
      %v4910 = vsub.f32 %v4862, %v4890
      %v4911 = vsub.f32 %v4863, %v4892
      %v4912 = vsub.f32 %v4864, %v4894
      %v4913 = vsub.f32 %v4865, %v4896
      %v4914 = vsub.f32 %v4866, %v4898
      %v4915 = vmul.f32 %v4899, 1.442695
      %v4916 = vpow.pop %v4915
      %v4917 = vmul.f32 %v4900, 1.442695
      %v4918 = vpow.pop %v4917
      %v4919 = vmul.f32 %v4901, 1.442695
      %v4920 = vpow.pop %v4919
      %v4921 = vmul.f32 %v4902, 1.442695
      %v4922 = vpow.pop %v4921
      %v4923 = vmul.f32 %v4903, 1.442695
      %v4924 = vpow.pop %v4923
      %v4925 = vmul.f32 %v4904, 1.442695
      %v4926 = vpow.pop %v4925
      %v4927 = vmul.f32 %v4905, 1.442695
      %v4928 = vpow.pop %v4927
      %v4929 = vmul.f32 %v4906, 1.442695
      %v4930 = vpow.pop %v4929
      %v4931 = vmul.f32 %v4907, 1.442695
      %v4932 = vpow.pop %v4931
      %v4933 = vmul.f32 %v4908, 1.442695
      %v4934 = vpow.pop %v4933
      %v4935 = vmul.f32 %v4909, 1.442695
      %v4936 = vpow.pop %v4935
      %v4937 = vmul.f32 %v4910, 1.442695
      %v4938 = vpow.pop %v4937
      %v4939 = vmul.f32 %v4911, 1.442695
      %v4940 = vpow.pop %v4939
      %v4941 = vmul.f32 %v4912, 1.442695
      %v4942 = vpow.pop %v4941
      %v4943 = vmul.f32 %v4913, 1.442695
      %v4944 = vpow.pop %v4943
      %v4945 = vmul.f32 %v4914, 1.442695
      %v4946 = vpow.pop %v4945
      %4947 = vadd.xlane.f32.xlu0 %v4916
      %v4948 = vpop.xlane.xlu0 %4947
      %4949 = vadd.xlane.f32.xlu0 %v4918
      %v4950 = vpop.xlane.xlu0 %4949
      %4951 = vadd.xlane.f32.xlu0 %v4920
      %v4952 = vpop.xlane.xlu0 %4951
      %4953 = vadd.xlane.f32.xlu0 %v4922
      %v4954 = vpop.xlane.xlu0 %4953
      %4955 = vadd.xlane.f32.xlu0 %v4924
      %v4956 = vpop.xlane.xlu0 %4955
      %4957 = vadd.xlane.f32.xlu0 %v4926
      %v4958 = vpop.xlane.xlu0 %4957
      %4959 = vadd.xlane.f32.xlu0 %v4928
      %v4960 = vpop.xlane.xlu0 %4959
      %4961 = vadd.xlane.f32.xlu0 %v4930
      %v4962 = vpop.xlane.xlu0 %4961
      %4963 = vadd.xlane.f32.xlu0 %v4932
      %v4964 = vpop.xlane.xlu0 %4963
      %4965 = vadd.xlane.f32.xlu0 %v4934
      %v4966 = vpop.xlane.xlu0 %4965
      %4967 = vadd.xlane.f32.xlu0 %v4936
      %v4968 = vpop.xlane.xlu0 %4967
      %4969 = vadd.xlane.f32.xlu0 %v4938
      %v4970 = vpop.xlane.xlu0 %4969
      %4971 = vadd.xlane.f32.xlu0 %v4940
      %v4972 = vpop.xlane.xlu0 %4971
      %4973 = vadd.xlane.f32.xlu0 %v4942
      %v4974 = vpop.xlane.xlu0 %4973
      %4975 = vadd.xlane.f32.xlu0 %v4944
      %v4976 = vpop.xlane.xlu0 %4975
      %4977 = vadd.xlane.f32.xlu0 %v4946
      %v4978 = vpop.xlane.xlu0 %4977
      %v4979 = vrcp.pop %v4948
      %v4980 = vrcp.pop %v4950
      %v4981 = vrcp.pop %v4952
      %v4982 = vrcp.pop %v4954
      %v4983 = vrcp.pop %v4956
      %v4984 = vrcp.pop %v4958
      %v4985 = vrcp.pop %v4960
      %v4986 = vrcp.pop %v4962
      %v4987 = vrcp.pop %v4964
      %v4988 = vrcp.pop %v4966
      %v4989 = vrcp.pop %v4968
      %v4990 = vrcp.pop %v4970
      %v4991 = vrcp.pop %v4972
      %v4992 = vrcp.pop %v4974
      %v4993 = vrcp.pop %v4976
      %v4994 = vrcp.pop %v4978
      %v4995 = vmul.f32 %v4916, %v4979
      %v4996 = vmul.f32 %v4918, %v4980
      %v4997 = vmul.f32 %v4920, %v4981
      %v4998 = vmul.f32 %v4922, %v4982
      %v4999 = vmul.f32 %v4924, %v4983
      %v5000 = vmul.f32 %v4926, %v4984
      %v5001 = vmul.f32 %v4928, %v4985
      %v5002 = vmul.f32 %v4930, %v4986
      %v5003 = vmul.f32 %v4932, %v4987
      %v5004 = vmul.f32 %v4934, %v4988
      %v5005 = vmul.f32 %v4936, %v4989
      %v5006 = vmul.f32 %v4938, %v4990
      %v5007 = vmul.f32 %v4940, %v4991
      %v5008 = vmul.f32 %v4942, %v4992
      %v5009 = vmul.f32 %v4944, %v4993
      %v5010 = vmul.f32 %v4946, %v4994
      %v5011 = vpack.c.bf16 %v4996, %v4995
      %v5012 = vpack.c.bf16 %v4998, %v4997
      %v5013 = vpack.c.bf16 %v5000, %v4999
      %v5014 = vpack.c.bf16 %v5002, %v5001
      %v5015 = vpack.c.bf16 %v5004, %v5003
      %v5016 = vpack.c.bf16 %v5006, %v5005
      %v5017 = vpack.c.bf16 %v5008, %v5007
      %v5018 = vpack.c.bf16 %v5010, %v5009
      %5027 = vrot.lane.b32.xlu0 %v4625, 64
      %v5028 = vpop.permute.xlu0 %5027
      %5029 = vrot.lane.b32.xlu0 %v4626, 64
      %v5030 = vpop.permute.xlu0 %5029
      %5031 = vrot.lane.b32.xlu0 %v4627, 64
      %v5032 = vpop.permute.xlu0 %5031
      %5033 = vrot.lane.b32.xlu0 %v4628, 64
      %v5034 = vpop.permute.xlu0 %5033
      %5035 = vrot.lane.b32.xlu0 %v4629, 64
      %v5036 = vpop.permute.xlu0 %5035
      %5037 = vrot.lane.b32.xlu0 %v4630, 64
      %v5038 = vpop.permute.xlu0 %5037
      %5039 = vrot.lane.b32.xlu0 %v4631, 64
      %v5040 = vpop.permute.xlu0 %5039
      %5041 = vrot.lane.b32.xlu0 %v4632, 64
      %v5042 = vpop.permute.xlu0 %5041
      %5051 = vmatpush.bf16.msra.mxu0 %v5042
      %5052 = vmatpush.bf16.msra.mxu0 %v5040
      %5053 = vmatpush.bf16.msra.mxu0 %v5038
      %5054 = vmatpush.bf16.msra.mxu0 %v5036
      %5055 = vmatpush.bf16.msra.mxu0 %v5034
      %5056 = vmatpush.bf16.msra.mxu0 %v5032
      %5057 = vmatpush.bf16.msra.mxu0 %v5030
      %5058 = vmatpush.bf16.msra.mxu0 %v5028
      %5059 = vmatmul.bf16.gmra.mxu0 %v5011
      %v5060 = vpop.f32.mrf.mxu0
      %v5061 = vadd.f32 0.0, %v5060
      %v5062 = vpop.f32.mrf.mxu0
      %v5063 = vadd.f32 0.0, %v5062
      %5064 = vmatmul.bf16.gmra.mxu0 %v5012
      %v5065 = vpop.f32.mrf.mxu0
      %v5066 = vadd.f32 0.0, %v5065
      %v5067 = vpop.f32.mrf.mxu0
      %v5068 = vadd.f32 0.0, %v5067
      %5069 = vmatmul.bf16.gmra.mxu0 %v5013
      %v5070 = vpop.f32.mrf.mxu0
      %v5071 = vadd.f32 0.0, %v5070
      %v5072 = vpop.f32.mrf.mxu0
      %v5073 = vadd.f32 0.0, %v5072
      %5074 = vmatmul.bf16.gmra.mxu0 %v5014
      %v5075 = vpop.f32.mrf.mxu0
      %v5076 = vadd.f32 0.0, %v5075
      %v5077 = vpop.f32.mrf.mxu0
      %v5078 = vadd.f32 0.0, %v5077
      %5079 = vmatmul.bf16.gmra.mxu0 %v5015
      %v5080 = vpop.f32.mrf.mxu0
      %v5081 = vadd.f32 0.0, %v5080
      %v5082 = vpop.f32.mrf.mxu0
      %v5083 = vadd.f32 0.0, %v5082
      %5084 = vmatmul.bf16.gmra.mxu0 %v5016
      %v5085 = vpop.f32.mrf.mxu0
      %v5086 = vadd.f32 0.0, %v5085
      %v5087 = vpop.f32.mrf.mxu0
      %v5088 = vadd.f32 0.0, %v5087
      %5089 = vmatmul.bf16.gmra.mxu0 %v5017
      %v5090 = vpop.f32.mrf.mxu0
      %v5091 = vadd.f32 0.0, %v5090
      %v5092 = vpop.f32.mrf.mxu0
      %v5093 = vadd.f32 0.0, %v5092
      %5094 = vmatmul.bf16.gmra.mxu0 %v5018
      %v5095 = vpop.f32.mrf.mxu0
      %v5096 = vadd.f32 0.0, %v5095
      %v5097 = vpop.f32.mrf.mxu0
      %v5098 = vadd.f32 0.0, %v5097
      %5099 = vdwg.mxu0
      %v5100 = vpack.c.bf16 %v5063, %v5061
      %v5101 = vpack.c.bf16 %v5068, %v5066
      %v5102 = vpack.c.bf16 %v5073, %v5071
      %v5103 = vpack.c.bf16 %v5078, %v5076
      %v5104 = vpack.c.bf16 %v5083, %v5081
      %v5105 = vpack.c.bf16 %v5088, %v5086
      %v5106 = vpack.c.bf16 %v5093, %v5091
      %v5107 = vpack.c.bf16 %v5098, %v5096
      %v5116 = vunpack.c.l.b16 %v4320
      %v5117 = vunpack.c.l.b16 %v4321
      %v5118 = vunpack.c.l.b16 %v4322
      %v5119 = vunpack.c.l.b16 %v4323
      %v5120 = vunpack.c.l.b16 %v4324
      %v5121 = vunpack.c.l.b16 %v4325
      %v5122 = vunpack.c.l.b16 %v4326
      %v5123 = vunpack.c.l.b16 %v4327
      %v5124 = vpack.c.b16 %v5117, %v5116
      %v5125 = vpack.c.b16 %v5119, %v5118
      %v5126 = vpack.c.b16 %v5121, %v5120
      %v5127 = vpack.c.b16 %v5123, %v5122
      %v5133 = vsel %vm1304, %v5100, 0
      %v5136 = vsel %vm1304, %v5101, 0
      %v5139 = vsel %vm1304, %v5102, 0
      %v5142 = vsel %vm1304, %v5103, 0
      %v5145 = vsel %vm1304, %v5104, 0
      %v5148 = vsel %vm1304, %v5105, 0
      %v5151 = vsel %vm1304, %v5106, 0
      %v5154 = vsel %vm1304, %v5107, 0
      %5156 = vmatpush.bf16.msra.mxu0 0
      %5157 = vmatpush.bf16.msra.mxu0 0
      %5158 = vmatpush.bf16.msra.mxu0 0
      %5159 = vmatpush.bf16.msra.mxu0 0
      %5160 = vmatpush.bf16.msra.mxu0 %v5127
      %5161 = vmatpush.bf16.msra.mxu0 %v5126
      %5162 = vmatpush.bf16.msra.mxu0 %v5125
      %5163 = vmatpush.bf16.msra.mxu0 %v5124
      %5164 = vmatmul.bf16.gmra.mxu0 %v5133
      %v5165 = vpop.f32.mrf.mxu0
      %v5166 = vadd.f32 0.0, %v5165
      %v5167 = vpop.f32.mrf.mxu0
      %v5168 = vadd.f32 0.0, %v5167
      %5169 = vmatmul.bf16.gmra.mxu0 %v5136
      %v5170 = vpop.f32.mrf.mxu0
      %v5171 = vadd.f32 0.0, %v5170
      %v5172 = vpop.f32.mrf.mxu0
      %v5173 = vadd.f32 0.0, %v5172
      %5174 = vmatmul.bf16.gmra.mxu0 %v5139
      %v5175 = vpop.f32.mrf.mxu0
      %v5176 = vadd.f32 0.0, %v5175
      %v5177 = vpop.f32.mrf.mxu0
      %v5178 = vadd.f32 0.0, %v5177
      %5179 = vmatmul.bf16.gmra.mxu0 %v5142
      %v5180 = vpop.f32.mrf.mxu0
      %v5181 = vadd.f32 0.0, %v5180
      %v5182 = vpop.f32.mrf.mxu0
      %v5183 = vadd.f32 0.0, %v5182
      %5184 = vmatmul.bf16.gmra.mxu0 %v5145
      %v5185 = vpop.f32.mrf.mxu0
      %v5186 = vadd.f32 0.0, %v5185
      %v5187 = vpop.f32.mrf.mxu0
      %v5188 = vadd.f32 0.0, %v5187
      %5189 = vmatmul.bf16.gmra.mxu0 %v5148
      %v5190 = vpop.f32.mrf.mxu0
      %v5191 = vadd.f32 0.0, %v5190
      %v5192 = vpop.f32.mrf.mxu0
      %v5193 = vadd.f32 0.0, %v5192
      %5194 = vmatmul.bf16.gmra.mxu0 %v5151
      %v5195 = vpop.f32.mrf.mxu0
      %v5196 = vadd.f32 0.0, %v5195
      %v5197 = vpop.f32.mrf.mxu0
      %v5198 = vadd.f32 0.0, %v5197
      %5199 = vmatmul.bf16.gmra.mxu0 %v5154
      %v5200 = vpop.f32.mrf.mxu0
      %v5201 = vadd.f32 0.0, %v5200
      %v5202 = vpop.f32.mrf.mxu0
      %v5203 = vadd.f32 0.0, %v5202
      %5204 = vdwg.mxu0
      %v5213 = vunpack.c.l.b16 %v4312
      %v5214 = vunpack.c.l.b16 %v4313
      %v5215 = vunpack.c.l.b16 %v4314
      %v5216 = vunpack.c.l.b16 %v4315
      %v5217 = vunpack.c.l.b16 %v4316
      %v5218 = vunpack.c.l.b16 %v4317
      %v5219 = vunpack.c.l.b16 %v4318
      %v5220 = vunpack.c.l.b16 %v4319
      %v5221 = vpack.c.b16 %v5214, %v5213
      %v5222 = vpack.c.b16 %v5216, %v5215
      %v5223 = vpack.c.b16 %v5218, %v5217
      %v5224 = vpack.c.b16 %v5220, %v5219
      %v5230 = vsel %vm1304, %v4682, 0
      %v5233 = vsel %vm1304, %v4683, 0
      %v5236 = vsel %vm1304, %v4684, 0
      %v5239 = vsel %vm1304, %v4685, 0
      %v5242 = vsel %vm1304, %v4686, 0
      %v5245 = vsel %vm1304, %v4687, 0
      %v5248 = vsel %vm1304, %v4688, 0
      %v5251 = vsel %vm1304, %v4689, 0
      %5253 = vmatpush.bf16.msra.mxu0 0
      %5254 = vmatpush.bf16.msra.mxu0 0
      %5255 = vmatpush.bf16.msra.mxu0 0
      %5256 = vmatpush.bf16.msra.mxu0 0
      %5257 = vmatpush.bf16.msra.mxu0 %v5224
      %5258 = vmatpush.bf16.msra.mxu0 %v5223
      %5259 = vmatpush.bf16.msra.mxu0 %v5222
      %5260 = vmatpush.bf16.msra.mxu0 %v5221
      %5261 = vmatmul.bf16.gmra.mxu0 %v5230
      %v5262 = vpop.f32.mrf.mxu0
      %v5263 = vadd.f32 %v5166, %v5262
      %v5264 = vpop.f32.mrf.mxu0
      %v5265 = vadd.f32 %v5168, %v5264
      %5266 = vmatmul.bf16.gmra.mxu0 %v5233
      %v5267 = vpop.f32.mrf.mxu0
      %v5268 = vadd.f32 %v5171, %v5267
      %v5269 = vpop.f32.mrf.mxu0
      %v5270 = vadd.f32 %v5173, %v5269
      %5271 = vmatmul.bf16.gmra.mxu0 %v5236
      %v5272 = vpop.f32.mrf.mxu0
      %v5273 = vadd.f32 %v5176, %v5272
      %v5274 = vpop.f32.mrf.mxu0
      %v5275 = vadd.f32 %v5178, %v5274
      %5276 = vmatmul.bf16.gmra.mxu0 %v5239
      %v5277 = vpop.f32.mrf.mxu0
      %v5278 = vadd.f32 %v5181, %v5277
      %v5279 = vpop.f32.mrf.mxu0
      %v5280 = vadd.f32 %v5183, %v5279
      %5281 = vmatmul.bf16.gmra.mxu0 %v5242
      %v5282 = vpop.f32.mrf.mxu0
      %v5283 = vadd.f32 %v5186, %v5282
      %v5284 = vpop.f32.mrf.mxu0
      %v5285 = vadd.f32 %v5188, %v5284
      %5286 = vmatmul.bf16.gmra.mxu0 %v5245
      %v5287 = vpop.f32.mrf.mxu0
      %v5288 = vadd.f32 %v5191, %v5287
      %v5289 = vpop.f32.mrf.mxu0
      %v5290 = vadd.f32 %v5193, %v5289
      %5291 = vmatmul.bf16.gmra.mxu0 %v5248
      %v5292 = vpop.f32.mrf.mxu0
      %v5293 = vadd.f32 %v5196, %v5292
      %v5294 = vpop.f32.mrf.mxu0
      %v5295 = vadd.f32 %v5198, %v5294
      %5296 = vmatmul.bf16.gmra.mxu0 %v5251
      %v5297 = vpop.f32.mrf.mxu0
      %v5298 = vadd.f32 %v5201, %v5297
      %v5299 = vpop.f32.mrf.mxu0
      %v5300 = vadd.f32 %v5203, %v5299
      %5301 = vdwg.mxu0
      %s5302 = scalar_lea.vmem %s5, 1
      %v5303 = vld [vmem:[%s5302] sm:$0x1]
      %v5305 = vperm.slane %v5303, 0
      %v5307 = vadd.f32 %v5263, %v5305
      %v5308 = vadd.f32 %v5265, %v5305
      %v5309 = vadd.f32 %v5268, %v5305
      %v5310 = vadd.f32 %v5270, %v5305
      %v5311 = vadd.f32 %v5273, %v5305
      %v5312 = vadd.f32 %v5275, %v5305
      %v5313 = vadd.f32 %v5278, %v5305
      %v5314 = vadd.f32 %v5280, %v5305
      %v5315 = vadd.f32 %v5283, %v5305
      %v5316 = vadd.f32 %v5285, %v5305
      %v5317 = vadd.f32 %v5288, %v5305
      %v5318 = vadd.f32 %v5290, %v5305
      %v5319 = vadd.f32 %v5293, %v5305
      %v5320 = vadd.f32 %v5295, %v5305
      %v5321 = vadd.f32 %v5298, %v5305
      %v5322 = vadd.f32 %v5300, %v5305
      %v5323 = vadd.f32 %v3617, %v5307
      %v5324 = vadd.f32 %v3618, %v5308
      %v5325 = vadd.f32 %v3619, %v5309
      %v5326 = vadd.f32 %v3620, %v5310
      %v5327 = vadd.f32 %v3621, %v5311
      %v5328 = vadd.f32 %v3622, %v5312
      %v5329 = vadd.f32 %v3623, %v5313
      %v5330 = vadd.f32 %v3624, %v5314
      %v5331 = vadd.f32 %v3625, %v5315
      %v5332 = vadd.f32 %v3626, %v5316
      %v5333 = vadd.f32 %v3627, %v5317
      %v5334 = vadd.f32 %v3628, %v5318
      %v5335 = vadd.f32 %v3629, %v5319
      %v5336 = vadd.f32 %v3630, %v5320
      %v5337 = vadd.f32 %v3631, %v5321
      %v5338 = vadd.f32 %v3632, %v5322
      %s5339 = scalar_lea.vmem %s6, 1
      %v5340 = vld [vmem:[%s5339] sm:$0x1]
      %s5341 = scalar_lea.vmem %s7, 1
      %v5342 = vld [vmem:[%s5341] sm:$0x1]
      %5343 = vadd.xlane.f32.xlu0 %v5323
      %v5344 = vpop.xlane.xlu0 %5343
      %5345 = vadd.xlane.f32.xlu0 %v5324
      %v5346 = vpop.xlane.xlu0 %5345
      %5347 = vadd.xlane.f32.xlu0 %v5325
      %v5348 = vpop.xlane.xlu0 %5347
      %5349 = vadd.xlane.f32.xlu0 %v5326
      %v5350 = vpop.xlane.xlu0 %5349
      %5351 = vadd.xlane.f32.xlu0 %v5327
      %v5352 = vpop.xlane.xlu0 %5351
      %5353 = vadd.xlane.f32.xlu0 %v5328
      %v5354 = vpop.xlane.xlu0 %5353
      %5355 = vadd.xlane.f32.xlu0 %v5329
      %v5356 = vpop.xlane.xlu0 %5355
      %5357 = vadd.xlane.f32.xlu0 %v5330
      %v5358 = vpop.xlane.xlu0 %5357
      %5359 = vadd.xlane.f32.xlu0 %v5331
      %v5360 = vpop.xlane.xlu0 %5359
      %5361 = vadd.xlane.f32.xlu0 %v5332
      %v5362 = vpop.xlane.xlu0 %5361
      %5363 = vadd.xlane.f32.xlu0 %v5333
      %v5364 = vpop.xlane.xlu0 %5363
      %5365 = vadd.xlane.f32.xlu0 %v5334
      %v5366 = vpop.xlane.xlu0 %5365
      %5367 = vadd.xlane.f32.xlu0 %v5335
      %v5368 = vpop.xlane.xlu0 %5367
      %5369 = vadd.xlane.f32.xlu0 %v5336
      %v5370 = vpop.xlane.xlu0 %5369
      %5371 = vadd.xlane.f32.xlu0 %v5337
      %v5372 = vpop.xlane.xlu0 %5371
      %5373 = vadd.xlane.f32.xlu0 %v5338
      %v5374 = vpop.xlane.xlu0 %5373
      %v5375 = vmul.f32 %v5344, %v630
      %v5376 = vmul.f32 %v5346, %v630
      %v5377 = vmul.f32 %v5348, %v630
      %v5378 = vmul.f32 %v5350, %v630
      %v5379 = vmul.f32 %v5352, %v630
      %v5380 = vmul.f32 %v5354, %v630
      %v5381 = vmul.f32 %v5356, %v630
      %v5382 = vmul.f32 %v5358, %v630
      %v5383 = vmul.f32 %v5360, %v630
      %v5384 = vmul.f32 %v5362, %v630
      %v5385 = vmul.f32 %v5364, %v630
      %v5386 = vmul.f32 %v5366, %v630
      %v5387 = vmul.f32 %v5368, %v630
      %v5388 = vmul.f32 %v5370, %v630
      %v5389 = vmul.f32 %v5372, %v630
      %v5390 = vmul.f32 %v5374, %v630
      %v5391 = vsub.f32 %v5323, %v5375
      %v5392 = vsub.f32 %v5324, %v5376
      %v5393 = vsub.f32 %v5325, %v5377
      %v5394 = vsub.f32 %v5326, %v5378
      %v5395 = vsub.f32 %v5327, %v5379
      %v5396 = vsub.f32 %v5328, %v5380
      %v5397 = vsub.f32 %v5329, %v5381
      %v5398 = vsub.f32 %v5330, %v5382
      %v5399 = vsub.f32 %v5331, %v5383
      %v5400 = vsub.f32 %v5332, %v5384
      %v5401 = vsub.f32 %v5333, %v5385
      %v5402 = vsub.f32 %v5334, %v5386
      %v5403 = vsub.f32 %v5335, %v5387
      %v5404 = vsub.f32 %v5336, %v5388
      %v5405 = vsub.f32 %v5337, %v5389
      %v5406 = vsub.f32 %v5338, %v5390
      %v5407 = vmul.f32 %v5391, %v5391
      %v5408 = vmul.f32 %v5392, %v5392
      %v5409 = vmul.f32 %v5393, %v5393
      %v5410 = vmul.f32 %v5394, %v5394
      %v5411 = vmul.f32 %v5395, %v5395
      %v5412 = vmul.f32 %v5396, %v5396
      %v5413 = vmul.f32 %v5397, %v5397
      %v5414 = vmul.f32 %v5398, %v5398
      %v5415 = vmul.f32 %v5399, %v5399
      %v5416 = vmul.f32 %v5400, %v5400
      %v5417 = vmul.f32 %v5401, %v5401
      %v5418 = vmul.f32 %v5402, %v5402
      %v5419 = vmul.f32 %v5403, %v5403
      %v5420 = vmul.f32 %v5404, %v5404
      %v5421 = vmul.f32 %v5405, %v5405
      %v5422 = vmul.f32 %v5406, %v5406
      %5423 = vadd.xlane.f32.xlu0 %v5407
      %v5424 = vpop.xlane.xlu0 %5423
      %5425 = vadd.xlane.f32.xlu0 %v5408
      %v5426 = vpop.xlane.xlu0 %5425
      %5427 = vadd.xlane.f32.xlu0 %v5409
      %v5428 = vpop.xlane.xlu0 %5427
      %5429 = vadd.xlane.f32.xlu0 %v5410
      %v5430 = vpop.xlane.xlu0 %5429
      %5431 = vadd.xlane.f32.xlu0 %v5411
      %v5432 = vpop.xlane.xlu0 %5431
      %5433 = vadd.xlane.f32.xlu0 %v5412
      %v5434 = vpop.xlane.xlu0 %5433
      %5435 = vadd.xlane.f32.xlu0 %v5413
      %v5436 = vpop.xlane.xlu0 %5435
      %5437 = vadd.xlane.f32.xlu0 %v5414
      %v5438 = vpop.xlane.xlu0 %5437
      %5439 = vadd.xlane.f32.xlu0 %v5415
      %v5440 = vpop.xlane.xlu0 %5439
      %5441 = vadd.xlane.f32.xlu0 %v5416
      %v5442 = vpop.xlane.xlu0 %5441
      %5443 = vadd.xlane.f32.xlu0 %v5417
      %v5444 = vpop.xlane.xlu0 %5443
      %5445 = vadd.xlane.f32.xlu0 %v5418
      %v5446 = vpop.xlane.xlu0 %5445
      %5447 = vadd.xlane.f32.xlu0 %v5419
      %v5448 = vpop.xlane.xlu0 %5447
      %5449 = vadd.xlane.f32.xlu0 %v5420
      %v5450 = vpop.xlane.xlu0 %5449
      %5451 = vadd.xlane.f32.xlu0 %v5421
      %v5452 = vpop.xlane.xlu0 %5451
      %5453 = vadd.xlane.f32.xlu0 %v5422
      %v5454 = vpop.xlane.xlu0 %5453
      %v5455 = vmul.f32 %v5424, %v630
      %v5456 = vmul.f32 %v5426, %v630
      %v5457 = vmul.f32 %v5428, %v630
      %v5458 = vmul.f32 %v5430, %v630
      %v5459 = vmul.f32 %v5432, %v630
      %v5460 = vmul.f32 %v5434, %v630
      %v5461 = vmul.f32 %v5436, %v630
      %v5462 = vmul.f32 %v5438, %v630
      %v5463 = vmul.f32 %v5440, %v630
      %v5464 = vmul.f32 %v5442, %v630
      %v5465 = vmul.f32 %v5444, %v630
      %v5466 = vmul.f32 %v5446, %v630
      %v5467 = vmul.f32 %v5448, %v630
      %v5468 = vmul.f32 %v5450, %v630
      %v5469 = vmul.f32 %v5452, %v630
      %v5470 = vmul.f32 %v5454, %v630
      %v5471 = vadd.f32 %v5455, 1e-05
      %v5472 = vadd.f32 %v5456, 1e-05
      %v5473 = vadd.f32 %v5457, 1e-05
      %v5474 = vadd.f32 %v5458, 1e-05
      %v5475 = vadd.f32 %v5459, 1e-05
      %v5476 = vadd.f32 %v5460, 1e-05
      %v5477 = vadd.f32 %v5461, 1e-05
      %v5478 = vadd.f32 %v5462, 1e-05
      %v5479 = vadd.f32 %v5463, 1e-05
      %v5480 = vadd.f32 %v5464, 1e-05
      %v5481 = vadd.f32 %v5465, 1e-05
      %v5482 = vadd.f32 %v5466, 1e-05
      %v5483 = vadd.f32 %v5467, 1e-05
      %v5484 = vadd.f32 %v5468, 1e-05
      %v5485 = vadd.f32 %v5469, 1e-05
      %v5486 = vadd.f32 %v5470, 1e-05
      %v5487 = vrsqrt.pop %v5471
      %v5488 = vmul.f32 %v5487, %v5471
      %v5489 = vmul.f32 %v5488, %v5487
      %v5490 = vmul.f32 0.5, %v5489
      %v5491 = vsub.f32 1.5, %v5490
      %v5492 = vmul.f32 %v5487, %v5491
      %vm5493 = vweird.f32 %v5471
      %vm5494 = vweird.f32 %v5487
      %vm5495 = vmor %vm5493, %vm5494
      %v5496 = vsel %vm5495, %v5487, %v5492
      %v5497 = vrsqrt.pop %v5472
      %v5498 = vmul.f32 %v5497, %v5472
      %v5499 = vmul.f32 %v5498, %v5497
      %v5500 = vmul.f32 0.5, %v5499
      %v5501 = vsub.f32 1.5, %v5500
      %v5502 = vmul.f32 %v5497, %v5501
      %vm5503 = vweird.f32 %v5472
      %vm5504 = vweird.f32 %v5497
      %vm5505 = vmor %vm5503, %vm5504
      %v5506 = vsel %vm5505, %v5497, %v5502
      %v5507 = vrsqrt.pop %v5473
      %v5508 = vmul.f32 %v5507, %v5473
      %v5509 = vmul.f32 %v5508, %v5507
      %v5510 = vmul.f32 0.5, %v5509
      %v5511 = vsub.f32 1.5, %v5510
      %v5512 = vmul.f32 %v5507, %v5511
      %vm5513 = vweird.f32 %v5473
      %vm5514 = vweird.f32 %v5507
      %vm5515 = vmor %vm5513, %vm5514
      %v5516 = vsel %vm5515, %v5507, %v5512
      %v5517 = vrsqrt.pop %v5474
      %v5518 = vmul.f32 %v5517, %v5474
      %v5519 = vmul.f32 %v5518, %v5517
      %v5520 = vmul.f32 0.5, %v5519
      %v5521 = vsub.f32 1.5, %v5520
      %v5522 = vmul.f32 %v5517, %v5521
      %vm5523 = vweird.f32 %v5474
      %vm5524 = vweird.f32 %v5517
      %vm5525 = vmor %vm5523, %vm5524
      %v5526 = vsel %vm5525, %v5517, %v5522
      %v5527 = vrsqrt.pop %v5475
      %v5528 = vmul.f32 %v5527, %v5475
      %v5529 = vmul.f32 %v5528, %v5527
      %v5530 = vmul.f32 0.5, %v5529
      %v5531 = vsub.f32 1.5, %v5530
      %v5532 = vmul.f32 %v5527, %v5531
      %vm5533 = vweird.f32 %v5475
      %vm5534 = vweird.f32 %v5527
      %vm5535 = vmor %vm5533, %vm5534
      %v5536 = vsel %vm5535, %v5527, %v5532
      %v5537 = vrsqrt.pop %v5476
      %v5538 = vmul.f32 %v5537, %v5476
      %v5539 = vmul.f32 %v5538, %v5537
      %v5540 = vmul.f32 0.5, %v5539
      %v5541 = vsub.f32 1.5, %v5540
      %v5542 = vmul.f32 %v5537, %v5541
      %vm5543 = vweird.f32 %v5476
      %vm5544 = vweird.f32 %v5537
      %vm5545 = vmor %vm5543, %vm5544
      %v5546 = vsel %vm5545, %v5537, %v5542
      %v5547 = vrsqrt.pop %v5477
      %v5548 = vmul.f32 %v5547, %v5477
      %v5549 = vmul.f32 %v5548, %v5547
      %v5550 = vmul.f32 0.5, %v5549
      %v5551 = vsub.f32 1.5, %v5550
      %v5552 = vmul.f32 %v5547, %v5551
      %vm5553 = vweird.f32 %v5477
      %vm5554 = vweird.f32 %v5547
      %vm5555 = vmor %vm5553, %vm5554
      %v5556 = vsel %vm5555, %v5547, %v5552
      %v5557 = vrsqrt.pop %v5478
      %v5558 = vmul.f32 %v5557, %v5478
      %v5559 = vmul.f32 %v5558, %v5557
      %v5560 = vmul.f32 0.5, %v5559
      %v5561 = vsub.f32 1.5, %v5560
      %v5562 = vmul.f32 %v5557, %v5561
      %vm5563 = vweird.f32 %v5478
      %vm5564 = vweird.f32 %v5557
      %vm5565 = vmor %vm5563, %vm5564
      %v5566 = vsel %vm5565, %v5557, %v5562
      %v5567 = vrsqrt.pop %v5479
      %v5568 = vmul.f32 %v5567, %v5479
      %v5569 = vmul.f32 %v5568, %v5567
      %v5570 = vmul.f32 0.5, %v5569
      %v5571 = vsub.f32 1.5, %v5570
      %v5572 = vmul.f32 %v5567, %v5571
      %vm5573 = vweird.f32 %v5479
      %vm5574 = vweird.f32 %v5567
      %vm5575 = vmor %vm5573, %vm5574
      %v5576 = vsel %vm5575, %v5567, %v5572
      %v5577 = vrsqrt.pop %v5480
      %v5578 = vmul.f32 %v5577, %v5480
      %v5579 = vmul.f32 %v5578, %v5577
      %v5580 = vmul.f32 0.5, %v5579
      %v5581 = vsub.f32 1.5, %v5580
      %v5582 = vmul.f32 %v5577, %v5581
      %vm5583 = vweird.f32 %v5480
      %vm5584 = vweird.f32 %v5577
      %vm5585 = vmor %vm5583, %vm5584
      %v5586 = vsel %vm5585, %v5577, %v5582
      %v5587 = vrsqrt.pop %v5481
      %v5588 = vmul.f32 %v5587, %v5481
      %v5589 = vmul.f32 %v5588, %v5587
      %v5590 = vmul.f32 0.5, %v5589
      %v5591 = vsub.f32 1.5, %v5590
      %v5592 = vmul.f32 %v5587, %v5591
      %vm5593 = vweird.f32 %v5481
      %vm5594 = vweird.f32 %v5587
      %vm5595 = vmor %vm5593, %vm5594
      %v5596 = vsel %vm5595, %v5587, %v5592
      %v5597 = vrsqrt.pop %v5482
      %v5598 = vmul.f32 %v5597, %v5482
      %v5599 = vmul.f32 %v5598, %v5597
      %v5600 = vmul.f32 0.5, %v5599
      %v5601 = vsub.f32 1.5, %v5600
      %v5602 = vmul.f32 %v5597, %v5601
      %vm5603 = vweird.f32 %v5482
      %vm5604 = vweird.f32 %v5597
      %vm5605 = vmor %vm5603, %vm5604
      %v5606 = vsel %vm5605, %v5597, %v5602
      %v5607 = vrsqrt.pop %v5483
      %v5608 = vmul.f32 %v5607, %v5483
      %v5609 = vmul.f32 %v5608, %v5607
      %v5610 = vmul.f32 0.5, %v5609
      %v5611 = vsub.f32 1.5, %v5610
      %v5612 = vmul.f32 %v5607, %v5611
      %vm5613 = vweird.f32 %v5483
      %vm5614 = vweird.f32 %v5607
      %vm5615 = vmor %vm5613, %vm5614
      %v5616 = vsel %vm5615, %v5607, %v5612
      %v5617 = vrsqrt.pop %v5484
      %v5618 = vmul.f32 %v5617, %v5484
      %v5619 = vmul.f32 %v5618, %v5617
      %v5620 = vmul.f32 0.5, %v5619
      %v5621 = vsub.f32 1.5, %v5620
      %v5622 = vmul.f32 %v5617, %v5621
      %vm5623 = vweird.f32 %v5484
      %vm5624 = vweird.f32 %v5617
      %vm5625 = vmor %vm5623, %vm5624
      %v5626 = vsel %vm5625, %v5617, %v5622
      %v5627 = vrsqrt.pop %v5485
      %v5628 = vmul.f32 %v5627, %v5485
      %v5629 = vmul.f32 %v5628, %v5627
      %v5630 = vmul.f32 0.5, %v5629
      %v5631 = vsub.f32 1.5, %v5630
      %v5632 = vmul.f32 %v5627, %v5631
      %vm5633 = vweird.f32 %v5485
      %vm5634 = vweird.f32 %v5627
      %vm5635 = vmor %vm5633, %vm5634
      %v5636 = vsel %vm5635, %v5627, %v5632
      %v5637 = vrsqrt.pop %v5486
      %v5638 = vmul.f32 %v5637, %v5486
      %v5639 = vmul.f32 %v5638, %v5637
      %v5640 = vmul.f32 0.5, %v5639
      %v5641 = vsub.f32 1.5, %v5640
      %v5642 = vmul.f32 %v5637, %v5641
      %vm5643 = vweird.f32 %v5486
      %vm5644 = vweird.f32 %v5637
      %vm5645 = vmor %vm5643, %vm5644
      %v5646 = vsel %vm5645, %v5637, %v5642
      %v5647 = vmul.f32 %v5391, %v5496
      %v5648 = vmul.f32 %v5392, %v5506
      %v5649 = vmul.f32 %v5393, %v5516
      %v5650 = vmul.f32 %v5394, %v5526
      %v5651 = vmul.f32 %v5395, %v5536
      %v5652 = vmul.f32 %v5396, %v5546
      %v5653 = vmul.f32 %v5397, %v5556
      %v5654 = vmul.f32 %v5398, %v5566
      %v5655 = vmul.f32 %v5399, %v5576
      %v5656 = vmul.f32 %v5400, %v5586
      %v5657 = vmul.f32 %v5401, %v5596
      %v5658 = vmul.f32 %v5402, %v5606
      %v5659 = vmul.f32 %v5403, %v5616
      %v5660 = vmul.f32 %v5404, %v5626
      %v5661 = vmul.f32 %v5405, %v5636
      %v5662 = vmul.f32 %v5406, %v5646
      %v5664 = vperm.slane %v5340, 0
      %v5666 = vmul.f32 %v5647, %v5664
      %v5667 = vmul.f32 %v5648, %v5664
      %v5668 = vmul.f32 %v5649, %v5664
      %v5669 = vmul.f32 %v5650, %v5664
      %v5670 = vmul.f32 %v5651, %v5664
      %v5671 = vmul.f32 %v5652, %v5664
      %v5672 = vmul.f32 %v5653, %v5664
      %v5673 = vmul.f32 %v5654, %v5664
      %v5674 = vmul.f32 %v5655, %v5664
      %v5675 = vmul.f32 %v5656, %v5664
      %v5676 = vmul.f32 %v5657, %v5664
      %v5677 = vmul.f32 %v5658, %v5664
      %v5678 = vmul.f32 %v5659, %v5664
      %v5679 = vmul.f32 %v5660, %v5664
      %v5680 = vmul.f32 %v5661, %v5664
      %v5681 = vmul.f32 %v5662, %v5664
      %v5683 = vperm.slane %v5342, 0
      %v5685 = vadd.f32 %v5666, %v5683
      %v5686 = vadd.f32 %v5667, %v5683
      %v5687 = vadd.f32 %v5668, %v5683
      %v5688 = vadd.f32 %v5669, %v5683
      %v5689 = vadd.f32 %v5670, %v5683
      %v5690 = vadd.f32 %v5671, %v5683
      %v5691 = vadd.f32 %v5672, %v5683
      %v5692 = vadd.f32 %v5673, %v5683
      %v5693 = vadd.f32 %v5674, %v5683
      %v5694 = vadd.f32 %v5675, %v5683
      %v5695 = vadd.f32 %v5676, %v5683
      %v5696 = vadd.f32 %v5677, %v5683
      %v5697 = vadd.f32 %v5678, %v5683
      %v5698 = vadd.f32 %v5679, %v5683
      %v5699 = vadd.f32 %v5680, %v5683
      %v5700 = vadd.f32 %v5681, %v5683
      %v5701 = vpack.c.bf16 %v5686, %v5685
      %v5702 = vpack.c.bf16 %v5688, %v5687
      %v5703 = vpack.c.bf16 %v5690, %v5689
      %v5704 = vpack.c.bf16 %v5692, %v5691
      %v5705 = vpack.c.bf16 %v5694, %v5693
      %v5706 = vpack.c.bf16 %v5696, %v5695
      %v5707 = vpack.c.bf16 %v5698, %v5697
      %v5708 = vpack.c.bf16 %v5700, %v5699
      %s5709 = scalar_lea.vmem %s8, 256
      %v5710 = vld [vmem:[%s5709] sm:$0xff]
      %v5711 = vld [vmem:[%s5709 + $0x8] sm:$0xff]
      %v5712 = vld [vmem:[%s5709 + $0x10] sm:$0xff]
      %v5713 = vld [vmem:[%s5709 + $0x18] sm:$0xff]
      %v5714 = vld [vmem:[%s5709 + $0x20] sm:$0xff]
      %v5715 = vld [vmem:[%s5709 + $0x28] sm:$0xff]
      %v5716 = vld [vmem:[%s5709 + $0x30] sm:$0xff]
      %v5717 = vld [vmem:[%s5709 + $0x38] sm:$0xff]
      %v5718 = vld [vmem:[%s5709 + $0x40] sm:$0xff]
      %v5719 = vld [vmem:[%s5709 + $0x48] sm:$0xff]
      %v5720 = vld [vmem:[%s5709 + $0x50] sm:$0xff]
      %v5721 = vld [vmem:[%s5709 + $0x58] sm:$0xff]
      %v5722 = vld [vmem:[%s5709 + $0x60] sm:$0xff]
      %v5723 = vld [vmem:[%s5709 + $0x68] sm:$0xff]
      %v5724 = vld [vmem:[%s5709 + $0x70] sm:$0xff]
      %v5725 = vld [vmem:[%s5709 + $0x78] sm:$0xff]
      %v5726 = vld [vmem:[%s5709 + $0x80] sm:$0xff]
      %v5727 = vld [vmem:[%s5709 + $0x88] sm:$0xff]
      %v5728 = vld [vmem:[%s5709 + $0x90] sm:$0xff]
      %v5729 = vld [vmem:[%s5709 + $0x98] sm:$0xff]
      %v5730 = vld [vmem:[%s5709 + $0xa0] sm:$0xff]
      %v5731 = vld [vmem:[%s5709 + $0xa8] sm:$0xff]
      %v5732 = vld [vmem:[%s5709 + $0xb0] sm:$0xff]
      %v5733 = vld [vmem:[%s5709 + $0xb8] sm:$0xff]
      %v5734 = vld [vmem:[%s5709 + $0xc0] sm:$0xff]
      %v5735 = vld [vmem:[%s5709 + $0xc8] sm:$0xff]
      %v5736 = vld [vmem:[%s5709 + $0xd0] sm:$0xff]
      %v5737 = vld [vmem:[%s5709 + $0xd8] sm:$0xff]
      %v5738 = vld [vmem:[%s5709 + $0xe0] sm:$0xff]
      %v5739 = vld [vmem:[%s5709 + $0xe8] sm:$0xff]
      %v5740 = vld [vmem:[%s5709 + $0xf0] sm:$0xff]
      %v5741 = vld [vmem:[%s5709 + $0xf8] sm:$0xff]
      %s5742 = scalar_lea.vmem %s9, 4
      %v5743 = vld [vmem:[%s5742] sm:$0xf]
      %v5745 = vperm.slane %v5743, 0
      %v5746 = vperm.slane %v5743, 1
      %v5747 = vperm.slane %v5743, 2
      %v5748 = vperm.slane %v5743, 3
      %v5785 = vunpack.c.l.b16 %v5710
      %v5786 = vunpack.c.h.b16 %v5710
      %v5787 = vunpack.c.l.b16 %v5711
      %v5788 = vunpack.c.h.b16 %v5711
      %v5789 = vunpack.c.l.b16 %v5712
      %v5790 = vunpack.c.h.b16 %v5712
      %v5791 = vunpack.c.l.b16 %v5713
      %v5792 = vunpack.c.h.b16 %v5713
      %v5793 = vunpack.c.l.b16 %v5714
      %v5794 = vunpack.c.h.b16 %v5714
      %v5795 = vunpack.c.l.b16 %v5715
      %v5796 = vunpack.c.h.b16 %v5715
      %v5797 = vunpack.c.l.b16 %v5716
      %v5798 = vunpack.c.h.b16 %v5716
      %v5799 = vunpack.c.l.b16 %v5717
      %v5800 = vunpack.c.h.b16 %v5717
      %v5801 = vunpack.c.l.b16 %v5718
      %v5802 = vunpack.c.h.b16 %v5718
      %v5803 = vunpack.c.l.b16 %v5719
      %v5804 = vunpack.c.h.b16 %v5719
      %v5805 = vunpack.c.l.b16 %v5720
      %v5806 = vunpack.c.h.b16 %v5720
      %v5807 = vunpack.c.l.b16 %v5721
      %v5808 = vunpack.c.h.b16 %v5721
      %v5809 = vunpack.c.l.b16 %v5722
      %v5810 = vunpack.c.h.b16 %v5722
      %v5811 = vunpack.c.l.b16 %v5723
      %v5812 = vunpack.c.h.b16 %v5723
      %v5813 = vunpack.c.l.b16 %v5724
      %v5814 = vunpack.c.h.b16 %v5724
      %v5815 = vunpack.c.l.b16 %v5725
      %v5816 = vunpack.c.h.b16 %v5725
      %v5817 = vunpack.c.l.b16 %v5726
      %v5818 = vunpack.c.h.b16 %v5726
      %v5819 = vunpack.c.l.b16 %v5727
      %v5820 = vunpack.c.h.b16 %v5727
      %v5821 = vunpack.c.l.b16 %v5728
      %v5822 = vunpack.c.h.b16 %v5728
      %v5823 = vunpack.c.l.b16 %v5729
      %v5824 = vunpack.c.h.b16 %v5729
      %v5825 = vunpack.c.l.b16 %v5730
      %v5826 = vunpack.c.h.b16 %v5730
      %v5827 = vunpack.c.l.b16 %v5731
      %v5828 = vunpack.c.h.b16 %v5731
      %v5829 = vunpack.c.l.b16 %v5732
      %v5830 = vunpack.c.h.b16 %v5732
      %v5831 = vunpack.c.l.b16 %v5733
      %v5832 = vunpack.c.h.b16 %v5733
      %v5833 = vunpack.c.l.b16 %v5734
      %v5834 = vunpack.c.h.b16 %v5734
      %v5835 = vunpack.c.l.b16 %v5735
      %v5836 = vunpack.c.h.b16 %v5735
      %v5837 = vunpack.c.l.b16 %v5736
      %v5838 = vunpack.c.h.b16 %v5736
      %v5839 = vunpack.c.l.b16 %v5737
      %v5840 = vunpack.c.h.b16 %v5737
      %v5841 = vunpack.c.l.b16 %v5738
      %v5842 = vunpack.c.h.b16 %v5738
      %v5843 = vunpack.c.l.b16 %v5739
      %v5844 = vunpack.c.h.b16 %v5739
      %v5845 = vunpack.c.l.b16 %v5740
      %v5846 = vunpack.c.h.b16 %v5740
      %v5847 = vunpack.c.l.b16 %v5741
      %v5848 = vunpack.c.h.b16 %v5741
      %v5849 = vpack.c.b16 %v5789, %v5785
      %v5850 = vpack.c.b16 %v5790, %v5786
      %v5851 = vpack.c.b16 %v5791, %v5787
      %v5852 = vpack.c.b16 %v5792, %v5788
      %v5853 = vpack.c.b16 %v5797, %v5793
      %v5854 = vpack.c.b16 %v5798, %v5794
      %v5855 = vpack.c.b16 %v5799, %v5795
      %v5856 = vpack.c.b16 %v5800, %v5796
      %v5857 = vpack.c.b16 %v5805, %v5801
      %v5858 = vpack.c.b16 %v5806, %v5802
      %v5859 = vpack.c.b16 %v5807, %v5803
      %v5860 = vpack.c.b16 %v5808, %v5804
      %v5861 = vpack.c.b16 %v5813, %v5809
      %v5862 = vpack.c.b16 %v5814, %v5810
      %v5863 = vpack.c.b16 %v5815, %v5811
      %v5864 = vpack.c.b16 %v5816, %v5812
      %v5865 = vpack.c.b16 %v5821, %v5817
      %v5866 = vpack.c.b16 %v5822, %v5818
      %v5867 = vpack.c.b16 %v5823, %v5819
      %v5868 = vpack.c.b16 %v5824, %v5820
      %v5869 = vpack.c.b16 %v5829, %v5825
      %v5870 = vpack.c.b16 %v5830, %v5826
      %v5871 = vpack.c.b16 %v5831, %v5827
      %v5872 = vpack.c.b16 %v5832, %v5828
      %v5873 = vpack.c.b16 %v5837, %v5833
      %v5874 = vpack.c.b16 %v5838, %v5834
      %v5875 = vpack.c.b16 %v5839, %v5835
      %v5876 = vpack.c.b16 %v5840, %v5836
      %v5877 = vpack.c.b16 %v5845, %v5841
      %v5878 = vpack.c.b16 %v5846, %v5842
      %v5879 = vpack.c.b16 %v5847, %v5843
      %v5880 = vpack.c.b16 %v5848, %v5844
      %5913 = vmatpush.bf16.msra.mxu0 %v5877
      %5914 = vmatpush.bf16.msra.mxu0 %v5873
      %5915 = vmatpush.bf16.msra.mxu0 %v5869
      %5916 = vmatpush.bf16.msra.mxu0 %v5865
      %5917 = vmatpush.bf16.msra.mxu0 %v5861
      %5918 = vmatpush.bf16.msra.mxu0 %v5857
      %5919 = vmatpush.bf16.msra.mxu0 %v5853
      %5920 = vmatpush.bf16.msra.mxu0 %v5849
      %5921 = vmatmul.bf16.gmra.mxu0 %v5701
      %v5922 = vpop.f32.mrf.mxu0
      %v5923 = vadd.f32 %v5745, %v5922
      %v5924 = vpop.f32.mrf.mxu0
      %v5925 = vadd.f32 %v5745, %v5924
      %5926 = vmatmul.bf16.gmra.mxu0 %v5702
      %v5927 = vpop.f32.mrf.mxu0
      %v5928 = vadd.f32 %v5745, %v5927
      %v5929 = vpop.f32.mrf.mxu0
      %v5930 = vadd.f32 %v5745, %v5929
      %5931 = vmatmul.bf16.gmra.mxu0 %v5703
      %v5932 = vpop.f32.mrf.mxu0
      %v5933 = vadd.f32 %v5745, %v5932
      %v5934 = vpop.f32.mrf.mxu0
      %v5935 = vadd.f32 %v5745, %v5934
      %5936 = vmatmul.bf16.gmra.mxu0 %v5704
      %v5937 = vpop.f32.mrf.mxu0
      %v5938 = vadd.f32 %v5745, %v5937
      %v5939 = vpop.f32.mrf.mxu0
      %v5940 = vadd.f32 %v5745, %v5939
      %5941 = vmatmul.bf16.gmra.mxu0 %v5705
      %v5942 = vpop.f32.mrf.mxu0
      %v5943 = vadd.f32 %v5745, %v5942
      %v5944 = vpop.f32.mrf.mxu0
      %v5945 = vadd.f32 %v5745, %v5944
      %5946 = vmatmul.bf16.gmra.mxu0 %v5706
      %v5947 = vpop.f32.mrf.mxu0
      %v5948 = vadd.f32 %v5745, %v5947
      %v5949 = vpop.f32.mrf.mxu0
      %v5950 = vadd.f32 %v5745, %v5949
      %5951 = vmatmul.bf16.gmra.mxu0 %v5707
      %v5952 = vpop.f32.mrf.mxu0
      %v5953 = vadd.f32 %v5745, %v5952
      %v5954 = vpop.f32.mrf.mxu0
      %v5955 = vadd.f32 %v5745, %v5954
      %5956 = vmatmul.bf16.gmra.mxu0 %v5708
      %v5957 = vpop.f32.mrf.mxu0
      %v5958 = vadd.f32 %v5745, %v5957
      %v5959 = vpop.f32.mrf.mxu0
      %v5960 = vadd.f32 %v5745, %v5959
      %5961 = vdwg.mxu0
      %5962 = vmatpush.bf16.msra.mxu0 %v5878
      %5963 = vmatpush.bf16.msra.mxu0 %v5874
      %5964 = vmatpush.bf16.msra.mxu0 %v5870
      %5965 = vmatpush.bf16.msra.mxu0 %v5866
      %5966 = vmatpush.bf16.msra.mxu0 %v5862
      %5967 = vmatpush.bf16.msra.mxu0 %v5858
      %5968 = vmatpush.bf16.msra.mxu0 %v5854
      %5969 = vmatpush.bf16.msra.mxu0 %v5850
      %5970 = vmatmul.bf16.gmra.mxu0 %v5701
      %v5971 = vpop.f32.mrf.mxu0
      %v5972 = vadd.f32 %v5746, %v5971
      %v5973 = vpop.f32.mrf.mxu0
      %v5974 = vadd.f32 %v5746, %v5973
      %5975 = vmatmul.bf16.gmra.mxu0 %v5702
      %v5976 = vpop.f32.mrf.mxu0
      %v5977 = vadd.f32 %v5746, %v5976
      %v5978 = vpop.f32.mrf.mxu0
      %v5979 = vadd.f32 %v5746, %v5978
      %5980 = vmatmul.bf16.gmra.mxu0 %v5703
      %v5981 = vpop.f32.mrf.mxu0
      %v5982 = vadd.f32 %v5746, %v5981
      %v5983 = vpop.f32.mrf.mxu0
      %v5984 = vadd.f32 %v5746, %v5983
      %5985 = vmatmul.bf16.gmra.mxu0 %v5704
      %v5986 = vpop.f32.mrf.mxu0
      %v5987 = vadd.f32 %v5746, %v5986
      %v5988 = vpop.f32.mrf.mxu0
      %v5989 = vadd.f32 %v5746, %v5988
      %5990 = vmatmul.bf16.gmra.mxu0 %v5705
      %v5991 = vpop.f32.mrf.mxu0
      %v5992 = vadd.f32 %v5746, %v5991
      %v5993 = vpop.f32.mrf.mxu0
      %v5994 = vadd.f32 %v5746, %v5993
      %5995 = vmatmul.bf16.gmra.mxu0 %v5706
      %v5996 = vpop.f32.mrf.mxu0
      %v5997 = vadd.f32 %v5746, %v5996
      %v5998 = vpop.f32.mrf.mxu0
      %v5999 = vadd.f32 %v5746, %v5998
      %6000 = vmatmul.bf16.gmra.mxu0 %v5707
      %v6001 = vpop.f32.mrf.mxu0
      %v6002 = vadd.f32 %v5746, %v6001
      %v6003 = vpop.f32.mrf.mxu0
      %v6004 = vadd.f32 %v5746, %v6003
      %6005 = vmatmul.bf16.gmra.mxu0 %v5708
      %v6006 = vpop.f32.mrf.mxu0
      %v6007 = vadd.f32 %v5746, %v6006
      %v6008 = vpop.f32.mrf.mxu0
      %v6009 = vadd.f32 %v5746, %v6008
      %6010 = vdwg.mxu0
      %6011 = vmatpush.bf16.msra.mxu0 %v5879
      %6012 = vmatpush.bf16.msra.mxu0 %v5875
      %6013 = vmatpush.bf16.msra.mxu0 %v5871
      %6014 = vmatpush.bf16.msra.mxu0 %v5867
      %6015 = vmatpush.bf16.msra.mxu0 %v5863
      %6016 = vmatpush.bf16.msra.mxu0 %v5859
      %6017 = vmatpush.bf16.msra.mxu0 %v5855
      %6018 = vmatpush.bf16.msra.mxu0 %v5851
      %6019 = vmatmul.bf16.gmra.mxu0 %v5701
      %v6020 = vpop.f32.mrf.mxu0
      %v6021 = vadd.f32 %v5747, %v6020
      %v6022 = vpop.f32.mrf.mxu0
      %v6023 = vadd.f32 %v5747, %v6022
      %6024 = vmatmul.bf16.gmra.mxu0 %v5702
      %v6025 = vpop.f32.mrf.mxu0
      %v6026 = vadd.f32 %v5747, %v6025
      %v6027 = vpop.f32.mrf.mxu0
      %v6028 = vadd.f32 %v5747, %v6027
      %6029 = vmatmul.bf16.gmra.mxu0 %v5703
      %v6030 = vpop.f32.mrf.mxu0
      %v6031 = vadd.f32 %v5747, %v6030
      %v6032 = vpop.f32.mrf.mxu0
      %v6033 = vadd.f32 %v5747, %v6032
      %6034 = vmatmul.bf16.gmra.mxu0 %v5704
      %v6035 = vpop.f32.mrf.mxu0
      %v6036 = vadd.f32 %v5747, %v6035
      %v6037 = vpop.f32.mrf.mxu0
      %v6038 = vadd.f32 %v5747, %v6037
      %6039 = vmatmul.bf16.gmra.mxu0 %v5705
      %v6040 = vpop.f32.mrf.mxu0
      %v6041 = vadd.f32 %v5747, %v6040
      %v6042 = vpop.f32.mrf.mxu0
      %v6043 = vadd.f32 %v5747, %v6042
      %6044 = vmatmul.bf16.gmra.mxu0 %v5706
      %v6045 = vpop.f32.mrf.mxu0
      %v6046 = vadd.f32 %v5747, %v6045
      %v6047 = vpop.f32.mrf.mxu0
      %v6048 = vadd.f32 %v5747, %v6047
      %6049 = vmatmul.bf16.gmra.mxu0 %v5707
      %v6050 = vpop.f32.mrf.mxu0
      %v6051 = vadd.f32 %v5747, %v6050
      %v6052 = vpop.f32.mrf.mxu0
      %v6053 = vadd.f32 %v5747, %v6052
      %6054 = vmatmul.bf16.gmra.mxu0 %v5708
      %v6055 = vpop.f32.mrf.mxu0
      %v6056 = vadd.f32 %v5747, %v6055
      %v6057 = vpop.f32.mrf.mxu0
      %v6058 = vadd.f32 %v5747, %v6057
      %6059 = vdwg.mxu0
      %6060 = vmatpush.bf16.msra.mxu0 %v5880
      %6061 = vmatpush.bf16.msra.mxu0 %v5876
      %6062 = vmatpush.bf16.msra.mxu0 %v5872
      %6063 = vmatpush.bf16.msra.mxu0 %v5868
      %6064 = vmatpush.bf16.msra.mxu0 %v5864
      %6065 = vmatpush.bf16.msra.mxu0 %v5860
      %6066 = vmatpush.bf16.msra.mxu0 %v5856
      %6067 = vmatpush.bf16.msra.mxu0 %v5852
      %6068 = vmatmul.bf16.gmra.mxu0 %v5701
      %v6069 = vpop.f32.mrf.mxu0
      %v6070 = vadd.f32 %v5748, %v6069
      %v6071 = vpop.f32.mrf.mxu0
      %v6072 = vadd.f32 %v5748, %v6071
      %6073 = vmatmul.bf16.gmra.mxu0 %v5702
      %v6074 = vpop.f32.mrf.mxu0
      %v6075 = vadd.f32 %v5748, %v6074
      %v6076 = vpop.f32.mrf.mxu0
      %v6077 = vadd.f32 %v5748, %v6076
      %6078 = vmatmul.bf16.gmra.mxu0 %v5703
      %v6079 = vpop.f32.mrf.mxu0
      %v6080 = vadd.f32 %v5748, %v6079
      %v6081 = vpop.f32.mrf.mxu0
      %v6082 = vadd.f32 %v5748, %v6081
      %6083 = vmatmul.bf16.gmra.mxu0 %v5704
      %v6084 = vpop.f32.mrf.mxu0
      %v6085 = vadd.f32 %v5748, %v6084
      %v6086 = vpop.f32.mrf.mxu0
      %v6087 = vadd.f32 %v5748, %v6086
      %6088 = vmatmul.bf16.gmra.mxu0 %v5705
      %v6089 = vpop.f32.mrf.mxu0
      %v6090 = vadd.f32 %v5748, %v6089
      %v6091 = vpop.f32.mrf.mxu0
      %v6092 = vadd.f32 %v5748, %v6091
      %6093 = vmatmul.bf16.gmra.mxu0 %v5706
      %v6094 = vpop.f32.mrf.mxu0
      %v6095 = vadd.f32 %v5748, %v6094
      %v6096 = vpop.f32.mrf.mxu0
      %v6097 = vadd.f32 %v5748, %v6096
      %6098 = vmatmul.bf16.gmra.mxu0 %v5707
      %v6099 = vpop.f32.mrf.mxu0
      %v6100 = vadd.f32 %v5748, %v6099
      %v6101 = vpop.f32.mrf.mxu0
      %v6102 = vadd.f32 %v5748, %v6101
      %6103 = vmatmul.bf16.gmra.mxu0 %v5708
      %v6104 = vpop.f32.mrf.mxu0
      %v6105 = vadd.f32 %v5748, %v6104
      %v6106 = vpop.f32.mrf.mxu0
      %v6107 = vadd.f32 %v5748, %v6106
      %6108 = vdwg.mxu0
      %v6109 = vmax.f32 %v5923, 0.0
      %v6110 = vmax.f32 %v5972, 0.0
      %v6111 = vmax.f32 %v6021, 0.0
      %v6112 = vmax.f32 %v6070, 0.0
      %v6113 = vmax.f32 %v5925, 0.0
      %v6114 = vmax.f32 %v5974, 0.0
      %v6115 = vmax.f32 %v6023, 0.0
      %v6116 = vmax.f32 %v6072, 0.0
      %v6117 = vmax.f32 %v5928, 0.0
      %v6118 = vmax.f32 %v5977, 0.0
      %v6119 = vmax.f32 %v6026, 0.0
      %v6120 = vmax.f32 %v6075, 0.0
      %v6121 = vmax.f32 %v5930, 0.0
      %v6122 = vmax.f32 %v5979, 0.0
      %v6123 = vmax.f32 %v6028, 0.0
      %v6124 = vmax.f32 %v6077, 0.0
      %v6125 = vmax.f32 %v5933, 0.0
      %v6126 = vmax.f32 %v5982, 0.0
      %v6127 = vmax.f32 %v6031, 0.0
      %v6128 = vmax.f32 %v6080, 0.0
      %v6129 = vmax.f32 %v5935, 0.0
      %v6130 = vmax.f32 %v5984, 0.0
      %v6131 = vmax.f32 %v6033, 0.0
      %v6132 = vmax.f32 %v6082, 0.0
      %v6133 = vmax.f32 %v5938, 0.0
      %v6134 = vmax.f32 %v5987, 0.0
      %v6135 = vmax.f32 %v6036, 0.0
      %v6136 = vmax.f32 %v6085, 0.0
      %v6137 = vmax.f32 %v5940, 0.0
      %v6138 = vmax.f32 %v5989, 0.0
      %v6139 = vmax.f32 %v6038, 0.0
      %v6140 = vmax.f32 %v6087, 0.0
      %v6141 = vmax.f32 %v5943, 0.0
      %v6142 = vmax.f32 %v5992, 0.0
      %v6143 = vmax.f32 %v6041, 0.0
      %v6144 = vmax.f32 %v6090, 0.0
      %v6145 = vmax.f32 %v5945, 0.0
      %v6146 = vmax.f32 %v5994, 0.0
      %v6147 = vmax.f32 %v6043, 0.0
      %v6148 = vmax.f32 %v6092, 0.0
      %v6149 = vmax.f32 %v5948, 0.0
      %v6150 = vmax.f32 %v5997, 0.0
      %v6151 = vmax.f32 %v6046, 0.0
      %v6152 = vmax.f32 %v6095, 0.0
      %v6153 = vmax.f32 %v5950, 0.0
      %v6154 = vmax.f32 %v5999, 0.0
      %v6155 = vmax.f32 %v6048, 0.0
      %v6156 = vmax.f32 %v6097, 0.0
      %v6157 = vmax.f32 %v5953, 0.0
      %v6158 = vmax.f32 %v6002, 0.0
      %v6159 = vmax.f32 %v6051, 0.0
      %v6160 = vmax.f32 %v6100, 0.0
      %v6161 = vmax.f32 %v5955, 0.0
      %v6162 = vmax.f32 %v6004, 0.0
      %v6163 = vmax.f32 %v6053, 0.0
      %v6164 = vmax.f32 %v6102, 0.0
      %v6165 = vmax.f32 %v5958, 0.0
      %v6166 = vmax.f32 %v6007, 0.0
      %v6167 = vmax.f32 %v6056, 0.0
      %v6168 = vmax.f32 %v6105, 0.0
      %v6169 = vmax.f32 %v5960, 0.0
      %v6170 = vmax.f32 %v6009, 0.0
      %v6171 = vmax.f32 %v6058, 0.0
      %v6172 = vmax.f32 %v6107, 0.0
      %v6173 = vpack.c.bf16 %v6113, %v6109
      %v6174 = vpack.c.bf16 %v6114, %v6110
      %v6175 = vpack.c.bf16 %v6115, %v6111
      %v6176 = vpack.c.bf16 %v6116, %v6112
      %v6177 = vpack.c.bf16 %v6121, %v6117
      %v6178 = vpack.c.bf16 %v6122, %v6118
      %v6179 = vpack.c.bf16 %v6123, %v6119
      %v6180 = vpack.c.bf16 %v6124, %v6120
      %v6181 = vpack.c.bf16 %v6129, %v6125
      %v6182 = vpack.c.bf16 %v6130, %v6126
      %v6183 = vpack.c.bf16 %v6131, %v6127
      %v6184 = vpack.c.bf16 %v6132, %v6128
      %v6185 = vpack.c.bf16 %v6137, %v6133
      %v6186 = vpack.c.bf16 %v6138, %v6134
      %v6187 = vpack.c.bf16 %v6139, %v6135
      %v6188 = vpack.c.bf16 %v6140, %v6136
      %v6189 = vpack.c.bf16 %v6145, %v6141
      %v6190 = vpack.c.bf16 %v6146, %v6142
      %v6191 = vpack.c.bf16 %v6147, %v6143
      %v6192 = vpack.c.bf16 %v6148, %v6144
      %v6193 = vpack.c.bf16 %v6153, %v6149
      %v6194 = vpack.c.bf16 %v6154, %v6150
      %v6195 = vpack.c.bf16 %v6155, %v6151
      %v6196 = vpack.c.bf16 %v6156, %v6152
      %v6197 = vpack.c.bf16 %v6161, %v6157
      %v6198 = vpack.c.bf16 %v6162, %v6158
      %v6199 = vpack.c.bf16 %v6163, %v6159
      %v6200 = vpack.c.bf16 %v6164, %v6160
      %v6201 = vpack.c.bf16 %v6169, %v6165
      %v6202 = vpack.c.bf16 %v6170, %v6166
      %v6203 = vpack.c.bf16 %v6171, %v6167
      %v6204 = vpack.c.bf16 %v6172, %v6168
      %s6205 = scalar_lea.vmem %s10, 256
      %v6206 = vld [vmem:[%s6205] sm:$0xf]
      %v6207 = vld [vmem:[%s6205 + $0x4] sm:$0xf]
      %v6208 = vld [vmem:[%s6205 + $0x8] sm:$0xf]
      %v6209 = vld [vmem:[%s6205 + $0xc] sm:$0xf]
      %v6210 = vld [vmem:[%s6205 + $0x10] sm:$0xf]
      %v6211 = vld [vmem:[%s6205 + $0x14] sm:$0xf]
      %v6212 = vld [vmem:[%s6205 + $0x18] sm:$0xf]
      %v6213 = vld [vmem:[%s6205 + $0x1c] sm:$0xf]
      %v6214 = vld [vmem:[%s6205 + $0x20] sm:$0xf]
      %v6215 = vld [vmem:[%s6205 + $0x24] sm:$0xf]
      %v6216 = vld [vmem:[%s6205 + $0x28] sm:$0xf]
      %v6217 = vld [vmem:[%s6205 + $0x2c] sm:$0xf]
      %v6218 = vld [vmem:[%s6205 + $0x30] sm:$0xf]
      %v6219 = vld [vmem:[%s6205 + $0x34] sm:$0xf]
      %v6220 = vld [vmem:[%s6205 + $0x38] sm:$0xf]
      %v6221 = vld [vmem:[%s6205 + $0x3c] sm:$0xf]
      %v6222 = vld [vmem:[%s6205 + $0x40] sm:$0xf]
      %v6223 = vld [vmem:[%s6205 + $0x44] sm:$0xf]
      %v6224 = vld [vmem:[%s6205 + $0x48] sm:$0xf]
      %v6225 = vld [vmem:[%s6205 + $0x4c] sm:$0xf]
      %v6226 = vld [vmem:[%s6205 + $0x50] sm:$0xf]
      %v6227 = vld [vmem:[%s6205 + $0x54] sm:$0xf]
      %v6228 = vld [vmem:[%s6205 + $0x58] sm:$0xf]
      %v6229 = vld [vmem:[%s6205 + $0x5c] sm:$0xf]
      %v6230 = vld [vmem:[%s6205 + $0x60] sm:$0xf]
      %v6231 = vld [vmem:[%s6205 + $0x64] sm:$0xf]
      %v6232 = vld [vmem:[%s6205 + $0x68] sm:$0xf]
      %v6233 = vld [vmem:[%s6205 + $0x6c] sm:$0xf]
      %v6234 = vld [vmem:[%s6205 + $0x70] sm:$0xf]
      %v6235 = vld [vmem:[%s6205 + $0x74] sm:$0xf]
      %v6236 = vld [vmem:[%s6205 + $0x78] sm:$0xf]
      %v6237 = vld [vmem:[%s6205 + $0x7c] sm:$0xf]
      %v6238 = vld [vmem:[%s6205 + $0x80] sm:$0xf]
      %v6239 = vld [vmem:[%s6205 + $0x84] sm:$0xf]
      %v6240 = vld [vmem:[%s6205 + $0x88] sm:$0xf]
      %v6241 = vld [vmem:[%s6205 + $0x8c] sm:$0xf]
      %v6242 = vld [vmem:[%s6205 + $0x90] sm:$0xf]
      %v6243 = vld [vmem:[%s6205 + $0x94] sm:$0xf]
      %v6244 = vld [vmem:[%s6205 + $0x98] sm:$0xf]
      %v6245 = vld [vmem:[%s6205 + $0x9c] sm:$0xf]
      %v6246 = vld [vmem:[%s6205 + $0xa0] sm:$0xf]
      %v6247 = vld [vmem:[%s6205 + $0xa4] sm:$0xf]
      %v6248 = vld [vmem:[%s6205 + $0xa8] sm:$0xf]
      %v6249 = vld [vmem:[%s6205 + $0xac] sm:$0xf]
      %v6250 = vld [vmem:[%s6205 + $0xb0] sm:$0xf]
      %v6251 = vld [vmem:[%s6205 + $0xb4] sm:$0xf]
      %v6252 = vld [vmem:[%s6205 + $0xb8] sm:$0xf]
      %v6253 = vld [vmem:[%s6205 + $0xbc] sm:$0xf]
      %v6254 = vld [vmem:[%s6205 + $0xc0] sm:$0xf]
      %v6255 = vld [vmem:[%s6205 + $0xc4] sm:$0xf]
      %v6256 = vld [vmem:[%s6205 + $0xc8] sm:$0xf]
      %v6257 = vld [vmem:[%s6205 + $0xcc] sm:$0xf]
      %v6258 = vld [vmem:[%s6205 + $0xd0] sm:$0xf]
      %v6259 = vld [vmem:[%s6205 + $0xd4] sm:$0xf]
      %v6260 = vld [vmem:[%s6205 + $0xd8] sm:$0xf]
      %v6261 = vld [vmem:[%s6205 + $0xdc] sm:$0xf]
      %v6262 = vld [vmem:[%s6205 + $0xe0] sm:$0xf]
      %v6263 = vld [vmem:[%s6205 + $0xe4] sm:$0xf]
      %v6264 = vld [vmem:[%s6205 + $0xe8] sm:$0xf]
      %v6265 = vld [vmem:[%s6205 + $0xec] sm:$0xf]
      %v6266 = vld [vmem:[%s6205 + $0xf0] sm:$0xf]
      %v6267 = vld [vmem:[%s6205 + $0xf4] sm:$0xf]
      %v6268 = vld [vmem:[%s6205 + $0xf8] sm:$0xf]
      %v6269 = vld [vmem:[%s6205 + $0xfc] sm:$0xf]
      %s6270 = scalar_lea.vmem %s11, 1
      %v6271 = vld [vmem:[%s6270] sm:$0x1]
      %v6273 = vperm.slane %v6271, 0
      %v6339 = vunpack.c.l.b16 %v6206
      %v6340 = vunpack.c.l.b16 %v6207
      %v6341 = vunpack.c.l.b16 %v6208
      %v6342 = vunpack.c.l.b16 %v6209
      %v6343 = vunpack.c.l.b16 %v6210
      %v6344 = vunpack.c.l.b16 %v6211
      %v6345 = vunpack.c.l.b16 %v6212
      %v6346 = vunpack.c.l.b16 %v6213
      %v6347 = vunpack.c.l.b16 %v6214
      %v6348 = vunpack.c.l.b16 %v6215
      %v6349 = vunpack.c.l.b16 %v6216
      %v6350 = vunpack.c.l.b16 %v6217
      %v6351 = vunpack.c.l.b16 %v6218
      %v6352 = vunpack.c.l.b16 %v6219
      %v6353 = vunpack.c.l.b16 %v6220
      %v6354 = vunpack.c.l.b16 %v6221
      %v6355 = vunpack.c.l.b16 %v6222
      %v6356 = vunpack.c.l.b16 %v6223
      %v6357 = vunpack.c.l.b16 %v6224
      %v6358 = vunpack.c.l.b16 %v6225
      %v6359 = vunpack.c.l.b16 %v6226
      %v6360 = vunpack.c.l.b16 %v6227
      %v6361 = vunpack.c.l.b16 %v6228
      %v6362 = vunpack.c.l.b16 %v6229
      %v6363 = vunpack.c.l.b16 %v6230
      %v6364 = vunpack.c.l.b16 %v6231
      %v6365 = vunpack.c.l.b16 %v6232
      %v6366 = vunpack.c.l.b16 %v6233
      %v6367 = vunpack.c.l.b16 %v6234
      %v6368 = vunpack.c.l.b16 %v6235
      %v6369 = vunpack.c.l.b16 %v6236
      %v6370 = vunpack.c.l.b16 %v6237
      %v6371 = vunpack.c.l.b16 %v6238
      %v6372 = vunpack.c.l.b16 %v6239
      %v6373 = vunpack.c.l.b16 %v6240
      %v6374 = vunpack.c.l.b16 %v6241
      %v6375 = vunpack.c.l.b16 %v6242
      %v6376 = vunpack.c.l.b16 %v6243
      %v6377 = vunpack.c.l.b16 %v6244
      %v6378 = vunpack.c.l.b16 %v6245
      %v6379 = vunpack.c.l.b16 %v6246
      %v6380 = vunpack.c.l.b16 %v6247
      %v6381 = vunpack.c.l.b16 %v6248
      %v6382 = vunpack.c.l.b16 %v6249
      %v6383 = vunpack.c.l.b16 %v6250
      %v6384 = vunpack.c.l.b16 %v6251
      %v6385 = vunpack.c.l.b16 %v6252
      %v6386 = vunpack.c.l.b16 %v6253
      %v6387 = vunpack.c.l.b16 %v6254
      %v6388 = vunpack.c.l.b16 %v6255
      %v6389 = vunpack.c.l.b16 %v6256
      %v6390 = vunpack.c.l.b16 %v6257
      %v6391 = vunpack.c.l.b16 %v6258
      %v6392 = vunpack.c.l.b16 %v6259
      %v6393 = vunpack.c.l.b16 %v6260
      %v6394 = vunpack.c.l.b16 %v6261
      %v6395 = vunpack.c.l.b16 %v6262
      %v6396 = vunpack.c.l.b16 %v6263
      %v6397 = vunpack.c.l.b16 %v6264
      %v6398 = vunpack.c.l.b16 %v6265
      %v6399 = vunpack.c.l.b16 %v6266
      %v6400 = vunpack.c.l.b16 %v6267
      %v6401 = vunpack.c.l.b16 %v6268
      %v6402 = vunpack.c.l.b16 %v6269
      %v6403 = vpack.c.b16 %v6340, %v6339
      %v6404 = vpack.c.b16 %v6342, %v6341
      %v6405 = vpack.c.b16 %v6344, %v6343
      %v6406 = vpack.c.b16 %v6346, %v6345
      %v6407 = vpack.c.b16 %v6348, %v6347
      %v6408 = vpack.c.b16 %v6350, %v6349
      %v6409 = vpack.c.b16 %v6352, %v6351
      %v6410 = vpack.c.b16 %v6354, %v6353
      %v6411 = vpack.c.b16 %v6356, %v6355
      %v6412 = vpack.c.b16 %v6358, %v6357
      %v6413 = vpack.c.b16 %v6360, %v6359
      %v6414 = vpack.c.b16 %v6362, %v6361
      %v6415 = vpack.c.b16 %v6364, %v6363
      %v6416 = vpack.c.b16 %v6366, %v6365
      %v6417 = vpack.c.b16 %v6368, %v6367
      %v6418 = vpack.c.b16 %v6370, %v6369
      %v6419 = vpack.c.b16 %v6372, %v6371
      %v6420 = vpack.c.b16 %v6374, %v6373
      %v6421 = vpack.c.b16 %v6376, %v6375
      %v6422 = vpack.c.b16 %v6378, %v6377
      %v6423 = vpack.c.b16 %v6380, %v6379
      %v6424 = vpack.c.b16 %v6382, %v6381
      %v6425 = vpack.c.b16 %v6384, %v6383
      %v6426 = vpack.c.b16 %v6386, %v6385
      %v6427 = vpack.c.b16 %v6388, %v6387
      %v6428 = vpack.c.b16 %v6390, %v6389
      %v6429 = vpack.c.b16 %v6392, %v6391
      %v6430 = vpack.c.b16 %v6394, %v6393
      %v6431 = vpack.c.b16 %v6396, %v6395
      %v6432 = vpack.c.b16 %v6398, %v6397
      %v6433 = vpack.c.b16 %v6400, %v6399
      %v6434 = vpack.c.b16 %v6402, %v6401
      %6467 = vmatpush.bf16.msra.mxu0 %v6410
      %6468 = vmatpush.bf16.msra.mxu0 %v6409
      %6469 = vmatpush.bf16.msra.mxu0 %v6408
      %6470 = vmatpush.bf16.msra.mxu0 %v6407
      %6471 = vmatpush.bf16.msra.mxu0 %v6406
      %6472 = vmatpush.bf16.msra.mxu0 %v6405
      %6473 = vmatpush.bf16.msra.mxu0 %v6404
      %6474 = vmatpush.bf16.msra.mxu0 %v6403
      %6475 = vmatmul.bf16.gmra.mxu0 %v6173
      %v6476 = vpop.f32.mrf.mxu0
      %v6477 = vadd.f32 %v6273, %v6476
      %v6478 = vpop.f32.mrf.mxu0
      %v6479 = vadd.f32 %v6273, %v6478
      %6480 = vmatmul.bf16.gmra.mxu0 %v6177
      %v6481 = vpop.f32.mrf.mxu0
      %v6482 = vadd.f32 %v6273, %v6481
      %v6483 = vpop.f32.mrf.mxu0
      %v6484 = vadd.f32 %v6273, %v6483
      %6485 = vmatmul.bf16.gmra.mxu0 %v6181
      %v6486 = vpop.f32.mrf.mxu0
      %v6487 = vadd.f32 %v6273, %v6486
      %v6488 = vpop.f32.mrf.mxu0
      %v6489 = vadd.f32 %v6273, %v6488
      %6490 = vmatmul.bf16.gmra.mxu0 %v6185
      %v6491 = vpop.f32.mrf.mxu0
      %v6492 = vadd.f32 %v6273, %v6491
      %v6493 = vpop.f32.mrf.mxu0
      %v6494 = vadd.f32 %v6273, %v6493
      %6495 = vmatmul.bf16.gmra.mxu0 %v6189
      %v6496 = vpop.f32.mrf.mxu0
      %v6497 = vadd.f32 %v6273, %v6496
      %v6498 = vpop.f32.mrf.mxu0
      %v6499 = vadd.f32 %v6273, %v6498
      %6500 = vmatmul.bf16.gmra.mxu0 %v6193
      %v6501 = vpop.f32.mrf.mxu0
      %v6502 = vadd.f32 %v6273, %v6501
      %v6503 = vpop.f32.mrf.mxu0
      %v6504 = vadd.f32 %v6273, %v6503
      %6505 = vmatmul.bf16.gmra.mxu0 %v6197
      %v6506 = vpop.f32.mrf.mxu0
      %v6507 = vadd.f32 %v6273, %v6506
      %v6508 = vpop.f32.mrf.mxu0
      %v6509 = vadd.f32 %v6273, %v6508
      %6510 = vmatmul.bf16.gmra.mxu0 %v6201
      %v6511 = vpop.f32.mrf.mxu0
      %v6512 = vadd.f32 %v6273, %v6511
      %v6513 = vpop.f32.mrf.mxu0
      %v6514 = vadd.f32 %v6273, %v6513
      %6515 = vdwg.mxu0
      %6516 = vmatpush.bf16.msra.mxu0 %v6418
      %6517 = vmatpush.bf16.msra.mxu0 %v6417
      %6518 = vmatpush.bf16.msra.mxu0 %v6416
      %6519 = vmatpush.bf16.msra.mxu0 %v6415
      %6520 = vmatpush.bf16.msra.mxu0 %v6414
      %6521 = vmatpush.bf16.msra.mxu0 %v6413
      %6522 = vmatpush.bf16.msra.mxu0 %v6412
      %6523 = vmatpush.bf16.msra.mxu0 %v6411
      %6524 = vmatmul.bf16.gmra.mxu0 %v6174
      %v6525 = vpop.f32.mrf.mxu0
      %v6526 = vadd.f32 %v6477, %v6525
      %v6527 = vpop.f32.mrf.mxu0
      %v6528 = vadd.f32 %v6479, %v6527
      %6529 = vmatmul.bf16.gmra.mxu0 %v6178
      %v6530 = vpop.f32.mrf.mxu0
      %v6531 = vadd.f32 %v6482, %v6530
      %v6532 = vpop.f32.mrf.mxu0
      %v6533 = vadd.f32 %v6484, %v6532
      %6534 = vmatmul.bf16.gmra.mxu0 %v6182
      %v6535 = vpop.f32.mrf.mxu0
      %v6536 = vadd.f32 %v6487, %v6535
      %v6537 = vpop.f32.mrf.mxu0
      %v6538 = vadd.f32 %v6489, %v6537
      %6539 = vmatmul.bf16.gmra.mxu0 %v6186
      %v6540 = vpop.f32.mrf.mxu0
      %v6541 = vadd.f32 %v6492, %v6540
      %v6542 = vpop.f32.mrf.mxu0
      %v6543 = vadd.f32 %v6494, %v6542
      %6544 = vmatmul.bf16.gmra.mxu0 %v6190
      %v6545 = vpop.f32.mrf.mxu0
      %v6546 = vadd.f32 %v6497, %v6545
      %v6547 = vpop.f32.mrf.mxu0
      %v6548 = vadd.f32 %v6499, %v6547
      %6549 = vmatmul.bf16.gmra.mxu0 %v6194
      %v6550 = vpop.f32.mrf.mxu0
      %v6551 = vadd.f32 %v6502, %v6550
      %v6552 = vpop.f32.mrf.mxu0
      %v6553 = vadd.f32 %v6504, %v6552
      %6554 = vmatmul.bf16.gmra.mxu0 %v6198
      %v6555 = vpop.f32.mrf.mxu0
      %v6556 = vadd.f32 %v6507, %v6555
      %v6557 = vpop.f32.mrf.mxu0
      %v6558 = vadd.f32 %v6509, %v6557
      %6559 = vmatmul.bf16.gmra.mxu0 %v6202
      %v6560 = vpop.f32.mrf.mxu0
      %v6561 = vadd.f32 %v6512, %v6560
      %v6562 = vpop.f32.mrf.mxu0
      %v6563 = vadd.f32 %v6514, %v6562
      %6564 = vdwg.mxu0
      %6565 = vmatpush.bf16.msra.mxu0 %v6426
      %6566 = vmatpush.bf16.msra.mxu0 %v6425
      %6567 = vmatpush.bf16.msra.mxu0 %v6424
      %6568 = vmatpush.bf16.msra.mxu0 %v6423
      %6569 = vmatpush.bf16.msra.mxu0 %v6422
      %6570 = vmatpush.bf16.msra.mxu0 %v6421
      %6571 = vmatpush.bf16.msra.mxu0 %v6420
      %6572 = vmatpush.bf16.msra.mxu0 %v6419
      %6573 = vmatmul.bf16.gmra.mxu0 %v6175
      %v6574 = vpop.f32.mrf.mxu0
      %v6575 = vadd.f32 %v6526, %v6574
      %v6576 = vpop.f32.mrf.mxu0
      %v6577 = vadd.f32 %v6528, %v6576
      %6578 = vmatmul.bf16.gmra.mxu0 %v6179
      %v6579 = vpop.f32.mrf.mxu0
      %v6580 = vadd.f32 %v6531, %v6579
      %v6581 = vpop.f32.mrf.mxu0
      %v6582 = vadd.f32 %v6533, %v6581
      %6583 = vmatmul.bf16.gmra.mxu0 %v6183
      %v6584 = vpop.f32.mrf.mxu0
      %v6585 = vadd.f32 %v6536, %v6584
      %v6586 = vpop.f32.mrf.mxu0
      %v6587 = vadd.f32 %v6538, %v6586
      %6588 = vmatmul.bf16.gmra.mxu0 %v6187
      %v6589 = vpop.f32.mrf.mxu0
      %v6590 = vadd.f32 %v6541, %v6589
      %v6591 = vpop.f32.mrf.mxu0
      %v6592 = vadd.f32 %v6543, %v6591
      %6593 = vmatmul.bf16.gmra.mxu0 %v6191
      %v6594 = vpop.f32.mrf.mxu0
      %v6595 = vadd.f32 %v6546, %v6594
      %v6596 = vpop.f32.mrf.mxu0
      %v6597 = vadd.f32 %v6548, %v6596
      %6598 = vmatmul.bf16.gmra.mxu0 %v6195
      %v6599 = vpop.f32.mrf.mxu0
      %v6600 = vadd.f32 %v6551, %v6599
      %v6601 = vpop.f32.mrf.mxu0
      %v6602 = vadd.f32 %v6553, %v6601
      %6603 = vmatmul.bf16.gmra.mxu0 %v6199
      %v6604 = vpop.f32.mrf.mxu0
      %v6605 = vadd.f32 %v6556, %v6604
      %v6606 = vpop.f32.mrf.mxu0
      %v6607 = vadd.f32 %v6558, %v6606
      %6608 = vmatmul.bf16.gmra.mxu0 %v6203
      %v6609 = vpop.f32.mrf.mxu0
      %v6610 = vadd.f32 %v6561, %v6609
      %v6611 = vpop.f32.mrf.mxu0
      %v6612 = vadd.f32 %v6563, %v6611
      %6613 = vdwg.mxu0
      %6614 = vmatpush.bf16.msra.mxu0 %v6434
      %6615 = vmatpush.bf16.msra.mxu0 %v6433
      %6616 = vmatpush.bf16.msra.mxu0 %v6432
      %6617 = vmatpush.bf16.msra.mxu0 %v6431
      %6618 = vmatpush.bf16.msra.mxu0 %v6430
      %6619 = vmatpush.bf16.msra.mxu0 %v6429
      %6620 = vmatpush.bf16.msra.mxu0 %v6428
      %6621 = vmatpush.bf16.msra.mxu0 %v6427
      %6622 = vmatmul.bf16.gmra.mxu0 %v6176
      %v6623 = vpop.f32.mrf.mxu0
      %v6624 = vadd.f32 %v6575, %v6623
      %v6625 = vpop.f32.mrf.mxu0
      %v6626 = vadd.f32 %v6577, %v6625
      %6627 = vmatmul.bf16.gmra.mxu0 %v6180
      %v6628 = vpop.f32.mrf.mxu0
      %v6629 = vadd.f32 %v6580, %v6628
      %v6630 = vpop.f32.mrf.mxu0
      %v6631 = vadd.f32 %v6582, %v6630
      %6632 = vmatmul.bf16.gmra.mxu0 %v6184
      %v6633 = vpop.f32.mrf.mxu0
      %v6634 = vadd.f32 %v6585, %v6633
      %v6635 = vpop.f32.mrf.mxu0
      %v6636 = vadd.f32 %v6587, %v6635
      %6637 = vmatmul.bf16.gmra.mxu0 %v6188
      %v6638 = vpop.f32.mrf.mxu0
      %v6639 = vadd.f32 %v6590, %v6638
      %v6640 = vpop.f32.mrf.mxu0
      %v6641 = vadd.f32 %v6592, %v6640
      %6642 = vmatmul.bf16.gmra.mxu0 %v6192
      %v6643 = vpop.f32.mrf.mxu0
      %v6644 = vadd.f32 %v6595, %v6643
      %v6645 = vpop.f32.mrf.mxu0
      %v6646 = vadd.f32 %v6597, %v6645
      %6647 = vmatmul.bf16.gmra.mxu0 %v6196
      %v6648 = vpop.f32.mrf.mxu0
      %v6649 = vadd.f32 %v6600, %v6648
      %v6650 = vpop.f32.mrf.mxu0
      %v6651 = vadd.f32 %v6602, %v6650
      %6652 = vmatmul.bf16.gmra.mxu0 %v6200
      %v6653 = vpop.f32.mrf.mxu0
      %v6654 = vadd.f32 %v6605, %v6653
      %v6655 = vpop.f32.mrf.mxu0
      %v6656 = vadd.f32 %v6607, %v6655
      %6657 = vmatmul.bf16.gmra.mxu0 %v6204
      %v6658 = vpop.f32.mrf.mxu0
      %v6659 = vadd.f32 %v6610, %v6658
      %v6660 = vpop.f32.mrf.mxu0
      %v6661 = vadd.f32 %v6612, %v6660
      %6662 = vdwg.mxu0
      %v6663 = vadd.f32 %v5323, %v6624
      %v6664 = vadd.f32 %v5324, %v6626
      %v6665 = vadd.f32 %v5325, %v6629
      %v6666 = vadd.f32 %v5326, %v6631
      %v6667 = vadd.f32 %v5327, %v6634
      %v6668 = vadd.f32 %v5328, %v6636
      %v6669 = vadd.f32 %v5329, %v6639
      %v6670 = vadd.f32 %v5330, %v6641
      %v6671 = vadd.f32 %v5331, %v6644
      %v6672 = vadd.f32 %v5332, %v6646
      %v6673 = vadd.f32 %v5333, %v6649
      %v6674 = vadd.f32 %v5334, %v6651
      %v6675 = vadd.f32 %v5335, %v6654
      %v6676 = vadd.f32 %v5336, %v6656
      %v6677 = vadd.f32 %v5337, %v6659
      %v6678 = vadd.f32 %v5338, %v6661
      %v6679 = vld [vmem:[%s12] sm:$0x1]
      %v6680 = vld [vmem:[%s13] sm:$0x1]
      %6681 = vadd.xlane.f32.xlu0 %v6663
      %v6682 = vpop.xlane.xlu0 %6681
      %6683 = vadd.xlane.f32.xlu0 %v6664
      %v6684 = vpop.xlane.xlu0 %6683
      %6685 = vadd.xlane.f32.xlu0 %v6665
      %v6686 = vpop.xlane.xlu0 %6685
      %6687 = vadd.xlane.f32.xlu0 %v6666
      %v6688 = vpop.xlane.xlu0 %6687
      %6689 = vadd.xlane.f32.xlu0 %v6667
      %v6690 = vpop.xlane.xlu0 %6689
      %6691 = vadd.xlane.f32.xlu0 %v6668
      %v6692 = vpop.xlane.xlu0 %6691
      %6693 = vadd.xlane.f32.xlu0 %v6669
      %v6694 = vpop.xlane.xlu0 %6693
      %6695 = vadd.xlane.f32.xlu0 %v6670
      %v6696 = vpop.xlane.xlu0 %6695
      %6697 = vadd.xlane.f32.xlu0 %v6671
      %v6698 = vpop.xlane.xlu0 %6697
      %6699 = vadd.xlane.f32.xlu0 %v6672
      %v6700 = vpop.xlane.xlu0 %6699
      %6701 = vadd.xlane.f32.xlu0 %v6673
      %v6702 = vpop.xlane.xlu0 %6701
      %6703 = vadd.xlane.f32.xlu0 %v6674
      %v6704 = vpop.xlane.xlu0 %6703
      %6705 = vadd.xlane.f32.xlu0 %v6675
      %v6706 = vpop.xlane.xlu0 %6705
      %6707 = vadd.xlane.f32.xlu0 %v6676
      %v6708 = vpop.xlane.xlu0 %6707
      %6709 = vadd.xlane.f32.xlu0 %v6677
      %v6710 = vpop.xlane.xlu0 %6709
      %6711 = vadd.xlane.f32.xlu0 %v6678
      %v6712 = vpop.xlane.xlu0 %6711
      %v6713 = vmul.f32 %v6682, %v630
      %v6714 = vmul.f32 %v6684, %v630
      %v6715 = vmul.f32 %v6686, %v630
      %v6716 = vmul.f32 %v6688, %v630
      %v6717 = vmul.f32 %v6690, %v630
      %v6718 = vmul.f32 %v6692, %v630
      %v6719 = vmul.f32 %v6694, %v630
      %v6720 = vmul.f32 %v6696, %v630
      %v6721 = vmul.f32 %v6698, %v630
      %v6722 = vmul.f32 %v6700, %v630
      %v6723 = vmul.f32 %v6702, %v630
      %v6724 = vmul.f32 %v6704, %v630
      %v6725 = vmul.f32 %v6706, %v630
      %v6726 = vmul.f32 %v6708, %v630
      %v6727 = vmul.f32 %v6710, %v630
      %v6728 = vmul.f32 %v6712, %v630
      %v6729 = vsub.f32 %v6663, %v6713
      %v6730 = vsub.f32 %v6664, %v6714
      %v6731 = vsub.f32 %v6665, %v6715
      %v6732 = vsub.f32 %v6666, %v6716
      %v6733 = vsub.f32 %v6667, %v6717
      %v6734 = vsub.f32 %v6668, %v6718
      %v6735 = vsub.f32 %v6669, %v6719
      %v6736 = vsub.f32 %v6670, %v6720
      %v6737 = vsub.f32 %v6671, %v6721
      %v6738 = vsub.f32 %v6672, %v6722
      %v6739 = vsub.f32 %v6673, %v6723
      %v6740 = vsub.f32 %v6674, %v6724
      %v6741 = vsub.f32 %v6675, %v6725
      %v6742 = vsub.f32 %v6676, %v6726
      %v6743 = vsub.f32 %v6677, %v6727
      %v6744 = vsub.f32 %v6678, %v6728
      %v6745 = vmul.f32 %v6729, %v6729
      %v6746 = vmul.f32 %v6730, %v6730
      %v6747 = vmul.f32 %v6731, %v6731
      %v6748 = vmul.f32 %v6732, %v6732
      %v6749 = vmul.f32 %v6733, %v6733
      %v6750 = vmul.f32 %v6734, %v6734
      %v6751 = vmul.f32 %v6735, %v6735
      %v6752 = vmul.f32 %v6736, %v6736
      %v6753 = vmul.f32 %v6737, %v6737
      %v6754 = vmul.f32 %v6738, %v6738
      %v6755 = vmul.f32 %v6739, %v6739
      %v6756 = vmul.f32 %v6740, %v6740
      %v6757 = vmul.f32 %v6741, %v6741
      %v6758 = vmul.f32 %v6742, %v6742
      %v6759 = vmul.f32 %v6743, %v6743
      %v6760 = vmul.f32 %v6744, %v6744
      %6761 = vadd.xlane.f32.xlu0 %v6745
      %v6762 = vpop.xlane.xlu0 %6761
      %6763 = vadd.xlane.f32.xlu0 %v6746
      %v6764 = vpop.xlane.xlu0 %6763
      %6765 = vadd.xlane.f32.xlu0 %v6747
      %v6766 = vpop.xlane.xlu0 %6765
      %6767 = vadd.xlane.f32.xlu0 %v6748
      %v6768 = vpop.xlane.xlu0 %6767
      %6769 = vadd.xlane.f32.xlu0 %v6749
      %v6770 = vpop.xlane.xlu0 %6769
      %6771 = vadd.xlane.f32.xlu0 %v6750
      %v6772 = vpop.xlane.xlu0 %6771
      %6773 = vadd.xlane.f32.xlu0 %v6751
      %v6774 = vpop.xlane.xlu0 %6773
      %6775 = vadd.xlane.f32.xlu0 %v6752
      %v6776 = vpop.xlane.xlu0 %6775
      %6777 = vadd.xlane.f32.xlu0 %v6753
      %v6778 = vpop.xlane.xlu0 %6777
      %6779 = vadd.xlane.f32.xlu0 %v6754
      %v6780 = vpop.xlane.xlu0 %6779
      %6781 = vadd.xlane.f32.xlu0 %v6755
      %v6782 = vpop.xlane.xlu0 %6781
      %6783 = vadd.xlane.f32.xlu0 %v6756
      %v6784 = vpop.xlane.xlu0 %6783
      %6785 = vadd.xlane.f32.xlu0 %v6757
      %v6786 = vpop.xlane.xlu0 %6785
      %6787 = vadd.xlane.f32.xlu0 %v6758
      %v6788 = vpop.xlane.xlu0 %6787
      %6789 = vadd.xlane.f32.xlu0 %v6759
      %v6790 = vpop.xlane.xlu0 %6789
      %6791 = vadd.xlane.f32.xlu0 %v6760
      %v6792 = vpop.xlane.xlu0 %6791
      %v6793 = vmul.f32 %v6762, %v630
      %v6794 = vmul.f32 %v6764, %v630
      %v6795 = vmul.f32 %v6766, %v630
      %v6796 = vmul.f32 %v6768, %v630
      %v6797 = vmul.f32 %v6770, %v630
      %v6798 = vmul.f32 %v6772, %v630
      %v6799 = vmul.f32 %v6774, %v630
      %v6800 = vmul.f32 %v6776, %v630
      %v6801 = vmul.f32 %v6778, %v630
      %v6802 = vmul.f32 %v6780, %v630
      %v6803 = vmul.f32 %v6782, %v630
      %v6804 = vmul.f32 %v6784, %v630
      %v6805 = vmul.f32 %v6786, %v630
      %v6806 = vmul.f32 %v6788, %v630
      %v6807 = vmul.f32 %v6790, %v630
      %v6808 = vmul.f32 %v6792, %v630
      %v6809 = vadd.f32 %v6793, 1e-05
      %v6810 = vadd.f32 %v6794, 1e-05
      %v6811 = vadd.f32 %v6795, 1e-05
      %v6812 = vadd.f32 %v6796, 1e-05
      %v6813 = vadd.f32 %v6797, 1e-05
      %v6814 = vadd.f32 %v6798, 1e-05
      %v6815 = vadd.f32 %v6799, 1e-05
      %v6816 = vadd.f32 %v6800, 1e-05
      %v6817 = vadd.f32 %v6801, 1e-05
      %v6818 = vadd.f32 %v6802, 1e-05
      %v6819 = vadd.f32 %v6803, 1e-05
      %v6820 = vadd.f32 %v6804, 1e-05
      %v6821 = vadd.f32 %v6805, 1e-05
      %v6822 = vadd.f32 %v6806, 1e-05
      %v6823 = vadd.f32 %v6807, 1e-05
      %v6824 = vadd.f32 %v6808, 1e-05
      %v6825 = vrsqrt.pop %v6809
      %v6826 = vmul.f32 %v6825, %v6809
      %v6827 = vmul.f32 %v6826, %v6825
      %v6828 = vmul.f32 0.5, %v6827
      %v6829 = vsub.f32 1.5, %v6828
      %v6830 = vmul.f32 %v6825, %v6829
      %vm6831 = vweird.f32 %v6809
      %vm6832 = vweird.f32 %v6825
      %vm6833 = vmor %vm6831, %vm6832
      %v6834 = vsel %vm6833, %v6825, %v6830
      %v6835 = vrsqrt.pop %v6810
      %v6836 = vmul.f32 %v6835, %v6810
      %v6837 = vmul.f32 %v6836, %v6835
      %v6838 = vmul.f32 0.5, %v6837
      %v6839 = vsub.f32 1.5, %v6838
      %v6840 = vmul.f32 %v6835, %v6839
      %vm6841 = vweird.f32 %v6810
      %vm6842 = vweird.f32 %v6835
      %vm6843 = vmor %vm6841, %vm6842
      %v6844 = vsel %vm6843, %v6835, %v6840
      %v6845 = vrsqrt.pop %v6811
      %v6846 = vmul.f32 %v6845, %v6811
      %v6847 = vmul.f32 %v6846, %v6845
      %v6848 = vmul.f32 0.5, %v6847
      %v6849 = vsub.f32 1.5, %v6848
      %v6850 = vmul.f32 %v6845, %v6849
      %vm6851 = vweird.f32 %v6811
      %vm6852 = vweird.f32 %v6845
      %vm6853 = vmor %vm6851, %vm6852
      %v6854 = vsel %vm6853, %v6845, %v6850
      %v6855 = vrsqrt.pop %v6812
      %v6856 = vmul.f32 %v6855, %v6812
      %v6857 = vmul.f32 %v6856, %v6855
      %v6858 = vmul.f32 0.5, %v6857
      %v6859 = vsub.f32 1.5, %v6858
      %v6860 = vmul.f32 %v6855, %v6859
      %vm6861 = vweird.f32 %v6812
      %vm6862 = vweird.f32 %v6855
      %vm6863 = vmor %vm6861, %vm6862
      %v6864 = vsel %vm6863, %v6855, %v6860
      %v6865 = vrsqrt.pop %v6813
      %v6866 = vmul.f32 %v6865, %v6813
      %v6867 = vmul.f32 %v6866, %v6865
      %v6868 = vmul.f32 0.5, %v6867
      %v6869 = vsub.f32 1.5, %v6868
      %v6870 = vmul.f32 %v6865, %v6869
      %vm6871 = vweird.f32 %v6813
      %vm6872 = vweird.f32 %v6865
      %vm6873 = vmor %vm6871, %vm6872
      %v6874 = vsel %vm6873, %v6865, %v6870
      %v6875 = vrsqrt.pop %v6814
      %v6876 = vmul.f32 %v6875, %v6814
      %v6877 = vmul.f32 %v6876, %v6875
      %v6878 = vmul.f32 0.5, %v6877
      %v6879 = vsub.f32 1.5, %v6878
      %v6880 = vmul.f32 %v6875, %v6879
      %vm6881 = vweird.f32 %v6814
      %vm6882 = vweird.f32 %v6875
      %vm6883 = vmor %vm6881, %vm6882
      %v6884 = vsel %vm6883, %v6875, %v6880
      %v6885 = vrsqrt.pop %v6815
      %v6886 = vmul.f32 %v6885, %v6815
      %v6887 = vmul.f32 %v6886, %v6885
      %v6888 = vmul.f32 0.5, %v6887
      %v6889 = vsub.f32 1.5, %v6888
      %v6890 = vmul.f32 %v6885, %v6889
      %vm6891 = vweird.f32 %v6815
      %vm6892 = vweird.f32 %v6885
      %vm6893 = vmor %vm6891, %vm6892
      %v6894 = vsel %vm6893, %v6885, %v6890
      %v6895 = vrsqrt.pop %v6816
      %v6896 = vmul.f32 %v6895, %v6816
      %v6897 = vmul.f32 %v6896, %v6895
      %v6898 = vmul.f32 0.5, %v6897
      %v6899 = vsub.f32 1.5, %v6898
      %v6900 = vmul.f32 %v6895, %v6899
      %vm6901 = vweird.f32 %v6816
      %vm6902 = vweird.f32 %v6895
      %vm6903 = vmor %vm6901, %vm6902
      %v6904 = vsel %vm6903, %v6895, %v6900
      %v6905 = vrsqrt.pop %v6817
      %v6906 = vmul.f32 %v6905, %v6817
      %v6907 = vmul.f32 %v6906, %v6905
      %v6908 = vmul.f32 0.5, %v6907
      %v6909 = vsub.f32 1.5, %v6908
      %v6910 = vmul.f32 %v6905, %v6909
      %vm6911 = vweird.f32 %v6817
      %vm6912 = vweird.f32 %v6905
      %vm6913 = vmor %vm6911, %vm6912
      %v6914 = vsel %vm6913, %v6905, %v6910
      %v6915 = vrsqrt.pop %v6818
      %v6916 = vmul.f32 %v6915, %v6818
      %v6917 = vmul.f32 %v6916, %v6915
      %v6918 = vmul.f32 0.5, %v6917
      %v6919 = vsub.f32 1.5, %v6918
      %v6920 = vmul.f32 %v6915, %v6919
      %vm6921 = vweird.f32 %v6818
      %vm6922 = vweird.f32 %v6915
      %vm6923 = vmor %vm6921, %vm6922
      %v6924 = vsel %vm6923, %v6915, %v6920
      %v6925 = vrsqrt.pop %v6819
      %v6926 = vmul.f32 %v6925, %v6819
      %v6927 = vmul.f32 %v6926, %v6925
      %v6928 = vmul.f32 0.5, %v6927
      %v6929 = vsub.f32 1.5, %v6928
      %v6930 = vmul.f32 %v6925, %v6929
      %vm6931 = vweird.f32 %v6819
      %vm6932 = vweird.f32 %v6925
      %vm6933 = vmor %vm6931, %vm6932
      %v6934 = vsel %vm6933, %v6925, %v6930
      %v6935 = vrsqrt.pop %v6820
      %v6936 = vmul.f32 %v6935, %v6820
      %v6937 = vmul.f32 %v6936, %v6935
      %v6938 = vmul.f32 0.5, %v6937
      %v6939 = vsub.f32 1.5, %v6938
      %v6940 = vmul.f32 %v6935, %v6939
      %vm6941 = vweird.f32 %v6820
      %vm6942 = vweird.f32 %v6935
      %vm6943 = vmor %vm6941, %vm6942
      %v6944 = vsel %vm6943, %v6935, %v6940
      %v6945 = vrsqrt.pop %v6821
      %v6946 = vmul.f32 %v6945, %v6821
      %v6947 = vmul.f32 %v6946, %v6945
      %v6948 = vmul.f32 0.5, %v6947
      %v6949 = vsub.f32 1.5, %v6948
      %v6950 = vmul.f32 %v6945, %v6949
      %vm6951 = vweird.f32 %v6821
      %vm6952 = vweird.f32 %v6945
      %vm6953 = vmor %vm6951, %vm6952
      %v6954 = vsel %vm6953, %v6945, %v6950
      %v6955 = vrsqrt.pop %v6822
      %v6956 = vmul.f32 %v6955, %v6822
      %v6957 = vmul.f32 %v6956, %v6955
      %v6958 = vmul.f32 0.5, %v6957
      %v6959 = vsub.f32 1.5, %v6958
      %v6960 = vmul.f32 %v6955, %v6959
      %vm6961 = vweird.f32 %v6822
      %vm6962 = vweird.f32 %v6955
      %vm6963 = vmor %vm6961, %vm6962
      %v6964 = vsel %vm6963, %v6955, %v6960
      %v6965 = vrsqrt.pop %v6823
      %v6966 = vmul.f32 %v6965, %v6823
      %v6967 = vmul.f32 %v6966, %v6965
      %v6968 = vmul.f32 0.5, %v6967
      %v6969 = vsub.f32 1.5, %v6968
      %v6970 = vmul.f32 %v6965, %v6969
      %vm6971 = vweird.f32 %v6823
      %vm6972 = vweird.f32 %v6965
      %vm6973 = vmor %vm6971, %vm6972
      %v6974 = vsel %vm6973, %v6965, %v6970
      %v6975 = vrsqrt.pop %v6824
      %v6976 = vmul.f32 %v6975, %v6824
      %v6977 = vmul.f32 %v6976, %v6975
      %v6978 = vmul.f32 0.5, %v6977
      %v6979 = vsub.f32 1.5, %v6978
      %v6980 = vmul.f32 %v6975, %v6979
      %vm6981 = vweird.f32 %v6824
      %vm6982 = vweird.f32 %v6975
      %vm6983 = vmor %vm6981, %vm6982
      %v6984 = vsel %vm6983, %v6975, %v6980
      %v6985 = vmul.f32 %v6729, %v6834
      %v6986 = vmul.f32 %v6730, %v6844
      %v6987 = vmul.f32 %v6731, %v6854
      %v6988 = vmul.f32 %v6732, %v6864
      %v6989 = vmul.f32 %v6733, %v6874
      %v6990 = vmul.f32 %v6734, %v6884
      %v6991 = vmul.f32 %v6735, %v6894
      %v6992 = vmul.f32 %v6736, %v6904
      %v6993 = vmul.f32 %v6737, %v6914
      %v6994 = vmul.f32 %v6738, %v6924
      %v6995 = vmul.f32 %v6739, %v6934
      %v6996 = vmul.f32 %v6740, %v6944
      %v6997 = vmul.f32 %v6741, %v6954
      %v6998 = vmul.f32 %v6742, %v6964
      %v6999 = vmul.f32 %v6743, %v6974
      %v7000 = vmul.f32 %v6744, %v6984
      %v7002 = vperm.slane %v6679, 0
      %v7004 = vmul.f32 %v6985, %v7002
      %v7005 = vmul.f32 %v6986, %v7002
      %v7006 = vmul.f32 %v6987, %v7002
      %v7007 = vmul.f32 %v6988, %v7002
      %v7008 = vmul.f32 %v6989, %v7002
      %v7009 = vmul.f32 %v6990, %v7002
      %v7010 = vmul.f32 %v6991, %v7002
      %v7011 = vmul.f32 %v6992, %v7002
      %v7012 = vmul.f32 %v6993, %v7002
      %v7013 = vmul.f32 %v6994, %v7002
      %v7014 = vmul.f32 %v6995, %v7002
      %v7015 = vmul.f32 %v6996, %v7002
      %v7016 = vmul.f32 %v6997, %v7002
      %v7017 = vmul.f32 %v6998, %v7002
      %v7018 = vmul.f32 %v6999, %v7002
      %v7019 = vmul.f32 %v7000, %v7002
      %v7021 = vperm.slane %v6680, 0
      %v7023 = vadd.f32 %v7004, %v7021
      %v7024 = vadd.f32 %v7005, %v7021
      %v7025 = vadd.f32 %v7006, %v7021
      %v7026 = vadd.f32 %v7007, %v7021
      %v7027 = vadd.f32 %v7008, %v7021
      %v7028 = vadd.f32 %v7009, %v7021
      %v7029 = vadd.f32 %v7010, %v7021
      %v7030 = vadd.f32 %v7011, %v7021
      %v7031 = vadd.f32 %v7012, %v7021
      %v7032 = vadd.f32 %v7013, %v7021
      %v7033 = vadd.f32 %v7014, %v7021
      %v7034 = vadd.f32 %v7015, %v7021
      %v7035 = vadd.f32 %v7016, %v7021
      %v7036 = vadd.f32 %v7017, %v7021
      %v7037 = vadd.f32 %v7018, %v7021
      %v7038 = vadd.f32 %v7019, %v7021
      %v7039 = vpack.c.bf16 %v7024, %v7023
      %v7040 = vpack.c.bf16 %v7026, %v7025
      %v7041 = vpack.c.bf16 %v7028, %v7027
      %v7042 = vpack.c.bf16 %v7030, %v7029
      %v7043 = vpack.c.bf16 %v7032, %v7031
      %v7044 = vpack.c.bf16 %v7034, %v7033
      %v7045 = vpack.c.bf16 %v7036, %v7035
      %v7046 = vpack.c.bf16 %v7038, %v7037
      %v7047 = vld [vmem:[%s14] sm:$0xf]
      %v7048 = vld [vmem:[%s14 + $0x4] sm:$0xf]
      %v7049 = vld [vmem:[%s14 + $0x8] sm:$0xf]
      %v7050 = vld [vmem:[%s14 + $0xc] sm:$0xf]
      %v7051 = vld [vmem:[%s14 + $0x10] sm:$0xf]
      %v7052 = vld [vmem:[%s14 + $0x14] sm:$0xf]
      %v7053 = vld [vmem:[%s14 + $0x18] sm:$0xf]
      %v7054 = vld [vmem:[%s14 + $0x1c] sm:$0xf]
      %v7055 = vld [vmem:[%s14 + $0x20] sm:$0xf]
      %v7056 = vld [vmem:[%s14 + $0x24] sm:$0xf]
      %v7057 = vld [vmem:[%s14 + $0x28] sm:$0xf]
      %v7058 = vld [vmem:[%s14 + $0x2c] sm:$0xf]
      %v7059 = vld [vmem:[%s14 + $0x30] sm:$0xf]
      %v7060 = vld [vmem:[%s14 + $0x34] sm:$0xf]
      %v7061 = vld [vmem:[%s14 + $0x38] sm:$0xf]
      %v7062 = vld [vmem:[%s14 + $0x3c] sm:$0xf]
      %v7063 = vld [vmem:[%s15] sm:$0x1]
      %v7065 = vperm.slane %v7063, 0
      %v7083 = vunpack.c.l.b16 %v7047
      %v7084 = vunpack.c.l.b16 %v7048
      %v7085 = vunpack.c.l.b16 %v7049
      %v7086 = vunpack.c.l.b16 %v7050
      %v7087 = vunpack.c.l.b16 %v7051
      %v7088 = vunpack.c.l.b16 %v7052
      %v7089 = vunpack.c.l.b16 %v7053
      %v7090 = vunpack.c.l.b16 %v7054
      %v7091 = vunpack.c.l.b16 %v7055
      %v7092 = vunpack.c.l.b16 %v7056
      %v7093 = vunpack.c.l.b16 %v7057
      %v7094 = vunpack.c.l.b16 %v7058
      %v7095 = vunpack.c.l.b16 %v7059
      %v7096 = vunpack.c.l.b16 %v7060
      %v7097 = vunpack.c.l.b16 %v7061
      %v7098 = vunpack.c.l.b16 %v7062
      %v7099 = vpack.c.b16 %v7084, %v7083
      %v7100 = vpack.c.b16 %v7086, %v7085
      %v7101 = vpack.c.b16 %v7088, %v7087
      %v7102 = vpack.c.b16 %v7090, %v7089
      %v7103 = vpack.c.b16 %v7092, %v7091
      %v7104 = vpack.c.b16 %v7094, %v7093
      %v7105 = vpack.c.b16 %v7096, %v7095
      %v7106 = vpack.c.b16 %v7098, %v7097
      %7115 = vmatpush.bf16.msra.mxu0 %v7106
      %7116 = vmatpush.bf16.msra.mxu0 %v7105
      %7117 = vmatpush.bf16.msra.mxu0 %v7104
      %7118 = vmatpush.bf16.msra.mxu0 %v7103
      %7119 = vmatpush.bf16.msra.mxu0 %v7102
      %7120 = vmatpush.bf16.msra.mxu0 %v7101
      %7121 = vmatpush.bf16.msra.mxu0 %v7100
      %7122 = vmatpush.bf16.msra.mxu0 %v7099
      %7123 = vmatmul.bf16.gmra.mxu0 %v7039
      %v7124 = vpop.f32.mrf.mxu0
      %v7125 = vadd.f32 %v7065, %v7124
      %v7126 = vpop.f32.mrf.mxu0
      %v7127 = vadd.f32 %v7065, %v7126
      %7128 = vmatmul.bf16.gmra.mxu0 %v7040
      %v7129 = vpop.f32.mrf.mxu0
      %v7130 = vadd.f32 %v7065, %v7129
      %v7131 = vpop.f32.mrf.mxu0
      %v7132 = vadd.f32 %v7065, %v7131
      %7133 = vmatmul.bf16.gmra.mxu0 %v7041
      %v7134 = vpop.f32.mrf.mxu0
      %v7135 = vadd.f32 %v7065, %v7134
      %v7136 = vpop.f32.mrf.mxu0
      %v7137 = vadd.f32 %v7065, %v7136
      %7138 = vmatmul.bf16.gmra.mxu0 %v7042
      %v7139 = vpop.f32.mrf.mxu0
      %v7140 = vadd.f32 %v7065, %v7139
      %v7141 = vpop.f32.mrf.mxu0
      %v7142 = vadd.f32 %v7065, %v7141
      %7143 = vmatmul.bf16.gmra.mxu0 %v7043
      %v7144 = vpop.f32.mrf.mxu0
      %v7145 = vadd.f32 %v7065, %v7144
      %v7146 = vpop.f32.mrf.mxu0
      %v7147 = vadd.f32 %v7065, %v7146
      %7148 = vmatmul.bf16.gmra.mxu0 %v7044
      %v7149 = vpop.f32.mrf.mxu0
      %v7150 = vadd.f32 %v7065, %v7149
      %v7151 = vpop.f32.mrf.mxu0
      %v7152 = vadd.f32 %v7065, %v7151
      %7153 = vmatmul.bf16.gmra.mxu0 %v7045
      %v7154 = vpop.f32.mrf.mxu0
      %v7155 = vadd.f32 %v7065, %v7154
      %v7156 = vpop.f32.mrf.mxu0
      %v7157 = vadd.f32 %v7065, %v7156
      %7158 = vmatmul.bf16.gmra.mxu0 %v7046
      %v7159 = vpop.f32.mrf.mxu0
      %v7160 = vadd.f32 %v7065, %v7159
      %v7161 = vpop.f32.mrf.mxu0
      %v7162 = vadd.f32 %v7065, %v7161
      %7163 = vdwg.mxu0
      %7164 = vst [vmem:[%s521] sm:$0xff] %v7125
      %7165 = vst [vmem:[%s521 + $0x8] sm:$0xff] %v7127
      %7166 = vst [vmem:[%s521 + $0x10] sm:$0xff] %v7130
      %7167 = vst [vmem:[%s521 + $0x18] sm:$0xff] %v7132
      %7168 = vst [vmem:[%s521 + $0x20] sm:$0xff] %v7135
      %7169 = vst [vmem:[%s521 + $0x28] sm:$0xff] %v7137
      %7170 = vst [vmem:[%s521 + $0x30] sm:$0xff] %v7140
      %7171 = vst [vmem:[%s521 + $0x38] sm:$0xff] %v7142
      %7172 = vst [vmem:[%s521 + $0x40] sm:$0xff] %v7145
      %7173 = vst [vmem:[%s521 + $0x48] sm:$0xff] %v7147
      %7174 = vst [vmem:[%s521 + $0x50] sm:$0xff] %v7150
      %7175 = vst [vmem:[%s521 + $0x58] sm:$0xff] %v7152
      %7176 = vst [vmem:[%s521 + $0x60] sm:$0xff] %v7155
      %7177 = vst [vmem:[%s521 + $0x68] sm:$0xff] %v7157
      %7178 = vst [vmem:[%s521 + $0x70] sm:$0xff] %v7160
      %7179 = vst [vmem:[%s521 + $0x78] sm:$0xff] %v7162
      %p7180 = scmp.lt.s32.totalorder %s27, 1
      %s7181 = scalar_select %p7180, %s27, 1
      %s7182 = smul.addr %s7181, 16
      %s7183 = smul.addr %s7182, 8
      %s7184 = scalar_lea.vmem %s16, %s7183
      // Predicated region
      $region85: #{bigram_lm_forward.1} parent=83 // pred_check
        %p7185 = pneg %p386
      $region86: #{bigram_lm_forward.1} parent=83 // pred_check_branch
        %7187 = sbr.rel (%p7185) target = $region88
      $region87: #{bigram_lm_forward.1} parent=83 // pred_region
        _
      $region88: #{bigram_lm_forward.1} parent=83 // pred_fallthru
        _
    $region84: #{bigram_lm_forward.1} parent=5 // pred_fallthru
      _
    %p7188 = scmp.le.s32.totalorder 2, %s22
    // Predicated region
    $region89: #{bigram_lm_forward.1} parent=5 // pred_check
      %p7189 = pneg %p7188
    $region90: #{bigram_lm_forward.1} parent=5 // pred_check_branch
      %7191 = sbr.rel (%p7189) target = $region92
    $region91: #{bigram_lm_forward.1} parent=5 // pred_region
      %s7192 = ssub.s32 %s22, 2
      // Predicated region
      $region93: #{bigram_lm_forward.1} parent=91 // pred_check
        %p7193 = pneg %p392
      $region94: #{bigram_lm_forward.1} parent=91 // pred_check_branch
        %7195 = sbr.rel (%p7193) target = $region96
      $region95: #{bigram_lm_forward.1} parent=91 // pred_region
        %p7196 = scmp.lt.s32.totalorder %s28, 1
        %s7197 = scalar_select %p7196, %s28, 1
        %s7198 = smul.addr %s7197, 16
        %s7199 = smul.addr %s7198, 8
        %s7200 = scalar_lea.vmem %s16, %s7199
      $region96: #{bigram_lm_forward.1} parent=91 // pred_fallthru
        _
    $region92: #{bigram_lm_forward.1} parent=5 // pred_fallthru
      _
  $region6: #{bigram_lm_forward.1} parent=0 // loop_footer
    %s26 = sadd.s32 1, %s22
  $region7: #{bigram_lm_forward.1} parent=0 // loop_footer_branch
    %21 = sbr.rel target = $region3
  $region8: #{bigram_lm_forward.1} parent=0 // loop_exit
    _

</llo_original>
